<compile_context>
chip_gen: v7x
topology: tpu7x:2x2x1
jax: 0.10.0
libtpu: 0.0.40
codegen_flags: <defaults>
</compile_context>

<pallas_src>
import functools

import numpy as np
import jax
import jax.numpy as jnp
from jax import lax
from jax.experimental import pallas as pl
from jax.experimental.pallas import tpu as pltpu


def _spec(block_shape, index_map, *, buffers=None):
    """BlockSpec helper: optionally request N-deep buffering (falls back cleanly)."""
    if buffers is not None and hasattr(pl, "Buffered"):
        try:
            return pl.BlockSpec(block_shape, index_map,
                                pipeline_mode=pl.Buffered(buffers))
        except TypeError:
            pass
    return pl.BlockSpec(block_shape, index_map)


# ----------------------------------------------------------------------------
# Pallas kernel: one bidirectional GRU layer, input projection fused in.
# grid = (direction, time_block); backward direction walks time in reverse.
# ----------------------------------------------------------------------------
def _gru_bidir_layer_kernel(x_ref, wih_ref, bgi_ref, whh_ref, bhn_ref, len_ref,
                            out_ref, hT_ref, h_scratch, gi_scratch):
    # x_ref   : (n_src, tile_t, B, Din)  layer-input block (n_src=1: embedding,
    #                                    n_src=2: fwd/bwd outputs of prev layer)
    # wih_ref : (n_src, Din, 3H)         input weights, gate-major along lanes
    # bgi_ref : (1, 3H) f32              b_ih (all gates) + b_hh (r,z) folded
    # whh_ref : (H, 3H)                  fused recurrent weights (h @ whh)
    # bhn_ref : (1, H) f32               recurrent bias of the n gate
    # len_ref : (B, 1) int32             sequence lengths (packed-seq mask)
    # out_ref : (tile_t, B, H)           per-step outputs of this (dir, block)
    # hT_ref  : (B, H) f32               final hidden state of this direction
    # h_scratch : (B, H) f32             persistent recurrent state
    # gi_scratch: (tile_t, B, 3H) f32    block-local hoisted input projection
    d = pl.program_id(0)                 # 0 = forward, 1 = backward
    t_blk = pl.program_id(1)
    n_tblk = pl.num_programs(1)
    n_src, tile_t, B, Din = x_ref.shape
    H = hT_ref.shape[-1]

    @pl.when(t_blk == 0)                 # start of each direction's sweep
    def _():
        h_scratch[...] = jnp.zeros_like(h_scratch)

    # Fused, hoisted input projection for the whole time block: one big MXU
    # matmul per source instead of one tiny matmul per step.
    x0 = x_ref[0].reshape(tile_t * B, Din)
    gi = jnp.dot(x0, wih_ref[0], preferred_element_type=jnp.float32)
    for s in range(1, n_src):            # static python loop (n_src in {1, 2})
        xs = x_ref[s].reshape(tile_t * B, Din)
        gi = gi + jnp.dot(xs, wih_ref[s], preferred_element_type=jnp.float32)
    gi = gi + bgi_ref[...]
    gi_scratch[...] = gi.reshape(tile_t, B, 3 * H)

    # Block-invariant values hoisted out of the unrolled recurrence.
    blk = t_blk * (1 - d) + (n_tblk - 1 - t_blk) * d   # real time-block index
    lens_rel = len_ref[...] - blk * tile_t             # (B, 1) int32
    bhn_b = jnp.broadcast_to(bhn_ref[...], (B, H))     # (B, H) f32

    def step(s, carry):
        local = s * (1 - d) + (tile_t - 1 - s) * d     # reverse walk for d == 1
        h = h_scratch[...]                             # (B, H) f32
        gi_t = gi_scratch[local]                       # (B, 3H) f32

        # single fused recurrent matmul (one MXU weight push per step)
        gh = jnp.dot(h.astype(whh_ref.dtype), whh_ref[...],
                     preferred_element_type=jnp.float32)

        r = jax.nn.sigmoid(gi_t[:, 0:H] + gh[:, 0:H])
        z = jax.nn.sigmoid(gi_t[:, H:2 * H] + gh[:, H:2 * H])
        n = jnp.tanh(gi_t[:, 2 * H:] + r * (gh[:, 2 * H:] + bhn_b))
        h_new = z * (h - n) + n                        # == (1 - z) * n + z * h

        # packed-sequence semantics: padded steps freeze h and emit zeros
        valid = local < lens_rel                       # (B, 1) bool
        h_upd = jnp.where(valid, h_new, h)
        h_scratch[...] = h_upd
        out_ref[local] = jnp.where(valid, h_upd, 0.0).astype(out_ref.dtype)
        return carry

    lax.fori_loop(0, tile_t, step, 0, unroll=(tile_t if tile_t <= 8 else 8))

    @pl.when(t_blk == n_tblk - 1)        # only the last block's hT matters
    def _():
        hT_ref[...] = h_scratch[...]


def gru_bidir_layer(x, w_ih, b_gi, w_hh, b_hn, lengths_col, *, tile_t,
                    out_dtype, vmem_limit_bytes):
    """One bidirectional GRU layer (both directions) in a single pallas_call.

    x           : (n_src, T_pad, B, Din)   layer input
    w_ih        : (2, n_src, Din, 3H)
    b_gi        : (2, 1, 3H) f32
    w_hh        : (2, H, 3H)
    b_hn        : (2, 1, H) f32
    lengths_col : (B, 1) int32
    returns out (2, T_pad, B, H) out_dtype, hT (2, B, H) f32
    """
    n_src, T_pad, B, Din = x.shape
    H = w_hh.shape[-1] // 3
    n_tblocks = T_pad // tile_t

    def t_map(d, t):          # backward direction walks time blocks in reverse
        return t * (1 - d) + (n_tblocks - 1 - t) * d

    out, hT = pl.pallas_call(
        _gru_bidir_layer_kernel,
        out_shape=(jax.ShapeDtypeStruct((2, T_pad, B, H), out_dtype),
                   jax.ShapeDtypeStruct((2, B, H), jnp.float32)),
        grid_spec=pltpu.PrefetchScalarGridSpec(
            num_scalar_prefetch=0,
            grid=(2, n_tblocks),
            in_specs=[
                pl.BlockSpec((n_src, tile_t, B, Din),
                             lambda d, t: (0, t_map(d, t), 0, 0)),
                _spec((None, n_src, Din, 3 * H), lambda d, t: (d, 0, 0, 0), buffers=1),
                _spec((None, 1, 3 * H), lambda d, t: (d, 0, 0), buffers=1),
                _spec((None, H, 3 * H), lambda d, t: (d, 0, 0), buffers=1),
                _spec((None, 1, H), lambda d, t: (d, 0, 0), buffers=1),
                _spec((B, 1), lambda d, t: (0, 0), buffers=1),
            ],
            out_specs=(
                pl.BlockSpec((None, tile_t, B, H),
                             lambda d, t: (d, t_map(d, t), 0, 0)),
                pl.BlockSpec((None, B, H), lambda d, t: (d, 0, 0)),
            ),
            scratch_shapes=[pltpu.VMEM((B, H), jnp.float32),
                            pltpu.VMEM((tile_t, B, 3 * H), jnp.float32)],
        ),
        compiler_params=pltpu.CompilerParams(
            # direction axis is independent (one TC per direction on v7x);
            # the time axis carries the recurrence.
            dimension_semantics=("parallel", "arbitrary"),
            vmem_limit_bytes=vmem_limit_bytes,
        ),
    )(x, w_ih, b_gi, w_hh, b_hn, lengths_col)
    return out, hT


# ----------------------------------------------------------------------------
# One-time parameter preparation (transposes / gate fusion / bias folding)
# ----------------------------------------------------------------------------
def prepare_params(raw, hidden_dim):
    H = hidden_dim
    layers = []
    for l in range(3):
        wih_d, whh_d, bgi_d, bhn_d = [], [], [], []
        for d in range(2):
            w_ih, w_hh, b_ih, b_hh = raw["gru"][(l, d)]
            if l == 0:
                wih = jnp.transpose(w_ih)[None]                     # (1, E, 3H)
            else:
                # columns 0:H act on the fwd-source features, H:2H on bwd-source
                wih = jnp.stack([jnp.transpose(w_ih[:, :H]),
                                 jnp.transpose(w_ih[:, H:])])       # (2, H, 3H)
            wih_d.append(wih)
            whh_d.append(jnp.transpose(w_hh))                       # (H, 3H) fused gates
            fold = jnp.concatenate([jnp.ones((2 * H,), jnp.float32),
                                    jnp.zeros((H,), jnp.float32)])
            # fold b_ih (all gates) + b_hh (r, z only) into the input projection
            bgi_d.append((b_ih + b_hh * fold).reshape(1, 3 * H))
            bhn_d.append(b_hh[2 * H:].reshape(1, H))
        layers.append({
            "w_ih": jnp.stack(wih_d),   # (2, n_src, Din, 3H)
            "w_hh": jnp.stack(whh_d),   # (2, H, 3H)
            "b_gi": jnp.stack(bgi_d),   # (2, 1, 3H)
            "b_hn": jnp.stack(bhn_d),   # (2, 1, H)
        })
    return {"embedding": raw["embedding"], "layers": layers}


# ----------------------------------------------------------------------------
# GRUEncoder forward (glue in plain JAX; projection + recurrence are in Pallas)
# ----------------------------------------------------------------------------
def gru_encoder_forward(prepared, tokens, lengths, hidden_dim, *, tile_t=32,
                        compute_dtype=jnp.float32,
                        vmem_limit_bytes=48 * 1024 * 1024):
    H = hidden_dim
    emb = jnp.take(prepared["embedding"], tokens, axis=0)            # (T, B, E)
    T, B, _ = emb.shape

    # Pad T to a multiple of tile_t and B to a multiple of 16 (bf16 sublane
    # tile); padded steps / rows are masked out by `lengths` inside the kernel.
    T_pad = ((T + tile_t - 1) // tile_t) * tile_t
    B_pad = ((B + 15) // 16) * 16
    lengths = lengths.astype(jnp.int32)
    if T_pad != T or B_pad != B:
        emb = jnp.pad(emb, ((0, T_pad - T), (0, B_pad - B), (0, 0)))
    if B_pad != B:
        lengths = jnp.pad(lengths, (0, B_pad - B))
    lengths_col = lengths.reshape(B_pad, 1)

    x = emb.astype(compute_dtype)[None]        # (1, T_pad, B_pad, E)
    hiddens = []
    n_layers = len(prepared["layers"])
    for l, lp in enumerate(prepared["layers"]):
        out_dtype = compute_dtype if l + 1 < n_layers else jnp.float32
        out, hT = gru_bidir_layer(
            x,
            lp["w_ih"].astype(compute_dtype),
            lp["b_gi"],
            lp["w_hh"].astype(compute_dtype),
            lp["b_hn"],
            lengths_col,
            tile_t=tile_t, out_dtype=out_dtype,
            vmem_limit_bytes=vmem_limit_bytes)
        hiddens.append(hT)                     # (2, B_pad, H) = (fwd, bwd)
        x = out                                # direction-major input of next layer
        # TODO(synk): inter-layer dropout(p=0.1) only applies in training mode;
        # this eval forward omits it.

    outputs = (x[0].astype(jnp.float32) + x[1].astype(jnp.float32))[:T, :B]
    hidden = jnp.concatenate(hiddens, axis=0)[:, :B]                 # (6, B, H)
    return outputs, hidden


# ----------------------------------------------------------------------------
# Pure-JAX reference (python time loop) for correctness checks
# ----------------------------------------------------------------------------
def _ref_gru_dir(x, mask, w_ih, w_hh, b_ih, b_hh, reverse):
    T, B, _ = x.shape
    H = w_hh.shape[1]
    hp = lax.Precision.HIGHEST
    h = jnp.zeros((B, H), jnp.float32)
    outs = [None] * T
    ts = range(T - 1, -1, -1) if reverse else range(T)
    for t in ts:
        gi = jnp.dot(x[t], w_ih.T, precision=hp) + b_ih
        gh = jnp.dot(h, w_hh.T, precision=hp) + b_hh
        r = jax.nn.sigmoid(gi[:, :H] + gh[:, :H])
        z = jax.nn.sigmoid(gi[:, H:2 * H] + gh[:, H:2 * H])
        n = jnp.tanh(gi[:, 2 * H:] + r * gh[:, 2 * H:])
        h_new = (1.0 - z) * n + z * h
        m = mask[t]
        h = m * h_new + (1.0 - m) * h
        outs[t] = m * h
    return jnp.stack(outs), h


def ref_forward(raw, tokens, lengths, hidden_dim):
    emb = raw["embedding"][tokens]
    T, B, _ = emb.shape
    H = hidden_dim
    mask = (jnp.arange(T)[:, None] < lengths[None, :]).astype(jnp.float32)
    mask = jnp.broadcast_to(mask[:, :, None], (T, B, H))
    x = emb
    hiddens = []
    for layer in range(3):
        outs = []
        for d, rev in enumerate((False, True)):
            w_ih, w_hh, b_ih, b_hh = raw["gru"][(layer, d)]
            o, hT = _ref_gru_dir(x, mask, w_ih, w_hh, b_ih, b_hh, rev)
            outs.append(o)
            hiddens.append(hT)
        x = jnp.concatenate(outs, axis=-1)
    return x[:, :, :H] + x[:, :, H:], jnp.stack(hiddens, axis=0)


# ----------------------------------------------------------------------------
# Deterministic parameter init (PyTorch GRU-style uniform(-1/sqrt(H), 1/sqrt(H)))
# ----------------------------------------------------------------------------
def init_params(key, vocab_size, embedding_dim, hidden_dim):
    k_emb, k_gru = jax.random.split(key)
    params = {}
    # TODO(synk): the original module copies GloVe vectors into the embedding;
    # here we use a deterministic synthetic init of the same shape.
    params["embedding"] = 0.1 * jax.random.normal(
        k_emb, (vocab_size, embedding_dim), jnp.float32)

    bound = 1.0 / float(np.sqrt(hidden_dim))
    keys = jax.random.split(k_gru, 3 * 2 * 4)
    gru = {}
    i = 0
    for layer in range(3):
        din = embedding_dim if layer == 0 else 2 * hidden_dim
        for d in range(2):
            w_ih = jax.random.uniform(keys[i], (3 * hidden_dim, din), jnp.float32, -bound, bound); i += 1
            w_hh = jax.random.uniform(keys[i], (3 * hidden_dim, hidden_dim), jnp.float32, -bound, bound); i += 1
            b_ih = jax.random.uniform(keys[i], (3 * hidden_dim,), jnp.float32, -bound, bound); i += 1
            b_hh = jax.random.uniform(keys[i], (3 * hidden_dim,), jnp.float32, -bound, bound); i += 1
            gru[(layer, d)] = (w_ih, w_hh, b_ih, b_hh)
    params["gru"] = gru
    return params


if __name__ == "__main__":
    vocab_size, embedding_dim, hidden_dim = 20, 16, 32
    T, B = 16, 8

    raw = init_params(jax.random.PRNGKey(0), vocab_size, embedding_dim, hidden_dim)
    prepared = prepare_params(raw, hidden_dim)

    tokens = jax.random.randint(jax.random.PRNGKey(1), (T, B), 0, vocab_size,
                                dtype=jnp.int32)
    # pack_padded_sequence requires lengths sorted in decreasing order
    lengths = jnp.array([16, 15, 13, 12, 9, 7, 5, 3], dtype=jnp.int32)

    ref_out, ref_hid = ref_forward(raw, tokens, lengths, hidden_dim)

    # f32 run, tile_t=8 -> two time blocks: exercises the cross-block h carry.
    fwd = jax.jit(functools.partial(gru_encoder_forward,
                                    hidden_dim=hidden_dim, tile_t=8))
    outputs, hidden = fwd(prepared, tokens, lengths)
    outputs = jax.block_until_ready(outputs)
    hidden = jax.block_until_ready(hidden)

    assert outputs.shape == (T, B, hidden_dim)
    assert hidden.shape == (6, B, hidden_dim)
    # MXU matmuls may run as bf16 passes; tolerances account for that.
    assert np.allclose(np.asarray(outputs), np.asarray(ref_out), atol=1e-2, rtol=1e-2)
    assert np.allclose(np.asarray(hidden), np.asarray(ref_hid), atol=1e-2, rtol=1e-2)

    # bf16-streamed variant (weights / activations streamed in bf16; hidden
    # state and accumulation stay f32) — checked against the reference too.
    fwd_bf16 = jax.jit(functools.partial(gru_encoder_forward,
                                         hidden_dim=hidden_dim, tile_t=16,
                                         compute_dtype=jnp.bfloat16))
    out_b, hid_b = fwd_bf16(prepared, tokens, lengths)
    out_b = jax.block_until_ready(out_b)
    hid_b = jax.block_until_ready(hid_b)
    assert np.allclose(np.asarray(out_b), np.asarray(ref_out), atol=5e-2, rtol=5e-2)
    assert np.allclose(np.asarray(hid_b), np.asarray(ref_hid), atol=5e-2, rtol=5e-2)

    print("KERNEL_OK")
</pallas_src>

<mosaic_0001>
module attributes {stable_mosaic.version = 11 : i64} {
  func.func @_gru_bidir_layer_kernel(%arg0: i32, %arg1: i32, %arg2: memref<1x8x16x16xf32, #tpu.memory_space<vmem>>, %arg3: memref<1x1x16x96xf32, #tpu.memory_space<vmem>>, %arg4: memref<1x1x96xf32, #tpu.memory_space<vmem>>, %arg5: memref<1x32x96xf32, #tpu.memory_space<vmem>>, %arg6: memref<1x1x32xf32, #tpu.memory_space<vmem>>, %arg7: memref<16x1xi32, #tpu.memory_space<vmem>>, %arg8: memref<1x8x16x32xf32, #tpu.memory_space<vmem>>, %arg9: memref<1x16x32xf32, #tpu.memory_space<vmem>>, %arg10: memref<16x32xf32, #tpu.memory_space<vmem>>, %arg11: memref<8x16x96xf32, #tpu.memory_space<vmem>>) attributes {dimension_semantics = [#tpu.dimension_semantics<parallel>, #tpu.dimension_semantics<arbitrary>], iteration_bounds = array<i64: 2, 2>, scalar_prefetch = 0 : i64, scratch_operands = 2 : i64, tpu.core_type = #tpu.core_type<tc>, window_params = [{transform_indices = @transform_0, window_bounds = array<i64: 1, 8, 16, 16>}, {pipeline_mode = #tpu.pipeline_mode<synchronous>, transform_indices = @transform_1, window_bounds = array<i64: 1, 1, 16, 96>}, {pipeline_mode = #tpu.pipeline_mode<synchronous>, transform_indices = @transform_2, window_bounds = array<i64: 1, 1, 96>}, {pipeline_mode = #tpu.pipeline_mode<synchronous>, transform_indices = @transform_3, window_bounds = array<i64: 1, 32, 96>}, {pipeline_mode = #tpu.pipeline_mode<synchronous>, transform_indices = @transform_4, window_bounds = array<i64: 1, 1, 32>}, {pipeline_mode = #tpu.pipeline_mode<synchronous>, transform_indices = @transform_5, window_bounds = array<i64: 16, 1>}, {transform_indices = @transform_6, window_bounds = array<i64: 1, 8, 16, 32>}, {transform_indices = @transform_7, window_bounds = array<i64: 1, 16, 32>}]} {
    %c0_i32 = arith.constant 0 : i32
    %0 = arith.cmpi eq, %arg1, %c0_i32 : i32
    %1 = arith.extui %0 : i1 to i32
    %c0_i32_0 = arith.constant 0 : i32
    %2 = arith.cmpi ne, %1, %c0_i32_0 : i32
    scf.if %2 {
      %cst_169 = arith.constant 0.000000e+00 : f32
      %439 = vector.broadcast %cst_169 : f32 to vector<16x32xf32>
      %c0_170 = arith.constant 0 : index
      %c0_171 = arith.constant 0 : index
      %440 = vector.load %arg10[%c0_170, %c0_171] : memref<16x32xf32, #tpu.memory_space<vmem>>, vector<16x32xf32>
      tpu.vector_store %arg10[%c0_170, %c0_171], %439 {strides = array<i32>} : memref<16x32xf32, #tpu.memory_space<vmem>>, vector<16x32xf32>,
    } else {
    }
    %c0 = arith.constant 0 : index
    %c0_1 = arith.constant 0 : index
    %c0_2 = arith.constant 0 : index
    %c0_3 = arith.constant 0 : index
    %3 = vector.load %arg2[%c0, %c0_1, %c0_2, %c0_3] : memref<1x8x16x16xf32, #tpu.memory_space<vmem>>, vector<1x8x16x16xf32>
    %4 = vector.shape_cast %3 : vector<1x8x16x16xf32> to vector<8x16x16xf32>
    %5 = vector.shape_cast %4 : vector<8x16x16xf32> to vector<128x16xf32>
    %c0_4 = arith.constant 0 : index
    %c0_5 = arith.constant 0 : index
    %c0_6 = arith.constant 0 : index
    %c0_7 = arith.constant 0 : index
    %6 = vector.load %arg3[%c0_4, %c0_5, %c0_6, %c0_7] : memref<1x1x16x96xf32, #tpu.memory_space<vmem>>, vector<1x1x16x96xf32>
    %7 = vector.shape_cast %6 : vector<1x1x16x96xf32> to vector<16x96xf32>
    %cst = arith.constant dense<0.000000e+00> : vector<128x96xf32>
    %8 = tpu.matmul %5, %7, %cst {dimension_numbers = #tpu.dot_dimension_numbers<[1], [0], [0], [1], [0, 0, 1, 1], [], []>} : vector<128x16xf32>, vector<16x96xf32>, vector<128x96xf32> -> vector<128x96xf32>
    %c0_8 = arith.constant 0 : index
    %c0_9 = arith.constant 0 : index
    %c0_10 = arith.constant 0 : index
    %9 = vector.load %arg4[%c0_8, %c0_9, %c0_10] : memref<1x1x96xf32, #tpu.memory_space<vmem>>, vector<1x1x96xf32>
    %10 = vector.shape_cast %9 : vector<1x1x96xf32> to vector<1x96xf32>
    %11 = vector.broadcast %10 : vector<1x96xf32> to vector<128x96xf32>
    %12 = arith.addf %8, %11 : vector<128x96xf32>
    %13 = vector.shape_cast %12 : vector<128x96xf32> to vector<8x16x96xf32>
    %c0_11 = arith.constant 0 : index
    %c0_12 = arith.constant 0 : index
    %c0_13 = arith.constant 0 : index
    %14 = vector.load %arg11[%c0_11, %c0_12, %c0_13] : memref<8x16x96xf32, #tpu.memory_space<vmem>>, vector<8x16x96xf32>
    tpu.vector_store %arg11[%c0_11, %c0_12, %c0_13], %13 {strides = array<i32>} : memref<8x16x96xf32, #tpu.memory_space<vmem>>, vector<8x16x96xf32>,
    %c1_i32 = arith.constant 1 : i32
    %15 = arith.subi %c1_i32, %arg0 : i32
    %16 = arith.muli %arg1, %15 : i32
    %c1_i32_14 = arith.constant 1 : i32
    %17 = arith.subi %c1_i32_14, %arg1 : i32
    %18 = arith.muli %17, %arg0 : i32
    %19 = arith.addi %16, %18 : i32
    %c0_15 = arith.constant 0 : index
    %c0_16 = arith.constant 0 : index
    %20 = vector.load %arg7[%c0_15, %c0_16] : memref<16x1xi32, #tpu.memory_space<vmem>>, vector<16x1xi32>
    %c8_i32 = arith.constant 8 : i32
    %21 = arith.muli %19, %c8_i32 : i32
    %22 = vector.broadcast %21 : i32 to vector<16x1xi32>
    %23 = arith.subi %20, %22 : vector<16x1xi32>
    %c0_17 = arith.constant 0 : index
    %c0_18 = arith.constant 0 : index
    %c0_19 = arith.constant 0 : index
    %24 = vector.load %arg6[%c0_17, %c0_18, %c0_19] : memref<1x1x32xf32, #tpu.memory_space<vmem>>, vector<1x1x32xf32>
    %25 = vector.shape_cast %24 : vector<1x1x32xf32> to vector<1x32xf32>
    %26 = vector.shape_cast %25 : vector<1x32xf32> to vector<1x32xf32>
    %27 = vector.broadcast %26 : vector<1x32xf32> to vector<16x32xf32>
    %c0_i32_20 = arith.constant 0 : i32
    %c1_i32_21 = arith.constant 1 : i32
    %28 = arith.subi %c1_i32_21, %arg0 : i32
    %29 = arith.muli %c0_i32_20, %28 : i32
    %c7_i32 = arith.constant 7 : i32
    %30 = arith.subi %c7_i32, %c0_i32_20 : i32
    %31 = arith.muli %30, %arg0 : i32
    %32 = arith.addi %29, %31 : i32
    %c0_22 = arith.constant 0 : index
    %c0_23 = arith.constant 0 : index
    %33 = vector.load %arg10[%c0_22, %c0_23] : memref<16x32xf32, #tpu.memory_space<vmem>>, vector<16x32xf32>
    %34 = arith.index_cast %32 : i32 to index
    %c0_24 = arith.constant 0 : index
    %c0_25 = arith.constant 0 : index
    %35 = vector.load %arg11[%34, %c0_24, %c0_25] : memref<8x16x96xf32, #tpu.memory_space<vmem>>, vector<1x16x96xf32>
    %36 = vector.shape_cast %35 : vector<1x16x96xf32> to vector<16x96xf32>
    %c0_26 = arith.constant 0 : index
    %c0_27 = arith.constant 0 : index
    %c0_28 = arith.constant 0 : index
    %37 = vector.load %arg5[%c0_26, %c0_27, %c0_28] : memref<1x32x96xf32, #tpu.memory_space<vmem>>, vector<1x32x96xf32>
    %38 = vector.shape_cast %37 : vector<1x32x96xf32> to vector<32x96xf32>
    %cst_29 = arith.constant dense<0.000000e+00> : vector<16x96xf32>
    %39 = tpu.matmul %33, %38, %cst_29 {dimension_numbers = #tpu.dot_dimension_numbers<[1], [0], [0], [1], [0, 0, 1, 1], [], []>} : vector<16x32xf32>, vector<32x96xf32>, vector<16x96xf32> -> vector<16x96xf32>
    %40 = vector.extract_strided_slice %36 {offsets = [0, 0], sizes = [16, 32], strides = [1, 1]} : vector<16x96xf32> to vector<16x32xf32>
    %41 = vector.extract_strided_slice %39 {offsets = [0, 0], sizes = [16, 32], strides = [1, 1]} : vector<16x96xf32> to vector<16x32xf32>
    %42 = arith.addf %40, %41 : vector<16x32xf32>
    %43 = arith.negf %42 : vector<16x32xf32>
    %44 = math.exp %43 : vector<16x32xf32>
    %cst_30 = arith.constant 1.000000e+00 : f32
    %45 = vector.broadcast %cst_30 : f32 to vector<16x32xf32>
    %46 = arith.addf %45, %44 : vector<16x32xf32>
    %47 = arith.divf %45, %46 : vector<16x32xf32>
    %48 = vector.extract_strided_slice %36 {offsets = [0, 32], sizes = [16, 32], strides = [1, 1]} : vector<16x96xf32> to vector<16x32xf32>
    %49 = vector.extract_strided_slice %39 {offsets = [0, 32], sizes = [16, 32], strides = [1, 1]} : vector<16x96xf32> to vector<16x32xf32>
    %50 = arith.addf %48, %49 : vector<16x32xf32>
    %51 = arith.negf %50 : vector<16x32xf32>
    %52 = math.exp %51 : vector<16x32xf32>
    %cst_31 = arith.constant 1.000000e+00 : f32
    %53 = vector.broadcast %cst_31 : f32 to vector<16x32xf32>
    %54 = arith.addf %53, %52 : vector<16x32xf32>
    %55 = arith.divf %53, %54 : vector<16x32xf32>
    %56 = vector.extract_strided_slice %36 {offsets = [0, 64], sizes = [16, 32], strides = [1, 1]} : vector<16x96xf32> to vector<16x32xf32>
    %57 = vector.extract_strided_slice %39 {offsets = [0, 64], sizes = [16, 32], strides = [1, 1]} : vector<16x96xf32> to vector<16x32xf32>
    %58 = arith.addf %57, %27 : vector<16x32xf32>
    %59 = arith.mulf %47, %58 : vector<16x32xf32>
    %60 = arith.addf %56, %59 : vector<16x32xf32>
    %61 = math.tanh %60 : vector<16x32xf32>
    %62 = arith.subf %33, %61 : vector<16x32xf32>
    %63 = arith.mulf %55, %62 : vector<16x32xf32>
    %64 = arith.addf %63, %61 : vector<16x32xf32>
    %65 = vector.broadcast %32 : i32 to vector<16x1xi32>
    %66 = arith.cmpi slt, %65, %23 : vector<16x1xi32>
    %67 = vector.shape_cast %66 : vector<16x1xi1> to vector<16x1xi1>
    %68 = vector.broadcast %67 : vector<16x1xi1> to vector<16x32xi1>
    %69 = arith.select %68, %64, %33 : vector<16x32xi1>, vector<16x32xf32>
    %c0_32 = arith.constant 0 : index
    %c0_33 = arith.constant 0 : index
    %70 = vector.load %arg10[%c0_32, %c0_33] : memref<16x32xf32, #tpu.memory_space<vmem>>, vector<16x32xf32>
    tpu.vector_store %arg10[%c0_32, %c0_33], %69 {strides = array<i32>} : memref<16x32xf32, #tpu.memory_space<vmem>>, vector<16x32xf32>,
    %cst_34 = arith.constant 0.000000e+00 : f32
    %71 = vector.shape_cast %66 : vector<16x1xi1> to vector<16x1xi1>
    %72 = vector.broadcast %71 : vector<16x1xi1> to vector<16x32xi1>
    %73 = vector.broadcast %cst_34 : f32 to vector<16x32xf32>
    %74 = arith.select %72, %69, %73 : vector<16x32xi1>, vector<16x32xf32>
    %c0_35 = arith.constant 0 : index
    %75 = arith.index_cast %32 : i32 to index
    %c0_36 = arith.constant 0 : index
    %c0_37 = arith.constant 0 : index
    %76 = vector.load %arg8[%c0_35, %75, %c0_36, %c0_37] : memref<1x8x16x32xf32, #tpu.memory_space<vmem>>, vector<1x1x16x32xf32>
    %77 = vector.shape_cast %76 : vector<1x1x16x32xf32> to vector<16x32xf32>
    %78 = vector.shape_cast %74 : vector<16x32xf32> to vector<1x1x16x32xf32>
    tpu.vector_store %arg8[%c0_35, %75, %c0_36, %c0_37], %78 {strides = array<i32>} : memref<1x8x16x32xf32, #tpu.memory_space<vmem>>, vector<1x1x16x32xf32>,
    %c1_i32_38 = arith.constant 1 : i32
    %c1_i32_39 = arith.constant 1 : i32
    %79 = arith.subi %c1_i32_39, %arg0 : i32
    %80 = arith.muli %c1_i32_38, %79 : i32
    %c7_i32_40 = arith.constant 7 : i32
    %81 = arith.subi %c7_i32_40, %c1_i32_38 : i32
    %82 = arith.muli %81, %arg0 : i32
    %83 = arith.addi %80, %82 : i32
    %c0_41 = arith.constant 0 : index
    %c0_42 = arith.constant 0 : index
    %84 = vector.load %arg10[%c0_41, %c0_42] : memref<16x32xf32, #tpu.memory_space<vmem>>, vector<16x32xf32>
    %85 = arith.index_cast %83 : i32 to index
    %c0_43 = arith.constant 0 : index
    %c0_44 = arith.constant 0 : index
    %86 = vector.load %arg11[%85, %c0_43, %c0_44] : memref<8x16x96xf32, #tpu.memory_space<vmem>>, vector<1x16x96xf32>
    %87 = vector.shape_cast %86 : vector<1x16x96xf32> to vector<16x96xf32>
    %c0_45 = arith.constant 0 : index
    %c0_46 = arith.constant 0 : index
    %c0_47 = arith.constant 0 : index
    %88 = vector.load %arg5[%c0_45, %c0_46, %c0_47] : memref<1x32x96xf32, #tpu.memory_space<vmem>>, vector<1x32x96xf32>
    %89 = vector.shape_cast %88 : vector<1x32x96xf32> to vector<32x96xf32>
    %cst_48 = arith.constant dense<0.000000e+00> : vector<16x96xf32>
    %90 = tpu.matmul %84, %89, %cst_48 {dimension_numbers = #tpu.dot_dimension_numbers<[1], [0], [0], [1], [0, 0, 1, 1], [], []>} : vector<16x32xf32>, vector<32x96xf32>, vector<16x96xf32> -> vector<16x96xf32>
    %91 = vector.extract_strided_slice %87 {offsets = [0, 0], sizes = [16, 32], strides = [1, 1]} : vector<16x96xf32> to vector<16x32xf32>
    %92 = vector.extract_strided_slice %90 {offsets = [0, 0], sizes = [16, 32], strides = [1, 1]} : vector<16x96xf32> to vector<16x32xf32>
    %93 = arith.addf %91, %92 : vector<16x32xf32>
    %94 = arith.negf %93 : vector<16x32xf32>
    %95 = math.exp %94 : vector<16x32xf32>
    %cst_49 = arith.constant 1.000000e+00 : f32
    %96 = vector.broadcast %cst_49 : f32 to vector<16x32xf32>
    %97 = arith.addf %96, %95 : vector<16x32xf32>
    %98 = arith.divf %96, %97 : vector<16x32xf32>
    %99 = vector.extract_strided_slice %87 {offsets = [0, 32], sizes = [16, 32], strides = [1, 1]} : vector<16x96xf32> to vector<16x32xf32>
    %100 = vector.extract_strided_slice %90 {offsets = [0, 32], sizes = [16, 32], strides = [1, 1]} : vector<16x96xf32> to vector<16x32xf32>
    %101 = arith.addf %99, %100 : vector<16x32xf32>
    %102 = arith.negf %101 : vector<16x32xf32>
    %103 = math.exp %102 : vector<16x32xf32>
    %cst_50 = arith.constant 1.000000e+00 : f32
    %104 = vector.broadcast %cst_50 : f32 to vector<16x32xf32>
    %105 = arith.addf %104, %103 : vector<16x32xf32>
    %106 = arith.divf %104, %105 : vector<16x32xf32>
    %107 = vector.extract_strided_slice %87 {offsets = [0, 64], sizes = [16, 32], strides = [1, 1]} : vector<16x96xf32> to vector<16x32xf32>
    %108 = vector.extract_strided_slice %90 {offsets = [0, 64], sizes = [16, 32], strides = [1, 1]} : vector<16x96xf32> to vector<16x32xf32>
    %109 = arith.addf %108, %27 : vector<16x32xf32>
    %110 = arith.mulf %98, %109 : vector<16x32xf32>
    %111 = arith.addf %107, %110 : vector<16x32xf32>
    %112 = math.tanh %111 : vector<16x32xf32>
    %113 = arith.subf %84, %112 : vector<16x32xf32>
    %114 = arith.mulf %106, %113 : vector<16x32xf32>
    %115 = arith.addf %114, %112 : vector<16x32xf32>
    %116 = vector.broadcast %83 : i32 to vector<16x1xi32>
    %117 = arith.cmpi slt, %116, %23 : vector<16x1xi32>
    %118 = vector.shape_cast %117 : vector<16x1xi1> to vector<16x1xi1>
    %119 = vector.broadcast %118 : vector<16x1xi1> to vector<16x32xi1>
    %120 = arith.select %119, %115, %84 : vector<16x32xi1>, vector<16x32xf32>
    %c0_51 = arith.constant 0 : index
    %c0_52 = arith.constant 0 : index
    %121 = vector.load %arg10[%c0_51, %c0_52] : memref<16x32xf32, #tpu.memory_space<vmem>>, vector<16x32xf32>
    tpu.vector_store %arg10[%c0_51, %c0_52], %120 {strides = array<i32>} : memref<16x32xf32, #tpu.memory_space<vmem>>, vector<16x32xf32>,
    %cst_53 = arith.constant 0.000000e+00 : f32
    %122 = vector.shape_cast %117 : vector<16x1xi1> to vector<16x1xi1>
    %123 = vector.broadcast %122 : vector<16x1xi1> to vector<16x32xi1>
    %124 = vector.broadcast %cst_53 : f32 to vector<16x32xf32>
    %125 = arith.select %123, %120, %124 : vector<16x32xi1>, vector<16x32xf32>
    %c0_54 = arith.constant 0 : index
    %126 = arith.index_cast %83 : i32 to index
    %c0_55 = arith.constant 0 : index
    %c0_56 = arith.constant 0 : index
    %127 = vector.load %arg8[%c0_54, %126, %c0_55, %c0_56] : memref<1x8x16x32xf32, #tpu.memory_space<vmem>>, vector<1x1x16x32xf32>
    %128 = vector.shape_cast %127 : vector<1x1x16x32xf32> to vector<16x32xf32>
    %129 = vector.shape_cast %125 : vector<16x32xf32> to vector<1x1x16x32xf32>
    tpu.vector_store %arg8[%c0_54, %126, %c0_55, %c0_56], %129 {strides = array<i32>} : memref<1x8x16x32xf32, #tpu.memory_space<vmem>>, vector<1x1x16x32xf32>,
    %c2_i32 = arith.constant 2 : i32
    %c1_i32_57 = arith.constant 1 : i32
    %130 = arith.subi %c1_i32_57, %arg0 : i32
    %131 = arith.muli %c2_i32, %130 : i32
    %c7_i32_58 = arith.constant 7 : i32
    %132 = arith.subi %c7_i32_58, %c2_i32 : i32
    %133 = arith.muli %132, %arg0 : i32
    %134 = arith.addi %131, %133 : i32
    %c0_59 = arith.constant 0 : index
    %c0_60 = arith.constant 0 : index
    %135 = vector.load %arg10[%c0_59, %c0_60] : memref<16x32xf32, #tpu.memory_space<vmem>>, vector<16x32xf32>
    %136 = arith.index_cast %134 : i32 to index
    %c0_61 = arith.constant 0 : index
    %c0_62 = arith.constant 0 : index
    %137 = vector.load %arg11[%136, %c0_61, %c0_62] : memref<8x16x96xf32, #tpu.memory_space<vmem>>, vector<1x16x96xf32>
    %138 = vector.shape_cast %137 : vector<1x16x96xf32> to vector<16x96xf32>
    %c0_63 = arith.constant 0 : index
    %c0_64 = arith.constant 0 : index
    %c0_65 = arith.constant 0 : index
    %139 = vector.load %arg5[%c0_63, %c0_64, %c0_65] : memref<1x32x96xf32, #tpu.memory_space<vmem>>, vector<1x32x96xf32>
    %140 = vector.shape_cast %139 : vector<1x32x96xf32> to vector<32x96xf32>
    %cst_66 = arith.constant dense<0.000000e+00> : vector<16x96xf32>
    %141 = tpu.matmul %135, %140, %cst_66 {dimension_numbers = #tpu.dot_dimension_numbers<[1], [0], [0], [1], [0, 0, 1, 1], [], []>} : vector<16x32xf32>, vector<32x96xf32>, vector<16x96xf32> -> vector<16x96xf32>
    %142 = vector.extract_strided_slice %138 {offsets = [0, 0], sizes = [16, 32], strides = [1, 1]} : vector<16x96xf32> to vector<16x32xf32>
    %143 = vector.extract_strided_slice %141 {offsets = [0, 0], sizes = [16, 32], strides = [1, 1]} : vector<16x96xf32> to vector<16x32xf32>
    %144 = arith.addf %142, %143 : vector<16x32xf32>
    %145 = arith.negf %144 : vector<16x32xf32>
    %146 = math.exp %145 : vector<16x32xf32>
    %cst_67 = arith.constant 1.000000e+00 : f32
    %147 = vector.broadcast %cst_67 : f32 to vector<16x32xf32>
    %148 = arith.addf %147, %146 : vector<16x32xf32>
    %149 = arith.divf %147, %148 : vector<16x32xf32>
    %150 = vector.extract_strided_slice %138 {offsets = [0, 32], sizes = [16, 32], strides = [1, 1]} : vector<16x96xf32> to vector<16x32xf32>
    %151 = vector.extract_strided_slice %141 {offsets = [0, 32], sizes = [16, 32], strides = [1, 1]} : vector<16x96xf32> to vector<16x32xf32>
    %152 = arith.addf %150, %151 : vector<16x32xf32>
    %153 = arith.negf %152 : vector<16x32xf32>
    %154 = math.exp %153 : vector<16x32xf32>
    %cst_68 = arith.constant 1.000000e+00 : f32
    %155 = vector.broadcast %cst_68 : f32 to vector<16x32xf32>
    %156 = arith.addf %155, %154 : vector<16x32xf32>
    %157 = arith.divf %155, %156 : vector<16x32xf32>
    %158 = vector.extract_strided_slice %138 {offsets = [0, 64], sizes = [16, 32], strides = [1, 1]} : vector<16x96xf32> to vector<16x32xf32>
    %159 = vector.extract_strided_slice %141 {offsets = [0, 64], sizes = [16, 32], strides = [1, 1]} : vector<16x96xf32> to vector<16x32xf32>
    %160 = arith.addf %159, %27 : vector<16x32xf32>
    %161 = arith.mulf %149, %160 : vector<16x32xf32>
    %162 = arith.addf %158, %161 : vector<16x32xf32>
    %163 = math.tanh %162 : vector<16x32xf32>
    %164 = arith.subf %135, %163 : vector<16x32xf32>
    %165 = arith.mulf %157, %164 : vector<16x32xf32>
    %166 = arith.addf %165, %163 : vector<16x32xf32>
    %167 = vector.broadcast %134 : i32 to vector<16x1xi32>
    %168 = arith.cmpi slt, %167, %23 : vector<16x1xi32>
    %169 = vector.shape_cast %168 : vector<16x1xi1> to vector<16x1xi1>
    %170 = vector.broadcast %169 : vector<16x1xi1> to vector<16x32xi1>
    %171 = arith.select %170, %166, %135 : vector<16x32xi1>, vector<16x32xf32>
    %c0_69 = arith.constant 0 : index
    %c0_70 = arith.constant 0 : index
    %172 = vector.load %arg10[%c0_69, %c0_70] : memref<16x32xf32, #tpu.memory_space<vmem>>, vector<16x32xf32>
    tpu.vector_store %arg10[%c0_69, %c0_70], %171 {strides = array<i32>} : memref<16x32xf32, #tpu.memory_space<vmem>>, vector<16x32xf32>,
    %cst_71 = arith.constant 0.000000e+00 : f32
    %173 = vector.shape_cast %168 : vector<16x1xi1> to vector<16x1xi1>
    %174 = vector.broadcast %173 : vector<16x1xi1> to vector<16x32xi1>
    %175 = vector.broadcast %cst_71 : f32 to vector<16x32xf32>
    %176 = arith.select %174, %171, %175 : vector<16x32xi1>, vector<16x32xf32>
    %c0_72 = arith.constant 0 : index
    %177 = arith.index_cast %134 : i32 to index
    %c0_73 = arith.constant 0 : index
    %c0_74 = arith.constant 0 : index
    %178 = vector.load %arg8[%c0_72, %177, %c0_73, %c0_74] : memref<1x8x16x32xf32, #tpu.memory_space<vmem>>, vector<1x1x16x32xf32>
    %179 = vector.shape_cast %178 : vector<1x1x16x32xf32> to vector<16x32xf32>
    %180 = vector.shape_cast %176 : vector<16x32xf32> to vector<1x1x16x32xf32>
    tpu.vector_store %arg8[%c0_72, %177, %c0_73, %c0_74], %180 {strides = array<i32>} : memref<1x8x16x32xf32, #tpu.memory_space<vmem>>, vector<1x1x16x32xf32>,
    %c3_i32 = arith.constant 3 : i32
    %c1_i32_75 = arith.constant 1 : i32
    %181 = arith.subi %c1_i32_75, %arg0 : i32
    %182 = arith.muli %c3_i32, %181 : i32
    %c7_i32_76 = arith.constant 7 : i32
    %183 = arith.subi %c7_i32_76, %c3_i32 : i32
    %184 = arith.muli %183, %arg0 : i32
    %185 = arith.addi %182, %184 : i32
    %c0_77 = arith.constant 0 : index
    %c0_78 = arith.constant 0 : index
    %186 = vector.load %arg10[%c0_77, %c0_78] : memref<16x32xf32, #tpu.memory_space<vmem>>, vector<16x32xf32>
    %187 = arith.index_cast %185 : i32 to index
    %c0_79 = arith.constant 0 : index
    %c0_80 = arith.constant 0 : index
    %188 = vector.load %arg11[%187, %c0_79, %c0_80] : memref<8x16x96xf32, #tpu.memory_space<vmem>>, vector<1x16x96xf32>
    %189 = vector.shape_cast %188 : vector<1x16x96xf32> to vector<16x96xf32>
    %c0_81 = arith.constant 0 : index
    %c0_82 = arith.constant 0 : index
    %c0_83 = arith.constant 0 : index
    %190 = vector.load %arg5[%c0_81, %c0_82, %c0_83] : memref<1x32x96xf32, #tpu.memory_space<vmem>>, vector<1x32x96xf32>
    %191 = vector.shape_cast %190 : vector<1x32x96xf32> to vector<32x96xf32>
    %cst_84 = arith.constant dense<0.000000e+00> : vector<16x96xf32>
    %192 = tpu.matmul %186, %191, %cst_84 {dimension_numbers = #tpu.dot_dimension_numbers<[1], [0], [0], [1], [0, 0, 1, 1], [], []>} : vector<16x32xf32>, vector<32x96xf32>, vector<16x96xf32> -> vector<16x96xf32>
    %193 = vector.extract_strided_slice %189 {offsets = [0, 0], sizes = [16, 32], strides = [1, 1]} : vector<16x96xf32> to vector<16x32xf32>
    %194 = vector.extract_strided_slice %192 {offsets = [0, 0], sizes = [16, 32], strides = [1, 1]} : vector<16x96xf32> to vector<16x32xf32>
    %195 = arith.addf %193, %194 : vector<16x32xf32>
    %196 = arith.negf %195 : vector<16x32xf32>
    %197 = math.exp %196 : vector<16x32xf32>
    %cst_85 = arith.constant 1.000000e+00 : f32
    %198 = vector.broadcast %cst_85 : f32 to vector<16x32xf32>
    %199 = arith.addf %198, %197 : vector<16x32xf32>
    %200 = arith.divf %198, %199 : vector<16x32xf32>
    %201 = vector.extract_strided_slice %189 {offsets = [0, 32], sizes = [16, 32], strides = [1, 1]} : vector<16x96xf32> to vector<16x32xf32>
    %202 = vector.extract_strided_slice %192 {offsets = [0, 32], sizes = [16, 32], strides = [1, 1]} : vector<16x96xf32> to vector<16x32xf32>
    %203 = arith.addf %201, %202 : vector<16x32xf32>
    %204 = arith.negf %203 : vector<16x32xf32>
    %205 = math.exp %204 : vector<16x32xf32>
    %cst_86 = arith.constant 1.000000e+00 : f32
    %206 = vector.broadcast %cst_86 : f32 to vector<16x32xf32>
    %207 = arith.addf %206, %205 : vector<16x32xf32>
    %208 = arith.divf %206, %207 : vector<16x32xf32>
    %209 = vector.extract_strided_slice %189 {offsets = [0, 64], sizes = [16, 32], strides = [1, 1]} : vector<16x96xf32> to vector<16x32xf32>
    %210 = vector.extract_strided_slice %192 {offsets = [0, 64], sizes = [16, 32], strides = [1, 1]} : vector<16x96xf32> to vector<16x32xf32>
    %211 = arith.addf %210, %27 : vector<16x32xf32>
    %212 = arith.mulf %200, %211 : vector<16x32xf32>
    %213 = arith.addf %209, %212 : vector<16x32xf32>
    %214 = math.tanh %213 : vector<16x32xf32>
    %215 = arith.subf %186, %214 : vector<16x32xf32>
    %216 = arith.mulf %208, %215 : vector<16x32xf32>
    %217 = arith.addf %216, %214 : vector<16x32xf32>
    %218 = vector.broadcast %185 : i32 to vector<16x1xi32>
    %219 = arith.cmpi slt, %218, %23 : vector<16x1xi32>
    %220 = vector.shape_cast %219 : vector<16x1xi1> to vector<16x1xi1>
    %221 = vector.broadcast %220 : vector<16x1xi1> to vector<16x32xi1>
    %222 = arith.select %221, %217, %186 : vector<16x32xi1>, vector<16x32xf32>
    %c0_87 = arith.constant 0 : index
    %c0_88 = arith.constant 0 : index
    %223 = vector.load %arg10[%c0_87, %c0_88] : memref<16x32xf32, #tpu.memory_space<vmem>>, vector<16x32xf32>
    tpu.vector_store %arg10[%c0_87, %c0_88], %222 {strides = array<i32>} : memref<16x32xf32, #tpu.memory_space<vmem>>, vector<16x32xf32>,
    %cst_89 = arith.constant 0.000000e+00 : f32
    %224 = vector.shape_cast %219 : vector<16x1xi1> to vector<16x1xi1>
    %225 = vector.broadcast %224 : vector<16x1xi1> to vector<16x32xi1>
    %226 = vector.broadcast %cst_89 : f32 to vector<16x32xf32>
    %227 = arith.select %225, %222, %226 : vector<16x32xi1>, vector<16x32xf32>
    %c0_90 = arith.constant 0 : index
    %228 = arith.index_cast %185 : i32 to index
    %c0_91 = arith.constant 0 : index
    %c0_92 = arith.constant 0 : index
    %229 = vector.load %arg8[%c0_90, %228, %c0_91, %c0_92] : memref<1x8x16x32xf32, #tpu.memory_space<vmem>>, vector<1x1x16x32xf32>
    %230 = vector.shape_cast %229 : vector<1x1x16x32xf32> to vector<16x32xf32>
    %231 = vector.shape_cast %227 : vector<16x32xf32> to vector<1x1x16x32xf32>
    tpu.vector_store %arg8[%c0_90, %228, %c0_91, %c0_92], %231 {strides = array<i32>} : memref<1x8x16x32xf32, #tpu.memory_space<vmem>>, vector<1x1x16x32xf32>,
    %c4_i32 = arith.constant 4 : i32
    %c1_i32_93 = arith.constant 1 : i32
    %232 = arith.subi %c1_i32_93, %arg0 : i32
    %233 = arith.muli %c4_i32, %232 : i32
    %c7_i32_94 = arith.constant 7 : i32
    %234 = arith.subi %c7_i32_94, %c4_i32 : i32
    %235 = arith.muli %234, %arg0 : i32
    %236 = arith.addi %233, %235 : i32
    %c0_95 = arith.constant 0 : index
    %c0_96 = arith.constant 0 : index
    %237 = vector.load %arg10[%c0_95, %c0_96] : memref<16x32xf32, #tpu.memory_space<vmem>>, vector<16x32xf32>
    %238 = arith.index_cast %236 : i32 to index
    %c0_97 = arith.constant 0 : index
    %c0_98 = arith.constant 0 : index
    %239 = vector.load %arg11[%238, %c0_97, %c0_98] : memref<8x16x96xf32, #tpu.memory_space<vmem>>, vector<1x16x96xf32>
    %240 = vector.shape_cast %239 : vector<1x16x96xf32> to vector<16x96xf32>
    %c0_99 = arith.constant 0 : index
    %c0_100 = arith.constant 0 : index
    %c0_101 = arith.constant 0 : index
    %241 = vector.load %arg5[%c0_99, %c0_100, %c0_101] : memref<1x32x96xf32, #tpu.memory_space<vmem>>, vector<1x32x96xf32>
    %242 = vector.shape_cast %241 : vector<1x32x96xf32> to vector<32x96xf32>
    %cst_102 = arith.constant dense<0.000000e+00> : vector<16x96xf32>
    %243 = tpu.matmul %237, %242, %cst_102 {dimension_numbers = #tpu.dot_dimension_numbers<[1], [0], [0], [1], [0, 0, 1, 1], [], []>} : vector<16x32xf32>, vector<32x96xf32>, vector<16x96xf32> -> vector<16x96xf32>
    %244 = vector.extract_strided_slice %240 {offsets = [0, 0], sizes = [16, 32], strides = [1, 1]} : vector<16x96xf32> to vector<16x32xf32>
    %245 = vector.extract_strided_slice %243 {offsets = [0, 0], sizes = [16, 32], strides = [1, 1]} : vector<16x96xf32> to vector<16x32xf32>
    %246 = arith.addf %244, %245 : vector<16x32xf32>
    %247 = arith.negf %246 : vector<16x32xf32>
    %248 = math.exp %247 : vector<16x32xf32>
    %cst_103 = arith.constant 1.000000e+00 : f32
    %249 = vector.broadcast %cst_103 : f32 to vector<16x32xf32>
    %250 = arith.addf %249, %248 : vector<16x32xf32>
    %251 = arith.divf %249, %250 : vector<16x32xf32>
    %252 = vector.extract_strided_slice %240 {offsets = [0, 32], sizes = [16, 32], strides = [1, 1]} : vector<16x96xf32> to vector<16x32xf32>
    %253 = vector.extract_strided_slice %243 {offsets = [0, 32], sizes = [16, 32], strides = [1, 1]} : vector<16x96xf32> to vector<16x32xf32>
    %254 = arith.addf %252, %253 : vector<16x32xf32>
    %255 = arith.negf %254 : vector<16x32xf32>
    %256 = math.exp %255 : vector<16x32xf32>
    %cst_104 = arith.constant 1.000000e+00 : f32
    %257 = vector.broadcast %cst_104 : f32 to vector<16x32xf32>
    %258 = arith.addf %257, %256 : vector<16x32xf32>
    %259 = arith.divf %257, %258 : vector<16x32xf32>
    %260 = vector.extract_strided_slice %240 {offsets = [0, 64], sizes = [16, 32], strides = [1, 1]} : vector<16x96xf32> to vector<16x32xf32>
    %261 = vector.extract_strided_slice %243 {offsets = [0, 64], sizes = [16, 32], strides = [1, 1]} : vector<16x96xf32> to vector<16x32xf32>
    %262 = arith.addf %261, %27 : vector<16x32xf32>
    %263 = arith.mulf %251, %262 : vector<16x32xf32>
    %264 = arith.addf %260, %263 : vector<16x32xf32>
    %265 = math.tanh %264 : vector<16x32xf32>
    %266 = arith.subf %237, %265 : vector<16x32xf32>
    %267 = arith.mulf %259, %266 : vector<16x32xf32>
    %268 = arith.addf %267, %265 : vector<16x32xf32>
    %269 = vector.broadcast %236 : i32 to vector<16x1xi32>
    %270 = arith.cmpi slt, %269, %23 : vector<16x1xi32>
    %271 = vector.shape_cast %270 : vector<16x1xi1> to vector<16x1xi1>
    %272 = vector.broadcast %271 : vector<16x1xi1> to vector<16x32xi1>
    %273 = arith.select %272, %268, %237 : vector<16x32xi1>, vector<16x32xf32>
    %c0_105 = arith.constant 0 : index
    %c0_106 = arith.constant 0 : index
    %274 = vector.load %arg10[%c0_105, %c0_106] : memref<16x32xf32, #tpu.memory_space<vmem>>, vector<16x32xf32>
    tpu.vector_store %arg10[%c0_105, %c0_106], %273 {strides = array<i32>} : memref<16x32xf32, #tpu.memory_space<vmem>>, vector<16x32xf32>,
    %cst_107 = arith.constant 0.000000e+00 : f32
    %275 = vector.shape_cast %270 : vector<16x1xi1> to vector<16x1xi1>
    %276 = vector.broadcast %275 : vector<16x1xi1> to vector<16x32xi1>
    %277 = vector.broadcast %cst_107 : f32 to vector<16x32xf32>
    %278 = arith.select %276, %273, %277 : vector<16x32xi1>, vector<16x32xf32>
    %c0_108 = arith.constant 0 : index
    %279 = arith.index_cast %236 : i32 to index
    %c0_109 = arith.constant 0 : index
    %c0_110 = arith.constant 0 : index
    %280 = vector.load %arg8[%c0_108, %279, %c0_109, %c0_110] : memref<1x8x16x32xf32, #tpu.memory_space<vmem>>, vector<1x1x16x32xf32>
    %281 = vector.shape_cast %280 : vector<1x1x16x32xf32> to vector<16x32xf32>
    %282 = vector.shape_cast %278 : vector<16x32xf32> to vector<1x1x16x32xf32>
    tpu.vector_store %arg8[%c0_108, %279, %c0_109, %c0_110], %282 {strides = array<i32>} : memref<1x8x16x32xf32, #tpu.memory_space<vmem>>, vector<1x1x16x32xf32>,
    %c5_i32 = arith.constant 5 : i32
    %c1_i32_111 = arith.constant 1 : i32
    %283 = arith.subi %c1_i32_111, %arg0 : i32
    %284 = arith.muli %c5_i32, %283 : i32
    %c7_i32_112 = arith.constant 7 : i32
    %285 = arith.subi %c7_i32_112, %c5_i32 : i32
    %286 = arith.muli %285, %arg0 : i32
    %287 = arith.addi %284, %286 : i32
    %c0_113 = arith.constant 0 : index
    %c0_114 = arith.constant 0 : index
    %288 = vector.load %arg10[%c0_113, %c0_114] : memref<16x32xf32, #tpu.memory_space<vmem>>, vector<16x32xf32>
    %289 = arith.index_cast %287 : i32 to index
    %c0_115 = arith.constant 0 : index
    %c0_116 = arith.constant 0 : index
    %290 = vector.load %arg11[%289, %c0_115, %c0_116] : memref<8x16x96xf32, #tpu.memory_space<vmem>>, vector<1x16x96xf32>
    %291 = vector.shape_cast %290 : vector<1x16x96xf32> to vector<16x96xf32>
    %c0_117 = arith.constant 0 : index
    %c0_118 = arith.constant 0 : index
    %c0_119 = arith.constant 0 : index
    %292 = vector.load %arg5[%c0_117, %c0_118, %c0_119] : memref<1x32x96xf32, #tpu.memory_space<vmem>>, vector<1x32x96xf32>
    %293 = vector.shape_cast %292 : vector<1x32x96xf32> to vector<32x96xf32>
    %cst_120 = arith.constant dense<0.000000e+00> : vector<16x96xf32>
    %294 = tpu.matmul %288, %293, %cst_120 {dimension_numbers = #tpu.dot_dimension_numbers<[1], [0], [0], [1], [0, 0, 1, 1], [], []>} : vector<16x32xf32>, vector<32x96xf32>, vector<16x96xf32> -> vector<16x96xf32>
    %295 = vector.extract_strided_slice %291 {offsets = [0, 0], sizes = [16, 32], strides = [1, 1]} : vector<16x96xf32> to vector<16x32xf32>
    %296 = vector.extract_strided_slice %294 {offsets = [0, 0], sizes = [16, 32], strides = [1, 1]} : vector<16x96xf32> to vector<16x32xf32>
    %297 = arith.addf %295, %296 : vector<16x32xf32>
    %298 = arith.negf %297 : vector<16x32xf32>
    %299 = math.exp %298 : vector<16x32xf32>
    %cst_121 = arith.constant 1.000000e+00 : f32
    %300 = vector.broadcast %cst_121 : f32 to vector<16x32xf32>
    %301 = arith.addf %300, %299 : vector<16x32xf32>
    %302 = arith.divf %300, %301 : vector<16x32xf32>
    %303 = vector.extract_strided_slice %291 {offsets = [0, 32], sizes = [16, 32], strides = [1, 1]} : vector<16x96xf32> to vector<16x32xf32>
    %304 = vector.extract_strided_slice %294 {offsets = [0, 32], sizes = [16, 32], strides = [1, 1]} : vector<16x96xf32> to vector<16x32xf32>
    %305 = arith.addf %303, %304 : vector<16x32xf32>
    %306 = arith.negf %305 : vector<16x32xf32>
    %307 = math.exp %306 : vector<16x32xf32>
    %cst_122 = arith.constant 1.000000e+00 : f32
    %308 = vector.broadcast %cst_122 : f32 to vector<16x32xf32>
    %309 = arith.addf %308, %307 : vector<16x32xf32>
    %310 = arith.divf %308, %309 : vector<16x32xf32>
    %311 = vector.extract_strided_slice %291 {offsets = [0, 64], sizes = [16, 32], strides = [1, 1]} : vector<16x96xf32> to vector<16x32xf32>
    %312 = vector.extract_strided_slice %294 {offsets = [0, 64], sizes = [16, 32], strides = [1, 1]} : vector<16x96xf32> to vector<16x32xf32>
    %313 = arith.addf %312, %27 : vector<16x32xf32>
    %314 = arith.mulf %302, %313 : vector<16x32xf32>
    %315 = arith.addf %311, %314 : vector<16x32xf32>
    %316 = math.tanh %315 : vector<16x32xf32>
    %317 = arith.subf %288, %316 : vector<16x32xf32>
    %318 = arith.mulf %310, %317 : vector<16x32xf32>
    %319 = arith.addf %318, %316 : vector<16x32xf32>
    %320 = vector.broadcast %287 : i32 to vector<16x1xi32>
    %321 = arith.cmpi slt, %320, %23 : vector<16x1xi32>
    %322 = vector.shape_cast %321 : vector<16x1xi1> to vector<16x1xi1>
    %323 = vector.broadcast %322 : vector<16x1xi1> to vector<16x32xi1>
    %324 = arith.select %323, %319, %288 : vector<16x32xi1>, vector<16x32xf32>
    %c0_123 = arith.constant 0 : index
    %c0_124 = arith.constant 0 : index
    %325 = vector.load %arg10[%c0_123, %c0_124] : memref<16x32xf32, #tpu.memory_space<vmem>>, vector<16x32xf32>
    tpu.vector_store %arg10[%c0_123, %c0_124], %324 {strides = array<i32>} : memref<16x32xf32, #tpu.memory_space<vmem>>, vector<16x32xf32>,
    %cst_125 = arith.constant 0.000000e+00 : f32
    %326 = vector.shape_cast %321 : vector<16x1xi1> to vector<16x1xi1>
    %327 = vector.broadcast %326 : vector<16x1xi1> to vector<16x32xi1>
    %328 = vector.broadcast %cst_125 : f32 to vector<16x32xf32>
    %329 = arith.select %327, %324, %328 : vector<16x32xi1>, vector<16x32xf32>
    %c0_126 = arith.constant 0 : index
    %330 = arith.index_cast %287 : i32 to index
    %c0_127 = arith.constant 0 : index
    %c0_128 = arith.constant 0 : index
    %331 = vector.load %arg8[%c0_126, %330, %c0_127, %c0_128] : memref<1x8x16x32xf32, #tpu.memory_space<vmem>>, vector<1x1x16x32xf32>
    %332 = vector.shape_cast %331 : vector<1x1x16x32xf32> to vector<16x32xf32>
    %333 = vector.shape_cast %329 : vector<16x32xf32> to vector<1x1x16x32xf32>
    tpu.vector_store %arg8[%c0_126, %330, %c0_127, %c0_128], %333 {strides = array<i32>} : memref<1x8x16x32xf32, #tpu.memory_space<vmem>>, vector<1x1x16x32xf32>,
    %c6_i32 = arith.constant 6 : i32
    %c1_i32_129 = arith.constant 1 : i32
    %334 = arith.subi %c1_i32_129, %arg0 : i32
    %335 = arith.muli %c6_i32, %334 : i32
    %c7_i32_130 = arith.constant 7 : i32
    %336 = arith.subi %c7_i32_130, %c6_i32 : i32
    %337 = arith.muli %336, %arg0 : i32
    %338 = arith.addi %335, %337 : i32
    %c0_131 = arith.constant 0 : index
    %c0_132 = arith.constant 0 : index
    %339 = vector.load %arg10[%c0_131, %c0_132] : memref<16x32xf32, #tpu.memory_space<vmem>>, vector<16x32xf32>
    %340 = arith.index_cast %338 : i32 to index
    %c0_133 = arith.constant 0 : index
    %c0_134 = arith.constant 0 : index
    %341 = vector.load %arg11[%340, %c0_133, %c0_134] : memref<8x16x96xf32, #tpu.memory_space<vmem>>, vector<1x16x96xf32>
    %342 = vector.shape_cast %341 : vector<1x16x96xf32> to vector<16x96xf32>
    %c0_135 = arith.constant 0 : index
    %c0_136 = arith.constant 0 : index
    %c0_137 = arith.constant 0 : index
    %343 = vector.load %arg5[%c0_135, %c0_136, %c0_137] : memref<1x32x96xf32, #tpu.memory_space<vmem>>, vector<1x32x96xf32>
    %344 = vector.shape_cast %343 : vector<1x32x96xf32> to vector<32x96xf32>
    %cst_138 = arith.constant dense<0.000000e+00> : vector<16x96xf32>
    %345 = tpu.matmul %339, %344, %cst_138 {dimension_numbers = #tpu.dot_dimension_numbers<[1], [0], [0], [1], [0, 0, 1, 1], [], []>} : vector<16x32xf32>, vector<32x96xf32>, vector<16x96xf32> -> vector<16x96xf32>
    %346 = vector.extract_strided_slice %342 {offsets = [0, 0], sizes = [16, 32], strides = [1, 1]} : vector<16x96xf32> to vector<16x32xf32>
    %347 = vector.extract_strided_slice %345 {offsets = [0, 0], sizes = [16, 32], strides = [1, 1]} : vector<16x96xf32> to vector<16x32xf32>
    %348 = arith.addf %346, %347 : vector<16x32xf32>
    %349 = arith.negf %348 : vector<16x32xf32>
    %350 = math.exp %349 : vector<16x32xf32>
    %cst_139 = arith.constant 1.000000e+00 : f32
    %351 = vector.broadcast %cst_139 : f32 to vector<16x32xf32>
    %352 = arith.addf %351, %350 : vector<16x32xf32>
    %353 = arith.divf %351, %352 : vector<16x32xf32>
    %354 = vector.extract_strided_slice %342 {offsets = [0, 32], sizes = [16, 32], strides = [1, 1]} : vector<16x96xf32> to vector<16x32xf32>
    %355 = vector.extract_strided_slice %345 {offsets = [0, 32], sizes = [16, 32], strides = [1, 1]} : vector<16x96xf32> to vector<16x32xf32>
    %356 = arith.addf %354, %355 : vector<16x32xf32>
    %357 = arith.negf %356 : vector<16x32xf32>
    %358 = math.exp %357 : vector<16x32xf32>
    %cst_140 = arith.constant 1.000000e+00 : f32
    %359 = vector.broadcast %cst_140 : f32 to vector<16x32xf32>
    %360 = arith.addf %359, %358 : vector<16x32xf32>
    %361 = arith.divf %359, %360 : vector<16x32xf32>
    %362 = vector.extract_strided_slice %342 {offsets = [0, 64], sizes = [16, 32], strides = [1, 1]} : vector<16x96xf32> to vector<16x32xf32>
    %363 = vector.extract_strided_slice %345 {offsets = [0, 64], sizes = [16, 32], strides = [1, 1]} : vector<16x96xf32> to vector<16x32xf32>
    %364 = arith.addf %363, %27 : vector<16x32xf32>
    %365 = arith.mulf %353, %364 : vector<16x32xf32>
    %366 = arith.addf %362, %365 : vector<16x32xf32>
    %367 = math.tanh %366 : vector<16x32xf32>
    %368 = arith.subf %339, %367 : vector<16x32xf32>
    %369 = arith.mulf %361, %368 : vector<16x32xf32>
    %370 = arith.addf %369, %367 : vector<16x32xf32>
    %371 = vector.broadcast %338 : i32 to vector<16x1xi32>
    %372 = arith.cmpi slt, %371, %23 : vector<16x1xi32>
    %373 = vector.shape_cast %372 : vector<16x1xi1> to vector<16x1xi1>
    %374 = vector.broadcast %373 : vector<16x1xi1> to vector<16x32xi1>
    %375 = arith.select %374, %370, %339 : vector<16x32xi1>, vector<16x32xf32>
    %c0_141 = arith.constant 0 : index
    %c0_142 = arith.constant 0 : index
    %376 = vector.load %arg10[%c0_141, %c0_142] : memref<16x32xf32, #tpu.memory_space<vmem>>, vector<16x32xf32>
    tpu.vector_store %arg10[%c0_141, %c0_142], %375 {strides = array<i32>} : memref<16x32xf32, #tpu.memory_space<vmem>>, vector<16x32xf32>,
    %cst_143 = arith.constant 0.000000e+00 : f32
    %377 = vector.shape_cast %372 : vector<16x1xi1> to vector<16x1xi1>
    %378 = vector.broadcast %377 : vector<16x1xi1> to vector<16x32xi1>
    %379 = vector.broadcast %cst_143 : f32 to vector<16x32xf32>
    %380 = arith.select %378, %375, %379 : vector<16x32xi1>, vector<16x32xf32>
    %c0_144 = arith.constant 0 : index
    %381 = arith.index_cast %338 : i32 to index
    %c0_145 = arith.constant 0 : index
    %c0_146 = arith.constant 0 : index
    %382 = vector.load %arg8[%c0_144, %381, %c0_145, %c0_146] : memref<1x8x16x32xf32, #tpu.memory_space<vmem>>, vector<1x1x16x32xf32>
    %383 = vector.shape_cast %382 : vector<1x1x16x32xf32> to vector<16x32xf32>
    %384 = vector.shape_cast %380 : vector<16x32xf32> to vector<1x1x16x32xf32>
    tpu.vector_store %arg8[%c0_144, %381, %c0_145, %c0_146], %384 {strides = array<i32>} : memref<1x8x16x32xf32, #tpu.memory_space<vmem>>, vector<1x1x16x32xf32>,
    %c7_i32_147 = arith.constant 7 : i32
    %c1_i32_148 = arith.constant 1 : i32
    %385 = arith.subi %c1_i32_148, %arg0 : i32
    %386 = arith.muli %c7_i32_147, %385 : i32
    %c7_i32_149 = arith.constant 7 : i32
    %387 = arith.subi %c7_i32_149, %c7_i32_147 : i32
    %388 = arith.muli %387, %arg0 : i32
    %389 = arith.addi %386, %388 : i32
    %c0_150 = arith.constant 0 : index
    %c0_151 = arith.constant 0 : index
    %390 = vector.load %arg10[%c0_150, %c0_151] : memref<16x32xf32, #tpu.memory_space<vmem>>, vector<16x32xf32>
    %391 = arith.index_cast %389 : i32 to index
    %c0_152 = arith.constant 0 : index
    %c0_153 = arith.constant 0 : index
    %392 = vector.load %arg11[%391, %c0_152, %c0_153] : memref<8x16x96xf32, #tpu.memory_space<vmem>>, vector<1x16x96xf32>
    %393 = vector.shape_cast %392 : vector<1x16x96xf32> to vector<16x96xf32>
    %c0_154 = arith.constant 0 : index
    %c0_155 = arith.constant 0 : index
    %c0_156 = arith.constant 0 : index
    %394 = vector.load %arg5[%c0_154, %c0_155, %c0_156] : memref<1x32x96xf32, #tpu.memory_space<vmem>>, vector<1x32x96xf32>
    %395 = vector.shape_cast %394 : vector<1x32x96xf32> to vector<32x96xf32>
    %cst_157 = arith.constant dense<0.000000e+00> : vector<16x96xf32>
    %396 = tpu.matmul %390, %395, %cst_157 {dimension_numbers = #tpu.dot_dimension_numbers<[1], [0], [0], [1], [0, 0, 1, 1], [], []>} : vector<16x32xf32>, vector<32x96xf32>, vector<16x96xf32> -> vector<16x96xf32>
    %397 = vector.extract_strided_slice %393 {offsets = [0, 0], sizes = [16, 32], strides = [1, 1]} : vector<16x96xf32> to vector<16x32xf32>
    %398 = vector.extract_strided_slice %396 {offsets = [0, 0], sizes = [16, 32], strides = [1, 1]} : vector<16x96xf32> to vector<16x32xf32>
    %399 = arith.addf %397, %398 : vector<16x32xf32>
    %400 = arith.negf %399 : vector<16x32xf32>
    %401 = math.exp %400 : vector<16x32xf32>
    %cst_158 = arith.constant 1.000000e+00 : f32
    %402 = vector.broadcast %cst_158 : f32 to vector<16x32xf32>
    %403 = arith.addf %402, %401 : vector<16x32xf32>
    %404 = arith.divf %402, %403 : vector<16x32xf32>
    %405 = vector.extract_strided_slice %393 {offsets = [0, 32], sizes = [16, 32], strides = [1, 1]} : vector<16x96xf32> to vector<16x32xf32>
    %406 = vector.extract_strided_slice %396 {offsets = [0, 32], sizes = [16, 32], strides = [1, 1]} : vector<16x96xf32> to vector<16x32xf32>
    %407 = arith.addf %405, %406 : vector<16x32xf32>
    %408 = arith.negf %407 : vector<16x32xf32>
    %409 = math.exp %408 : vector<16x32xf32>
    %cst_159 = arith.constant 1.000000e+00 : f32
    %410 = vector.broadcast %cst_159 : f32 to vector<16x32xf32>
    %411 = arith.addf %410, %409 : vector<16x32xf32>
    %412 = arith.divf %410, %411 : vector<16x32xf32>
    %413 = vector.extract_strided_slice %393 {offsets = [0, 64], sizes = [16, 32], strides = [1, 1]} : vector<16x96xf32> to vector<16x32xf32>
    %414 = vector.extract_strided_slice %396 {offsets = [0, 64], sizes = [16, 32], strides = [1, 1]} : vector<16x96xf32> to vector<16x32xf32>
    %415 = arith.addf %414, %27 : vector<16x32xf32>
    %416 = arith.mulf %404, %415 : vector<16x32xf32>
    %417 = arith.addf %413, %416 : vector<16x32xf32>
    %418 = math.tanh %417 : vector<16x32xf32>
    %419 = arith.subf %390, %418 : vector<16x32xf32>
    %420 = arith.mulf %412, %419 : vector<16x32xf32>
    %421 = arith.addf %420, %418 : vector<16x32xf32>
    %422 = vector.broadcast %389 : i32 to vector<16x1xi32>
    %423 = arith.cmpi slt, %422, %23 : vector<16x1xi32>
    %424 = vector.shape_cast %423 : vector<16x1xi1> to vector<16x1xi1>
    %425 = vector.broadcast %424 : vector<16x1xi1> to vector<16x32xi1>
    %426 = arith.select %425, %421, %390 : vector<16x32xi1>, vector<16x32xf32>
    %c0_160 = arith.constant 0 : index
    %c0_161 = arith.constant 0 : index
    %427 = vector.load %arg10[%c0_160, %c0_161] : memref<16x32xf32, #tpu.memory_space<vmem>>, vector<16x32xf32>
    tpu.vector_store %arg10[%c0_160, %c0_161], %426 {strides = array<i32>} : memref<16x32xf32, #tpu.memory_space<vmem>>, vector<16x32xf32>,
    %cst_162 = arith.constant 0.000000e+00 : f32
    %428 = vector.shape_cast %423 : vector<16x1xi1> to vector<16x1xi1>
    %429 = vector.broadcast %428 : vector<16x1xi1> to vector<16x32xi1>
    %430 = vector.broadcast %cst_162 : f32 to vector<16x32xf32>
    %431 = arith.select %429, %426, %430 : vector<16x32xi1>, vector<16x32xf32>
    %c0_163 = arith.constant 0 : index
    %432 = arith.index_cast %389 : i32 to index
    %c0_164 = arith.constant 0 : index
    %c0_165 = arith.constant 0 : index
    %433 = vector.load %arg8[%c0_163, %432, %c0_164, %c0_165] : memref<1x8x16x32xf32, #tpu.memory_space<vmem>>, vector<1x1x16x32xf32>
    %434 = vector.shape_cast %433 : vector<1x1x16x32xf32> to vector<16x32xf32>
    %435 = vector.shape_cast %431 : vector<16x32xf32> to vector<1x1x16x32xf32>
    tpu.vector_store %arg8[%c0_163, %432, %c0_164, %c0_165], %435 {strides = array<i32>} : memref<1x8x16x32xf32, #tpu.memory_space<vmem>>, vector<1x1x16x32xf32>,
    %c8_i32_166 = arith.constant 8 : i32
    %c1_i32_167 = arith.constant 1 : i32
    %436 = arith.cmpi eq, %arg1, %c1_i32_167 : i32
    %437 = arith.extui %436 : i1 to i32
    %c0_i32_168 = arith.constant 0 : i32
    %438 = arith.cmpi ne, %437, %c0_i32_168 : i32
    scf.if %438 {
      %c0_169 = arith.constant 0 : index
      %c0_170 = arith.constant 0 : index
      %439 = vector.load %arg10[%c0_169, %c0_170] : memref<16x32xf32, #tpu.memory_space<vmem>>, vector<16x32xf32>
      %c0_171 = arith.constant 0 : index
      %c0_172 = arith.constant 0 : index
      %c0_173 = arith.constant 0 : index
      %440 = vector.load %arg9[%c0_171, %c0_172, %c0_173] : memref<1x16x32xf32, #tpu.memory_space<vmem>>, vector<1x16x32xf32>
      %441 = vector.shape_cast %440 : vector<1x16x32xf32> to vector<16x32xf32>
      %442 = vector.shape_cast %439 : vector<16x32xf32> to vector<1x16x32xf32>
      tpu.vector_store %arg9[%c0_171, %c0_172, %c0_173], %442 {strides = array<i32>} : memref<1x16x32xf32, #tpu.memory_space<vmem>>, vector<1x16x32xf32>,
    } else {
    }
    return
  }
  func.func @transform_0(%arg0: i32, %arg1: i32) -> (i32, i32, i32, i32) {
    %c1_i32 = arith.constant 1 : i32
    %0 = arith.subi %c1_i32, %arg0 : i32
    %1 = arith.muli %arg1, %0 : i32
    %c1_i32_0 = arith.constant 1 : i32
    %2 = arith.subi %c1_i32_0, %arg1 : i32
    %3 = arith.muli %2, %arg0 : i32
    %4 = arith.addi %1, %3 : i32
    %c0_i32 = arith.constant 0 : i32
    %c0_i32_1 = arith.constant 0 : i32
    %c0_i32_2 = arith.constant 0 : i32
    %c0_i32_3 = arith.constant 0 : i32
    return %c0_i32, %4, %c0_i32_1, %c0_i32_2 : i32, i32, i32, i32
  }
  func.func @transform_1(%arg0: i32, %arg1: i32) -> (i32, i32, i32, i32) {
    %c0_i32 = arith.constant 0 : i32
    %c0_i32_0 = arith.constant 0 : i32
    %c0_i32_1 = arith.constant 0 : i32
    %c0_i32_2 = arith.constant 0 : i32
    return %arg0, %c0_i32, %c0_i32_0, %c0_i32_1 : i32, i32, i32, i32
  }
  func.func @transform_2(%arg0: i32, %arg1: i32) -> (i32, i32, i32) {
    %c0_i32 = arith.constant 0 : i32
    %c0_i32_0 = arith.constant 0 : i32
    %c0_i32_1 = arith.constant 0 : i32
    return %arg0, %c0_i32, %c0_i32_0 : i32, i32, i32
  }
  func.func @transform_3(%arg0: i32, %arg1: i32) -> (i32, i32, i32) {
    %c0_i32 = arith.constant 0 : i32
    %c0_i32_0 = arith.constant 0 : i32
    %c0_i32_1 = arith.constant 0 : i32
    return %arg0, %c0_i32, %c0_i32_0 : i32, i32, i32
  }
  func.func @transform_4(%arg0: i32, %arg1: i32) -> (i32, i32, i32) {
    %c0_i32 = arith.constant 0 : i32
    %c0_i32_0 = arith.constant 0 : i32
    %c0_i32_1 = arith.constant 0 : i32
    return %arg0, %c0_i32, %c0_i32_0 : i32, i32, i32
  }
  func.func @transform_5(%arg0: i32, %arg1: i32) -> (i32, i32) {
    %c0_i32 = arith.constant 0 : i32
    %c0_i32_0 = arith.constant 0 : i32
    %c0_i32_1 = arith.constant 0 : i32
    return %c0_i32, %c0_i32_0 : i32, i32
  }
  func.func @transform_6(%arg0: i32, %arg1: i32) -> (i32, i32, i32, i32) {
    %c1_i32 = arith.constant 1 : i32
    %0 = arith.subi %c1_i32, %arg0 : i32
    %1 = arith.muli %arg1, %0 : i32
    %c1_i32_0 = arith.constant 1 : i32
    %2 = arith.subi %c1_i32_0, %arg1 : i32
    %3 = arith.muli %2, %arg0 : i32
    %4 = arith.addi %1, %3 : i32
    %c0_i32 = arith.constant 0 : i32
    %c0_i32_1 = arith.constant 0 : i32
    %c0_i32_2 = arith.constant 0 : i32
    return %arg0, %4, %c0_i32, %c0_i32_1 : i32, i32, i32, i32
  }
  func.func @transform_7(%arg0: i32, %arg1: i32) -> (i32, i32, i32) {
    %c0_i32 = arith.constant 0 : i32
    %c0_i32_0 = arith.constant 0 : i32
    %c0_i32_1 = arith.constant 0 : i32
    return %arg0, %c0_i32, %c0_i32_0 : i32, i32, i32
  }
}

module attributes {stable_mosaic.version = 11 : i64} {
  func.func @_gru_bidir_layer_kernel(%arg0: i32, %arg1: i32, %arg2: memref<2x8x16x32xf32, #tpu.memory_space<vmem>>, %arg3: memref<1x2x32x96xf32, #tpu.memory_space<vmem>>, %arg4: memref<1x1x96xf32, #tpu.memory_space<vmem>>, %arg5: memref<1x32x96xf32, #tpu.memory_space<vmem>>, %arg6: memref<1x1x32xf32, #tpu.memory_space<vmem>>, %arg7: memref<16x1xi32, #tpu.memory_space<vmem>>, %arg8: memref<1x8x16x32xf32, #tpu.memory_space<vmem>>, %arg9: memref<1x16x32xf32, #tpu.memory_space<vmem>>, %arg10: memref<16x32xf32, #tpu.memory_space<vmem>>, %arg11: memref<8x16x96xf32, #tpu.memory_space<vmem>>) attributes {dimension_semantics = [#tpu.dimension_semantics<parallel>, #tpu.dimension_semantics<arbitrary>], iteration_bounds = array<i64: 2, 2>, scalar_prefetch = 0 : i64, scratch_operands = 2 : i64, tpu.core_type = #tpu.core_type<tc>, window_params = [{transform_indices = @transform_0, window_bounds = array<i64: 2, 8, 16, 32>}, {pipeline_mode = #tpu.pipeline_mode<synchronous>, transform_indices = @transform_1, window_bounds = array<i64: 1, 2, 32, 96>}, {pipeline_mode = #tpu.pipeline_mode<synchronous>, transform_indices = @transform_2, window_bounds = array<i64: 1, 1, 96>}, {pipeline_mode = #tpu.pipeline_mode<synchronous>, transform_indices = @transform_3, window_bounds = array<i64: 1, 32, 96>}, {pipeline_mode = #tpu.pipeline_mode<synchronous>, transform_indices = @transform_4, window_bounds = array<i64: 1, 1, 32>}, {pipeline_mode = #tpu.pipeline_mode<synchronous>, transform_indices = @transform_5, window_bounds = array<i64: 16, 1>}, {transform_indices = @transform_6, window_bounds = array<i64: 1, 8, 16, 32>}, {transform_indices = @transform_7, window_bounds = array<i64: 1, 16, 32>}]} {
    %c0_i32 = arith.constant 0 : i32
    %0 = arith.cmpi eq, %arg1, %c0_i32 : i32
    %1 = arith.extui %0 : i1 to i32
    %c0_i32_0 = arith.constant 0 : i32
    %2 = arith.cmpi ne, %1, %c0_i32_0 : i32
    scf.if %2 {
      %cst_177 = arith.constant 0.000000e+00 : f32
      %446 = vector.broadcast %cst_177 : f32 to vector<16x32xf32>
      %c0_178 = arith.constant 0 : index
      %c0_179 = arith.constant 0 : index
      %447 = vector.load %arg10[%c0_178, %c0_179] : memref<16x32xf32, #tpu.memory_space<vmem>>, vector<16x32xf32>
      tpu.vector_store %arg10[%c0_178, %c0_179], %446 {strides = array<i32>} : memref<16x32xf32, #tpu.memory_space<vmem>>, vector<16x32xf32>,
    } else {
    }
    %c0 = arith.constant 0 : index
    %c0_1 = arith.constant 0 : index
    %c0_2 = arith.constant 0 : index
    %c0_3 = arith.constant 0 : index
    %3 = vector.load %arg2[%c0, %c0_1, %c0_2, %c0_3] : memref<2x8x16x32xf32, #tpu.memory_space<vmem>>, vector<1x8x16x32xf32>
    %4 = vector.shape_cast %3 : vector<1x8x16x32xf32> to vector<8x16x32xf32>
    %5 = vector.shape_cast %4 : vector<8x16x32xf32> to vector<128x32xf32>
    %c0_4 = arith.constant 0 : index
    %c0_5 = arith.constant 0 : index
    %c0_6 = arith.constant 0 : index
    %c0_7 = arith.constant 0 : index
    %6 = vector.load %arg3[%c0_4, %c0_5, %c0_6, %c0_7] : memref<1x2x32x96xf32, #tpu.memory_space<vmem>>, vector<1x1x32x96xf32>
    %7 = vector.shape_cast %6 : vector<1x1x32x96xf32> to vector<32x96xf32>
    %cst = arith.constant dense<0.000000e+00> : vector<128x96xf32>
    %8 = tpu.matmul %5, %7, %cst {dimension_numbers = #tpu.dot_dimension_numbers<[1], [0], [0], [1], [0, 0, 1, 1], [], []>} : vector<128x32xf32>, vector<32x96xf32>, vector<128x96xf32> -> vector<128x96xf32>
    %c1 = arith.constant 1 : index
    %c0_8 = arith.constant 0 : index
    %c0_9 = arith.constant 0 : index
    %c0_10 = arith.constant 0 : index
    %9 = vector.load %arg2[%c1, %c0_8, %c0_9, %c0_10] : memref<2x8x16x32xf32, #tpu.memory_space<vmem>>, vector<1x8x16x32xf32>
    %10 = vector.shape_cast %9 : vector<1x8x16x32xf32> to vector<8x16x32xf32>
    %11 = vector.shape_cast %10 : vector<8x16x32xf32> to vector<128x32xf32>
    %c0_11 = arith.constant 0 : index
    %c1_12 = arith.constant 1 : index
    %c0_13 = arith.constant 0 : index
    %c0_14 = arith.constant 0 : index
    %12 = vector.load %arg3[%c0_11, %c1_12, %c0_13, %c0_14] : memref<1x2x32x96xf32, #tpu.memory_space<vmem>>, vector<1x1x32x96xf32>
    %13 = vector.shape_cast %12 : vector<1x1x32x96xf32> to vector<32x96xf32>
    %cst_15 = arith.constant dense<0.000000e+00> : vector<128x96xf32>
    %14 = tpu.matmul %11, %13, %cst_15 {dimension_numbers = #tpu.dot_dimension_numbers<[1], [0], [0], [1], [0, 0, 1, 1], [], []>} : vector<128x32xf32>, vector<32x96xf32>, vector<128x96xf32> -> vector<128x96xf32>
    %15 = arith.addf %8, %14 : vector<128x96xf32>
    %c0_16 = arith.constant 0 : index
    %c0_17 = arith.constant 0 : index
    %c0_18 = arith.constant 0 : index
    %16 = vector.load %arg4[%c0_16, %c0_17, %c0_18] : memref<1x1x96xf32, #tpu.memory_space<vmem>>, vector<1x1x96xf32>
    %17 = vector.shape_cast %16 : vector<1x1x96xf32> to vector<1x96xf32>
    %18 = vector.broadcast %17 : vector<1x96xf32> to vector<128x96xf32>
    %19 = arith.addf %15, %18 : vector<128x96xf32>
    %20 = vector.shape_cast %19 : vector<128x96xf32> to vector<8x16x96xf32>
    %c0_19 = arith.constant 0 : index
    %c0_20 = arith.constant 0 : index
    %c0_21 = arith.constant 0 : index
    %21 = vector.load %arg11[%c0_19, %c0_20, %c0_21] : memref<8x16x96xf32, #tpu.memory_space<vmem>>, vector<8x16x96xf32>
    tpu.vector_store %arg11[%c0_19, %c0_20, %c0_21], %20 {strides = array<i32>} : memref<8x16x96xf32, #tpu.memory_space<vmem>>, vector<8x16x96xf32>,
    %c1_i32 = arith.constant 1 : i32
    %22 = arith.subi %c1_i32, %arg0 : i32
    %23 = arith.muli %arg1, %22 : i32
    %c1_i32_22 = arith.constant 1 : i32
    %24 = arith.subi %c1_i32_22, %arg1 : i32
    %25 = arith.muli %24, %arg0 : i32
    %26 = arith.addi %23, %25 : i32
    %c0_23 = arith.constant 0 : index
    %c0_24 = arith.constant 0 : index
    %27 = vector.load %arg7[%c0_23, %c0_24] : memref<16x1xi32, #tpu.memory_space<vmem>>, vector<16x1xi32>
    %c8_i32 = arith.constant 8 : i32
    %28 = arith.muli %26, %c8_i32 : i32
    %29 = vector.broadcast %28 : i32 to vector<16x1xi32>
    %30 = arith.subi %27, %29 : vector<16x1xi32>
    %c0_25 = arith.constant 0 : index
    %c0_26 = arith.constant 0 : index
    %c0_27 = arith.constant 0 : index
    %31 = vector.load %arg6[%c0_25, %c0_26, %c0_27] : memref<1x1x32xf32, #tpu.memory_space<vmem>>, vector<1x1x32xf32>
    %32 = vector.shape_cast %31 : vector<1x1x32xf32> to vector<1x32xf32>
    %33 = vector.shape_cast %32 : vector<1x32xf32> to vector<1x32xf32>
    %34 = vector.broadcast %33 : vector<1x32xf32> to vector<16x32xf32>
    %c0_i32_28 = arith.constant 0 : i32
    %c1_i32_29 = arith.constant 1 : i32
    %35 = arith.subi %c1_i32_29, %arg0 : i32
    %36 = arith.muli %c0_i32_28, %35 : i32
    %c7_i32 = arith.constant 7 : i32
    %37 = arith.subi %c7_i32, %c0_i32_28 : i32
    %38 = arith.muli %37, %arg0 : i32
    %39 = arith.addi %36, %38 : i32
    %c0_30 = arith.constant 0 : index
    %c0_31 = arith.constant 0 : index
    %40 = vector.load %arg10[%c0_30, %c0_31] : memref<16x32xf32, #tpu.memory_space<vmem>>, vector<16x32xf32>
    %41 = arith.index_cast %39 : i32 to index
    %c0_32 = arith.constant 0 : index
    %c0_33 = arith.constant 0 : index
    %42 = vector.load %arg11[%41, %c0_32, %c0_33] : memref<8x16x96xf32, #tpu.memory_space<vmem>>, vector<1x16x96xf32>
    %43 = vector.shape_cast %42 : vector<1x16x96xf32> to vector<16x96xf32>
    %c0_34 = arith.constant 0 : index
    %c0_35 = arith.constant 0 : index
    %c0_36 = arith.constant 0 : index
    %44 = vector.load %arg5[%c0_34, %c0_35, %c0_36] : memref<1x32x96xf32, #tpu.memory_space<vmem>>, vector<1x32x96xf32>
    %45 = vector.shape_cast %44 : vector<1x32x96xf32> to vector<32x96xf32>
    %cst_37 = arith.constant dense<0.000000e+00> : vector<16x96xf32>
    %46 = tpu.matmul %40, %45, %cst_37 {dimension_numbers = #tpu.dot_dimension_numbers<[1], [0], [0], [1], [0, 0, 1, 1], [], []>} : vector<16x32xf32>, vector<32x96xf32>, vector<16x96xf32> -> vector<16x96xf32>
    %47 = vector.extract_strided_slice %43 {offsets = [0, 0], sizes = [16, 32], strides = [1, 1]} : vector<16x96xf32> to vector<16x32xf32>
    %48 = vector.extract_strided_slice %46 {offsets = [0, 0], sizes = [16, 32], strides = [1, 1]} : vector<16x96xf32> to vector<16x32xf32>
    %49 = arith.addf %47, %48 : vector<16x32xf32>
    %50 = arith.negf %49 : vector<16x32xf32>
    %51 = math.exp %50 : vector<16x32xf32>
    %cst_38 = arith.constant 1.000000e+00 : f32
    %52 = vector.broadcast %cst_38 : f32 to vector<16x32xf32>
    %53 = arith.addf %52, %51 : vector<16x32xf32>
    %54 = arith.divf %52, %53 : vector<16x32xf32>
    %55 = vector.extract_strided_slice %43 {offsets = [0, 32], sizes = [16, 32], strides = [1, 1]} : vector<16x96xf32> to vector<16x32xf32>
    %56 = vector.extract_strided_slice %46 {offsets = [0, 32], sizes = [16, 32], strides = [1, 1]} : vector<16x96xf32> to vector<16x32xf32>
    %57 = arith.addf %55, %56 : vector<16x32xf32>
    %58 = arith.negf %57 : vector<16x32xf32>
    %59 = math.exp %58 : vector<16x32xf32>
    %cst_39 = arith.constant 1.000000e+00 : f32
    %60 = vector.broadcast %cst_39 : f32 to vector<16x32xf32>
    %61 = arith.addf %60, %59 : vector<16x32xf32>
    %62 = arith.divf %60, %61 : vector<16x32xf32>
    %63 = vector.extract_strided_slice %43 {offsets = [0, 64], sizes = [16, 32], strides = [1, 1]} : vector<16x96xf32> to vector<16x32xf32>
    %64 = vector.extract_strided_slice %46 {offsets = [0, 64], sizes = [16, 32], strides = [1, 1]} : vector<16x96xf32> to vector<16x32xf32>
    %65 = arith.addf %64, %34 : vector<16x32xf32>
    %66 = arith.mulf %54, %65 : vector<16x32xf32>
    %67 = arith.addf %63, %66 : vector<16x32xf32>
    %68 = math.tanh %67 : vector<16x32xf32>
    %69 = arith.subf %40, %68 : vector<16x32xf32>
    %70 = arith.mulf %62, %69 : vector<16x32xf32>
    %71 = arith.addf %70, %68 : vector<16x32xf32>
    %72 = vector.broadcast %39 : i32 to vector<16x1xi32>
    %73 = arith.cmpi slt, %72, %30 : vector<16x1xi32>
    %74 = vector.shape_cast %73 : vector<16x1xi1> to vector<16x1xi1>
    %75 = vector.broadcast %74 : vector<16x1xi1> to vector<16x32xi1>
    %76 = arith.select %75, %71, %40 : vector<16x32xi1>, vector<16x32xf32>
    %c0_40 = arith.constant 0 : index
    %c0_41 = arith.constant 0 : index
    %77 = vector.load %arg10[%c0_40, %c0_41] : memref<16x32xf32, #tpu.memory_space<vmem>>, vector<16x32xf32>
    tpu.vector_store %arg10[%c0_40, %c0_41], %76 {strides = array<i32>} : memref<16x32xf32, #tpu.memory_space<vmem>>, vector<16x32xf32>,
    %cst_42 = arith.constant 0.000000e+00 : f32
    %78 = vector.shape_cast %73 : vector<16x1xi1> to vector<16x1xi1>
    %79 = vector.broadcast %78 : vector<16x1xi1> to vector<16x32xi1>
    %80 = vector.broadcast %cst_42 : f32 to vector<16x32xf32>
    %81 = arith.select %79, %76, %80 : vector<16x32xi1>, vector<16x32xf32>
    %c0_43 = arith.constant 0 : index
    %82 = arith.index_cast %39 : i32 to index
    %c0_44 = arith.constant 0 : index
    %c0_45 = arith.constant 0 : index
    %83 = vector.load %arg8[%c0_43, %82, %c0_44, %c0_45] : memref<1x8x16x32xf32, #tpu.memory_space<vmem>>, vector<1x1x16x32xf32>
    %84 = vector.shape_cast %83 : vector<1x1x16x32xf32> to vector<16x32xf32>
    %85 = vector.shape_cast %81 : vector<16x32xf32> to vector<1x1x16x32xf32>
    tpu.vector_store %arg8[%c0_43, %82, %c0_44, %c0_45], %85 {strides = array<i32>} : memref<1x8x16x32xf32, #tpu.memory_space<vmem>>, vector<1x1x16x32xf32>,
    %c1_i32_46 = arith.constant 1 : i32
    %c1_i32_47 = arith.constant 1 : i32
    %86 = arith.subi %c1_i32_47, %arg0 : i32
    %87 = arith.muli %c1_i32_46, %86 : i32
    %c7_i32_48 = arith.constant 7 : i32
    %88 = arith.subi %c7_i32_48, %c1_i32_46 : i32
    %89 = arith.muli %88, %arg0 : i32
    %90 = arith.addi %87, %89 : i32
    %c0_49 = arith.constant 0 : index
    %c0_50 = arith.constant 0 : index
    %91 = vector.load %arg10[%c0_49, %c0_50] : memref<16x32xf32, #tpu.memory_space<vmem>>, vector<16x32xf32>
    %92 = arith.index_cast %90 : i32 to index
    %c0_51 = arith.constant 0 : index
    %c0_52 = arith.constant 0 : index
    %93 = vector.load %arg11[%92, %c0_51, %c0_52] : memref<8x16x96xf32, #tpu.memory_space<vmem>>, vector<1x16x96xf32>
    %94 = vector.shape_cast %93 : vector<1x16x96xf32> to vector<16x96xf32>
    %c0_53 = arith.constant 0 : index
    %c0_54 = arith.constant 0 : index
    %c0_55 = arith.constant 0 : index
    %95 = vector.load %arg5[%c0_53, %c0_54, %c0_55] : memref<1x32x96xf32, #tpu.memory_space<vmem>>, vector<1x32x96xf32>
    %96 = vector.shape_cast %95 : vector<1x32x96xf32> to vector<32x96xf32>
    %cst_56 = arith.constant dense<0.000000e+00> : vector<16x96xf32>
    %97 = tpu.matmul %91, %96, %cst_56 {dimension_numbers = #tpu.dot_dimension_numbers<[1], [0], [0], [1], [0, 0, 1, 1], [], []>} : vector<16x32xf32>, vector<32x96xf32>, vector<16x96xf32> -> vector<16x96xf32>
    %98 = vector.extract_strided_slice %94 {offsets = [0, 0], sizes = [16, 32], strides = [1, 1]} : vector<16x96xf32> to vector<16x32xf32>
    %99 = vector.extract_strided_slice %97 {offsets = [0, 0], sizes = [16, 32], strides = [1, 1]} : vector<16x96xf32> to vector<16x32xf32>
    %100 = arith.addf %98, %99 : vector<16x32xf32>
    %101 = arith.negf %100 : vector<16x32xf32>
    %102 = math.exp %101 : vector<16x32xf32>
    %cst_57 = arith.constant 1.000000e+00 : f32
    %103 = vector.broadcast %cst_57 : f32 to vector<16x32xf32>
    %104 = arith.addf %103, %102 : vector<16x32xf32>
    %105 = arith.divf %103, %104 : vector<16x32xf32>
    %106 = vector.extract_strided_slice %94 {offsets = [0, 32], sizes = [16, 32], strides = [1, 1]} : vector<16x96xf32> to vector<16x32xf32>
    %107 = vector.extract_strided_slice %97 {offsets = [0, 32], sizes = [16, 32], strides = [1, 1]} : vector<16x96xf32> to vector<16x32xf32>
    %108 = arith.addf %106, %107 : vector<16x32xf32>
    %109 = arith.negf %108 : vector<16x32xf32>
    %110 = math.exp %109 : vector<16x32xf32>
    %cst_58 = arith.constant 1.000000e+00 : f32
    %111 = vector.broadcast %cst_58 : f32 to vector<16x32xf32>
    %112 = arith.addf %111, %110 : vector<16x32xf32>
    %113 = arith.divf %111, %112 : vector<16x32xf32>
    %114 = vector.extract_strided_slice %94 {offsets = [0, 64], sizes = [16, 32], strides = [1, 1]} : vector<16x96xf32> to vector<16x32xf32>
    %115 = vector.extract_strided_slice %97 {offsets = [0, 64], sizes = [16, 32], strides = [1, 1]} : vector<16x96xf32> to vector<16x32xf32>
    %116 = arith.addf %115, %34 : vector<16x32xf32>
    %117 = arith.mulf %105, %116 : vector<16x32xf32>
    %118 = arith.addf %114, %117 : vector<16x32xf32>
    %119 = math.tanh %118 : vector<16x32xf32>
    %120 = arith.subf %91, %119 : vector<16x32xf32>
    %121 = arith.mulf %113, %120 : vector<16x32xf32>
    %122 = arith.addf %121, %119 : vector<16x32xf32>
    %123 = vector.broadcast %90 : i32 to vector<16x1xi32>
    %124 = arith.cmpi slt, %123, %30 : vector<16x1xi32>
    %125 = vector.shape_cast %124 : vector<16x1xi1> to vector<16x1xi1>
    %126 = vector.broadcast %125 : vector<16x1xi1> to vector<16x32xi1>
    %127 = arith.select %126, %122, %91 : vector<16x32xi1>, vector<16x32xf32>
    %c0_59 = arith.constant 0 : index
    %c0_60 = arith.constant 0 : index
    %128 = vector.load %arg10[%c0_59, %c0_60] : memref<16x32xf32, #tpu.memory_space<vmem>>, vector<16x32xf32>
    tpu.vector_store %arg10[%c0_59, %c0_60], %127 {strides = array<i32>} : memref<16x32xf32, #tpu.memory_space<vmem>>, vector<16x32xf32>,
    %cst_61 = arith.constant 0.000000e+00 : f32
    %129 = vector.shape_cast %124 : vector<16x1xi1> to vector<16x1xi1>
    %130 = vector.broadcast %129 : vector<16x1xi1> to vector<16x32xi1>
    %131 = vector.broadcast %cst_61 : f32 to vector<16x32xf32>
    %132 = arith.select %130, %127, %131 : vector<16x32xi1>, vector<16x32xf32>
    %c0_62 = arith.constant 0 : index
    %133 = arith.index_cast %90 : i32 to index
    %c0_63 = arith.constant 0 : index
    %c0_64 = arith.constant 0 : index
    %134 = vector.load %arg8[%c0_62, %133, %c0_63, %c0_64] : memref<1x8x16x32xf32, #tpu.memory_space<vmem>>, vector<1x1x16x32xf32>
    %135 = vector.shape_cast %134 : vector<1x1x16x32xf32> to vector<16x32xf32>
    %136 = vector.shape_cast %132 : vector<16x32xf32> to vector<1x1x16x32xf32>
    tpu.vector_store %arg8[%c0_62, %133, %c0_63, %c0_64], %136 {strides = array<i32>} : memref<1x8x16x32xf32, #tpu.memory_space<vmem>>, vector<1x1x16x32xf32>,
    %c2_i32 = arith.constant 2 : i32
    %c1_i32_65 = arith.constant 1 : i32
    %137 = arith.subi %c1_i32_65, %arg0 : i32
    %138 = arith.muli %c2_i32, %137 : i32
    %c7_i32_66 = arith.constant 7 : i32
    %139 = arith.subi %c7_i32_66, %c2_i32 : i32
    %140 = arith.muli %139, %arg0 : i32
    %141 = arith.addi %138, %140 : i32
    %c0_67 = arith.constant 0 : index
    %c0_68 = arith.constant 0 : index
    %142 = vector.load %arg10[%c0_67, %c0_68] : memref<16x32xf32, #tpu.memory_space<vmem>>, vector<16x32xf32>
    %143 = arith.index_cast %141 : i32 to index
    %c0_69 = arith.constant 0 : index
    %c0_70 = arith.constant 0 : index
    %144 = vector.load %arg11[%143, %c0_69, %c0_70] : memref<8x16x96xf32, #tpu.memory_space<vmem>>, vector<1x16x96xf32>
    %145 = vector.shape_cast %144 : vector<1x16x96xf32> to vector<16x96xf32>
    %c0_71 = arith.constant 0 : index
    %c0_72 = arith.constant 0 : index
    %c0_73 = arith.constant 0 : index
    %146 = vector.load %arg5[%c0_71, %c0_72, %c0_73] : memref<1x32x96xf32, #tpu.memory_space<vmem>>, vector<1x32x96xf32>
    %147 = vector.shape_cast %146 : vector<1x32x96xf32> to vector<32x96xf32>
    %cst_74 = arith.constant dense<0.000000e+00> : vector<16x96xf32>
    %148 = tpu.matmul %142, %147, %cst_74 {dimension_numbers = #tpu.dot_dimension_numbers<[1], [0], [0], [1], [0, 0, 1, 1], [], []>} : vector<16x32xf32>, vector<32x96xf32>, vector<16x96xf32> -> vector<16x96xf32>
    %149 = vector.extract_strided_slice %145 {offsets = [0, 0], sizes = [16, 32], strides = [1, 1]} : vector<16x96xf32> to vector<16x32xf32>
    %150 = vector.extract_strided_slice %148 {offsets = [0, 0], sizes = [16, 32], strides = [1, 1]} : vector<16x96xf32> to vector<16x32xf32>
    %151 = arith.addf %149, %150 : vector<16x32xf32>
    %152 = arith.negf %151 : vector<16x32xf32>
    %153 = math.exp %152 : vector<16x32xf32>
    %cst_75 = arith.constant 1.000000e+00 : f32
    %154 = vector.broadcast %cst_75 : f32 to vector<16x32xf32>
    %155 = arith.addf %154, %153 : vector<16x32xf32>
    %156 = arith.divf %154, %155 : vector<16x32xf32>
    %157 = vector.extract_strided_slice %145 {offsets = [0, 32], sizes = [16, 32], strides = [1, 1]} : vector<16x96xf32> to vector<16x32xf32>
    %158 = vector.extract_strided_slice %148 {offsets = [0, 32], sizes = [16, 32], strides = [1, 1]} : vector<16x96xf32> to vector<16x32xf32>
    %159 = arith.addf %157, %158 : vector<16x32xf32>
    %160 = arith.negf %159 : vector<16x32xf32>
    %161 = math.exp %160 : vector<16x32xf32>
    %cst_76 = arith.constant 1.000000e+00 : f32
    %162 = vector.broadcast %cst_76 : f32 to vector<16x32xf32>
    %163 = arith.addf %162, %161 : vector<16x32xf32>
    %164 = arith.divf %162, %163 : vector<16x32xf32>
    %165 = vector.extract_strided_slice %145 {offsets = [0, 64], sizes = [16, 32], strides = [1, 1]} : vector<16x96xf32> to vector<16x32xf32>
    %166 = vector.extract_strided_slice %148 {offsets = [0, 64], sizes = [16, 32], strides = [1, 1]} : vector<16x96xf32> to vector<16x32xf32>
    %167 = arith.addf %166, %34 : vector<16x32xf32>
    %168 = arith.mulf %156, %167 : vector<16x32xf32>
    %169 = arith.addf %165, %168 : vector<16x32xf32>
    %170 = math.tanh %169 : vector<16x32xf32>
    %171 = arith.subf %142, %170 : vector<16x32xf32>
    %172 = arith.mulf %164, %171 : vector<16x32xf32>
    %173 = arith.addf %172, %170 : vector<16x32xf32>
    %174 = vector.broadcast %141 : i32 to vector<16x1xi32>
    %175 = arith.cmpi slt, %174, %30 : vector<16x1xi32>
    %176 = vector.shape_cast %175 : vector<16x1xi1> to vector<16x1xi1>
    %177 = vector.broadcast %176 : vector<16x1xi1> to vector<16x32xi1>
    %178 = arith.select %177, %173, %142 : vector<16x32xi1>, vector<16x32xf32>
    %c0_77 = arith.constant 0 : index
    %c0_78 = arith.constant 0 : index
    %179 = vector.load %arg10[%c0_77, %c0_78] : memref<16x32xf32, #tpu.memory_space<vmem>>, vector<16x32xf32>
    tpu.vector_store %arg10[%c0_77, %c0_78], %178 {strides = array<i32>} : memref<16x32xf32, #tpu.memory_space<vmem>>, vector<16x32xf32>,
    %cst_79 = arith.constant 0.000000e+00 : f32
    %180 = vector.shape_cast %175 : vector<16x1xi1> to vector<16x1xi1>
    %181 = vector.broadcast %180 : vector<16x1xi1> to vector<16x32xi1>
    %182 = vector.broadcast %cst_79 : f32 to vector<16x32xf32>
    %183 = arith.select %181, %178, %182 : vector<16x32xi1>, vector<16x32xf32>
    %c0_80 = arith.constant 0 : index
    %184 = arith.index_cast %141 : i32 to index
    %c0_81 = arith.constant 0 : index
    %c0_82 = arith.constant 0 : index
    %185 = vector.load %arg8[%c0_80, %184, %c0_81, %c0_82] : memref<1x8x16x32xf32, #tpu.memory_space<vmem>>, vector<1x1x16x32xf32>
    %186 = vector.shape_cast %185 : vector<1x1x16x32xf32> to vector<16x32xf32>
    %187 = vector.shape_cast %183 : vector<16x32xf32> to vector<1x1x16x32xf32>
    tpu.vector_store %arg8[%c0_80, %184, %c0_81, %c0_82], %187 {strides = array<i32>} : memref<1x8x16x32xf32, #tpu.memory_space<vmem>>, vector<1x1x16x32xf32>,
    %c3_i32 = arith.constant 3 : i32
    %c1_i32_83 = arith.constant 1 : i32
    %188 = arith.subi %c1_i32_83, %arg0 : i32
    %189 = arith.muli %c3_i32, %188 : i32
    %c7_i32_84 = arith.constant 7 : i32
    %190 = arith.subi %c7_i32_84, %c3_i32 : i32
    %191 = arith.muli %190, %arg0 : i32
    %192 = arith.addi %189, %191 : i32
    %c0_85 = arith.constant 0 : index
    %c0_86 = arith.constant 0 : index
    %193 = vector.load %arg10[%c0_85, %c0_86] : memref<16x32xf32, #tpu.memory_space<vmem>>, vector<16x32xf32>
    %194 = arith.index_cast %192 : i32 to index
    %c0_87 = arith.constant 0 : index
    %c0_88 = arith.constant 0 : index
    %195 = vector.load %arg11[%194, %c0_87, %c0_88] : memref<8x16x96xf32, #tpu.memory_space<vmem>>, vector<1x16x96xf32>
    %196 = vector.shape_cast %195 : vector<1x16x96xf32> to vector<16x96xf32>
    %c0_89 = arith.constant 0 : index
    %c0_90 = arith.constant 0 : index
    %c0_91 = arith.constant 0 : index
    %197 = vector.load %arg5[%c0_89, %c0_90, %c0_91] : memref<1x32x96xf32, #tpu.memory_space<vmem>>, vector<1x32x96xf32>
    %198 = vector.shape_cast %197 : vector<1x32x96xf32> to vector<32x96xf32>
    %cst_92 = arith.constant dense<0.000000e+00> : vector<16x96xf32>
    %199 = tpu.matmul %193, %198, %cst_92 {dimension_numbers = #tpu.dot_dimension_numbers<[1], [0], [0], [1], [0, 0, 1, 1], [], []>} : vector<16x32xf32>, vector<32x96xf32>, vector<16x96xf32> -> vector<16x96xf32>
    %200 = vector.extract_strided_slice %196 {offsets = [0, 0], sizes = [16, 32], strides = [1, 1]} : vector<16x96xf32> to vector<16x32xf32>
    %201 = vector.extract_strided_slice %199 {offsets = [0, 0], sizes = [16, 32], strides = [1, 1]} : vector<16x96xf32> to vector<16x32xf32>
    %202 = arith.addf %200, %201 : vector<16x32xf32>
    %203 = arith.negf %202 : vector<16x32xf32>
    %204 = math.exp %203 : vector<16x32xf32>
    %cst_93 = arith.constant 1.000000e+00 : f32
    %205 = vector.broadcast %cst_93 : f32 to vector<16x32xf32>
    %206 = arith.addf %205, %204 : vector<16x32xf32>
    %207 = arith.divf %205, %206 : vector<16x32xf32>
    %208 = vector.extract_strided_slice %196 {offsets = [0, 32], sizes = [16, 32], strides = [1, 1]} : vector<16x96xf32> to vector<16x32xf32>
    %209 = vector.extract_strided_slice %199 {offsets = [0, 32], sizes = [16, 32], strides = [1, 1]} : vector<16x96xf32> to vector<16x32xf32>
    %210 = arith.addf %208, %209 : vector<16x32xf32>
    %211 = arith.negf %210 : vector<16x32xf32>
    %212 = math.exp %211 : vector<16x32xf32>
    %cst_94 = arith.constant 1.000000e+00 : f32
    %213 = vector.broadcast %cst_94 : f32 to vector<16x32xf32>
    %214 = arith.addf %213, %212 : vector<16x32xf32>
    %215 = arith.divf %213, %214 : vector<16x32xf32>
    %216 = vector.extract_strided_slice %196 {offsets = [0, 64], sizes = [16, 32], strides = [1, 1]} : vector<16x96xf32> to vector<16x32xf32>
    %217 = vector.extract_strided_slice %199 {offsets = [0, 64], sizes = [16, 32], strides = [1, 1]} : vector<16x96xf32> to vector<16x32xf32>
    %218 = arith.addf %217, %34 : vector<16x32xf32>
    %219 = arith.mulf %207, %218 : vector<16x32xf32>
    %220 = arith.addf %216, %219 : vector<16x32xf32>
    %221 = math.tanh %220 : vector<16x32xf32>
    %222 = arith.subf %193, %221 : vector<16x32xf32>
    %223 = arith.mulf %215, %222 : vector<16x32xf32>
    %224 = arith.addf %223, %221 : vector<16x32xf32>
    %225 = vector.broadcast %192 : i32 to vector<16x1xi32>
    %226 = arith.cmpi slt, %225, %30 : vector<16x1xi32>
    %227 = vector.shape_cast %226 : vector<16x1xi1> to vector<16x1xi1>
    %228 = vector.broadcast %227 : vector<16x1xi1> to vector<16x32xi1>
    %229 = arith.select %228, %224, %193 : vector<16x32xi1>, vector<16x32xf32>
    %c0_95 = arith.constant 0 : index
    %c0_96 = arith.constant 0 : index
    %230 = vector.load %arg10[%c0_95, %c0_96] : memref<16x32xf32, #tpu.memory_space<vmem>>, vector<16x32xf32>
    tpu.vector_store %arg10[%c0_95, %c0_96], %229 {strides = array<i32>} : memref<16x32xf32, #tpu.memory_space<vmem>>, vector<16x32xf32>,
    %cst_97 = arith.constant 0.000000e+00 : f32
    %231 = vector.shape_cast %226 : vector<16x1xi1> to vector<16x1xi1>
    %232 = vector.broadcast %231 : vector<16x1xi1> to vector<16x32xi1>
    %233 = vector.broadcast %cst_97 : f32 to vector<16x32xf32>
    %234 = arith.select %232, %229, %233 : vector<16x32xi1>, vector<16x32xf32>
    %c0_98 = arith.constant 0 : index
    %235 = arith.index_cast %192 : i32 to index
    %c0_99 = arith.constant 0 : index
    %c0_100 = arith.constant 0 : index
    %236 = vector.load %arg8[%c0_98, %235, %c0_99, %c0_100] : memref<1x8x16x32xf32, #tpu.memory_space<vmem>>, vector<1x1x16x32xf32>
    %237 = vector.shape_cast %236 : vector<1x1x16x32xf32> to vector<16x32xf32>
    %238 = vector.shape_cast %234 : vector<16x32xf32> to vector<1x1x16x32xf32>
    tpu.vector_store %arg8[%c0_98, %235, %c0_99, %c0_100], %238 {strides = array<i32>} : memref<1x8x16x32xf32, #tpu.memory_space<vmem>>, vector<1x1x16x32xf32>,
    %c4_i32 = arith.constant 4 : i32
    %c1_i32_101 = arith.constant 1 : i32
    %239 = arith.subi %c1_i32_101, %arg0 : i32
    %240 = arith.muli %c4_i32, %239 : i32
    %c7_i32_102 = arith.constant 7 : i32
    %241 = arith.subi %c7_i32_102, %c4_i32 : i32
    %242 = arith.muli %241, %arg0 : i32
    %243 = arith.addi %240, %242 : i32
    %c0_103 = arith.constant 0 : index
    %c0_104 = arith.constant 0 : index
    %244 = vector.load %arg10[%c0_103, %c0_104] : memref<16x32xf32, #tpu.memory_space<vmem>>, vector<16x32xf32>
    %245 = arith.index_cast %243 : i32 to index
    %c0_105 = arith.constant 0 : index
    %c0_106 = arith.constant 0 : index
    %246 = vector.load %arg11[%245, %c0_105, %c0_106] : memref<8x16x96xf32, #tpu.memory_space<vmem>>, vector<1x16x96xf32>
    %247 = vector.shape_cast %246 : vector<1x16x96xf32> to vector<16x96xf32>
    %c0_107 = arith.constant 0 : index
    %c0_108 = arith.constant 0 : index
    %c0_109 = arith.constant 0 : index
    %248 = vector.load %arg5[%c0_107, %c0_108, %c0_109] : memref<1x32x96xf32, #tpu.memory_space<vmem>>, vector<1x32x96xf32>
    %249 = vector.shape_cast %248 : vector<1x32x96xf32> to vector<32x96xf32>
    %cst_110 = arith.constant dense<0.000000e+00> : vector<16x96xf32>
    %250 = tpu.matmul %244, %249, %cst_110 {dimension_numbers = #tpu.dot_dimension_numbers<[1], [0], [0], [1], [0, 0, 1, 1], [], []>} : vector<16x32xf32>, vector<32x96xf32>, vector<16x96xf32> -> vector<16x96xf32>
    %251 = vector.extract_strided_slice %247 {offsets = [0, 0], sizes = [16, 32], strides = [1, 1]} : vector<16x96xf32> to vector<16x32xf32>
    %252 = vector.extract_strided_slice %250 {offsets = [0, 0], sizes = [16, 32], strides = [1, 1]} : vector<16x96xf32> to vector<16x32xf32>
    %253 = arith.addf %251, %252 : vector<16x32xf32>
    %254 = arith.negf %253 : vector<16x32xf32>
    %255 = math.exp %254 : vector<16x32xf32>
    %cst_111 = arith.constant 1.000000e+00 : f32
    %256 = vector.broadcast %cst_111 : f32 to vector<16x32xf32>
    %257 = arith.addf %256, %255 : vector<16x32xf32>
    %258 = arith.divf %256, %257 : vector<16x32xf32>
    %259 = vector.extract_strided_slice %247 {offsets = [0, 32], sizes = [16, 32], strides = [1, 1]} : vector<16x96xf32> to vector<16x32xf32>
    %260 = vector.extract_strided_slice %250 {offsets = [0, 32], sizes = [16, 32], strides = [1, 1]} : vector<16x96xf32> to vector<16x32xf32>
    %261 = arith.addf %259, %260 : vector<16x32xf32>
    %262 = arith.negf %261 : vector<16x32xf32>
    %263 = math.exp %262 : vector<16x32xf32>
    %cst_112 = arith.constant 1.000000e+00 : f32
    %264 = vector.broadcast %cst_112 : f32 to vector<16x32xf32>
    %265 = arith.addf %264, %263 : vector<16x32xf32>
    %266 = arith.divf %264, %265 : vector<16x32xf32>
    %267 = vector.extract_strided_slice %247 {offsets = [0, 64], sizes = [16, 32], strides = [1, 1]} : vector<16x96xf32> to vector<16x32xf32>
    %268 = vector.extract_strided_slice %250 {offsets = [0, 64], sizes = [16, 32], strides = [1, 1]} : vector<16x96xf32> to vector<16x32xf32>
    %269 = arith.addf %268, %34 : vector<16x32xf32>
    %270 = arith.mulf %258, %269 : vector<16x32xf32>
    %271 = arith.addf %267, %270 : vector<16x32xf32>
    %272 = math.tanh %271 : vector<16x32xf32>
    %273 = arith.subf %244, %272 : vector<16x32xf32>
    %274 = arith.mulf %266, %273 : vector<16x32xf32>
    %275 = arith.addf %274, %272 : vector<16x32xf32>
    %276 = vector.broadcast %243 : i32 to vector<16x1xi32>
    %277 = arith.cmpi slt, %276, %30 : vector<16x1xi32>
    %278 = vector.shape_cast %277 : vector<16x1xi1> to vector<16x1xi1>
    %279 = vector.broadcast %278 : vector<16x1xi1> to vector<16x32xi1>
    %280 = arith.select %279, %275, %244 : vector<16x32xi1>, vector<16x32xf32>
    %c0_113 = arith.constant 0 : index
    %c0_114 = arith.constant 0 : index
    %281 = vector.load %arg10[%c0_113, %c0_114] : memref<16x32xf32, #tpu.memory_space<vmem>>, vector<16x32xf32>
    tpu.vector_store %arg10[%c0_113, %c0_114], %280 {strides = array<i32>} : memref<16x32xf32, #tpu.memory_space<vmem>>, vector<16x32xf32>,
    %cst_115 = arith.constant 0.000000e+00 : f32
    %282 = vector.shape_cast %277 : vector<16x1xi1> to vector<16x1xi1>
    %283 = vector.broadcast %282 : vector<16x1xi1> to vector<16x32xi1>
    %284 = vector.broadcast %cst_115 : f32 to vector<16x32xf32>
    %285 = arith.select %283, %280, %284 : vector<16x32xi1>, vector<16x32xf32>
    %c0_116 = arith.constant 0 : index
    %286 = arith.index_cast %243 : i32 to index
    %c0_117 = arith.constant 0 : index
    %c0_118 = arith.constant 0 : index
    %287 = vector.load %arg8[%c0_116, %286, %c0_117, %c0_118] : memref<1x8x16x32xf32, #tpu.memory_space<vmem>>, vector<1x1x16x32xf32>
    %288 = vector.shape_cast %287 : vector<1x1x16x32xf32> to vector<16x32xf32>
    %289 = vector.shape_cast %285 : vector<16x32xf32> to vector<1x1x16x32xf32>
    tpu.vector_store %arg8[%c0_116, %286, %c0_117, %c0_118], %289 {strides = array<i32>} : memref<1x8x16x32xf32, #tpu.memory_space<vmem>>, vector<1x1x16x32xf32>,
    %c5_i32 = arith.constant 5 : i32
    %c1_i32_119 = arith.constant 1 : i32
    %290 = arith.subi %c1_i32_119, %arg0 : i32
    %291 = arith.muli %c5_i32, %290 : i32
    %c7_i32_120 = arith.constant 7 : i32
    %292 = arith.subi %c7_i32_120, %c5_i32 : i32
    %293 = arith.muli %292, %arg0 : i32
    %294 = arith.addi %291, %293 : i32
    %c0_121 = arith.constant 0 : index
    %c0_122 = arith.constant 0 : index
    %295 = vector.load %arg10[%c0_121, %c0_122] : memref<16x32xf32, #tpu.memory_space<vmem>>, vector<16x32xf32>
    %296 = arith.index_cast %294 : i32 to index
    %c0_123 = arith.constant 0 : index
    %c0_124 = arith.constant 0 : index
    %297 = vector.load %arg11[%296, %c0_123, %c0_124] : memref<8x16x96xf32, #tpu.memory_space<vmem>>, vector<1x16x96xf32>
    %298 = vector.shape_cast %297 : vector<1x16x96xf32> to vector<16x96xf32>
    %c0_125 = arith.constant 0 : index
    %c0_126 = arith.constant 0 : index
    %c0_127 = arith.constant 0 : index
    %299 = vector.load %arg5[%c0_125, %c0_126, %c0_127] : memref<1x32x96xf32, #tpu.memory_space<vmem>>, vector<1x32x96xf32>
    %300 = vector.shape_cast %299 : vector<1x32x96xf32> to vector<32x96xf32>
    %cst_128 = arith.constant dense<0.000000e+00> : vector<16x96xf32>
    %301 = tpu.matmul %295, %300, %cst_128 {dimension_numbers = #tpu.dot_dimension_numbers<[1], [0], [0], [1], [0, 0, 1, 1], [], []>} : vector<16x32xf32>, vector<32x96xf32>, vector<16x96xf32> -> vector<16x96xf32>
    %302 = vector.extract_strided_slice %298 {offsets = [0, 0], sizes = [16, 32], strides = [1, 1]} : vector<16x96xf32> to vector<16x32xf32>
    %303 = vector.extract_strided_slice %301 {offsets = [0, 0], sizes = [16, 32], strides = [1, 1]} : vector<16x96xf32> to vector<16x32xf32>
    %304 = arith.addf %302, %303 : vector<16x32xf32>
    %305 = arith.negf %304 : vector<16x32xf32>
    %306 = math.exp %305 : vector<16x32xf32>
    %cst_129 = arith.constant 1.000000e+00 : f32
    %307 = vector.broadcast %cst_129 : f32 to vector<16x32xf32>
    %308 = arith.addf %307, %306 : vector<16x32xf32>
    %309 = arith.divf %307, %308 : vector<16x32xf32>
    %310 = vector.extract_strided_slice %298 {offsets = [0, 32], sizes = [16, 32], strides = [1, 1]} : vector<16x96xf32> to vector<16x32xf32>
    %311 = vector.extract_strided_slice %301 {offsets = [0, 32], sizes = [16, 32], strides = [1, 1]} : vector<16x96xf32> to vector<16x32xf32>
    %312 = arith.addf %310, %311 : vector<16x32xf32>
    %313 = arith.negf %312 : vector<16x32xf32>
    %314 = math.exp %313 : vector<16x32xf32>
    %cst_130 = arith.constant 1.000000e+00 : f32
    %315 = vector.broadcast %cst_130 : f32 to vector<16x32xf32>
    %316 = arith.addf %315, %314 : vector<16x32xf32>
    %317 = arith.divf %315, %316 : vector<16x32xf32>
    %318 = vector.extract_strided_slice %298 {offsets = [0, 64], sizes = [16, 32], strides = [1, 1]} : vector<16x96xf32> to vector<16x32xf32>
    %319 = vector.extract_strided_slice %301 {offsets = [0, 64], sizes = [16, 32], strides = [1, 1]} : vector<16x96xf32> to vector<16x32xf32>
    %320 = arith.addf %319, %34 : vector<16x32xf32>
    %321 = arith.mulf %309, %320 : vector<16x32xf32>
    %322 = arith.addf %318, %321 : vector<16x32xf32>
    %323 = math.tanh %322 : vector<16x32xf32>
    %324 = arith.subf %295, %323 : vector<16x32xf32>
    %325 = arith.mulf %317, %324 : vector<16x32xf32>
    %326 = arith.addf %325, %323 : vector<16x32xf32>
    %327 = vector.broadcast %294 : i32 to vector<16x1xi32>
    %328 = arith.cmpi slt, %327, %30 : vector<16x1xi32>
    %329 = vector.shape_cast %328 : vector<16x1xi1> to vector<16x1xi1>
    %330 = vector.broadcast %329 : vector<16x1xi1> to vector<16x32xi1>
    %331 = arith.select %330, %326, %295 : vector<16x32xi1>, vector<16x32xf32>
    %c0_131 = arith.constant 0 : index
    %c0_132 = arith.constant 0 : index
    %332 = vector.load %arg10[%c0_131, %c0_132] : memref<16x32xf32, #tpu.memory_space<vmem>>, vector<16x32xf32>
    tpu.vector_store %arg10[%c0_131, %c0_132], %331 {strides = array<i32>} : memref<16x32xf32, #tpu.memory_space<vmem>>, vector<16x32xf32>,
    %cst_133 = arith.constant 0.000000e+00 : f32
    %333 = vector.shape_cast %328 : vector<16x1xi1> to vector<16x1xi1>
    %334 = vector.broadcast %333 : vector<16x1xi1> to vector<16x32xi1>
    %335 = vector.broadcast %cst_133 : f32 to vector<16x32xf32>
    %336 = arith.select %334, %331, %335 : vector<16x32xi1>, vector<16x32xf32>
    %c0_134 = arith.constant 0 : index
    %337 = arith.index_cast %294 : i32 to index
    %c0_135 = arith.constant 0 : index
    %c0_136 = arith.constant 0 : index
    %338 = vector.load %arg8[%c0_134, %337, %c0_135, %c0_136] : memref<1x8x16x32xf32, #tpu.memory_space<vmem>>, vector<1x1x16x32xf32>
    %339 = vector.shape_cast %338 : vector<1x1x16x32xf32> to vector<16x32xf32>
    %340 = vector.shape_cast %336 : vector<16x32xf32> to vector<1x1x16x32xf32>
    tpu.vector_store %arg8[%c0_134, %337, %c0_135, %c0_136], %340 {strides = array<i32>} : memref<1x8x16x32xf32, #tpu.memory_space<vmem>>, vector<1x1x16x32xf32>,
    %c6_i32 = arith.constant 6 : i32
    %c1_i32_137 = arith.constant 1 : i32
    %341 = arith.subi %c1_i32_137, %arg0 : i32
    %342 = arith.muli %c6_i32, %341 : i32
    %c7_i32_138 = arith.constant 7 : i32
    %343 = arith.subi %c7_i32_138, %c6_i32 : i32
    %344 = arith.muli %343, %arg0 : i32
    %345 = arith.addi %342, %344 : i32
    %c0_139 = arith.constant 0 : index
    %c0_140 = arith.constant 0 : index
    %346 = vector.load %arg10[%c0_139, %c0_140] : memref<16x32xf32, #tpu.memory_space<vmem>>, vector<16x32xf32>
    %347 = arith.index_cast %345 : i32 to index
    %c0_141 = arith.constant 0 : index
    %c0_142 = arith.constant 0 : index
    %348 = vector.load %arg11[%347, %c0_141, %c0_142] : memref<8x16x96xf32, #tpu.memory_space<vmem>>, vector<1x16x96xf32>
    %349 = vector.shape_cast %348 : vector<1x16x96xf32> to vector<16x96xf32>
    %c0_143 = arith.constant 0 : index
    %c0_144 = arith.constant 0 : index
    %c0_145 = arith.constant 0 : index
    %350 = vector.load %arg5[%c0_143, %c0_144, %c0_145] : memref<1x32x96xf32, #tpu.memory_space<vmem>>, vector<1x32x96xf32>
    %351 = vector.shape_cast %350 : vector<1x32x96xf32> to vector<32x96xf32>
    %cst_146 = arith.constant dense<0.000000e+00> : vector<16x96xf32>
    %352 = tpu.matmul %346, %351, %cst_146 {dimension_numbers = #tpu.dot_dimension_numbers<[1], [0], [0], [1], [0, 0, 1, 1], [], []>} : vector<16x32xf32>, vector<32x96xf32>, vector<16x96xf32> -> vector<16x96xf32>
    %353 = vector.extract_strided_slice %349 {offsets = [0, 0], sizes = [16, 32], strides = [1, 1]} : vector<16x96xf32> to vector<16x32xf32>
    %354 = vector.extract_strided_slice %352 {offsets = [0, 0], sizes = [16, 32], strides = [1, 1]} : vector<16x96xf32> to vector<16x32xf32>
    %355 = arith.addf %353, %354 : vector<16x32xf32>
    %356 = arith.negf %355 : vector<16x32xf32>
    %357 = math.exp %356 : vector<16x32xf32>
    %cst_147 = arith.constant 1.000000e+00 : f32
    %358 = vector.broadcast %cst_147 : f32 to vector<16x32xf32>
    %359 = arith.addf %358, %357 : vector<16x32xf32>
    %360 = arith.divf %358, %359 : vector<16x32xf32>
    %361 = vector.extract_strided_slice %349 {offsets = [0, 32], sizes = [16, 32], strides = [1, 1]} : vector<16x96xf32> to vector<16x32xf32>
    %362 = vector.extract_strided_slice %352 {offsets = [0, 32], sizes = [16, 32], strides = [1, 1]} : vector<16x96xf32> to vector<16x32xf32>
    %363 = arith.addf %361, %362 : vector<16x32xf32>
    %364 = arith.negf %363 : vector<16x32xf32>
    %365 = math.exp %364 : vector<16x32xf32>
    %cst_148 = arith.constant 1.000000e+00 : f32
    %366 = vector.broadcast %cst_148 : f32 to vector<16x32xf32>
    %367 = arith.addf %366, %365 : vector<16x32xf32>
    %368 = arith.divf %366, %367 : vector<16x32xf32>
    %369 = vector.extract_strided_slice %349 {offsets = [0, 64], sizes = [16, 32], strides = [1, 1]} : vector<16x96xf32> to vector<16x32xf32>
    %370 = vector.extract_strided_slice %352 {offsets = [0, 64], sizes = [16, 32], strides = [1, 1]} : vector<16x96xf32> to vector<16x32xf32>
    %371 = arith.addf %370, %34 : vector<16x32xf32>
    %372 = arith.mulf %360, %371 : vector<16x32xf32>
    %373 = arith.addf %369, %372 : vector<16x32xf32>
    %374 = math.tanh %373 : vector<16x32xf32>
    %375 = arith.subf %346, %374 : vector<16x32xf32>
    %376 = arith.mulf %368, %375 : vector<16x32xf32>
    %377 = arith.addf %376, %374 : vector<16x32xf32>
    %378 = vector.broadcast %345 : i32 to vector<16x1xi32>
    %379 = arith.cmpi slt, %378, %30 : vector<16x1xi32>
    %380 = vector.shape_cast %379 : vector<16x1xi1> to vector<16x1xi1>
    %381 = vector.broadcast %380 : vector<16x1xi1> to vector<16x32xi1>
    %382 = arith.select %381, %377, %346 : vector<16x32xi1>, vector<16x32xf32>
    %c0_149 = arith.constant 0 : index
    %c0_150 = arith.constant 0 : index
    %383 = vector.load %arg10[%c0_149, %c0_150] : memref<16x32xf32, #tpu.memory_space<vmem>>, vector<16x32xf32>
    tpu.vector_store %arg10[%c0_149, %c0_150], %382 {strides = array<i32>} : memref<16x32xf32, #tpu.memory_space<vmem>>, vector<16x32xf32>,
    %cst_151 = arith.constant 0.000000e+00 : f32
    %384 = vector.shape_cast %379 : vector<16x1xi1> to vector<16x1xi1>
    %385 = vector.broadcast %384 : vector<16x1xi1> to vector<16x32xi1>
    %386 = vector.broadcast %cst_151 : f32 to vector<16x32xf32>
    %387 = arith.select %385, %382, %386 : vector<16x32xi1>, vector<16x32xf32>
    %c0_152 = arith.constant 0 : index
    %388 = arith.index_cast %345 : i32 to index
    %c0_153 = arith.constant 0 : index
    %c0_154 = arith.constant 0 : index
    %389 = vector.load %arg8[%c0_152, %388, %c0_153, %c0_154] : memref<1x8x16x32xf32, #tpu.memory_space<vmem>>, vector<1x1x16x32xf32>
    %390 = vector.shape_cast %389 : vector<1x1x16x32xf32> to vector<16x32xf32>
    %391 = vector.shape_cast %387 : vector<16x32xf32> to vector<1x1x16x32xf32>
    tpu.vector_store %arg8[%c0_152, %388, %c0_153, %c0_154], %391 {strides = array<i32>} : memref<1x8x16x32xf32, #tpu.memory_space<vmem>>, vector<1x1x16x32xf32>,
    %c7_i32_155 = arith.constant 7 : i32
    %c1_i32_156 = arith.constant 1 : i32
    %392 = arith.subi %c1_i32_156, %arg0 : i32
    %393 = arith.muli %c7_i32_155, %392 : i32
    %c7_i32_157 = arith.constant 7 : i32
    %394 = arith.subi %c7_i32_157, %c7_i32_155 : i32
    %395 = arith.muli %394, %arg0 : i32
    %396 = arith.addi %393, %395 : i32
    %c0_158 = arith.constant 0 : index
    %c0_159 = arith.constant 0 : index
    %397 = vector.load %arg10[%c0_158, %c0_159] : memref<16x32xf32, #tpu.memory_space<vmem>>, vector<16x32xf32>
    %398 = arith.index_cast %396 : i32 to index
    %c0_160 = arith.constant 0 : index
    %c0_161 = arith.constant 0 : index
    %399 = vector.load %arg11[%398, %c0_160, %c0_161] : memref<8x16x96xf32, #tpu.memory_space<vmem>>, vector<1x16x96xf32>
    %400 = vector.shape_cast %399 : vector<1x16x96xf32> to vector<16x96xf32>
    %c0_162 = arith.constant 0 : index
    %c0_163 = arith.constant 0 : index
    %c0_164 = arith.constant 0 : index
    %401 = vector.load %arg5[%c0_162, %c0_163, %c0_164] : memref<1x32x96xf32, #tpu.memory_space<vmem>>, vector<1x32x96xf32>
    %402 = vector.shape_cast %401 : vector<1x32x96xf32> to vector<32x96xf32>
    %cst_165 = arith.constant dense<0.000000e+00> : vector<16x96xf32>
    %403 = tpu.matmul %397, %402, %cst_165 {dimension_numbers = #tpu.dot_dimension_numbers<[1], [0], [0], [1], [0, 0, 1, 1], [], []>} : vector<16x32xf32>, vector<32x96xf32>, vector<16x96xf32> -> vector<16x96xf32>
    %404 = vector.extract_strided_slice %400 {offsets = [0, 0], sizes = [16, 32], strides = [1, 1]} : vector<16x96xf32> to vector<16x32xf32>
    %405 = vector.extract_strided_slice %403 {offsets = [0, 0], sizes = [16, 32], strides = [1, 1]} : vector<16x96xf32> to vector<16x32xf32>
    %406 = arith.addf %404, %405 : vector<16x32xf32>
    %407 = arith.negf %406 : vector<16x32xf32>
    %408 = math.exp %407 : vector<16x32xf32>
    %cst_166 = arith.constant 1.000000e+00 : f32
    %409 = vector.broadcast %cst_166 : f32 to vector<16x32xf32>
    %410 = arith.addf %409, %408 : vector<16x32xf32>
    %411 = arith.divf %409, %410 : vector<16x32xf32>
    %412 = vector.extract_strided_slice %400 {offsets = [0, 32], sizes = [16, 32], strides = [1, 1]} : vector<16x96xf32> to vector<16x32xf32>
    %413 = vector.extract_strided_slice %403 {offsets = [0, 32], sizes = [16, 32], strides = [1, 1]} : vector<16x96xf32> to vector<16x32xf32>
    %414 = arith.addf %412, %413 : vector<16x32xf32>
    %415 = arith.negf %414 : vector<16x32xf32>
    %416 = math.exp %415 : vector<16x32xf32>
    %cst_167 = arith.constant 1.000000e+00 : f32
    %417 = vector.broadcast %cst_167 : f32 to vector<16x32xf32>
    %418 = arith.addf %417, %416 : vector<16x32xf32>
    %419 = arith.divf %417, %418 : vector<16x32xf32>
    %420 = vector.extract_strided_slice %400 {offsets = [0, 64], sizes = [16, 32], strides = [1, 1]} : vector<16x96xf32> to vector<16x32xf32>
    %421 = vector.extract_strided_slice %403 {offsets = [0, 64], sizes = [16, 32], strides = [1, 1]} : vector<16x96xf32> to vector<16x32xf32>
    %422 = arith.addf %421, %34 : vector<16x32xf32>
    %423 = arith.mulf %411, %422 : vector<16x32xf32>
    %424 = arith.addf %420, %423 : vector<16x32xf32>
    %425 = math.tanh %424 : vector<16x32xf32>
    %426 = arith.subf %397, %425 : vector<16x32xf32>
    %427 = arith.mulf %419, %426 : vector<16x32xf32>
    %428 = arith.addf %427, %425 : vector<16x32xf32>
    %429 = vector.broadcast %396 : i32 to vector<16x1xi32>
    %430 = arith.cmpi slt, %429, %30 : vector<16x1xi32>
    %431 = vector.shape_cast %430 : vector<16x1xi1> to vector<16x1xi1>
    %432 = vector.broadcast %431 : vector<16x1xi1> to vector<16x32xi1>
    %433 = arith.select %432, %428, %397 : vector<16x32xi1>, vector<16x32xf32>
    %c0_168 = arith.constant 0 : index
    %c0_169 = arith.constant 0 : index
    %434 = vector.load %arg10[%c0_168, %c0_169] : memref<16x32xf32, #tpu.memory_space<vmem>>, vector<16x32xf32>
    tpu.vector_store %arg10[%c0_168, %c0_169], %433 {strides = array<i32>} : memref<16x32xf32, #tpu.memory_space<vmem>>, vector<16x32xf32>,
    %cst_170 = arith.constant 0.000000e+00 : f32
    %435 = vector.shape_cast %430 : vector<16x1xi1> to vector<16x1xi1>
    %436 = vector.broadcast %435 : vector<16x1xi1> to vector<16x32xi1>
    %437 = vector.broadcast %cst_170 : f32 to vector<16x32xf32>
    %438 = arith.select %436, %433, %437 : vector<16x32xi1>, vector<16x32xf32>
    %c0_171 = arith.constant 0 : index
    %439 = arith.index_cast %396 : i32 to index
    %c0_172 = arith.constant 0 : index
    %c0_173 = arith.constant 0 : index
    %440 = vector.load %arg8[%c0_171, %439, %c0_172, %c0_173] : memref<1x8x16x32xf32, #tpu.memory_space<vmem>>, vector<1x1x16x32xf32>
    %441 = vector.shape_cast %440 : vector<1x1x16x32xf32> to vector<16x32xf32>
    %442 = vector.shape_cast %438 : vector<16x32xf32> to vector<1x1x16x32xf32>
    tpu.vector_store %arg8[%c0_171, %439, %c0_172, %c0_173], %442 {strides = array<i32>} : memref<1x8x16x32xf32, #tpu.memory_space<vmem>>, vector<1x1x16x32xf32>,
    %c8_i32_174 = arith.constant 8 : i32
    %c1_i32_175 = arith.constant 1 : i32
    %443 = arith.cmpi eq, %arg1, %c1_i32_175 : i32
    %444 = arith.extui %443 : i1 to i32
    %c0_i32_176 = arith.constant 0 : i32
    %445 = arith.cmpi ne, %444, %c0_i32_176 : i32
    scf.if %445 {
      %c0_177 = arith.constant 0 : index
      %c0_178 = arith.constant 0 : index
      %446 = vector.load %arg10[%c0_177, %c0_178] : memref<16x32xf32, #tpu.memory_space<vmem>>, vector<16x32xf32>
      %c0_179 = arith.constant 0 : index
      %c0_180 = arith.constant 0 : index
      %c0_181 = arith.constant 0 : index
      %447 = vector.load %arg9[%c0_179, %c0_180, %c0_181] : memref<1x16x32xf32, #tpu.memory_space<vmem>>, vector<1x16x32xf32>
      %448 = vector.shape_cast %447 : vector<1x16x32xf32> to vector<16x32xf32>
      %449 = vector.shape_cast %446 : vector<16x32xf32> to vector<1x16x32xf32>
      tpu.vector_store %arg9[%c0_179, %c0_180, %c0_181], %449 {strides = array<i32>} : memref<1x16x32xf32, #tpu.memory_space<vmem>>, vector<1x16x32xf32>,
    } else {
    }
    return
  }
  func.func @transform_0(%arg0: i32, %arg1: i32) -> (i32, i32, i32, i32) {
    %c1_i32 = arith.constant 1 : i32
    %0 = arith.subi %c1_i32, %arg0 : i32
    %1 = arith.muli %arg1, %0 : i32
    %c1_i32_0 = arith.constant 1 : i32
    %2 = arith.subi %c1_i32_0, %arg1 : i32
    %3 = arith.muli %2, %arg0 : i32
    %4 = arith.addi %1, %3 : i32
    %c0_i32 = arith.constant 0 : i32
    %c0_i32_1 = arith.constant 0 : i32
    %c0_i32_2 = arith.constant 0 : i32
    %c0_i32_3 = arith.constant 0 : i32
    return %c0_i32, %4, %c0_i32_1, %c0_i32_2 : i32, i32, i32, i32
  }
  func.func @transform_1(%arg0: i32, %arg1: i32) -> (i32, i32, i32, i32) {
    %c0_i32 = arith.constant 0 : i32
    %c0_i32_0 = arith.constant 0 : i32
    %c0_i32_1 = arith.constant 0 : i32
    %c0_i32_2 = arith.constant 0 : i32
    return %arg0, %c0_i32, %c0_i32_0, %c0_i32_1 : i32, i32, i32, i32
  }
  func.func @transform_2(%arg0: i32, %arg1: i32) -> (i32, i32, i32) {
    %c0_i32 = arith.constant 0 : i32
    %c0_i32_0 = arith.constant 0 : i32
    %c0_i32_1 = arith.constant 0 : i32
    return %arg0, %c0_i32, %c0_i32_0 : i32, i32, i32
  }
  func.func @transform_3(%arg0: i32, %arg1: i32) -> (i32, i32, i32) {
    %c0_i32 = arith.constant 0 : i32
    %c0_i32_0 = arith.constant 0 : i32
    %c0_i32_1 = arith.constant 0 : i32
    return %arg0, %c0_i32, %c0_i32_0 : i32, i32, i32
  }
  func.func @transform_4(%arg0: i32, %arg1: i32) -> (i32, i32, i32) {
    %c0_i32 = arith.constant 0 : i32
    %c0_i32_0 = arith.constant 0 : i32
    %c0_i32_1 = arith.constant 0 : i32
    return %arg0, %c0_i32, %c0_i32_0 : i32, i32, i32
  }
  func.func @transform_5(%arg0: i32, %arg1: i32) -> (i32, i32) {
    %c0_i32 = arith.constant 0 : i32
    %c0_i32_0 = arith.constant 0 : i32
    %c0_i32_1 = arith.constant 0 : i32
    return %c0_i32, %c0_i32_0 : i32, i32
  }
  func.func @transform_6(%arg0: i32, %arg1: i32) -> (i32, i32, i32, i32) {
    %c1_i32 = arith.constant 1 : i32
    %0 = arith.subi %c1_i32, %arg0 : i32
    %1 = arith.muli %arg1, %0 : i32
    %c1_i32_0 = arith.constant 1 : i32
    %2 = arith.subi %c1_i32_0, %arg1 : i32
    %3 = arith.muli %2, %arg0 : i32
    %4 = arith.addi %1, %3 : i32
    %c0_i32 = arith.constant 0 : i32
    %c0_i32_1 = arith.constant 0 : i32
    %c0_i32_2 = arith.constant 0 : i32
    return %arg0, %4, %c0_i32, %c0_i32_1 : i32, i32, i32, i32
  }
  func.func @transform_7(%arg0: i32, %arg1: i32) -> (i32, i32, i32) {
    %c0_i32 = arith.constant 0 : i32
    %c0_i32_0 = arith.constant 0 : i32
    %c0_i32_1 = arith.constant 0 : i32
    return %arg0, %c0_i32, %c0_i32_0 : i32, i32, i32
  }
}

</mosaic_0001>

<llo_original>
// kernel: gru_encoder_forward.3
$region0: #{gru_encoder_forward.3}
  #allocation0 [shape = 'u32[]', space=smem, size = 0x4, offset = 0x4, fixed_abs, tag = 'smem constant byte address 0x4 - core index']
  #allocation1 [shape = 'u32[144,128]{1,0:T(1,128)}', space=vmem, size = 0x12000, scoped, tag = 'internal scratch']
  #allocation2 [shape = 'f32[16,32]{1,0:T(8,128)}', space=vmem, size = 0x2000, scoped, tag = 'scratch operand']
  #allocation3 [shape = 'f32[8,16,96]{2,1,0:T(8,128)}', space=vmem, size = 0x10000, scoped, tag = 'scratch operand']
  %s0 = inlined_call_operand.vmem [shape: f32[1,16,16,16], index: 0, kind: input, shape index: {}]
  %s1 = inlined_call_operand.vmem [shape: f32[2,1,16,96], index: 1, kind: input, shape index: {}]
  %s2 = inlined_call_operand.vmem [shape: f32[2,1,96], index: 2, kind: input, shape index: {}]
  %s3 = inlined_call_operand.vmem [shape: f32[2,32,96], index: 3, kind: input, shape index: {}]
  %s4 = inlined_call_operand.vmem [shape: f32[2,1,32], index: 4, kind: input, shape index: {}]
  %s5 = inlined_call_operand.vmem [shape: s32[16,1], index: 5, kind: input, shape index: {}]
  %s6 = inlined_call_operand.vmem [shape: f32[2,16,16,32], index: 6, kind: output, shape index: {0}]
  %s7 = inlined_call_operand.vmem [shape: f32[2,16,32], index: 7, kind: output, shape index: {1}]
  %8 = xla_tuple %s6, %s7
  %s9 = sld [smem:[#allocation0]]
  $region73: #{gru_encoder_forward.3} parent=0
    _
  %s11 = ssub.s32 1, %s9
  %s12 = scalar_select 0, %s11, %s9
  loop: start=0, step=1, limit=6
  $region2: #{gru_encoder_forward.3} parent=0 // loop_pre_header
    _
  $region3: #{gru_encoder_forward.3} parent=0 // loop_header
    %s14 = sphi 0, %s18
    %p15 = scmp.ge.s32.totalorder %s14, 6
    %s21 = sphi 0, %s33
    %s22 = sphi 0, %s29
    %s23 = sphi 0, %s21
    %s24 = sphi 0, %s22
    %s25 = sphi 0, %s23
    %s26 = sphi 0, %s24
    %s46 = sphi 0, %s48
    %s49 = sphi 0, %s46
    %s50 = sphi 0, %s49
    %s66 = sphi 0, %s50
    %s72 = sphi 0, %s74
    %s75 = sphi 0, %s72
    %s76 = sphi 0, %s75
    %s92 = sphi 0, %s76
    %s98 = sphi 0, %s100
    %s101 = sphi 0, %s98
    %s102 = sphi 0, %s101
    %s118 = sphi 0, %s102
    %s124 = sphi 0, %s126
    %s127 = sphi 0, %s124
    %s128 = sphi 0, %s127
    %s144 = sphi 0, %s128
    %s150 = sphi 0, %s152
    %s153 = sphi 0, %s150
    %s154 = sphi 0, %s153
    %s170 = sphi 0, %s154
    %s174 = sphi 0, %s174
    %s176 = sphi 0, %s174
    %s177 = sphi 0, %s176
    %s191 = sphi 0, %s177
    %s209 = sphi 0, %s211
    %s212 = sphi 0, %s209
    %s213 = sphi 0, %s212
    %s229 = sphi 0, %s213
    %s235 = sphi 0, %s237
    %s238 = sphi 0, %s235
    %s239 = sphi 0, %s238
    %s255 = sphi 0, %s239
  $region4: #{gru_encoder_forward.3} parent=0 // loop_header_branch
    %17 = sbr.rel (%p15) target = $region8
  $region5: #{gru_encoder_forward.3} parent=0 // loop_body
    %s19 = ssub.s32 %s14, 1
    %s20 = ssub.s32 %s14, 2
    %s27 = sadd.s32 1, %s22
    %p28 = scmp.ge.s32.totalorder %s27, 2
    %s29 = scalar_select %p28, 0, %s27
    %s30 = sadd.s32 1, %s21
    %s31 = scalar_select %p28, %s30, %s21
    %p32 = scmp.ge.s32.totalorder %s31, 2
    %s33 = scalar_select %p32, 0, %s31
    %s34 = ssub.s32 1, %s21
    %s35 = smul.u32 %s22, %s34
    %s36 = ssub.s32 1, %s22
    %s37 = smul.u32 %s36, %s21
    %s38 = sadd.s32 %s35, %s37
    %s39 = ssub.s32 1, %s33
    %s40 = smul.u32 %s29, %s39
    %s41 = ssub.s32 1, %s29
    %s42 = smul.u32 %s41, %s33
    %s43 = sadd.s32 %s40, %s42
    %s44 = ssub.s32 %s38, %s43
    %p45 = scmp.eq.s32.totalorder %s44, 0
    %s47 = sadd.s32 %s46, 1
    %s48 = scalar_select %p45, %s46, %s47
    %p51 = pneg %p45
    %p52 = scmp.eq.s32.totalorder %s14, 3
    %p53 = por %p51, %p52
    %p54 = scmp.ne.s32.totalorder %s46, %s49
    %p55 = scmp.eq.s32.totalorder %s14, 0
    %p56 = por %p54, %p55
    %p57 = scmp.ne.s32.totalorder %s46, %s49
    %p58 = scmp.eq.s32.totalorder %s19, 3
    %p59 = por %p57, %p58
    %p60 = scmp.ne.s32.totalorder %s49, %s50
    %p61 = scmp.eq.s32.totalorder %s19, 0
    %p62 = por %p60, %p61
    %p63 = scmp.ne.s32.totalorder %s49, %s50
    %p64 = scmp.eq.s32.totalorder %s20, 3
    %p65 = por %p63, %p64
    %p67 = scmp.ne.s32.totalorder %s50, %s66
    %p68 = scmp.eq.s32.totalorder %s20, 0
    %p69 = por %p67, %p68
    %s70 = ssub.s32 %s21, %s33
    %p71 = scmp.eq.s32.totalorder %s70, 0
    %s73 = sadd.s32 %s72, 1
    %s74 = scalar_select %p71, %s72, %s73
    %p77 = pneg %p71
    %p78 = scmp.eq.s32.totalorder %s14, 3
    %p79 = por %p77, %p78
    %p80 = scmp.ne.s32.totalorder %s72, %s75
    %p81 = scmp.eq.s32.totalorder %s14, 0
    %p82 = por %p80, %p81
    %p83 = scmp.ne.s32.totalorder %s72, %s75
    %p84 = scmp.eq.s32.totalorder %s19, 3
    %p85 = por %p83, %p84
    %p86 = scmp.ne.s32.totalorder %s75, %s76
    %p87 = scmp.eq.s32.totalorder %s19, 0
    %p88 = por %p86, %p87
    %p89 = scmp.ne.s32.totalorder %s75, %s76
    %p90 = scmp.eq.s32.totalorder %s20, 3
    %p91 = por %p89, %p90
    %p93 = scmp.ne.s32.totalorder %s76, %s92
    %p94 = scmp.eq.s32.totalorder %s20, 0
    %p95 = por %p93, %p94
    %s96 = ssub.s32 %s21, %s33
    %p97 = scmp.eq.s32.totalorder %s96, 0
    %s99 = sadd.s32 %s98, 1
    %s100 = scalar_select %p97, %s98, %s99
    %p103 = pneg %p97
    %p104 = scmp.eq.s32.totalorder %s14, 3
    %p105 = por %p103, %p104
    %p106 = scmp.ne.s32.totalorder %s98, %s101
    %p107 = scmp.eq.s32.totalorder %s14, 0
    %p108 = por %p106, %p107
    %p109 = scmp.ne.s32.totalorder %s98, %s101
    %p110 = scmp.eq.s32.totalorder %s19, 3
    %p111 = por %p109, %p110
    %p112 = scmp.ne.s32.totalorder %s101, %s102
    %p113 = scmp.eq.s32.totalorder %s19, 0
    %p114 = por %p112, %p113
    %p115 = scmp.ne.s32.totalorder %s101, %s102
    %p116 = scmp.eq.s32.totalorder %s20, 3
    %p117 = por %p115, %p116
    %p119 = scmp.ne.s32.totalorder %s102, %s118
    %p120 = scmp.eq.s32.totalorder %s20, 0
    %p121 = por %p119, %p120
    %s122 = ssub.s32 %s21, %s33
    %p123 = scmp.eq.s32.totalorder %s122, 0
    %s125 = sadd.s32 %s124, 1
    %s126 = scalar_select %p123, %s124, %s125
    %p129 = pneg %p123
    %p130 = scmp.eq.s32.totalorder %s14, 3
    %p131 = por %p129, %p130
    %p132 = scmp.ne.s32.totalorder %s124, %s127
    %p133 = scmp.eq.s32.totalorder %s14, 0
    %p134 = por %p132, %p133
    %p135 = scmp.ne.s32.totalorder %s124, %s127
    %p136 = scmp.eq.s32.totalorder %s19, 3
    %p137 = por %p135, %p136
    %p138 = scmp.ne.s32.totalorder %s127, %s128
    %p139 = scmp.eq.s32.totalorder %s19, 0
    %p140 = por %p138, %p139
    %p141 = scmp.ne.s32.totalorder %s127, %s128
    %p142 = scmp.eq.s32.totalorder %s20, 3
    %p143 = por %p141, %p142
    %p145 = scmp.ne.s32.totalorder %s128, %s144
    %p146 = scmp.eq.s32.totalorder %s20, 0
    %p147 = por %p145, %p146
    %s148 = ssub.s32 %s21, %s33
    %p149 = scmp.eq.s32.totalorder %s148, 0
    %s151 = sadd.s32 %s150, 1
    %s152 = scalar_select %p149, %s150, %s151
    %p155 = pneg %p149
    %p156 = scmp.eq.s32.totalorder %s14, 3
    %p157 = por %p155, %p156
    %p158 = scmp.ne.s32.totalorder %s150, %s153
    %p159 = scmp.eq.s32.totalorder %s14, 0
    %p160 = por %p158, %p159
    %p161 = scmp.ne.s32.totalorder %s150, %s153
    %p162 = scmp.eq.s32.totalorder %s19, 3
    %p163 = por %p161, %p162
    %p164 = scmp.ne.s32.totalorder %s153, %s154
    %p165 = scmp.eq.s32.totalorder %s19, 0
    %p166 = por %p164, %p165
    %p167 = scmp.ne.s32.totalorder %s153, %s154
    %p168 = scmp.eq.s32.totalorder %s20, 3
    %p169 = por %p167, %p168
    %p171 = scmp.ne.s32.totalorder %s154, %s170
    %p172 = scmp.eq.s32.totalorder %s20, 0
    %p173 = por %p171, %p172
    %s175 = sadd.s32 %s174, 1
    %p178 = scmp.eq.s32.totalorder %s14, 3
    %p179 = scmp.ne.s32.totalorder %s174, %s176
    %p180 = scmp.eq.s32.totalorder %s14, 0
    %p181 = por %p179, %p180
    %p182 = scmp.ne.s32.totalorder %s174, %s176
    %p183 = scmp.eq.s32.totalorder %s19, 3
    %p184 = por %p182, %p183
    %p185 = scmp.ne.s32.totalorder %s176, %s177
    %p186 = scmp.eq.s32.totalorder %s19, 0
    %p187 = por %p185, %p186
    %p188 = scmp.ne.s32.totalorder %s176, %s177
    %p189 = scmp.eq.s32.totalorder %s20, 3
    %p190 = por %p188, %p189
    %p192 = scmp.ne.s32.totalorder %s177, %s191
    %p193 = scmp.eq.s32.totalorder %s20, 0
    %p194 = por %p192, %p193
    %s195 = ssub.s32 1, %s21
    %s196 = smul.u32 %s22, %s195
    %s197 = ssub.s32 1, %s22
    %s198 = smul.u32 %s197, %s21
    %s199 = sadd.s32 %s196, %s198
    %s200 = ssub.s32 1, %s33
    %s201 = smul.u32 %s29, %s200
    %s202 = ssub.s32 1, %s29
    %s203 = smul.u32 %s202, %s33
    %s204 = sadd.s32 %s201, %s203
    %s205 = ssub.s32 %s21, %s33
    %s206 = ssub.s32 %s199, %s204
    %s207 = sor.u32 %s205, %s206
    %p208 = scmp.eq.s32.totalorder %s207, 0
    %s210 = sadd.s32 %s209, 1
    %s211 = scalar_select %p208, %s209, %s210
    %p214 = pneg %p208
    %p215 = scmp.eq.s32.totalorder %s14, 3
    %p216 = por %p214, %p215
    %p217 = scmp.ne.s32.totalorder %s209, %s212
    %p218 = scmp.eq.s32.totalorder %s14, 0
    %p219 = por %p217, %p218
    %p220 = scmp.ne.s32.totalorder %s209, %s212
    %p221 = scmp.eq.s32.totalorder %s19, 3
    %p222 = por %p220, %p221
    %p223 = scmp.ne.s32.totalorder %s212, %s213
    %p224 = scmp.eq.s32.totalorder %s19, 0
    %p225 = por %p223, %p224
    %p226 = scmp.ne.s32.totalorder %s212, %s213
    %p227 = scmp.eq.s32.totalorder %s20, 3
    %p228 = por %p226, %p227
    %p230 = scmp.ne.s32.totalorder %s213, %s229
    %p231 = scmp.eq.s32.totalorder %s20, 0
    %p232 = por %p230, %p231
    %s233 = ssub.s32 %s21, %s33
    %p234 = scmp.eq.s32.totalorder %s233, 0
    %s236 = sadd.s32 %s235, 1
    %s237 = scalar_select %p234, %s235, %s236
    %p240 = pneg %p234
    %p241 = scmp.eq.s32.totalorder %s14, 3
    %p242 = por %p240, %p241
    %p243 = scmp.ne.s32.totalorder %s235, %s238
    %p244 = scmp.eq.s32.totalorder %s14, 0
    %p245 = por %p243, %p244
    %p246 = scmp.ne.s32.totalorder %s235, %s238
    %p247 = scmp.eq.s32.totalorder %s19, 3
    %p248 = por %p246, %p247
    %p249 = scmp.ne.s32.totalorder %s238, %s239
    %p250 = scmp.eq.s32.totalorder %s19, 0
    %p251 = por %p249, %p250
    %p252 = scmp.ne.s32.totalorder %s238, %s239
    %p253 = scmp.eq.s32.totalorder %s20, 3
    %p254 = por %p252, %p253
    %p256 = scmp.ne.s32.totalorder %s239, %s255
    %p257 = scmp.eq.s32.totalorder %s20, 0
    %p258 = por %p256, %p257
    %p259 = scmp.le.s32.totalorder 1, %s14
    %p260 = scmp.lt.s32.totalorder %s14, 5
    %p261 = pnand %p259, %p260
    %p262 = pneg %p261
    // Predicated region
    $region9: #{gru_encoder_forward.3} parent=5 // pred_check
      _
    $region10: #{gru_encoder_forward.3} parent=5 // pred_check_branch
      %264 = sbr.rel (%p261) target = $region12
    $region11: #{gru_encoder_forward.3} parent=5 // pred_region
      %s265 = ssub.s32 %s14, 1
      // Predicated region
      $region13: #{gru_encoder_forward.3} parent=11 // pred_check
        %p266 = pneg %p88
      $region14: #{gru_encoder_forward.3} parent=11 // pred_check_branch
        %268 = sbr.rel (%p266) target = $region16
      $region15: #{gru_encoder_forward.3} parent=11 // pred_region
        %p269 = scmp.lt.s32.totalorder %s23, 1
        %s270 = scalar_select %p269, %s23, 1
        %s271 = smul.addr %s270, 2
        %s272 = smul.addr %s271, 8
        %s273 = scalar_lea.vmem %s1, %s272
      $region16: #{gru_encoder_forward.3} parent=11 // pred_fallthru
        _
      // Predicated region
      $region17: #{gru_encoder_forward.3} parent=11 // pred_check
        %p274 = pneg %p114
      $region18: #{gru_encoder_forward.3} parent=11 // pred_check_branch
        %276 = sbr.rel (%p274) target = $region20
      $region19: #{gru_encoder_forward.3} parent=11 // pred_region
        %p277 = scmp.lt.s32.totalorder %s23, 1
        %s278 = scalar_select %p277, %s23, 1
        %s279 = scalar_lea.vmem %s2, %s278
      $region20: #{gru_encoder_forward.3} parent=11 // pred_fallthru
        _
      // Predicated region
      $region21: #{gru_encoder_forward.3} parent=11 // pred_check
        %p280 = pneg %p140
      $region22: #{gru_encoder_forward.3} parent=11 // pred_check_branch
        %282 = sbr.rel (%p280) target = $region24
      $region23: #{gru_encoder_forward.3} parent=11 // pred_region
        %p283 = scmp.lt.s32.totalorder %s23, 1
        %s284 = scalar_select %p283, %s23, 1
        %s285 = smul.addr %s284, 4
        %s286 = smul.addr %s285, 8
        %s287 = scalar_lea.vmem %s3, %s286
      $region24: #{gru_encoder_forward.3} parent=11 // pred_fallthru
        _
      // Predicated region
      $region25: #{gru_encoder_forward.3} parent=11 // pred_check
        %p288 = pneg %p166
      $region26: #{gru_encoder_forward.3} parent=11 // pred_check_branch
        %290 = sbr.rel (%p288) target = $region28
      $region27: #{gru_encoder_forward.3} parent=11 // pred_region
        %p291 = scmp.lt.s32.totalorder %s23, 1
        %s292 = scalar_select %p291, %s23, 1
        %s293 = scalar_lea.vmem %s4, %s292
      $region28: #{gru_encoder_forward.3} parent=11 // pred_fallthru
        _
      // Predicated region
      $region29: #{gru_encoder_forward.3} parent=11 // pred_check
        %p294 = pneg %p187
      $region30: #{gru_encoder_forward.3} parent=11 // pred_check_branch
        %296 = sbr.rel (%p294) target = $region32
      $region31: #{gru_encoder_forward.3} parent=11 // pred_region
        _
      $region32: #{gru_encoder_forward.3} parent=11 // pred_fallthru
        _
    $region12: #{gru_encoder_forward.3} parent=5 // pred_fallthru
      _
    %p297 = scmp.lt.s32.totalorder %s14, 4
    // Predicated region
    $region33: #{gru_encoder_forward.3} parent=5 // pred_check
      %p298 = pneg %p297
    $region34: #{gru_encoder_forward.3} parent=5 // pred_check_branch
      %300 = sbr.rel (%p298) target = $region36
    $region35: #{gru_encoder_forward.3} parent=5 // pred_region
      // Predicated region
      $region37: #{gru_encoder_forward.3} parent=35 // pred_check
        %p301 = pneg %p56
      $region38: #{gru_encoder_forward.3} parent=35 // pred_check_branch
        %303 = sbr.rel (%p301) target = $region40
      $region39: #{gru_encoder_forward.3} parent=35 // pred_region
        %s304 = ssub.s32 1, %s21
        %s305 = smul.u32 %s22, %s304
        %s306 = ssub.s32 1, %s22
        %s307 = smul.u32 %s306, %s21
        %s308 = sadd.s32 %s305, %s307
        %s309 = smul.u32 8, %s308
        %p310 = scmp.lt.s32.totalorder %s309, 15
        %s311 = scalar_select %p310, %s309, 15
        %s312 = smul.addr %s311, 2
        %s313 = smul.addr %s312, 8
        %s314 = scalar_lea.vmem %s0, %s313
        %s315 = ssub.s32 1, %s21
        %s316 = smul.u32 %s22, %s315
        %s317 = ssub.s32 1, %s22
        %s318 = smul.u32 %s317, %s21
        %s319 = sadd.s32 %s316, %s318
        %s320 = smul.u32 8, %s319
      $region40: #{gru_encoder_forward.3} parent=35 // pred_fallthru
        _
    $region36: #{gru_encoder_forward.3} parent=5 // pred_fallthru
      _
    %p321 = scmp.le.s32.totalorder 1, %s14
    %p322 = scmp.lt.s32.totalorder %s14, 5
    %p323 = pnand %p321, %p322
    %p324 = pneg %p323
    // Predicated region
    $region41: #{gru_encoder_forward.3} parent=5 // pred_check
      _
    $region42: #{gru_encoder_forward.3} parent=5 // pred_check_branch
      %326 = sbr.rel (%p323) target = $region44
    $region43: #{gru_encoder_forward.3} parent=5 // pred_region
      %s327 = ssub.s32 %s14, 1
      %s328 = ssub.s32 1, %s23
      %s329 = smul.u32 %s24, %s328
      %s330 = ssub.s32 1, %s24
      %s331 = smul.u32 %s330, %s23
      %s332 = sadd.s32 %s329, %s331
      %s333 = smul.u32 8, %s332
      %p334 = scmp.lt.s32.totalorder %s333, 15
      %s335 = scalar_select %p334, %s333, 15
      %s336 = smul.addr %s335, 2
      %s337 = smul.addr %s336, 8
      %s338 = scalar_lea.vmem %s0, %s337
      %p339 = pneg %p62
      %p340 = pneg %p59
      %p341 = scmp.lt.s32.totalorder %s23, 1
      %s342 = scalar_select %p341, %s23, 1
      %s343 = smul.addr %s342, 2
      %s344 = smul.addr %s343, 8
      %s345 = scalar_lea.vmem %s1, %s344
      %p346 = pneg %p88
      %p347 = pneg %p85
      %p348 = scmp.lt.s32.totalorder %s23, 1
      %s349 = scalar_select %p348, %s23, 1
      %s350 = scalar_lea.vmem %s2, %s349
      %p351 = pneg %p114
      %p352 = pneg %p111
      %p353 = scmp.lt.s32.totalorder %s23, 1
      %s354 = scalar_select %p353, %s23, 1
      %s355 = smul.addr %s354, 4
      %s356 = smul.addr %s355, 8
      %s357 = scalar_lea.vmem %s3, %s356
      %p358 = pneg %p140
      %p359 = pneg %p137
      %p360 = scmp.lt.s32.totalorder %s23, 1
      %s361 = scalar_select %p360, %s23, 1
      %s362 = scalar_lea.vmem %s4, %s361
      %p363 = pneg %p166
      %p364 = pneg %p163
      %p365 = pneg %p187
      %p366 = pneg %p184
      %p367 = pneg %p225
      %p368 = pneg %p222
      %s369 = ssub.s32 1, %s23
      %s370 = smul.u32 %s24, %s369
      %s371 = ssub.s32 1, %s24
      %s372 = smul.u32 %s371, %s23
      %s373 = sadd.s32 %s370, %s372
      %s374 = smul.u32 8, %s373
      %p375 = scmp.lt.s32.totalorder %s23, 1
      %s376 = scalar_select %p375, %s23, 1
      %p377 = scmp.lt.s32.totalorder %s374, 15
      %s378 = scalar_select %p377, %s374, 15
      %s379 = smul.addr %s378, 2
      %s380 = smul.addr %s376, 32
      %s381 = sadd.s32 %s379, %s380
      %s382 = smul.addr %s381, 8
      %s383 = scalar_lea.vmem %s6, %s382
      %p384 = pneg %p251
      %p385 = pneg %p248
      %p386 = scmp.lt.s32.totalorder %s23, 1
      %s387 = scalar_select %p386, %s23, 1
      %s388 = smul.addr %s387, 2
      %s389 = smul.addr %s388, 8
      %s390 = scalar_lea.vmem %s7, %s389
      %s391 = ssub.s32 1, %s23
      %s392 = smul.u32 %s24, %s391
      %s393 = ssub.s32 1, %s24
      %s394 = smul.u32 %s393, %s23
      %s395 = sadd.s32 %s392, %s394
      %s396 = smul.u32 8, %s395
      %p397 = scmp.lt.s32.totalorder %s396, 15
      %s398 = scalar_select %p397, %s396, 15
      %s399 = smul.addr %s398, 2
      %s400 = smul.addr %s399, 8
      %s401 = scalar_lea.vmem %s0, %s400
      %s402 = ssub.s32 1, %s23
      %s403 = smul.u32 %s24, %s402
      %s404 = ssub.s32 1, %s24
      %s405 = smul.u32 %s404, %s23
      %s406 = sadd.s32 %s403, %s405
      %s407 = smul.u32 8, %s406
      %p408 = scmp.lt.s32.totalorder %s23, 1
      %s409 = scalar_select %p408, %s23, 1
      %s410 = smul.addr %s409, 2
      %s411 = smul.addr %s410, 8
      %s412 = scalar_lea.vmem %s1, %s411
      %p413 = scmp.lt.s32.totalorder %s23, 1
      %s414 = scalar_select %p413, %s23, 1
      %s415 = scalar_lea.vmem %s2, %s414
      %p416 = scmp.lt.s32.totalorder %s23, 1
      %s417 = scalar_select %p416, %s23, 1
      %s418 = smul.addr %s417, 4
      %s419 = smul.addr %s418, 8
      %s420 = scalar_lea.vmem %s3, %s419
      %p421 = scmp.lt.s32.totalorder %s23, 1
      %s422 = scalar_select %p421, %s23, 1
      %s423 = scalar_lea.vmem %s4, %s422
      %s424 = ssub.s32 1, %s23
      %s425 = smul.u32 %s24, %s424
      %s426 = ssub.s32 1, %s24
      %s427 = smul.u32 %s426, %s23
      %s428 = sadd.s32 %s425, %s427
      %s429 = smul.u32 8, %s428
      %p430 = scmp.lt.s32.totalorder %s23, 1
      %s431 = scalar_select %p430, %s23, 1
      %p432 = scmp.lt.s32.totalorder %s429, 15
      %s433 = scalar_select %p432, %s429, 15
      %s434 = smul.addr %s433, 2
      %s435 = smul.addr %s431, 32
      %s436 = sadd.s32 %s434, %s435
      %s437 = smul.addr %s436, 8
      %s438 = scalar_lea.vmem %s6, %s437
      %s439 = ssub.s32 1, %s23
      %s440 = smul.u32 %s24, %s439
      %s441 = ssub.s32 1, %s24
      %s442 = smul.u32 %s441, %s23
      %s443 = sadd.s32 %s440, %s442
      %s444 = smul.u32 8, %s443
      %p445 = scmp.lt.s32.totalorder %s23, 1
      %s446 = scalar_select %p445, %s23, 1
      %s447 = smul.addr %s446, 2
      %s448 = smul.addr %s447, 8
      %s449 = scalar_lea.vmem %s7, %s448
      %p450 = scmp.eq.s32.totalorder %s24, 0
      // Predicated region
      $region45: #{gru_encoder_forward.3} parent=43 // pred_check
        %p451 = pneg %p450
      $region46: #{gru_encoder_forward.3} parent=43 // pred_check_branch
        %453 = sbr.rel (%p451) target = $region48
      $region47: #{gru_encoder_forward.3} parent=43 // pred_region
        %vm454 = vcmask 261120
        %455 = vst.msk [vmem:[#allocation2] sm:$0xff] %vm454, 0.0
        %456 = vst.msk [vmem:[#allocation2 + $0x8] sm:$0xff] %vm454, 0.0
      $region48: #{gru_encoder_forward.3} parent=43 // pred_fallthru
        _
      %v457 = vld [vmem:[%s401] sm:$0xff]
      %v458 = vld [vmem:[%s401 + $0x8] sm:$0xff]
      %v459 = vld [vmem:[%s401 + $0x10] sm:$0xff]
      %v460 = vld [vmem:[%s401 + $0x18] sm:$0xff]
      %v461 = vld [vmem:[%s401 + $0x20] sm:$0xff]
      %v462 = vld [vmem:[%s401 + $0x28] sm:$0xff]
      %v463 = vld [vmem:[%s401 + $0x30] sm:$0xff]
      %v464 = vld [vmem:[%s401 + $0x38] sm:$0xff]
      %v465 = vld [vmem:[%s401 + $0x40] sm:$0xff]
      %v466 = vld [vmem:[%s401 + $0x48] sm:$0xff]
      %v467 = vld [vmem:[%s401 + $0x50] sm:$0xff]
      %v468 = vld [vmem:[%s401 + $0x58] sm:$0xff]
      %v469 = vld [vmem:[%s401 + $0x60] sm:$0xff]
      %v470 = vld [vmem:[%s401 + $0x68] sm:$0xff]
      %v471 = vld [vmem:[%s401 + $0x70] sm:$0xff]
      %v472 = vld [vmem:[%s401 + $0x78] sm:$0xff]
      %v473 = vld [vmem:[%s412] sm:$0xff]
      %v474 = vld [vmem:[%s412 + $0x8] sm:$0xff]
      %v475 = vld [vmem:[%s415] sm:$0x1]
      %v477 = vlaneseq
      %v478 = vshrl.u32 %v477, 7
      %v479 = vsub.s32 0, %v478
      %v480 = vrot.slane %v475, %v479
      %vm482 = vcmask 130048
      %v484 = vsel %vm482, %v457, 0
      %v487 = vsel %vm482, %v458, 0
      %v490 = vsel %vm482, %v459, 0
      %v493 = vsel %vm482, %v460, 0
      %v496 = vsel %vm482, %v461, 0
      %v499 = vsel %vm482, %v462, 0
      %v502 = vsel %vm482, %v463, 0
      %v505 = vsel %vm482, %v464, 0
      %v508 = vsel %vm482, %v465, 0
      %v511 = vsel %vm482, %v466, 0
      %v514 = vsel %vm482, %v467, 0
      %v517 = vsel %vm482, %v468, 0
      %v520 = vsel %vm482, %v469, 0
      %v523 = vsel %vm482, %v470, 0
      %v526 = vsel %vm482, %v471, 0
      %v529 = vsel %vm482, %v472, 0
      %531 = vmatprep.subr.mxu0 0.0
      %532 = vmatpush1.msra.mxu0 %v473
      %533 = vmatprep.subr.mxu0 0.0
      %534 = vmatpush1.msra.mxu0 %v474
      %535 = vmatprep.subr.mxu0 0.0
      %536 = vmatpush1.msra.mxu0 0.0
      %537 = vmatprep.subr.mxu0 0.0
      %538 = vmatpush1.msra.mxu0 0.0
      %539 = vmatprep.subr.mxu0 0.0
      %540 = vmatpush1.msra.mxu0 0.0
      %541 = vmatprep.subr.mxu0 0.0
      %542 = vmatpush1.msra.mxu0 0.0
      %543 = vmatprep.subr.mxu0 0.0
      %544 = vmatpush1.msra.mxu0 0.0
      %545 = vmatprep.subr.mxu0 0.0
      %546 = vmatpush1.msra.mxu0 0.0
      %547 = vmatprep.subr.mxu0 0.0
      %548 = vmatpush1.msra.mxu0 0.0
      %549 = vmatprep.subr.mxu0 0.0
      %550 = vmatpush1.msra.mxu0 0.0
      %551 = vmatprep.subr.mxu0 0.0
      %552 = vmatpush1.msra.mxu0 0.0
      %553 = vmatprep.subr.mxu0 0.0
      %554 = vmatpush1.msra.mxu0 0.0
      %555 = vmatprep.subr.mxu0 0.0
      %556 = vmatpush1.msra.mxu0 0.0
      %557 = vmatprep.subr.mxu0 0.0
      %558 = vmatpush1.msra.mxu0 0.0
      %559 = vmatprep.subr.mxu0 0.0
      %560 = vmatpush1.msra.mxu0 0.0
      %561 = vmatprep.subr.mxu0 0.0
      %562 = vmatpush1.msra.mxu0 0.0
      %563 = vmatprep.subr.mxu0 0.0
      %564 = vmatpush1.msra.mxu0 0.0
      %565 = vmatprep.subr.mxu0 0.0
      %566 = vmatpush1.msra.mxu0 0.0
      %567 = vmatprep.subr.mxu0 0.0
      %568 = vmatpush1.msra.mxu0 0.0
      %569 = vmatprep.subr.mxu0 0.0
      %570 = vmatpush1.msra.mxu0 0.0
      %571 = vmatprep.subr.mxu0 0.0
      %572 = vmatpush1.msra.mxu0 0.0
      %573 = vmatprep.subr.mxu0 0.0
      %574 = vmatpush1.msra.mxu0 0.0
      %575 = vmatprep.subr.mxu0 0.0
      %576 = vmatpush1.msra.mxu0 0.0
      %577 = vmatprep.subr.mxu0 0.0
      %578 = vmatpush1.msra.mxu0 0.0
      %579 = vmatprep.subr.mxu0 0.0
      %580 = vmatpush1.msra.mxu0 0.0
      %581 = vmatprep.subr.mxu0 0.0
      %582 = vmatpush1.msra.mxu0 0.0
      %583 = vmatprep.subr.mxu0 0.0
      %584 = vmatpush1.msra.mxu0 0.0
      %585 = vmatprep.subr.mxu0 0.0
      %586 = vmatpush1.msra.mxu0 0.0
      %587 = vmatprep.subr.mxu0 0.0
      %588 = vmatpush1.msra.mxu0 0.0
      %589 = vmatprep.subr.mxu0 0.0
      %590 = vmatpush1.msra.mxu0 0.0
      %591 = vmatprep.subr.mxu0 0.0
      %592 = vmatpush1.msra.mxu0 0.0
      %593 = vmatprep.subr.mxu0 0.0
      %594 = vmatpush1.msra.mxu0 0.0
      %595 = vmatprep.mubr.f32.mxu0 0.0
      %596 = vmatmul.mubr.f32.gmra.mrb[0].mxu0 %v484
      %v597 = vpop.f32.mrb[0].mxu0
      %v598 = vadd.f32 %v480, %v597
      %v599 = vpop.f32.mrb[0].mxu0
      %600 = vmatprep.mubr.f32.mxu0 0.0
      %601 = vmatmul.mubr.f32.gmra.mrb[0].mxu0 %v487
      %v602 = vpop.f32.mrb[0].mxu0
      %v603 = vadd.f32 %v480, %v602
      %v604 = vpop.f32.mrb[0].mxu0
      %605 = vmatprep.mubr.f32.mxu0 0.0
      %606 = vmatmul.mubr.f32.gmra.mrb[0].mxu0 %v490
      %v607 = vpop.f32.mrb[0].mxu0
      %v608 = vadd.f32 %v480, %v607
      %v609 = vpop.f32.mrb[0].mxu0
      %610 = vmatprep.mubr.f32.mxu0 0.0
      %611 = vmatmul.mubr.f32.gmra.mrb[0].mxu0 %v493
      %v612 = vpop.f32.mrb[0].mxu0
      %v613 = vadd.f32 %v480, %v612
      %v614 = vpop.f32.mrb[0].mxu0
      %615 = vmatprep.mubr.f32.mxu0 0.0
      %616 = vmatmul.mubr.f32.gmra.mrb[0].mxu0 %v496
      %v617 = vpop.f32.mrb[0].mxu0
      %v618 = vadd.f32 %v480, %v617
      %v619 = vpop.f32.mrb[0].mxu0
      %620 = vmatprep.mubr.f32.mxu0 0.0
      %621 = vmatmul.mubr.f32.gmra.mrb[0].mxu0 %v499
      %v622 = vpop.f32.mrb[0].mxu0
      %v623 = vadd.f32 %v480, %v622
      %v624 = vpop.f32.mrb[0].mxu0
      %625 = vmatprep.mubr.f32.mxu0 0.0
      %626 = vmatmul.mubr.f32.gmra.mrb[0].mxu0 %v502
      %v627 = vpop.f32.mrb[0].mxu0
      %v628 = vadd.f32 %v480, %v627
      %v629 = vpop.f32.mrb[0].mxu0
      %630 = vmatprep.mubr.f32.mxu0 0.0
      %631 = vmatmul.mubr.f32.gmra.mrb[0].mxu0 %v505
      %v632 = vpop.f32.mrb[0].mxu0
      %v633 = vadd.f32 %v480, %v632
      %v634 = vpop.f32.mrb[0].mxu0
      %635 = vmatprep.mubr.f32.mxu0 0.0
      %636 = vmatmul.mubr.f32.gmra.mrb[0].mxu0 %v508
      %v637 = vpop.f32.mrb[0].mxu0
      %v638 = vadd.f32 %v480, %v637
      %v639 = vpop.f32.mrb[0].mxu0
      %640 = vmatprep.mubr.f32.mxu0 0.0
      %641 = vmatmul.mubr.f32.gmra.mrb[0].mxu0 %v511
      %v642 = vpop.f32.mrb[0].mxu0
      %v643 = vadd.f32 %v480, %v642
      %v644 = vpop.f32.mrb[0].mxu0
      %645 = vmatprep.mubr.f32.mxu0 0.0
      %646 = vmatmul.mubr.f32.gmra.mrb[0].mxu0 %v514
      %v647 = vpop.f32.mrb[0].mxu0
      %v648 = vadd.f32 %v480, %v647
      %v649 = vpop.f32.mrb[0].mxu0
      %650 = vmatprep.mubr.f32.mxu0 0.0
      %651 = vmatmul.mubr.f32.gmra.mrb[0].mxu0 %v517
      %v652 = vpop.f32.mrb[0].mxu0
      %v653 = vadd.f32 %v480, %v652
      %v654 = vpop.f32.mrb[0].mxu0
      %655 = vmatprep.mubr.f32.mxu0 0.0
      %656 = vmatmul.mubr.f32.gmra.mrb[0].mxu0 %v520
      %v657 = vpop.f32.mrb[0].mxu0
      %v658 = vadd.f32 %v480, %v657
      %v659 = vpop.f32.mrb[0].mxu0
      %660 = vmatprep.mubr.f32.mxu0 0.0
      %661 = vmatmul.mubr.f32.gmra.mrb[0].mxu0 %v523
      %v662 = vpop.f32.mrb[0].mxu0
      %v663 = vadd.f32 %v480, %v662
      %v664 = vpop.f32.mrb[0].mxu0
      %665 = vmatprep.mubr.f32.mxu0 0.0
      %666 = vmatmul.mubr.f32.gmra.mrb[0].mxu0 %v526
      %v667 = vpop.f32.mrb[0].mxu0
      %v668 = vadd.f32 %v480, %v667
      %v669 = vpop.f32.mrb[0].mxu0
      %670 = vmatprep.mubr.f32.mxu0 0.0
      %671 = vmatmul.mubr.f32.gmra.mrb[0].mxu0 %v529
      %v672 = vpop.f32.mrb[0].mxu0
      %v673 = vadd.f32 %v480, %v672
      %v674 = vpop.f32.mrb[0].mxu0
      %675 = vdwg.mxu0
      %vm676 = vcmask 785408
      %677 = vst.msk [vmem:[#allocation3] sm:$0xff] %vm676, %v598
      %678 = vst.msk [vmem:[#allocation3 + $0x8] sm:$0xff] %vm676, %v603
      %679 = vst.msk [vmem:[#allocation3 + $0x10] sm:$0xff] %vm676, %v608
      %680 = vst.msk [vmem:[#allocation3 + $0x18] sm:$0xff] %vm676, %v613
      %681 = vst.msk [vmem:[#allocation3 + $0x20] sm:$0xff] %vm676, %v618
      %682 = vst.msk [vmem:[#allocation3 + $0x28] sm:$0xff] %vm676, %v623
      %683 = vst.msk [vmem:[#allocation3 + $0x30] sm:$0xff] %vm676, %v628
      %684 = vst.msk [vmem:[#allocation3 + $0x38] sm:$0xff] %vm676, %v633
      %685 = vst.msk [vmem:[#allocation3 + $0x40] sm:$0xff] %vm676, %v638
      %686 = vst.msk [vmem:[#allocation3 + $0x48] sm:$0xff] %vm676, %v643
      %687 = vst.msk [vmem:[#allocation3 + $0x50] sm:$0xff] %vm676, %v648
      %688 = vst.msk [vmem:[#allocation3 + $0x58] sm:$0xff] %vm676, %v653
      %689 = vst.msk [vmem:[#allocation3 + $0x60] sm:$0xff] %vm676, %v658
      %690 = vst.msk [vmem:[#allocation3 + $0x68] sm:$0xff] %vm676, %v663
      %691 = vst.msk [vmem:[#allocation3 + $0x70] sm:$0xff] %vm676, %v668
      %692 = vst.msk [vmem:[#allocation3 + $0x78] sm:$0xff] %vm676, %v673
      %s693 = ssub.s32 1, %s23
      %s694 = smul.u32 %s24, %s693
      %s695 = ssub.s32 1, %s24
      %s696 = smul.u32 %s695, %s23
      %s697 = sadd.s32 %s694, %s696
      %v698 = vld [vmem:[%s5] sm:$0xff]
      %v699 = vld [vmem:[%s5 + $0x8] sm:$0xff]
      %s700 = smul.u32 %s697, 8
      %v701 = vstv %s700
      %v702 = vsub.s32 %v698, %v701
      %v703 = vsub.s32 %v699, %v701
      %v704 = vld [vmem:[%s423] sm:$0x1]
      %v706 = vlaneseq
      %v707 = vshrl.u32 %v706, 7
      %v708 = vsub.s32 0, %v707
      %v709 = vrot.slane %v704, %v708
      %s710 = smul.u32 %s23, 7
      %v711 = vld [vmem:[#allocation2] sm:$0xff]
      %v712 = vld [vmem:[#allocation2 + $0x8] sm:$0xff]
      %s713 = smul.u32 %s710, 16
      %s714 = scalar_lea.vmem [#allocation3], %s713
      %v715 = vld [vmem:[%s714] sm:$0xff]
      %v716 = vld [vmem:[%s714 + $0x8] sm:$0xff]
      %v717 = vld [vmem:[%s420] sm:$0xff]
      %v718 = vld [vmem:[%s420 + $0x8] sm:$0xff]
      %v719 = vld [vmem:[%s420 + $0x10] sm:$0xff]
      %v720 = vld [vmem:[%s420 + $0x18] sm:$0xff]
      %vm721 = vcmask 261120
      %v723 = vsel %vm721, %v711, 0
      %v726 = vsel %vm721, %v712, 0
      %728 = vmatprep.subr.mxu0 0.0
      %729 = vmatpush1.msra.mxu0 %v717
      %730 = vmatprep.subr.mxu0 0.0
      %731 = vmatpush1.msra.mxu0 %v718
      %732 = vmatprep.subr.mxu0 0.0
      %733 = vmatpush1.msra.mxu0 %v719
      %734 = vmatprep.subr.mxu0 0.0
      %735 = vmatpush1.msra.mxu0 %v720
      %736 = vmatprep.subr.mxu0 0.0
      %737 = vmatpush1.msra.mxu0 0.0
      %738 = vmatprep.subr.mxu0 0.0
      %739 = vmatpush1.msra.mxu0 0.0
      %740 = vmatprep.subr.mxu0 0.0
      %741 = vmatpush1.msra.mxu0 0.0
      %742 = vmatprep.subr.mxu0 0.0
      %743 = vmatpush1.msra.mxu0 0.0
      %744 = vmatprep.subr.mxu0 0.0
      %745 = vmatpush1.msra.mxu0 0.0
      %746 = vmatprep.subr.mxu0 0.0
      %747 = vmatpush1.msra.mxu0 0.0
      %748 = vmatprep.subr.mxu0 0.0
      %749 = vmatpush1.msra.mxu0 0.0
      %750 = vmatprep.subr.mxu0 0.0
      %751 = vmatpush1.msra.mxu0 0.0
      %752 = vmatprep.subr.mxu0 0.0
      %753 = vmatpush1.msra.mxu0 0.0
      %754 = vmatprep.subr.mxu0 0.0
      %755 = vmatpush1.msra.mxu0 0.0
      %756 = vmatprep.subr.mxu0 0.0
      %757 = vmatpush1.msra.mxu0 0.0
      %758 = vmatprep.subr.mxu0 0.0
      %759 = vmatpush1.msra.mxu0 0.0
      %760 = vmatprep.subr.mxu0 0.0
      %761 = vmatpush1.msra.mxu0 0.0
      %762 = vmatprep.subr.mxu0 0.0
      %763 = vmatpush1.msra.mxu0 0.0
      %764 = vmatprep.subr.mxu0 0.0
      %765 = vmatpush1.msra.mxu0 0.0
      %766 = vmatprep.subr.mxu0 0.0
      %767 = vmatpush1.msra.mxu0 0.0
      %768 = vmatprep.subr.mxu0 0.0
      %769 = vmatpush1.msra.mxu0 0.0
      %770 = vmatprep.subr.mxu0 0.0
      %771 = vmatpush1.msra.mxu0 0.0
      %772 = vmatprep.subr.mxu0 0.0
      %773 = vmatpush1.msra.mxu0 0.0
      %774 = vmatprep.subr.mxu0 0.0
      %775 = vmatpush1.msra.mxu0 0.0
      %776 = vmatprep.subr.mxu0 0.0
      %777 = vmatpush1.msra.mxu0 0.0
      %778 = vmatprep.subr.mxu0 0.0
      %779 = vmatpush1.msra.mxu0 0.0
      %780 = vmatprep.subr.mxu0 0.0
      %781 = vmatpush1.msra.mxu0 0.0
      %782 = vmatprep.subr.mxu0 0.0
      %783 = vmatpush1.msra.mxu0 0.0
      %784 = vmatprep.subr.mxu0 0.0
      %785 = vmatpush1.msra.mxu0 0.0
      %786 = vmatprep.subr.mxu0 0.0
      %787 = vmatpush1.msra.mxu0 0.0
      %788 = vmatprep.subr.mxu0 0.0
      %789 = vmatpush1.msra.mxu0 0.0
      %790 = vmatprep.subr.mxu0 0.0
      %791 = vmatpush1.msra.mxu0 0.0
      %792 = vmatprep.mubr.f32.mxu0 0.0
      %793 = vmatmul.mubr.f32.gmra.mrb[0].mxu0 %v723
      %v794 = vpop.f32.mrb[0].mxu0
      %v795 = vadd.f32 0.0, %v794
      %v796 = vpop.f32.mrb[0].mxu0
      %797 = vmatprep.mubr.f32.mxu0 0.0
      %798 = vmatmul.mubr.f32.gmra.mrb[0].mxu0 %v726
      %v799 = vpop.f32.mrb[0].mxu0
      %v800 = vadd.f32 0.0, %v799
      %v801 = vpop.f32.mrb[0].mxu0
      %802 = vdwg.mxu0
      %v803 = vadd.f32 %v715, %v795
      %v804 = vadd.f32 %v716, %v800
      %v805 = vxor.u32 %v803, 2147483648
      %v806 = vxor.u32 %v804, 2147483648
      %v807 = vmul.f32 %v805, 1.442695
      %v808 = vpow.pop %v807
      %v809 = vmul.f32 %v806, 1.442695
      %v810 = vpow.pop %v809
      %v811 = vadd.f32 %v808, 1.0
      %v812 = vadd.f32 %v810, 1.0
      %v813 = vrcp.pop %v811
      %v814 = vmul.f32 1.0, %v813
      %v815 = vrcp.pop %v812
      %v816 = vmul.f32 1.0, %v815
      %817 = vrot.lane.b32.xlu0 %v709, 64
      %v818 = vpop.permute.xlu0 %817
      %v820 = vadd.f32 %v795, %v818
      %v821 = vadd.f32 %v800, %v818
      %824 = vrot.lane.b32.xlu0 %v820, 64
      %v825 = vpop.permute.xlu0 %824
      %826 = vrot.lane.b32.xlu0 %v821, 64
      %v827 = vpop.permute.xlu0 %826
      %v830 = vmul.f32 %v814, %v825
      %v831 = vmul.f32 %v816, %v827
      %834 = vrot.lane.b32.xlu0 %v830, 64
      %v835 = vpop.permute.xlu0 %834
      %836 = vrot.lane.b32.xlu0 %v831, 64
      %v837 = vpop.permute.xlu0 %836
      %v840 = vadd.f32 %v715, %v835
      %v841 = vadd.f32 %v716, %v837
      %v842 = vtanh.pop %v840
      %v843 = vtanh.pop %v841
      %846 = vrot.lane.b32.xlu0 %v842, 64
      %v847 = vpop.permute.xlu0 %846
      %848 = vrot.lane.b32.xlu0 %v843, 64
      %v849 = vpop.permute.xlu0 %848
      %v852 = vsub.f32 %v711, %v847
      %v853 = vsub.f32 %v712, %v849
      %856 = vrot.lane.b32.xlu0 %v852, 32
      %v857 = vpop.permute.xlu0 %856
      %858 = vrot.lane.b32.xlu0 %v853, 32
      %v859 = vpop.permute.xlu0 %858
      %v862 = vmul.f32 %v814, %v857
      %v863 = vmul.f32 %v816, %v859
      %864 = vrot.lane.b32.xlu0 %v842, 96
      %v865 = vpop.permute.xlu0 %864
      %866 = vrot.lane.b32.xlu0 %v843, 96
      %v867 = vpop.permute.xlu0 %866
      %v870 = vadd.f32 %v862, %v865
      %v871 = vadd.f32 %v863, %v867
      %v872 = vstv %s710
      %vm873 = vcmp.lt.s32.totalorder %v872, %v702
      %vm874 = vcmp.lt.s32.totalorder %v872, %v703
      %v875 = vsel %vm873, 1, 0
      %v876 = vsel %vm874, 1, 0
      %877 = vset.pattern.permute.xlu0 0
      %878 = vperm.xlu0 %877, %v875
      %v879 = vpop.permute.xlu0 %878
      %880 = vset.pattern.permute.xlu0 0
      %881 = vperm.xlu0 %880, %v876
      %v882 = vpop.permute.xlu0 %881
      %vm883 = vcmp.eq.s32.totalorder %v879, 1
      %vm884 = vcmp.eq.s32.totalorder %v882, 1
      %885 = vrot.lane.b32.xlu0 %v711, 32
      %v886 = vpop.permute.xlu0 %885
      %887 = vrot.lane.b32.xlu0 %v712, 32
      %v888 = vpop.permute.xlu0 %887
      %v891 = vsel %vm883, %v870, %v886
      %v892 = vsel %vm884, %v871, %v888
      %895 = vrot.lane.b32.xlu0 %v891, 96
      %v896 = vpop.permute.xlu0 %895
      %897 = vrot.lane.b32.xlu0 %v892, 96
      %v898 = vpop.permute.xlu0 %897
      %901 = vst.msk [vmem:[#allocation2] sm:$0xff] %vm721, %v896
      %902 = vst.msk [vmem:[#allocation2 + $0x8] sm:$0xff] %vm721, %v898
      %v903 = vsel %vm883, %v870, 0.0
      %v904 = vsel %vm884, %v871, 0.0
      %907 = vrot.lane.b32.xlu0 %v903, 96
      %v908 = vpop.permute.xlu0 %907
      %909 = vrot.lane.b32.xlu0 %v904, 96
      %v910 = vpop.permute.xlu0 %909
      %s913 = scalar_lea.vmem %s438, %s713
      %914 = vst.msk [vmem:[%s913] sm:$0xff] %vm721, %v908
      %915 = vst.msk [vmem:[%s913 + $0x8] sm:$0xff] %vm721, %v910
      %s916 = smul.u32 %s23, 6
      %s917 = sadd.s32 %s693, %s916
      %v918 = vld [vmem:[#allocation2] sm:$0xff]
      %v919 = vld [vmem:[#allocation2 + $0x8] sm:$0xff]
      %s920 = smul.u32 %s917, 16
      %s921 = scalar_lea.vmem [#allocation3], %s920
      %v922 = vld [vmem:[%s921] sm:$0xff]
      %v923 = vld [vmem:[%s921 + $0x8] sm:$0xff]
      %v924 = vld [vmem:[%s420] sm:$0xff]
      %v925 = vld [vmem:[%s420 + $0x8] sm:$0xff]
      %v926 = vld [vmem:[%s420 + $0x10] sm:$0xff]
      %v927 = vld [vmem:[%s420 + $0x18] sm:$0xff]
      %v929 = vsel %vm721, %v918, 0
      %v932 = vsel %vm721, %v919, 0
      %934 = vmatprep.subr.mxu0 0.0
      %935 = vmatpush1.msra.mxu0 %v924
      %936 = vmatprep.subr.mxu0 0.0
      %937 = vmatpush1.msra.mxu0 %v925
      %938 = vmatprep.subr.mxu0 0.0
      %939 = vmatpush1.msra.mxu0 %v926
      %940 = vmatprep.subr.mxu0 0.0
      %941 = vmatpush1.msra.mxu0 %v927
      %942 = vmatprep.subr.mxu0 0.0
      %943 = vmatpush1.msra.mxu0 0.0
      %944 = vmatprep.subr.mxu0 0.0
      %945 = vmatpush1.msra.mxu0 0.0
      %946 = vmatprep.subr.mxu0 0.0
      %947 = vmatpush1.msra.mxu0 0.0
      %948 = vmatprep.subr.mxu0 0.0
      %949 = vmatpush1.msra.mxu0 0.0
      %950 = vmatprep.subr.mxu0 0.0
      %951 = vmatpush1.msra.mxu0 0.0
      %952 = vmatprep.subr.mxu0 0.0
      %953 = vmatpush1.msra.mxu0 0.0
      %954 = vmatprep.subr.mxu0 0.0
      %955 = vmatpush1.msra.mxu0 0.0
      %956 = vmatprep.subr.mxu0 0.0
      %957 = vmatpush1.msra.mxu0 0.0
      %958 = vmatprep.subr.mxu0 0.0
      %959 = vmatpush1.msra.mxu0 0.0
      %960 = vmatprep.subr.mxu0 0.0
      %961 = vmatpush1.msra.mxu0 0.0
      %962 = vmatprep.subr.mxu0 0.0
      %963 = vmatpush1.msra.mxu0 0.0
      %964 = vmatprep.subr.mxu0 0.0
      %965 = vmatpush1.msra.mxu0 0.0
      %966 = vmatprep.subr.mxu0 0.0
      %967 = vmatpush1.msra.mxu0 0.0
      %968 = vmatprep.subr.mxu0 0.0
      %969 = vmatpush1.msra.mxu0 0.0
      %970 = vmatprep.subr.mxu0 0.0
      %971 = vmatpush1.msra.mxu0 0.0
      %972 = vmatprep.subr.mxu0 0.0
      %973 = vmatpush1.msra.mxu0 0.0
      %974 = vmatprep.subr.mxu0 0.0
      %975 = vmatpush1.msra.mxu0 0.0
      %976 = vmatprep.subr.mxu0 0.0
      %977 = vmatpush1.msra.mxu0 0.0
      %978 = vmatprep.subr.mxu0 0.0
      %979 = vmatpush1.msra.mxu0 0.0
      %980 = vmatprep.subr.mxu0 0.0
      %981 = vmatpush1.msra.mxu0 0.0
      %982 = vmatprep.subr.mxu0 0.0
      %983 = vmatpush1.msra.mxu0 0.0
      %984 = vmatprep.subr.mxu0 0.0
      %985 = vmatpush1.msra.mxu0 0.0
      %986 = vmatprep.subr.mxu0 0.0
      %987 = vmatpush1.msra.mxu0 0.0
      %988 = vmatprep.subr.mxu0 0.0
      %989 = vmatpush1.msra.mxu0 0.0
      %990 = vmatprep.subr.mxu0 0.0
      %991 = vmatpush1.msra.mxu0 0.0
      %992 = vmatprep.subr.mxu0 0.0
      %993 = vmatpush1.msra.mxu0 0.0
      %994 = vmatprep.subr.mxu0 0.0
      %995 = vmatpush1.msra.mxu0 0.0
      %996 = vmatprep.subr.mxu0 0.0
      %997 = vmatpush1.msra.mxu0 0.0
      %998 = vmatprep.mubr.f32.mxu0 0.0
      %999 = vmatmul.mubr.f32.gmra.mrb[0].mxu0 %v929
      %v1000 = vpop.f32.mrb[0].mxu0
      %v1001 = vadd.f32 0.0, %v1000
      %v1002 = vpop.f32.mrb[0].mxu0
      %1003 = vmatprep.mubr.f32.mxu0 0.0
      %1004 = vmatmul.mubr.f32.gmra.mrb[0].mxu0 %v932
      %v1005 = vpop.f32.mrb[0].mxu0
      %v1006 = vadd.f32 0.0, %v1005
      %v1007 = vpop.f32.mrb[0].mxu0
      %1008 = vdwg.mxu0
      %v1009 = vadd.f32 %v922, %v1001
      %v1010 = vadd.f32 %v923, %v1006
      %v1011 = vxor.u32 %v1009, 2147483648
      %v1012 = vxor.u32 %v1010, 2147483648
      %v1013 = vmul.f32 %v1011, 1.442695
      %v1014 = vpow.pop %v1013
      %v1015 = vmul.f32 %v1012, 1.442695
      %v1016 = vpow.pop %v1015
      %v1017 = vadd.f32 %v1014, 1.0
      %v1018 = vadd.f32 %v1016, 1.0
      %v1019 = vrcp.pop %v1017
      %v1020 = vmul.f32 1.0, %v1019
      %v1021 = vrcp.pop %v1018
      %v1022 = vmul.f32 1.0, %v1021
      %v1023 = vadd.f32 %v1001, %v818
      %v1024 = vadd.f32 %v1006, %v818
      %1027 = vrot.lane.b32.xlu0 %v1023, 64
      %v1028 = vpop.permute.xlu0 %1027
      %1029 = vrot.lane.b32.xlu0 %v1024, 64
      %v1030 = vpop.permute.xlu0 %1029
      %v1033 = vmul.f32 %v1020, %v1028
      %v1034 = vmul.f32 %v1022, %v1030
      %1037 = vrot.lane.b32.xlu0 %v1033, 64
      %v1038 = vpop.permute.xlu0 %1037
      %1039 = vrot.lane.b32.xlu0 %v1034, 64
      %v1040 = vpop.permute.xlu0 %1039
      %v1043 = vadd.f32 %v922, %v1038
      %v1044 = vadd.f32 %v923, %v1040
      %v1045 = vtanh.pop %v1043
      %v1046 = vtanh.pop %v1044
      %1049 = vrot.lane.b32.xlu0 %v1045, 64
      %v1050 = vpop.permute.xlu0 %1049
      %1051 = vrot.lane.b32.xlu0 %v1046, 64
      %v1052 = vpop.permute.xlu0 %1051
      %v1055 = vsub.f32 %v918, %v1050
      %v1056 = vsub.f32 %v919, %v1052
      %1059 = vrot.lane.b32.xlu0 %v1055, 32
      %v1060 = vpop.permute.xlu0 %1059
      %1061 = vrot.lane.b32.xlu0 %v1056, 32
      %v1062 = vpop.permute.xlu0 %1061
      %v1065 = vmul.f32 %v1020, %v1060
      %v1066 = vmul.f32 %v1022, %v1062
      %1067 = vrot.lane.b32.xlu0 %v1045, 96
      %v1068 = vpop.permute.xlu0 %1067
      %1069 = vrot.lane.b32.xlu0 %v1046, 96
      %v1070 = vpop.permute.xlu0 %1069
      %v1073 = vadd.f32 %v1065, %v1068
      %v1074 = vadd.f32 %v1066, %v1070
      %v1075 = vstv %s917
      %vm1076 = vcmp.lt.s32.totalorder %v1075, %v702
      %vm1077 = vcmp.lt.s32.totalorder %v1075, %v703
      %v1078 = vsel %vm1076, 1, 0
      %v1079 = vsel %vm1077, 1, 0
      %1080 = vset.pattern.permute.xlu0 0
      %1081 = vperm.xlu0 %1080, %v1078
      %v1082 = vpop.permute.xlu0 %1081
      %1083 = vset.pattern.permute.xlu0 0
      %1084 = vperm.xlu0 %1083, %v1079
      %v1085 = vpop.permute.xlu0 %1084
      %vm1086 = vcmp.eq.s32.totalorder %v1082, 1
      %vm1087 = vcmp.eq.s32.totalorder %v1085, 1
      %1088 = vrot.lane.b32.xlu0 %v918, 32
      %v1089 = vpop.permute.xlu0 %1088
      %1090 = vrot.lane.b32.xlu0 %v919, 32
      %v1091 = vpop.permute.xlu0 %1090
      %v1094 = vsel %vm1086, %v1073, %v1089
      %v1095 = vsel %vm1087, %v1074, %v1091
      %1098 = vrot.lane.b32.xlu0 %v1094, 96
      %v1099 = vpop.permute.xlu0 %1098
      %1100 = vrot.lane.b32.xlu0 %v1095, 96
      %v1101 = vpop.permute.xlu0 %1100
      %1104 = vst.msk [vmem:[#allocation2] sm:$0xff] %vm721, %v1099
      %1105 = vst.msk [vmem:[#allocation2 + $0x8] sm:$0xff] %vm721, %v1101
      %v1106 = vsel %vm1086, %v1073, 0.0
      %v1107 = vsel %vm1087, %v1074, 0.0
      %1110 = vrot.lane.b32.xlu0 %v1106, 96
      %v1111 = vpop.permute.xlu0 %1110
      %1112 = vrot.lane.b32.xlu0 %v1107, 96
      %v1113 = vpop.permute.xlu0 %1112
      %s1116 = scalar_lea.vmem %s438, %s920
      %1117 = vst.msk [vmem:[%s1116] sm:$0xff] %vm721, %v1111
      %1118 = vst.msk [vmem:[%s1116 + $0x8] sm:$0xff] %vm721, %v1113
      %s1119 = smul.u32 %s693, 2
      %s1120 = smul.u32 %s23, 5
      %s1121 = sadd.s32 %s1119, %s1120
      %v1122 = vld [vmem:[#allocation2] sm:$0xff]
      %v1123 = vld [vmem:[#allocation2 + $0x8] sm:$0xff]
      %s1124 = smul.u32 %s1121, 16
      %s1125 = scalar_lea.vmem [#allocation3], %s1124
      %v1126 = vld [vmem:[%s1125] sm:$0xff]
      %v1127 = vld [vmem:[%s1125 + $0x8] sm:$0xff]
      %v1128 = vld [vmem:[%s420] sm:$0xff]
      %v1129 = vld [vmem:[%s420 + $0x8] sm:$0xff]
      %v1130 = vld [vmem:[%s420 + $0x10] sm:$0xff]
      %v1131 = vld [vmem:[%s420 + $0x18] sm:$0xff]
      %v1133 = vsel %vm721, %v1122, 0
      %v1136 = vsel %vm721, %v1123, 0
      %1138 = vmatprep.subr.mxu0 0.0
      %1139 = vmatpush1.msra.mxu0 %v1128
      %1140 = vmatprep.subr.mxu0 0.0
      %1141 = vmatpush1.msra.mxu0 %v1129
      %1142 = vmatprep.subr.mxu0 0.0
      %1143 = vmatpush1.msra.mxu0 %v1130
      %1144 = vmatprep.subr.mxu0 0.0
      %1145 = vmatpush1.msra.mxu0 %v1131
      %1146 = vmatprep.subr.mxu0 0.0
      %1147 = vmatpush1.msra.mxu0 0.0
      %1148 = vmatprep.subr.mxu0 0.0
      %1149 = vmatpush1.msra.mxu0 0.0
      %1150 = vmatprep.subr.mxu0 0.0
      %1151 = vmatpush1.msra.mxu0 0.0
      %1152 = vmatprep.subr.mxu0 0.0
      %1153 = vmatpush1.msra.mxu0 0.0
      %1154 = vmatprep.subr.mxu0 0.0
      %1155 = vmatpush1.msra.mxu0 0.0
      %1156 = vmatprep.subr.mxu0 0.0
      %1157 = vmatpush1.msra.mxu0 0.0
      %1158 = vmatprep.subr.mxu0 0.0
      %1159 = vmatpush1.msra.mxu0 0.0
      %1160 = vmatprep.subr.mxu0 0.0
      %1161 = vmatpush1.msra.mxu0 0.0
      %1162 = vmatprep.subr.mxu0 0.0
      %1163 = vmatpush1.msra.mxu0 0.0
      %1164 = vmatprep.subr.mxu0 0.0
      %1165 = vmatpush1.msra.mxu0 0.0
      %1166 = vmatprep.subr.mxu0 0.0
      %1167 = vmatpush1.msra.mxu0 0.0
      %1168 = vmatprep.subr.mxu0 0.0
      %1169 = vmatpush1.msra.mxu0 0.0
      %1170 = vmatprep.subr.mxu0 0.0
      %1171 = vmatpush1.msra.mxu0 0.0
      %1172 = vmatprep.subr.mxu0 0.0
      %1173 = vmatpush1.msra.mxu0 0.0
      %1174 = vmatprep.subr.mxu0 0.0
      %1175 = vmatpush1.msra.mxu0 0.0
      %1176 = vmatprep.subr.mxu0 0.0
      %1177 = vmatpush1.msra.mxu0 0.0
      %1178 = vmatprep.subr.mxu0 0.0
      %1179 = vmatpush1.msra.mxu0 0.0
      %1180 = vmatprep.subr.mxu0 0.0
      %1181 = vmatpush1.msra.mxu0 0.0
      %1182 = vmatprep.subr.mxu0 0.0
      %1183 = vmatpush1.msra.mxu0 0.0
      %1184 = vmatprep.subr.mxu0 0.0
      %1185 = vmatpush1.msra.mxu0 0.0
      %1186 = vmatprep.subr.mxu0 0.0
      %1187 = vmatpush1.msra.mxu0 0.0
      %1188 = vmatprep.subr.mxu0 0.0
      %1189 = vmatpush1.msra.mxu0 0.0
      %1190 = vmatprep.subr.mxu0 0.0
      %1191 = vmatpush1.msra.mxu0 0.0
      %1192 = vmatprep.subr.mxu0 0.0
      %1193 = vmatpush1.msra.mxu0 0.0
      %1194 = vmatprep.subr.mxu0 0.0
      %1195 = vmatpush1.msra.mxu0 0.0
      %1196 = vmatprep.subr.mxu0 0.0
      %1197 = vmatpush1.msra.mxu0 0.0
      %1198 = vmatprep.subr.mxu0 0.0
      %1199 = vmatpush1.msra.mxu0 0.0
      %1200 = vmatprep.subr.mxu0 0.0
      %1201 = vmatpush1.msra.mxu0 0.0
      %1202 = vmatprep.mubr.f32.mxu0 0.0
      %1203 = vmatmul.mubr.f32.gmra.mrb[0].mxu0 %v1133
      %v1204 = vpop.f32.mrb[0].mxu0
      %v1205 = vadd.f32 0.0, %v1204
      %v1206 = vpop.f32.mrb[0].mxu0
      %1207 = vmatprep.mubr.f32.mxu0 0.0
      %1208 = vmatmul.mubr.f32.gmra.mrb[0].mxu0 %v1136
      %v1209 = vpop.f32.mrb[0].mxu0
      %v1210 = vadd.f32 0.0, %v1209
      %v1211 = vpop.f32.mrb[0].mxu0
      %1212 = vdwg.mxu0
      %v1213 = vadd.f32 %v1126, %v1205
      %v1214 = vadd.f32 %v1127, %v1210
      %v1215 = vxor.u32 %v1213, 2147483648
      %v1216 = vxor.u32 %v1214, 2147483648
      %v1217 = vmul.f32 %v1215, 1.442695
      %v1218 = vpow.pop %v1217
      %v1219 = vmul.f32 %v1216, 1.442695
      %v1220 = vpow.pop %v1219
      %v1221 = vadd.f32 %v1218, 1.0
      %v1222 = vadd.f32 %v1220, 1.0
      %v1223 = vrcp.pop %v1221
      %v1224 = vmul.f32 1.0, %v1223
      %v1225 = vrcp.pop %v1222
      %v1226 = vmul.f32 1.0, %v1225
      %v1227 = vadd.f32 %v1205, %v818
      %v1228 = vadd.f32 %v1210, %v818
      %1231 = vrot.lane.b32.xlu0 %v1227, 64
      %v1232 = vpop.permute.xlu0 %1231
      %1233 = vrot.lane.b32.xlu0 %v1228, 64
      %v1234 = vpop.permute.xlu0 %1233
      %v1237 = vmul.f32 %v1224, %v1232
      %v1238 = vmul.f32 %v1226, %v1234
      %1241 = vrot.lane.b32.xlu0 %v1237, 64
      %v1242 = vpop.permute.xlu0 %1241
      %1243 = vrot.lane.b32.xlu0 %v1238, 64
      %v1244 = vpop.permute.xlu0 %1243
      %v1247 = vadd.f32 %v1126, %v1242
      %v1248 = vadd.f32 %v1127, %v1244
      %v1249 = vtanh.pop %v1247
      %v1250 = vtanh.pop %v1248
      %1253 = vrot.lane.b32.xlu0 %v1249, 64
      %v1254 = vpop.permute.xlu0 %1253
      %1255 = vrot.lane.b32.xlu0 %v1250, 64
      %v1256 = vpop.permute.xlu0 %1255
      %v1259 = vsub.f32 %v1122, %v1254
      %v1260 = vsub.f32 %v1123, %v1256
      %1263 = vrot.lane.b32.xlu0 %v1259, 32
      %v1264 = vpop.permute.xlu0 %1263
      %1265 = vrot.lane.b32.xlu0 %v1260, 32
      %v1266 = vpop.permute.xlu0 %1265
      %v1269 = vmul.f32 %v1224, %v1264
      %v1270 = vmul.f32 %v1226, %v1266
      %1271 = vrot.lane.b32.xlu0 %v1249, 96
      %v1272 = vpop.permute.xlu0 %1271
      %1273 = vrot.lane.b32.xlu0 %v1250, 96
      %v1274 = vpop.permute.xlu0 %1273
      %v1277 = vadd.f32 %v1269, %v1272
      %v1278 = vadd.f32 %v1270, %v1274
      %v1279 = vstv %s1121
      %vm1280 = vcmp.lt.s32.totalorder %v1279, %v702
      %vm1281 = vcmp.lt.s32.totalorder %v1279, %v703
      %v1282 = vsel %vm1280, 1, 0
      %v1283 = vsel %vm1281, 1, 0
      %1284 = vset.pattern.permute.xlu0 0
      %1285 = vperm.xlu0 %1284, %v1282
      %v1286 = vpop.permute.xlu0 %1285
      %1287 = vset.pattern.permute.xlu0 0
      %1288 = vperm.xlu0 %1287, %v1283
      %v1289 = vpop.permute.xlu0 %1288
      %vm1290 = vcmp.eq.s32.totalorder %v1286, 1
      %vm1291 = vcmp.eq.s32.totalorder %v1289, 1
      %1292 = vrot.lane.b32.xlu0 %v1122, 32
      %v1293 = vpop.permute.xlu0 %1292
      %1294 = vrot.lane.b32.xlu0 %v1123, 32
      %v1295 = vpop.permute.xlu0 %1294
      %v1298 = vsel %vm1290, %v1277, %v1293
      %v1299 = vsel %vm1291, %v1278, %v1295
      %1302 = vrot.lane.b32.xlu0 %v1298, 96
      %v1303 = vpop.permute.xlu0 %1302
      %1304 = vrot.lane.b32.xlu0 %v1299, 96
      %v1305 = vpop.permute.xlu0 %1304
      %1308 = vst.msk [vmem:[#allocation2] sm:$0xff] %vm721, %v1303
      %1309 = vst.msk [vmem:[#allocation2 + $0x8] sm:$0xff] %vm721, %v1305
      %v1310 = vsel %vm1290, %v1277, 0.0
      %v1311 = vsel %vm1291, %v1278, 0.0
      %1314 = vrot.lane.b32.xlu0 %v1310, 96
      %v1315 = vpop.permute.xlu0 %1314
      %1316 = vrot.lane.b32.xlu0 %v1311, 96
      %v1317 = vpop.permute.xlu0 %1316
      %s1320 = scalar_lea.vmem %s438, %s1124
      %1321 = vst.msk [vmem:[%s1320] sm:$0xff] %vm721, %v1315
      %1322 = vst.msk [vmem:[%s1320 + $0x8] sm:$0xff] %vm721, %v1317
      %s1323 = smul.u32 %s693, 3
      %s1324 = smul.u32 %s23, 4
      %s1325 = sadd.s32 %s1323, %s1324
      %v1326 = vld [vmem:[#allocation2] sm:$0xff]
      %v1327 = vld [vmem:[#allocation2 + $0x8] sm:$0xff]
      %s1328 = smul.u32 %s1325, 16
      %s1329 = scalar_lea.vmem [#allocation3], %s1328
      %v1330 = vld [vmem:[%s1329] sm:$0xff]
      %v1331 = vld [vmem:[%s1329 + $0x8] sm:$0xff]
      %v1332 = vld [vmem:[%s420] sm:$0xff]
      %v1333 = vld [vmem:[%s420 + $0x8] sm:$0xff]
      %v1334 = vld [vmem:[%s420 + $0x10] sm:$0xff]
      %v1335 = vld [vmem:[%s420 + $0x18] sm:$0xff]
      %v1337 = vsel %vm721, %v1326, 0
      %v1340 = vsel %vm721, %v1327, 0
      %1342 = vmatprep.subr.mxu0 0.0
      %1343 = vmatpush1.msra.mxu0 %v1332
      %1344 = vmatprep.subr.mxu0 0.0
      %1345 = vmatpush1.msra.mxu0 %v1333
      %1346 = vmatprep.subr.mxu0 0.0
      %1347 = vmatpush1.msra.mxu0 %v1334
      %1348 = vmatprep.subr.mxu0 0.0
      %1349 = vmatpush1.msra.mxu0 %v1335
      %1350 = vmatprep.subr.mxu0 0.0
      %1351 = vmatpush1.msra.mxu0 0.0
      %1352 = vmatprep.subr.mxu0 0.0
      %1353 = vmatpush1.msra.mxu0 0.0
      %1354 = vmatprep.subr.mxu0 0.0
      %1355 = vmatpush1.msra.mxu0 0.0
      %1356 = vmatprep.subr.mxu0 0.0
      %1357 = vmatpush1.msra.mxu0 0.0
      %1358 = vmatprep.subr.mxu0 0.0
      %1359 = vmatpush1.msra.mxu0 0.0
      %1360 = vmatprep.subr.mxu0 0.0
      %1361 = vmatpush1.msra.mxu0 0.0
      %1362 = vmatprep.subr.mxu0 0.0
      %1363 = vmatpush1.msra.mxu0 0.0
      %1364 = vmatprep.subr.mxu0 0.0
      %1365 = vmatpush1.msra.mxu0 0.0
      %1366 = vmatprep.subr.mxu0 0.0
      %1367 = vmatpush1.msra.mxu0 0.0
      %1368 = vmatprep.subr.mxu0 0.0
      %1369 = vmatpush1.msra.mxu0 0.0
      %1370 = vmatprep.subr.mxu0 0.0
      %1371 = vmatpush1.msra.mxu0 0.0
      %1372 = vmatprep.subr.mxu0 0.0
      %1373 = vmatpush1.msra.mxu0 0.0
      %1374 = vmatprep.subr.mxu0 0.0
      %1375 = vmatpush1.msra.mxu0 0.0
      %1376 = vmatprep.subr.mxu0 0.0
      %1377 = vmatpush1.msra.mxu0 0.0
      %1378 = vmatprep.subr.mxu0 0.0
      %1379 = vmatpush1.msra.mxu0 0.0
      %1380 = vmatprep.subr.mxu0 0.0
      %1381 = vmatpush1.msra.mxu0 0.0
      %1382 = vmatprep.subr.mxu0 0.0
      %1383 = vmatpush1.msra.mxu0 0.0
      %1384 = vmatprep.subr.mxu0 0.0
      %1385 = vmatpush1.msra.mxu0 0.0
      %1386 = vmatprep.subr.mxu0 0.0
      %1387 = vmatpush1.msra.mxu0 0.0
      %1388 = vmatprep.subr.mxu0 0.0
      %1389 = vmatpush1.msra.mxu0 0.0
      %1390 = vmatprep.subr.mxu0 0.0
      %1391 = vmatpush1.msra.mxu0 0.0
      %1392 = vmatprep.subr.mxu0 0.0
      %1393 = vmatpush1.msra.mxu0 0.0
      %1394 = vmatprep.subr.mxu0 0.0
      %1395 = vmatpush1.msra.mxu0 0.0
      %1396 = vmatprep.subr.mxu0 0.0
      %1397 = vmatpush1.msra.mxu0 0.0
      %1398 = vmatprep.subr.mxu0 0.0
      %1399 = vmatpush1.msra.mxu0 0.0
      %1400 = vmatprep.subr.mxu0 0.0
      %1401 = vmatpush1.msra.mxu0 0.0
      %1402 = vmatprep.subr.mxu0 0.0
      %1403 = vmatpush1.msra.mxu0 0.0
      %1404 = vmatprep.subr.mxu0 0.0
      %1405 = vmatpush1.msra.mxu0 0.0
      %1406 = vmatprep.mubr.f32.mxu0 0.0
      %1407 = vmatmul.mubr.f32.gmra.mrb[0].mxu0 %v1337
      %v1408 = vpop.f32.mrb[0].mxu0
      %v1409 = vadd.f32 0.0, %v1408
      %v1410 = vpop.f32.mrb[0].mxu0
      %1411 = vmatprep.mubr.f32.mxu0 0.0
      %1412 = vmatmul.mubr.f32.gmra.mrb[0].mxu0 %v1340
      %v1413 = vpop.f32.mrb[0].mxu0
      %v1414 = vadd.f32 0.0, %v1413
      %v1415 = vpop.f32.mrb[0].mxu0
      %1416 = vdwg.mxu0
      %v1417 = vadd.f32 %v1330, %v1409
      %v1418 = vadd.f32 %v1331, %v1414
      %v1419 = vxor.u32 %v1417, 2147483648
      %v1420 = vxor.u32 %v1418, 2147483648
      %v1421 = vmul.f32 %v1419, 1.442695
      %v1422 = vpow.pop %v1421
      %v1423 = vmul.f32 %v1420, 1.442695
      %v1424 = vpow.pop %v1423
      %v1425 = vadd.f32 %v1422, 1.0
      %v1426 = vadd.f32 %v1424, 1.0
      %v1427 = vrcp.pop %v1425
      %v1428 = vmul.f32 1.0, %v1427
      %v1429 = vrcp.pop %v1426
      %v1430 = vmul.f32 1.0, %v1429
      %v1431 = vadd.f32 %v1409, %v818
      %v1432 = vadd.f32 %v1414, %v818
      %1435 = vrot.lane.b32.xlu0 %v1431, 64
      %v1436 = vpop.permute.xlu0 %1435
      %1437 = vrot.lane.b32.xlu0 %v1432, 64
      %v1438 = vpop.permute.xlu0 %1437
      %v1441 = vmul.f32 %v1428, %v1436
      %v1442 = vmul.f32 %v1430, %v1438
      %1445 = vrot.lane.b32.xlu0 %v1441, 64
      %v1446 = vpop.permute.xlu0 %1445
      %1447 = vrot.lane.b32.xlu0 %v1442, 64
      %v1448 = vpop.permute.xlu0 %1447
      %v1451 = vadd.f32 %v1330, %v1446
      %v1452 = vadd.f32 %v1331, %v1448
      %v1453 = vtanh.pop %v1451
      %v1454 = vtanh.pop %v1452
      %1457 = vrot.lane.b32.xlu0 %v1453, 64
      %v1458 = vpop.permute.xlu0 %1457
      %1459 = vrot.lane.b32.xlu0 %v1454, 64
      %v1460 = vpop.permute.xlu0 %1459
      %v1463 = vsub.f32 %v1326, %v1458
      %v1464 = vsub.f32 %v1327, %v1460
      %1467 = vrot.lane.b32.xlu0 %v1463, 32
      %v1468 = vpop.permute.xlu0 %1467
      %1469 = vrot.lane.b32.xlu0 %v1464, 32
      %v1470 = vpop.permute.xlu0 %1469
      %v1473 = vmul.f32 %v1428, %v1468
      %v1474 = vmul.f32 %v1430, %v1470
      %1475 = vrot.lane.b32.xlu0 %v1453, 96
      %v1476 = vpop.permute.xlu0 %1475
      %1477 = vrot.lane.b32.xlu0 %v1454, 96
      %v1478 = vpop.permute.xlu0 %1477
      %v1481 = vadd.f32 %v1473, %v1476
      %v1482 = vadd.f32 %v1474, %v1478
      %v1483 = vstv %s1325
      %vm1484 = vcmp.lt.s32.totalorder %v1483, %v702
      %vm1485 = vcmp.lt.s32.totalorder %v1483, %v703
      %v1486 = vsel %vm1484, 1, 0
      %v1487 = vsel %vm1485, 1, 0
      %1488 = vset.pattern.permute.xlu0 0
      %1489 = vperm.xlu0 %1488, %v1486
      %v1490 = vpop.permute.xlu0 %1489
      %1491 = vset.pattern.permute.xlu0 0
      %1492 = vperm.xlu0 %1491, %v1487
      %v1493 = vpop.permute.xlu0 %1492
      %vm1494 = vcmp.eq.s32.totalorder %v1490, 1
      %vm1495 = vcmp.eq.s32.totalorder %v1493, 1
      %1496 = vrot.lane.b32.xlu0 %v1326, 32
      %v1497 = vpop.permute.xlu0 %1496
      %1498 = vrot.lane.b32.xlu0 %v1327, 32
      %v1499 = vpop.permute.xlu0 %1498
      %v1502 = vsel %vm1494, %v1481, %v1497
      %v1503 = vsel %vm1495, %v1482, %v1499
      %1506 = vrot.lane.b32.xlu0 %v1502, 96
      %v1507 = vpop.permute.xlu0 %1506
      %1508 = vrot.lane.b32.xlu0 %v1503, 96
      %v1509 = vpop.permute.xlu0 %1508
      %1512 = vst.msk [vmem:[#allocation2] sm:$0xff] %vm721, %v1507
      %1513 = vst.msk [vmem:[#allocation2 + $0x8] sm:$0xff] %vm721, %v1509
      %v1514 = vsel %vm1494, %v1481, 0.0
      %v1515 = vsel %vm1495, %v1482, 0.0
      %1518 = vrot.lane.b32.xlu0 %v1514, 96
      %v1519 = vpop.permute.xlu0 %1518
      %1520 = vrot.lane.b32.xlu0 %v1515, 96
      %v1521 = vpop.permute.xlu0 %1520
      %s1524 = scalar_lea.vmem %s438, %s1328
      %1525 = vst.msk [vmem:[%s1524] sm:$0xff] %vm721, %v1519
      %1526 = vst.msk [vmem:[%s1524 + $0x8] sm:$0xff] %vm721, %v1521
      %s1527 = smul.u32 %s693, 4
      %s1528 = smul.u32 %s23, 3
      %s1529 = sadd.s32 %s1527, %s1528
      %v1530 = vld [vmem:[#allocation2] sm:$0xff]
      %v1531 = vld [vmem:[#allocation2 + $0x8] sm:$0xff]
      %s1532 = smul.u32 %s1529, 16
      %s1533 = scalar_lea.vmem [#allocation3], %s1532
      %v1534 = vld [vmem:[%s1533] sm:$0xff]
      %v1535 = vld [vmem:[%s1533 + $0x8] sm:$0xff]
      %v1536 = vld [vmem:[%s420] sm:$0xff]
      %v1537 = vld [vmem:[%s420 + $0x8] sm:$0xff]
      %v1538 = vld [vmem:[%s420 + $0x10] sm:$0xff]
      %v1539 = vld [vmem:[%s420 + $0x18] sm:$0xff]
      %v1541 = vsel %vm721, %v1530, 0
      %v1544 = vsel %vm721, %v1531, 0
      %1546 = vmatprep.subr.mxu0 0.0
      %1547 = vmatpush1.msra.mxu0 %v1536
      %1548 = vmatprep.subr.mxu0 0.0
      %1549 = vmatpush1.msra.mxu0 %v1537
      %1550 = vmatprep.subr.mxu0 0.0
      %1551 = vmatpush1.msra.mxu0 %v1538
      %1552 = vmatprep.subr.mxu0 0.0
      %1553 = vmatpush1.msra.mxu0 %v1539
      %1554 = vmatprep.subr.mxu0 0.0
      %1555 = vmatpush1.msra.mxu0 0.0
      %1556 = vmatprep.subr.mxu0 0.0
      %1557 = vmatpush1.msra.mxu0 0.0
      %1558 = vmatprep.subr.mxu0 0.0
      %1559 = vmatpush1.msra.mxu0 0.0
      %1560 = vmatprep.subr.mxu0 0.0
      %1561 = vmatpush1.msra.mxu0 0.0
      %1562 = vmatprep.subr.mxu0 0.0
      %1563 = vmatpush1.msra.mxu0 0.0
      %1564 = vmatprep.subr.mxu0 0.0
      %1565 = vmatpush1.msra.mxu0 0.0
      %1566 = vmatprep.subr.mxu0 0.0
      %1567 = vmatpush1.msra.mxu0 0.0
      %1568 = vmatprep.subr.mxu0 0.0
      %1569 = vmatpush1.msra.mxu0 0.0
      %1570 = vmatprep.subr.mxu0 0.0
      %1571 = vmatpush1.msra.mxu0 0.0
      %1572 = vmatprep.subr.mxu0 0.0
      %1573 = vmatpush1.msra.mxu0 0.0
      %1574 = vmatprep.subr.mxu0 0.0
      %1575 = vmatpush1.msra.mxu0 0.0
      %1576 = vmatprep.subr.mxu0 0.0
      %1577 = vmatpush1.msra.mxu0 0.0
      %1578 = vmatprep.subr.mxu0 0.0
      %1579 = vmatpush1.msra.mxu0 0.0
      %1580 = vmatprep.subr.mxu0 0.0
      %1581 = vmatpush1.msra.mxu0 0.0
      %1582 = vmatprep.subr.mxu0 0.0
      %1583 = vmatpush1.msra.mxu0 0.0
      %1584 = vmatprep.subr.mxu0 0.0
      %1585 = vmatpush1.msra.mxu0 0.0
      %1586 = vmatprep.subr.mxu0 0.0
      %1587 = vmatpush1.msra.mxu0 0.0
      %1588 = vmatprep.subr.mxu0 0.0
      %1589 = vmatpush1.msra.mxu0 0.0
      %1590 = vmatprep.subr.mxu0 0.0
      %1591 = vmatpush1.msra.mxu0 0.0
      %1592 = vmatprep.subr.mxu0 0.0
      %1593 = vmatpush1.msra.mxu0 0.0
      %1594 = vmatprep.subr.mxu0 0.0
      %1595 = vmatpush1.msra.mxu0 0.0
      %1596 = vmatprep.subr.mxu0 0.0
      %1597 = vmatpush1.msra.mxu0 0.0
      %1598 = vmatprep.subr.mxu0 0.0
      %1599 = vmatpush1.msra.mxu0 0.0
      %1600 = vmatprep.subr.mxu0 0.0
      %1601 = vmatpush1.msra.mxu0 0.0
      %1602 = vmatprep.subr.mxu0 0.0
      %1603 = vmatpush1.msra.mxu0 0.0
      %1604 = vmatprep.subr.mxu0 0.0
      %1605 = vmatpush1.msra.mxu0 0.0
      %1606 = vmatprep.subr.mxu0 0.0
      %1607 = vmatpush1.msra.mxu0 0.0
      %1608 = vmatprep.subr.mxu0 0.0
      %1609 = vmatpush1.msra.mxu0 0.0
      %1610 = vmatprep.mubr.f32.mxu0 0.0
      %1611 = vmatmul.mubr.f32.gmra.mrb[0].mxu0 %v1541
      %v1612 = vpop.f32.mrb[0].mxu0
      %v1613 = vadd.f32 0.0, %v1612
      %v1614 = vpop.f32.mrb[0].mxu0
      %1615 = vmatprep.mubr.f32.mxu0 0.0
      %1616 = vmatmul.mubr.f32.gmra.mrb[0].mxu0 %v1544
      %v1617 = vpop.f32.mrb[0].mxu0
      %v1618 = vadd.f32 0.0, %v1617
      %v1619 = vpop.f32.mrb[0].mxu0
      %1620 = vdwg.mxu0
      %v1621 = vadd.f32 %v1534, %v1613
      %v1622 = vadd.f32 %v1535, %v1618
      %v1623 = vxor.u32 %v1621, 2147483648
      %v1624 = vxor.u32 %v1622, 2147483648
      %v1625 = vmul.f32 %v1623, 1.442695
      %v1626 = vpow.pop %v1625
      %v1627 = vmul.f32 %v1624, 1.442695
      %v1628 = vpow.pop %v1627
      %v1629 = vadd.f32 %v1626, 1.0
      %v1630 = vadd.f32 %v1628, 1.0
      %v1631 = vrcp.pop %v1629
      %v1632 = vmul.f32 1.0, %v1631
      %v1633 = vrcp.pop %v1630
      %v1634 = vmul.f32 1.0, %v1633
      %v1635 = vadd.f32 %v1613, %v818
      %v1636 = vadd.f32 %v1618, %v818
      %1639 = vrot.lane.b32.xlu0 %v1635, 64
      %v1640 = vpop.permute.xlu0 %1639
      %1641 = vrot.lane.b32.xlu0 %v1636, 64
      %v1642 = vpop.permute.xlu0 %1641
      %v1645 = vmul.f32 %v1632, %v1640
      %v1646 = vmul.f32 %v1634, %v1642
      %1649 = vrot.lane.b32.xlu0 %v1645, 64
      %v1650 = vpop.permute.xlu0 %1649
      %1651 = vrot.lane.b32.xlu0 %v1646, 64
      %v1652 = vpop.permute.xlu0 %1651
      %v1655 = vadd.f32 %v1534, %v1650
      %v1656 = vadd.f32 %v1535, %v1652
      %v1657 = vtanh.pop %v1655
      %v1658 = vtanh.pop %v1656
      %1661 = vrot.lane.b32.xlu0 %v1657, 64
      %v1662 = vpop.permute.xlu0 %1661
      %1663 = vrot.lane.b32.xlu0 %v1658, 64
      %v1664 = vpop.permute.xlu0 %1663
      %v1667 = vsub.f32 %v1530, %v1662
      %v1668 = vsub.f32 %v1531, %v1664
      %1671 = vrot.lane.b32.xlu0 %v1667, 32
      %v1672 = vpop.permute.xlu0 %1671
      %1673 = vrot.lane.b32.xlu0 %v1668, 32
      %v1674 = vpop.permute.xlu0 %1673
      %v1677 = vmul.f32 %v1632, %v1672
      %v1678 = vmul.f32 %v1634, %v1674
      %1679 = vrot.lane.b32.xlu0 %v1657, 96
      %v1680 = vpop.permute.xlu0 %1679
      %1681 = vrot.lane.b32.xlu0 %v1658, 96
      %v1682 = vpop.permute.xlu0 %1681
      %v1685 = vadd.f32 %v1677, %v1680
      %v1686 = vadd.f32 %v1678, %v1682
      %v1687 = vstv %s1529
      %vm1688 = vcmp.lt.s32.totalorder %v1687, %v702
      %vm1689 = vcmp.lt.s32.totalorder %v1687, %v703
      %v1690 = vsel %vm1688, 1, 0
      %v1691 = vsel %vm1689, 1, 0
      %1692 = vset.pattern.permute.xlu0 0
      %1693 = vperm.xlu0 %1692, %v1690
      %v1694 = vpop.permute.xlu0 %1693
      %1695 = vset.pattern.permute.xlu0 0
      %1696 = vperm.xlu0 %1695, %v1691
      %v1697 = vpop.permute.xlu0 %1696
      %vm1698 = vcmp.eq.s32.totalorder %v1694, 1
      %vm1699 = vcmp.eq.s32.totalorder %v1697, 1
      %1700 = vrot.lane.b32.xlu0 %v1530, 32
      %v1701 = vpop.permute.xlu0 %1700
      %1702 = vrot.lane.b32.xlu0 %v1531, 32
      %v1703 = vpop.permute.xlu0 %1702
      %v1706 = vsel %vm1698, %v1685, %v1701
      %v1707 = vsel %vm1699, %v1686, %v1703
      %1710 = vrot.lane.b32.xlu0 %v1706, 96
      %v1711 = vpop.permute.xlu0 %1710
      %1712 = vrot.lane.b32.xlu0 %v1707, 96
      %v1713 = vpop.permute.xlu0 %1712
      %1716 = vst.msk [vmem:[#allocation2] sm:$0xff] %vm721, %v1711
      %1717 = vst.msk [vmem:[#allocation2 + $0x8] sm:$0xff] %vm721, %v1713
      %v1718 = vsel %vm1698, %v1685, 0.0
      %v1719 = vsel %vm1699, %v1686, 0.0
      %1722 = vrot.lane.b32.xlu0 %v1718, 96
      %v1723 = vpop.permute.xlu0 %1722
      %1724 = vrot.lane.b32.xlu0 %v1719, 96
      %v1725 = vpop.permute.xlu0 %1724
      %s1728 = scalar_lea.vmem %s438, %s1532
      %1729 = vst.msk [vmem:[%s1728] sm:$0xff] %vm721, %v1723
      %1730 = vst.msk [vmem:[%s1728 + $0x8] sm:$0xff] %vm721, %v1725
      %s1731 = smul.u32 %s693, 5
      %s1732 = smul.u32 %s23, 2
      %s1733 = sadd.s32 %s1731, %s1732
      %v1734 = vld [vmem:[#allocation2] sm:$0xff]
      %v1735 = vld [vmem:[#allocation2 + $0x8] sm:$0xff]
      %s1736 = smul.u32 %s1733, 16
      %s1737 = scalar_lea.vmem [#allocation3], %s1736
      %v1738 = vld [vmem:[%s1737] sm:$0xff]
      %v1739 = vld [vmem:[%s1737 + $0x8] sm:$0xff]
      %v1740 = vld [vmem:[%s420] sm:$0xff]
      %v1741 = vld [vmem:[%s420 + $0x8] sm:$0xff]
      %v1742 = vld [vmem:[%s420 + $0x10] sm:$0xff]
      %v1743 = vld [vmem:[%s420 + $0x18] sm:$0xff]
      %v1745 = vsel %vm721, %v1734, 0
      %v1748 = vsel %vm721, %v1735, 0
      %1750 = vmatprep.subr.mxu0 0.0
      %1751 = vmatpush1.msra.mxu0 %v1740
      %1752 = vmatprep.subr.mxu0 0.0
      %1753 = vmatpush1.msra.mxu0 %v1741
      %1754 = vmatprep.subr.mxu0 0.0
      %1755 = vmatpush1.msra.mxu0 %v1742
      %1756 = vmatprep.subr.mxu0 0.0
      %1757 = vmatpush1.msra.mxu0 %v1743
      %1758 = vmatprep.subr.mxu0 0.0
      %1759 = vmatpush1.msra.mxu0 0.0
      %1760 = vmatprep.subr.mxu0 0.0
      %1761 = vmatpush1.msra.mxu0 0.0
      %1762 = vmatprep.subr.mxu0 0.0
      %1763 = vmatpush1.msra.mxu0 0.0
      %1764 = vmatprep.subr.mxu0 0.0
      %1765 = vmatpush1.msra.mxu0 0.0
      %1766 = vmatprep.subr.mxu0 0.0
      %1767 = vmatpush1.msra.mxu0 0.0
      %1768 = vmatprep.subr.mxu0 0.0
      %1769 = vmatpush1.msra.mxu0 0.0
      %1770 = vmatprep.subr.mxu0 0.0
      %1771 = vmatpush1.msra.mxu0 0.0
      %1772 = vmatprep.subr.mxu0 0.0
      %1773 = vmatpush1.msra.mxu0 0.0
      %1774 = vmatprep.subr.mxu0 0.0
      %1775 = vmatpush1.msra.mxu0 0.0
      %1776 = vmatprep.subr.mxu0 0.0
      %1777 = vmatpush1.msra.mxu0 0.0
      %1778 = vmatprep.subr.mxu0 0.0
      %1779 = vmatpush1.msra.mxu0 0.0
      %1780 = vmatprep.subr.mxu0 0.0
      %1781 = vmatpush1.msra.mxu0 0.0
      %1782 = vmatprep.subr.mxu0 0.0
      %1783 = vmatpush1.msra.mxu0 0.0
      %1784 = vmatprep.subr.mxu0 0.0
      %1785 = vmatpush1.msra.mxu0 0.0
      %1786 = vmatprep.subr.mxu0 0.0
      %1787 = vmatpush1.msra.mxu0 0.0
      %1788 = vmatprep.subr.mxu0 0.0
      %1789 = vmatpush1.msra.mxu0 0.0
      %1790 = vmatprep.subr.mxu0 0.0
      %1791 = vmatpush1.msra.mxu0 0.0
      %1792 = vmatprep.subr.mxu0 0.0
      %1793 = vmatpush1.msra.mxu0 0.0
      %1794 = vmatprep.subr.mxu0 0.0
      %1795 = vmatpush1.msra.mxu0 0.0
      %1796 = vmatprep.subr.mxu0 0.0
      %1797 = vmatpush1.msra.mxu0 0.0
      %1798 = vmatprep.subr.mxu0 0.0
      %1799 = vmatpush1.msra.mxu0 0.0
      %1800 = vmatprep.subr.mxu0 0.0
      %1801 = vmatpush1.msra.mxu0 0.0
      %1802 = vmatprep.subr.mxu0 0.0
      %1803 = vmatpush1.msra.mxu0 0.0
      %1804 = vmatprep.subr.mxu0 0.0
      %1805 = vmatpush1.msra.mxu0 0.0
      %1806 = vmatprep.subr.mxu0 0.0
      %1807 = vmatpush1.msra.mxu0 0.0
      %1808 = vmatprep.subr.mxu0 0.0
      %1809 = vmatpush1.msra.mxu0 0.0
      %1810 = vmatprep.subr.mxu0 0.0
      %1811 = vmatpush1.msra.mxu0 0.0
      %1812 = vmatprep.subr.mxu0 0.0
      %1813 = vmatpush1.msra.mxu0 0.0
      %1814 = vmatprep.mubr.f32.mxu0 0.0
      %1815 = vmatmul.mubr.f32.gmra.mrb[0].mxu0 %v1745
      %v1816 = vpop.f32.mrb[0].mxu0
      %v1817 = vadd.f32 0.0, %v1816
      %v1818 = vpop.f32.mrb[0].mxu0
      %1819 = vmatprep.mubr.f32.mxu0 0.0
      %1820 = vmatmul.mubr.f32.gmra.mrb[0].mxu0 %v1748
      %v1821 = vpop.f32.mrb[0].mxu0
      %v1822 = vadd.f32 0.0, %v1821
      %v1823 = vpop.f32.mrb[0].mxu0
      %1824 = vdwg.mxu0
      %v1825 = vadd.f32 %v1738, %v1817
      %v1826 = vadd.f32 %v1739, %v1822
      %v1827 = vxor.u32 %v1825, 2147483648
      %v1828 = vxor.u32 %v1826, 2147483648
      %v1829 = vmul.f32 %v1827, 1.442695
      %v1830 = vpow.pop %v1829
      %v1831 = vmul.f32 %v1828, 1.442695
      %v1832 = vpow.pop %v1831
      %v1833 = vadd.f32 %v1830, 1.0
      %v1834 = vadd.f32 %v1832, 1.0
      %v1835 = vrcp.pop %v1833
      %v1836 = vmul.f32 1.0, %v1835
      %v1837 = vrcp.pop %v1834
      %v1838 = vmul.f32 1.0, %v1837
      %v1839 = vadd.f32 %v1817, %v818
      %v1840 = vadd.f32 %v1822, %v818
      %1843 = vrot.lane.b32.xlu0 %v1839, 64
      %v1844 = vpop.permute.xlu0 %1843
      %1845 = vrot.lane.b32.xlu0 %v1840, 64
      %v1846 = vpop.permute.xlu0 %1845
      %v1849 = vmul.f32 %v1836, %v1844
      %v1850 = vmul.f32 %v1838, %v1846
      %1853 = vrot.lane.b32.xlu0 %v1849, 64
      %v1854 = vpop.permute.xlu0 %1853
      %1855 = vrot.lane.b32.xlu0 %v1850, 64
      %v1856 = vpop.permute.xlu0 %1855
      %v1859 = vadd.f32 %v1738, %v1854
      %v1860 = vadd.f32 %v1739, %v1856
      %v1861 = vtanh.pop %v1859
      %v1862 = vtanh.pop %v1860
      %1865 = vrot.lane.b32.xlu0 %v1861, 64
      %v1866 = vpop.permute.xlu0 %1865
      %1867 = vrot.lane.b32.xlu0 %v1862, 64
      %v1868 = vpop.permute.xlu0 %1867
      %v1871 = vsub.f32 %v1734, %v1866
      %v1872 = vsub.f32 %v1735, %v1868
      %1875 = vrot.lane.b32.xlu0 %v1871, 32
      %v1876 = vpop.permute.xlu0 %1875
      %1877 = vrot.lane.b32.xlu0 %v1872, 32
      %v1878 = vpop.permute.xlu0 %1877
      %v1881 = vmul.f32 %v1836, %v1876
      %v1882 = vmul.f32 %v1838, %v1878
      %1883 = vrot.lane.b32.xlu0 %v1861, 96
      %v1884 = vpop.permute.xlu0 %1883
      %1885 = vrot.lane.b32.xlu0 %v1862, 96
      %v1886 = vpop.permute.xlu0 %1885
      %v1889 = vadd.f32 %v1881, %v1884
      %v1890 = vadd.f32 %v1882, %v1886
      %v1891 = vstv %s1733
      %vm1892 = vcmp.lt.s32.totalorder %v1891, %v702
      %vm1893 = vcmp.lt.s32.totalorder %v1891, %v703
      %v1894 = vsel %vm1892, 1, 0
      %v1895 = vsel %vm1893, 1, 0
      %1896 = vset.pattern.permute.xlu0 0
      %1897 = vperm.xlu0 %1896, %v1894
      %v1898 = vpop.permute.xlu0 %1897
      %1899 = vset.pattern.permute.xlu0 0
      %1900 = vperm.xlu0 %1899, %v1895
      %v1901 = vpop.permute.xlu0 %1900
      %vm1902 = vcmp.eq.s32.totalorder %v1898, 1
      %vm1903 = vcmp.eq.s32.totalorder %v1901, 1
      %1904 = vrot.lane.b32.xlu0 %v1734, 32
      %v1905 = vpop.permute.xlu0 %1904
      %1906 = vrot.lane.b32.xlu0 %v1735, 32
      %v1907 = vpop.permute.xlu0 %1906
      %v1910 = vsel %vm1902, %v1889, %v1905
      %v1911 = vsel %vm1903, %v1890, %v1907
      %1914 = vrot.lane.b32.xlu0 %v1910, 96
      %v1915 = vpop.permute.xlu0 %1914
      %1916 = vrot.lane.b32.xlu0 %v1911, 96
      %v1917 = vpop.permute.xlu0 %1916
      %1920 = vst.msk [vmem:[#allocation2] sm:$0xff] %vm721, %v1915
      %1921 = vst.msk [vmem:[#allocation2 + $0x8] sm:$0xff] %vm721, %v1917
      %v1922 = vsel %vm1902, %v1889, 0.0
      %v1923 = vsel %vm1903, %v1890, 0.0
      %1926 = vrot.lane.b32.xlu0 %v1922, 96
      %v1927 = vpop.permute.xlu0 %1926
      %1928 = vrot.lane.b32.xlu0 %v1923, 96
      %v1929 = vpop.permute.xlu0 %1928
      %s1932 = scalar_lea.vmem %s438, %s1736
      %1933 = vst.msk [vmem:[%s1932] sm:$0xff] %vm721, %v1927
      %1934 = vst.msk [vmem:[%s1932 + $0x8] sm:$0xff] %vm721, %v1929
      %s1935 = smul.u32 %s693, 6
      %s1936 = sadd.s32 %s1935, %s23
      %v1937 = vld [vmem:[#allocation2] sm:$0xff]
      %v1938 = vld [vmem:[#allocation2 + $0x8] sm:$0xff]
      %s1939 = smul.u32 %s1936, 16
      %s1940 = scalar_lea.vmem [#allocation3], %s1939
      %v1941 = vld [vmem:[%s1940] sm:$0xff]
      %v1942 = vld [vmem:[%s1940 + $0x8] sm:$0xff]
      %v1943 = vld [vmem:[%s420] sm:$0xff]
      %v1944 = vld [vmem:[%s420 + $0x8] sm:$0xff]
      %v1945 = vld [vmem:[%s420 + $0x10] sm:$0xff]
      %v1946 = vld [vmem:[%s420 + $0x18] sm:$0xff]
      %v1948 = vsel %vm721, %v1937, 0
      %v1951 = vsel %vm721, %v1938, 0
      %1953 = vmatprep.subr.mxu0 0.0
      %1954 = vmatpush1.msra.mxu0 %v1943
      %1955 = vmatprep.subr.mxu0 0.0
      %1956 = vmatpush1.msra.mxu0 %v1944
      %1957 = vmatprep.subr.mxu0 0.0
      %1958 = vmatpush1.msra.mxu0 %v1945
      %1959 = vmatprep.subr.mxu0 0.0
      %1960 = vmatpush1.msra.mxu0 %v1946
      %1961 = vmatprep.subr.mxu0 0.0
      %1962 = vmatpush1.msra.mxu0 0.0
      %1963 = vmatprep.subr.mxu0 0.0
      %1964 = vmatpush1.msra.mxu0 0.0
      %1965 = vmatprep.subr.mxu0 0.0
      %1966 = vmatpush1.msra.mxu0 0.0
      %1967 = vmatprep.subr.mxu0 0.0
      %1968 = vmatpush1.msra.mxu0 0.0
      %1969 = vmatprep.subr.mxu0 0.0
      %1970 = vmatpush1.msra.mxu0 0.0
      %1971 = vmatprep.subr.mxu0 0.0
      %1972 = vmatpush1.msra.mxu0 0.0
      %1973 = vmatprep.subr.mxu0 0.0
      %1974 = vmatpush1.msra.mxu0 0.0
      %1975 = vmatprep.subr.mxu0 0.0
      %1976 = vmatpush1.msra.mxu0 0.0
      %1977 = vmatprep.subr.mxu0 0.0
      %1978 = vmatpush1.msra.mxu0 0.0
      %1979 = vmatprep.subr.mxu0 0.0
      %1980 = vmatpush1.msra.mxu0 0.0
      %1981 = vmatprep.subr.mxu0 0.0
      %1982 = vmatpush1.msra.mxu0 0.0
      %1983 = vmatprep.subr.mxu0 0.0
      %1984 = vmatpush1.msra.mxu0 0.0
      %1985 = vmatprep.subr.mxu0 0.0
      %1986 = vmatpush1.msra.mxu0 0.0
      %1987 = vmatprep.subr.mxu0 0.0
      %1988 = vmatpush1.msra.mxu0 0.0
      %1989 = vmatprep.subr.mxu0 0.0
      %1990 = vmatpush1.msra.mxu0 0.0
      %1991 = vmatprep.subr.mxu0 0.0
      %1992 = vmatpush1.msra.mxu0 0.0
      %1993 = vmatprep.subr.mxu0 0.0
      %1994 = vmatpush1.msra.mxu0 0.0
      %1995 = vmatprep.subr.mxu0 0.0
      %1996 = vmatpush1.msra.mxu0 0.0
      %1997 = vmatprep.subr.mxu0 0.0
      %1998 = vmatpush1.msra.mxu0 0.0
      %1999 = vmatprep.subr.mxu0 0.0
      %2000 = vmatpush1.msra.mxu0 0.0
      %2001 = vmatprep.subr.mxu0 0.0
      %2002 = vmatpush1.msra.mxu0 0.0
      %2003 = vmatprep.subr.mxu0 0.0
      %2004 = vmatpush1.msra.mxu0 0.0
      %2005 = vmatprep.subr.mxu0 0.0
      %2006 = vmatpush1.msra.mxu0 0.0
      %2007 = vmatprep.subr.mxu0 0.0
      %2008 = vmatpush1.msra.mxu0 0.0
      %2009 = vmatprep.subr.mxu0 0.0
      %2010 = vmatpush1.msra.mxu0 0.0
      %2011 = vmatprep.subr.mxu0 0.0
      %2012 = vmatpush1.msra.mxu0 0.0
      %2013 = vmatprep.subr.mxu0 0.0
      %2014 = vmatpush1.msra.mxu0 0.0
      %2015 = vmatprep.subr.mxu0 0.0
      %2016 = vmatpush1.msra.mxu0 0.0
      %2017 = vmatprep.mubr.f32.mxu0 0.0
      %2018 = vmatmul.mubr.f32.gmra.mrb[0].mxu0 %v1948
      %v2019 = vpop.f32.mrb[0].mxu0
      %v2020 = vadd.f32 0.0, %v2019
      %v2021 = vpop.f32.mrb[0].mxu0
      %2022 = vmatprep.mubr.f32.mxu0 0.0
      %2023 = vmatmul.mubr.f32.gmra.mrb[0].mxu0 %v1951
      %v2024 = vpop.f32.mrb[0].mxu0
      %v2025 = vadd.f32 0.0, %v2024
      %v2026 = vpop.f32.mrb[0].mxu0
      %2027 = vdwg.mxu0
      %v2028 = vadd.f32 %v1941, %v2020
      %v2029 = vadd.f32 %v1942, %v2025
      %v2030 = vxor.u32 %v2028, 2147483648
      %v2031 = vxor.u32 %v2029, 2147483648
      %v2032 = vmul.f32 %v2030, 1.442695
      %v2033 = vpow.pop %v2032
      %v2034 = vmul.f32 %v2031, 1.442695
      %v2035 = vpow.pop %v2034
      %v2036 = vadd.f32 %v2033, 1.0
      %v2037 = vadd.f32 %v2035, 1.0
      %v2038 = vrcp.pop %v2036
      %v2039 = vmul.f32 1.0, %v2038
      %v2040 = vrcp.pop %v2037
      %v2041 = vmul.f32 1.0, %v2040
      %v2042 = vadd.f32 %v2020, %v818
      %v2043 = vadd.f32 %v2025, %v818
      %2046 = vrot.lane.b32.xlu0 %v2042, 64
      %v2047 = vpop.permute.xlu0 %2046
      %2048 = vrot.lane.b32.xlu0 %v2043, 64
      %v2049 = vpop.permute.xlu0 %2048
      %v2052 = vmul.f32 %v2039, %v2047
      %v2053 = vmul.f32 %v2041, %v2049
      %2056 = vrot.lane.b32.xlu0 %v2052, 64
      %v2057 = vpop.permute.xlu0 %2056
      %2058 = vrot.lane.b32.xlu0 %v2053, 64
      %v2059 = vpop.permute.xlu0 %2058
      %v2062 = vadd.f32 %v1941, %v2057
      %v2063 = vadd.f32 %v1942, %v2059
      %v2064 = vtanh.pop %v2062
      %v2065 = vtanh.pop %v2063
      %2068 = vrot.lane.b32.xlu0 %v2064, 64
      %v2069 = vpop.permute.xlu0 %2068
      %2070 = vrot.lane.b32.xlu0 %v2065, 64
      %v2071 = vpop.permute.xlu0 %2070
      %v2074 = vsub.f32 %v1937, %v2069
      %v2075 = vsub.f32 %v1938, %v2071
      %2078 = vrot.lane.b32.xlu0 %v2074, 32
      %v2079 = vpop.permute.xlu0 %2078
      %2080 = vrot.lane.b32.xlu0 %v2075, 32
      %v2081 = vpop.permute.xlu0 %2080
      %v2084 = vmul.f32 %v2039, %v2079
      %v2085 = vmul.f32 %v2041, %v2081
      %2086 = vrot.lane.b32.xlu0 %v2064, 96
      %v2087 = vpop.permute.xlu0 %2086
      %2088 = vrot.lane.b32.xlu0 %v2065, 96
      %v2089 = vpop.permute.xlu0 %2088
      %v2092 = vadd.f32 %v2084, %v2087
      %v2093 = vadd.f32 %v2085, %v2089
      %v2094 = vstv %s1936
      %vm2095 = vcmp.lt.s32.totalorder %v2094, %v702
      %vm2096 = vcmp.lt.s32.totalorder %v2094, %v703
      %v2097 = vsel %vm2095, 1, 0
      %v2098 = vsel %vm2096, 1, 0
      %2099 = vset.pattern.permute.xlu0 0
      %2100 = vperm.xlu0 %2099, %v2097
      %v2101 = vpop.permute.xlu0 %2100
      %2102 = vset.pattern.permute.xlu0 0
      %2103 = vperm.xlu0 %2102, %v2098
      %v2104 = vpop.permute.xlu0 %2103
      %vm2105 = vcmp.eq.s32.totalorder %v2101, 1
      %vm2106 = vcmp.eq.s32.totalorder %v2104, 1
      %2107 = vrot.lane.b32.xlu0 %v1937, 32
      %v2108 = vpop.permute.xlu0 %2107
      %2109 = vrot.lane.b32.xlu0 %v1938, 32
      %v2110 = vpop.permute.xlu0 %2109
      %v2113 = vsel %vm2105, %v2092, %v2108
      %v2114 = vsel %vm2106, %v2093, %v2110
      %2117 = vrot.lane.b32.xlu0 %v2113, 96
      %v2118 = vpop.permute.xlu0 %2117
      %2119 = vrot.lane.b32.xlu0 %v2114, 96
      %v2120 = vpop.permute.xlu0 %2119
      %2123 = vst.msk [vmem:[#allocation2] sm:$0xff] %vm721, %v2118
      %2124 = vst.msk [vmem:[#allocation2 + $0x8] sm:$0xff] %vm721, %v2120
      %v2125 = vsel %vm2105, %v2092, 0.0
      %v2126 = vsel %vm2106, %v2093, 0.0
      %2129 = vrot.lane.b32.xlu0 %v2125, 96
      %v2130 = vpop.permute.xlu0 %2129
      %2131 = vrot.lane.b32.xlu0 %v2126, 96
      %v2132 = vpop.permute.xlu0 %2131
      %s2135 = scalar_lea.vmem %s438, %s1939
      %2136 = vst.msk [vmem:[%s2135] sm:$0xff] %vm721, %v2130
      %2137 = vst.msk [vmem:[%s2135 + $0x8] sm:$0xff] %vm721, %v2132
      %s2138 = smul.u32 %s693, 7
      %v2139 = vld [vmem:[#allocation2] sm:$0xff]
      %v2140 = vld [vmem:[#allocation2 + $0x8] sm:$0xff]
      %s2141 = smul.u32 %s2138, 16
      %s2142 = scalar_lea.vmem [#allocation3], %s2141
      %v2143 = vld [vmem:[%s2142] sm:$0xff]
      %v2144 = vld [vmem:[%s2142 + $0x8] sm:$0xff]
      %v2145 = vld [vmem:[%s420] sm:$0xff]
      %v2146 = vld [vmem:[%s420 + $0x8] sm:$0xff]
      %v2147 = vld [vmem:[%s420 + $0x10] sm:$0xff]
      %v2148 = vld [vmem:[%s420 + $0x18] sm:$0xff]
      %v2150 = vsel %vm721, %v2139, 0
      %v2153 = vsel %vm721, %v2140, 0
      %2155 = vmatprep.subr.mxu0 0.0
      %2156 = vmatpush1.msra.mxu0 %v2145
      %2157 = vmatprep.subr.mxu0 0.0
      %2158 = vmatpush1.msra.mxu0 %v2146
      %2159 = vmatprep.subr.mxu0 0.0
      %2160 = vmatpush1.msra.mxu0 %v2147
      %2161 = vmatprep.subr.mxu0 0.0
      %2162 = vmatpush1.msra.mxu0 %v2148
      %2163 = vmatprep.subr.mxu0 0.0
      %2164 = vmatpush1.msra.mxu0 0.0
      %2165 = vmatprep.subr.mxu0 0.0
      %2166 = vmatpush1.msra.mxu0 0.0
      %2167 = vmatprep.subr.mxu0 0.0
      %2168 = vmatpush1.msra.mxu0 0.0
      %2169 = vmatprep.subr.mxu0 0.0
      %2170 = vmatpush1.msra.mxu0 0.0
      %2171 = vmatprep.subr.mxu0 0.0
      %2172 = vmatpush1.msra.mxu0 0.0
      %2173 = vmatprep.subr.mxu0 0.0
      %2174 = vmatpush1.msra.mxu0 0.0
      %2175 = vmatprep.subr.mxu0 0.0
      %2176 = vmatpush1.msra.mxu0 0.0
      %2177 = vmatprep.subr.mxu0 0.0
      %2178 = vmatpush1.msra.mxu0 0.0
      %2179 = vmatprep.subr.mxu0 0.0
      %2180 = vmatpush1.msra.mxu0 0.0
      %2181 = vmatprep.subr.mxu0 0.0
      %2182 = vmatpush1.msra.mxu0 0.0
      %2183 = vmatprep.subr.mxu0 0.0
      %2184 = vmatpush1.msra.mxu0 0.0
      %2185 = vmatprep.subr.mxu0 0.0
      %2186 = vmatpush1.msra.mxu0 0.0
      %2187 = vmatprep.subr.mxu0 0.0
      %2188 = vmatpush1.msra.mxu0 0.0
      %2189 = vmatprep.subr.mxu0 0.0
      %2190 = vmatpush1.msra.mxu0 0.0
      %2191 = vmatprep.subr.mxu0 0.0
      %2192 = vmatpush1.msra.mxu0 0.0
      %2193 = vmatprep.subr.mxu0 0.0
      %2194 = vmatpush1.msra.mxu0 0.0
      %2195 = vmatprep.subr.mxu0 0.0
      %2196 = vmatpush1.msra.mxu0 0.0
      %2197 = vmatprep.subr.mxu0 0.0
      %2198 = vmatpush1.msra.mxu0 0.0
      %2199 = vmatprep.subr.mxu0 0.0
      %2200 = vmatpush1.msra.mxu0 0.0
      %2201 = vmatprep.subr.mxu0 0.0
      %2202 = vmatpush1.msra.mxu0 0.0
      %2203 = vmatprep.subr.mxu0 0.0
      %2204 = vmatpush1.msra.mxu0 0.0
      %2205 = vmatprep.subr.mxu0 0.0
      %2206 = vmatpush1.msra.mxu0 0.0
      %2207 = vmatprep.subr.mxu0 0.0
      %2208 = vmatpush1.msra.mxu0 0.0
      %2209 = vmatprep.subr.mxu0 0.0
      %2210 = vmatpush1.msra.mxu0 0.0
      %2211 = vmatprep.subr.mxu0 0.0
      %2212 = vmatpush1.msra.mxu0 0.0
      %2213 = vmatprep.subr.mxu0 0.0
      %2214 = vmatpush1.msra.mxu0 0.0
      %2215 = vmatprep.subr.mxu0 0.0
      %2216 = vmatpush1.msra.mxu0 0.0
      %2217 = vmatprep.subr.mxu0 0.0
      %2218 = vmatpush1.msra.mxu0 0.0
      %2219 = vmatprep.mubr.f32.mxu0 0.0
      %2220 = vmatmul.mubr.f32.gmra.mrb[0].mxu0 %v2150
      %v2221 = vpop.f32.mrb[0].mxu0
      %v2222 = vadd.f32 0.0, %v2221
      %v2223 = vpop.f32.mrb[0].mxu0
      %2224 = vmatprep.mubr.f32.mxu0 0.0
      %2225 = vmatmul.mubr.f32.gmra.mrb[0].mxu0 %v2153
      %v2226 = vpop.f32.mrb[0].mxu0
      %v2227 = vadd.f32 0.0, %v2226
      %v2228 = vpop.f32.mrb[0].mxu0
      %2229 = vdwg.mxu0
      %v2230 = vadd.f32 %v2143, %v2222
      %v2231 = vadd.f32 %v2144, %v2227
      %v2232 = vxor.u32 %v2230, 2147483648
      %v2233 = vxor.u32 %v2231, 2147483648
      %v2234 = vmul.f32 %v2232, 1.442695
      %v2235 = vpow.pop %v2234
      %v2236 = vmul.f32 %v2233, 1.442695
      %v2237 = vpow.pop %v2236
      %v2238 = vadd.f32 %v2235, 1.0
      %v2239 = vadd.f32 %v2237, 1.0
      %v2240 = vrcp.pop %v2238
      %v2241 = vmul.f32 1.0, %v2240
      %v2242 = vrcp.pop %v2239
      %v2243 = vmul.f32 1.0, %v2242
      %v2244 = vadd.f32 %v2222, %v818
      %v2245 = vadd.f32 %v2227, %v818
      %2248 = vrot.lane.b32.xlu0 %v2244, 64
      %v2249 = vpop.permute.xlu0 %2248
      %2250 = vrot.lane.b32.xlu0 %v2245, 64
      %v2251 = vpop.permute.xlu0 %2250
      %v2254 = vmul.f32 %v2241, %v2249
      %v2255 = vmul.f32 %v2243, %v2251
      %2258 = vrot.lane.b32.xlu0 %v2254, 64
      %v2259 = vpop.permute.xlu0 %2258
      %2260 = vrot.lane.b32.xlu0 %v2255, 64
      %v2261 = vpop.permute.xlu0 %2260
      %v2264 = vadd.f32 %v2143, %v2259
      %v2265 = vadd.f32 %v2144, %v2261
      %v2266 = vtanh.pop %v2264
      %v2267 = vtanh.pop %v2265
      %2270 = vrot.lane.b32.xlu0 %v2266, 64
      %v2271 = vpop.permute.xlu0 %2270
      %2272 = vrot.lane.b32.xlu0 %v2267, 64
      %v2273 = vpop.permute.xlu0 %2272
      %v2276 = vsub.f32 %v2139, %v2271
      %v2277 = vsub.f32 %v2140, %v2273
      %2280 = vrot.lane.b32.xlu0 %v2276, 32
      %v2281 = vpop.permute.xlu0 %2280
      %2282 = vrot.lane.b32.xlu0 %v2277, 32
      %v2283 = vpop.permute.xlu0 %2282
      %v2286 = vmul.f32 %v2241, %v2281
      %v2287 = vmul.f32 %v2243, %v2283
      %2288 = vrot.lane.b32.xlu0 %v2266, 96
      %v2289 = vpop.permute.xlu0 %2288
      %2290 = vrot.lane.b32.xlu0 %v2267, 96
      %v2291 = vpop.permute.xlu0 %2290
      %v2294 = vadd.f32 %v2286, %v2289
      %v2295 = vadd.f32 %v2287, %v2291
      %v2296 = vstv %s2138
      %vm2297 = vcmp.lt.s32.totalorder %v2296, %v702
      %vm2298 = vcmp.lt.s32.totalorder %v2296, %v703
      %v2299 = vsel %vm2297, 1, 0
      %v2300 = vsel %vm2298, 1, 0
      %2301 = vset.pattern.permute.xlu0 0
      %2302 = vperm.xlu0 %2301, %v2299
      %v2303 = vpop.permute.xlu0 %2302
      %2304 = vset.pattern.permute.xlu0 0
      %2305 = vperm.xlu0 %2304, %v2300
      %v2306 = vpop.permute.xlu0 %2305
      %vm2307 = vcmp.eq.s32.totalorder %v2303, 1
      %vm2308 = vcmp.eq.s32.totalorder %v2306, 1
      %2309 = vrot.lane.b32.xlu0 %v2139, 32
      %v2310 = vpop.permute.xlu0 %2309
      %2311 = vrot.lane.b32.xlu0 %v2140, 32
      %v2312 = vpop.permute.xlu0 %2311
      %v2315 = vsel %vm2307, %v2294, %v2310
      %v2316 = vsel %vm2308, %v2295, %v2312
      %2319 = vrot.lane.b32.xlu0 %v2315, 96
      %v2320 = vpop.permute.xlu0 %2319
      %2321 = vrot.lane.b32.xlu0 %v2316, 96
      %v2322 = vpop.permute.xlu0 %2321
      %2325 = vst.msk [vmem:[#allocation2] sm:$0xff] %vm721, %v2320
      %2326 = vst.msk [vmem:[#allocation2 + $0x8] sm:$0xff] %vm721, %v2322
      %v2327 = vsel %vm2307, %v2294, 0.0
      %v2328 = vsel %vm2308, %v2295, 0.0
      %2331 = vrot.lane.b32.xlu0 %v2327, 96
      %v2332 = vpop.permute.xlu0 %2331
      %2333 = vrot.lane.b32.xlu0 %v2328, 96
      %v2334 = vpop.permute.xlu0 %2333
      %s2337 = scalar_lea.vmem %s438, %s2141
      %2338 = vst.msk [vmem:[%s2337] sm:$0xff] %vm721, %v2332
      %2339 = vst.msk [vmem:[%s2337 + $0x8] sm:$0xff] %vm721, %v2334
      %p2340 = scmp.eq.s32.totalorder %s24, 1
      // Predicated region
      $region49: #{gru_encoder_forward.3} parent=43 // pred_check
        %p2341 = pneg %p2340
      $region50: #{gru_encoder_forward.3} parent=43 // pred_check_branch
        %2343 = sbr.rel (%p2341) target = $region52
      $region51: #{gru_encoder_forward.3} parent=43 // pred_region
        %v2344 = vld [vmem:[#allocation2] sm:$0xff]
        %v2345 = vld [vmem:[#allocation2 + $0x8] sm:$0xff]
        %2346 = vst.msk [vmem:[%s449] sm:$0xff] %vm721, %v2344
        %2347 = vst.msk [vmem:[%s449 + $0x8] sm:$0xff] %vm721, %v2345
      $region52: #{gru_encoder_forward.3} parent=43 // pred_fallthru
        _
      %s2348 = ssub.s32 1, %s23
      %s2349 = smul.u32 %s24, %s2348
      %s2350 = ssub.s32 1, %s24
      %s2351 = smul.u32 %s2350, %s23
      %s2352 = sadd.s32 %s2349, %s2351
      %s2353 = smul.u32 8, %s2352
      %p2354 = scmp.lt.s32.totalorder %s23, 1
      %s2355 = scalar_select %p2354, %s23, 1
      %p2356 = scmp.lt.s32.totalorder %s2353, 15
      %s2357 = scalar_select %p2356, %s2353, 15
      %s2358 = smul.addr %s2357, 2
      %s2359 = smul.addr %s2355, 32
      %s2360 = sadd.s32 %s2358, %s2359
      %s2361 = smul.addr %s2360, 8
      %s2362 = scalar_lea.vmem %s6, %s2361
      %p2363 = scmp.lt.s32.totalorder %s23, 1
      %s2364 = scalar_select %p2363, %s23, 1
      %s2365 = smul.addr %s2364, 2
      %s2366 = smul.addr %s2365, 8
      %s2367 = scalar_lea.vmem %s7, %s2366
      // Predicated region
      $region53: #{gru_encoder_forward.3} parent=43 // pred_check
        %p2368 = pneg %p222
      $region54: #{gru_encoder_forward.3} parent=43 // pred_check_branch
        %2370 = sbr.rel (%p2368) target = $region56
      $region55: #{gru_encoder_forward.3} parent=43 // pred_region
        %s2371 = ssub.s32 1, %s23
        %s2372 = smul.u32 %s24, %s2371
        %s2373 = ssub.s32 1, %s24
        %s2374 = smul.u32 %s2373, %s23
        %s2375 = sadd.s32 %s2372, %s2374
        %s2376 = smul.u32 8, %s2375
      $region56: #{gru_encoder_forward.3} parent=43 // pred_fallthru
        _
      // Predicated region
      $region57: #{gru_encoder_forward.3} parent=43 // pred_check
        %p2377 = pneg %p248
      $region58: #{gru_encoder_forward.3} parent=43 // pred_check_branch
        %2379 = sbr.rel (%p2377) target = $region60
      $region59: #{gru_encoder_forward.3} parent=43 // pred_region
        _
      $region60: #{gru_encoder_forward.3} parent=43 // pred_fallthru
        _
    $region44: #{gru_encoder_forward.3} parent=5 // pred_fallthru
      _
    %p2380 = scmp.le.s32.totalorder 2, %s14
    // Predicated region
    $region61: #{gru_encoder_forward.3} parent=5 // pred_check
      %p2381 = pneg %p2380
    $region62: #{gru_encoder_forward.3} parent=5 // pred_check_branch
      %2383 = sbr.rel (%p2381) target = $region64
    $region63: #{gru_encoder_forward.3} parent=5 // pred_region
      %s2384 = ssub.s32 %s14, 2
      // Predicated region
      $region65: #{gru_encoder_forward.3} parent=63 // pred_check
        %p2385 = pneg %p228
      $region66: #{gru_encoder_forward.3} parent=63 // pred_check_branch
        %2387 = sbr.rel (%p2385) target = $region68
      $region67: #{gru_encoder_forward.3} parent=63 // pred_region
        %s2388 = ssub.s32 1, %s25
        %s2389 = smul.u32 %s26, %s2388
        %s2390 = ssub.s32 1, %s26
        %s2391 = smul.u32 %s2390, %s25
        %s2392 = sadd.s32 %s2389, %s2391
        %s2393 = smul.u32 8, %s2392
        %p2394 = scmp.lt.s32.totalorder %s25, 1
        %s2395 = scalar_select %p2394, %s25, 1
        %p2396 = scmp.lt.s32.totalorder %s2393, 15
        %s2397 = scalar_select %p2396, %s2393, 15
        %s2398 = smul.addr %s2397, 2
        %s2399 = smul.addr %s2395, 32
        %s2400 = sadd.s32 %s2398, %s2399
        %s2401 = smul.addr %s2400, 8
        %s2402 = scalar_lea.vmem %s6, %s2401
      $region68: #{gru_encoder_forward.3} parent=63 // pred_fallthru
        _
      // Predicated region
      $region69: #{gru_encoder_forward.3} parent=63 // pred_check
        %p2403 = pneg %p254
      $region70: #{gru_encoder_forward.3} parent=63 // pred_check_branch
        %2405 = sbr.rel (%p2403) target = $region72
      $region71: #{gru_encoder_forward.3} parent=63 // pred_region
        %p2406 = scmp.lt.s32.totalorder %s25, 1
        %s2407 = scalar_select %p2406, %s25, 1
        %s2408 = smul.addr %s2407, 2
        %s2409 = smul.addr %s2408, 8
        %s2410 = scalar_lea.vmem %s7, %s2409
      $region72: #{gru_encoder_forward.3} parent=63 // pred_fallthru
        _
    $region64: #{gru_encoder_forward.3} parent=5 // pred_fallthru
      _
  $region6: #{gru_encoder_forward.3} parent=0 // loop_footer
    %s18 = sadd.s32 1, %s14
  $region7: #{gru_encoder_forward.3} parent=0 // loop_footer_branch
    %13 = sbr.rel target = $region3
  $region8: #{gru_encoder_forward.3} parent=0 // loop_exit
    _

// kernel: gru_encoder_forward.4
$region0: #{gru_encoder_forward.4}
  #allocation0 [shape = 'u32[]', space=smem, size = 0x4, offset = 0x4, fixed_abs, tag = 'smem constant byte address 0x4 - core index']
  #allocation1 [shape = 'u32[144,128]{1,0:T(1,128)}', space=vmem, size = 0x12000, scoped, tag = 'internal scratch']
  #allocation2 [shape = 'f32[16,32]{1,0:T(8,128)}', space=vmem, size = 0x2000, scoped, tag = 'scratch operand']
  #allocation3 [shape = 'f32[8,16,96]{2,1,0:T(8,128)}', space=vmem, size = 0x10000, scoped, tag = 'scratch operand']
  %s0 = inlined_call_operand.vmem [shape: f32[2,16,16,32], index: 0, kind: input, shape index: {}]
  %s1 = inlined_call_operand.vmem [shape: f32[2,2,32,96], index: 1, kind: input, shape index: {}]
  %s2 = inlined_call_operand.vmem [shape: f32[2,1,96], index: 2, kind: input, shape index: {}]
  %s3 = inlined_call_operand.vmem [shape: f32[2,32,96], index: 3, kind: input, shape index: {}]
  %s4 = inlined_call_operand.vmem [shape: f32[2,1,32], index: 4, kind: input, shape index: {}]
  %s5 = inlined_call_operand.vmem [shape: s32[16,1], index: 5, kind: input, shape index: {}]
  %s6 = inlined_call_operand.vmem [shape: f32[2,16,16,32], index: 6, kind: output, shape index: {0}]
  %s7 = inlined_call_operand.vmem [shape: f32[2,16,32], index: 7, kind: output, shape index: {1}]
  %8 = xla_tuple %s6, %s7
  %s9 = sld [smem:[#allocation0]]
  $region111: #{gru_encoder_forward.4} parent=0
    _
  %s11 = ssub.s32 1, %s9
  %s12 = scalar_select 0, %s11, %s9
  $region1: #{gru_encoder_forward.4} parent=0
    #allocation4 [shape = 'u8[262144]{0}', space=vmem, size = 0x40000, scoped, tag = 'input window, operand 0']
    loop: start=0, step=1, limit=6
    $region2: #{gru_encoder_forward.4} parent=1 // loop_pre_header
      _
    $region3: #{gru_encoder_forward.4} parent=1 // loop_header
      %s14 = sphi 0, %s18
      %p15 = scmp.ge.s32.totalorder %s14, 6
      %s21 = sphi 0, %s33
      %s22 = sphi 0, %s29
      %s23 = sphi 0, %s21
      %s24 = sphi 0, %s22
      %s25 = sphi 0, %s23
      %s26 = sphi 0, %s24
      %s46 = sphi 0, %s48
      %s49 = sphi 0, %s46
      %s50 = sphi 0, %s49
      %s66 = sphi 0, %s50
      %s72 = sphi 0, %s74
      %s75 = sphi 0, %s72
      %s76 = sphi 0, %s75
      %s92 = sphi 0, %s76
      %s98 = sphi 0, %s100
      %s101 = sphi 0, %s98
      %s102 = sphi 0, %s101
      %s118 = sphi 0, %s102
      %s124 = sphi 0, %s126
      %s127 = sphi 0, %s124
      %s128 = sphi 0, %s127
      %s144 = sphi 0, %s128
      %s150 = sphi 0, %s152
      %s153 = sphi 0, %s150
      %s154 = sphi 0, %s153
      %s170 = sphi 0, %s154
      %s174 = sphi 0, %s174
      %s176 = sphi 0, %s174
      %s177 = sphi 0, %s176
      %s191 = sphi 0, %s177
      %s209 = sphi 0, %s211
      %s212 = sphi 0, %s209
      %s213 = sphi 0, %s212
      %s229 = sphi 0, %s213
      %s235 = sphi 0, %s237
      %s238 = sphi 0, %s235
      %s239 = sphi 0, %s238
      %s255 = sphi 0, %s239
    $region4: #{gru_encoder_forward.4} parent=1 // loop_header_branch
      %17 = sbr.rel (%p15) target = $region8
    $region5: #{gru_encoder_forward.4} parent=1 // loop_body
      %s19 = ssub.s32 %s14, 1
      %s20 = ssub.s32 %s14, 2
      %s27 = sadd.s32 1, %s22
      %p28 = scmp.ge.s32.totalorder %s27, 2
      %s29 = scalar_select %p28, 0, %s27
      %s30 = sadd.s32 1, %s21
      %s31 = scalar_select %p28, %s30, %s21
      %p32 = scmp.ge.s32.totalorder %s31, 2
      %s33 = scalar_select %p32, 0, %s31
      %s34 = ssub.s32 1, %s21
      %s35 = smul.u32 %s22, %s34
      %s36 = ssub.s32 1, %s22
      %s37 = smul.u32 %s36, %s21
      %s38 = sadd.s32 %s35, %s37
      %s39 = ssub.s32 1, %s33
      %s40 = smul.u32 %s29, %s39
      %s41 = ssub.s32 1, %s29
      %s42 = smul.u32 %s41, %s33
      %s43 = sadd.s32 %s40, %s42
      %s44 = ssub.s32 %s38, %s43
      %p45 = scmp.eq.s32.totalorder %s44, 0
      %s47 = sadd.s32 %s46, 1
      %s48 = scalar_select %p45, %s46, %s47
      %p51 = pneg %p45
      %p52 = scmp.eq.s32.totalorder %s14, 3
      %p53 = por %p51, %p52
      %p54 = scmp.ne.s32.totalorder %s46, %s49
      %p55 = scmp.eq.s32.totalorder %s14, 0
      %p56 = por %p54, %p55
      %p57 = scmp.ne.s32.totalorder %s46, %s49
      %p58 = scmp.eq.s32.totalorder %s19, 3
      %p59 = por %p57, %p58
      %p60 = scmp.ne.s32.totalorder %s49, %s50
      %p61 = scmp.eq.s32.totalorder %s19, 0
      %p62 = por %p60, %p61
      %p63 = scmp.ne.s32.totalorder %s49, %s50
      %p64 = scmp.eq.s32.totalorder %s20, 3
      %p65 = por %p63, %p64
      %p67 = scmp.ne.s32.totalorder %s50, %s66
      %p68 = scmp.eq.s32.totalorder %s20, 0
      %p69 = por %p67, %p68
      %s70 = ssub.s32 %s21, %s33
      %p71 = scmp.eq.s32.totalorder %s70, 0
      %s73 = sadd.s32 %s72, 1
      %s74 = scalar_select %p71, %s72, %s73
      %p77 = pneg %p71
      %p78 = scmp.eq.s32.totalorder %s14, 3
      %p79 = por %p77, %p78
      %p80 = scmp.ne.s32.totalorder %s72, %s75
      %p81 = scmp.eq.s32.totalorder %s14, 0
      %p82 = por %p80, %p81
      %p83 = scmp.ne.s32.totalorder %s72, %s75
      %p84 = scmp.eq.s32.totalorder %s19, 3
      %p85 = por %p83, %p84
      %p86 = scmp.ne.s32.totalorder %s75, %s76
      %p87 = scmp.eq.s32.totalorder %s19, 0
      %p88 = por %p86, %p87
      %p89 = scmp.ne.s32.totalorder %s75, %s76
      %p90 = scmp.eq.s32.totalorder %s20, 3
      %p91 = por %p89, %p90
      %p93 = scmp.ne.s32.totalorder %s76, %s92
      %p94 = scmp.eq.s32.totalorder %s20, 0
      %p95 = por %p93, %p94
      %s96 = ssub.s32 %s21, %s33
      %p97 = scmp.eq.s32.totalorder %s96, 0
      %s99 = sadd.s32 %s98, 1
      %s100 = scalar_select %p97, %s98, %s99
      %p103 = pneg %p97
      %p104 = scmp.eq.s32.totalorder %s14, 3
      %p105 = por %p103, %p104
      %p106 = scmp.ne.s32.totalorder %s98, %s101
      %p107 = scmp.eq.s32.totalorder %s14, 0
      %p108 = por %p106, %p107
      %p109 = scmp.ne.s32.totalorder %s98, %s101
      %p110 = scmp.eq.s32.totalorder %s19, 3
      %p111 = por %p109, %p110
      %p112 = scmp.ne.s32.totalorder %s101, %s102
      %p113 = scmp.eq.s32.totalorder %s19, 0
      %p114 = por %p112, %p113
      %p115 = scmp.ne.s32.totalorder %s101, %s102
      %p116 = scmp.eq.s32.totalorder %s20, 3
      %p117 = por %p115, %p116
      %p119 = scmp.ne.s32.totalorder %s102, %s118
      %p120 = scmp.eq.s32.totalorder %s20, 0
      %p121 = por %p119, %p120
      %s122 = ssub.s32 %s21, %s33
      %p123 = scmp.eq.s32.totalorder %s122, 0
      %s125 = sadd.s32 %s124, 1
      %s126 = scalar_select %p123, %s124, %s125
      %p129 = pneg %p123
      %p130 = scmp.eq.s32.totalorder %s14, 3
      %p131 = por %p129, %p130
      %p132 = scmp.ne.s32.totalorder %s124, %s127
      %p133 = scmp.eq.s32.totalorder %s14, 0
      %p134 = por %p132, %p133
      %p135 = scmp.ne.s32.totalorder %s124, %s127
      %p136 = scmp.eq.s32.totalorder %s19, 3
      %p137 = por %p135, %p136
      %p138 = scmp.ne.s32.totalorder %s127, %s128
      %p139 = scmp.eq.s32.totalorder %s19, 0
      %p140 = por %p138, %p139
      %p141 = scmp.ne.s32.totalorder %s127, %s128
      %p142 = scmp.eq.s32.totalorder %s20, 3
      %p143 = por %p141, %p142
      %p145 = scmp.ne.s32.totalorder %s128, %s144
      %p146 = scmp.eq.s32.totalorder %s20, 0
      %p147 = por %p145, %p146
      %s148 = ssub.s32 %s21, %s33
      %p149 = scmp.eq.s32.totalorder %s148, 0
      %s151 = sadd.s32 %s150, 1
      %s152 = scalar_select %p149, %s150, %s151
      %p155 = pneg %p149
      %p156 = scmp.eq.s32.totalorder %s14, 3
      %p157 = por %p155, %p156
      %p158 = scmp.ne.s32.totalorder %s150, %s153
      %p159 = scmp.eq.s32.totalorder %s14, 0
      %p160 = por %p158, %p159
      %p161 = scmp.ne.s32.totalorder %s150, %s153
      %p162 = scmp.eq.s32.totalorder %s19, 3
      %p163 = por %p161, %p162
      %p164 = scmp.ne.s32.totalorder %s153, %s154
      %p165 = scmp.eq.s32.totalorder %s19, 0
      %p166 = por %p164, %p165
      %p167 = scmp.ne.s32.totalorder %s153, %s154
      %p168 = scmp.eq.s32.totalorder %s20, 3
      %p169 = por %p167, %p168
      %p171 = scmp.ne.s32.totalorder %s154, %s170
      %p172 = scmp.eq.s32.totalorder %s20, 0
      %p173 = por %p171, %p172
      %s175 = sadd.s32 %s174, 1
      %p178 = scmp.eq.s32.totalorder %s14, 3
      %p179 = scmp.ne.s32.totalorder %s174, %s176
      %p180 = scmp.eq.s32.totalorder %s14, 0
      %p181 = por %p179, %p180
      %p182 = scmp.ne.s32.totalorder %s174, %s176
      %p183 = scmp.eq.s32.totalorder %s19, 3
      %p184 = por %p182, %p183
      %p185 = scmp.ne.s32.totalorder %s176, %s177
      %p186 = scmp.eq.s32.totalorder %s19, 0
      %p187 = por %p185, %p186
      %p188 = scmp.ne.s32.totalorder %s176, %s177
      %p189 = scmp.eq.s32.totalorder %s20, 3
      %p190 = por %p188, %p189
      %p192 = scmp.ne.s32.totalorder %s177, %s191
      %p193 = scmp.eq.s32.totalorder %s20, 0
      %p194 = por %p192, %p193
      %s195 = ssub.s32 1, %s21
      %s196 = smul.u32 %s22, %s195
      %s197 = ssub.s32 1, %s22
      %s198 = smul.u32 %s197, %s21
      %s199 = sadd.s32 %s196, %s198
      %s200 = ssub.s32 1, %s33
      %s201 = smul.u32 %s29, %s200
      %s202 = ssub.s32 1, %s29
      %s203 = smul.u32 %s202, %s33
      %s204 = sadd.s32 %s201, %s203
      %s205 = ssub.s32 %s21, %s33
      %s206 = ssub.s32 %s199, %s204
      %s207 = sor.u32 %s205, %s206
      %p208 = scmp.eq.s32.totalorder %s207, 0
      %s210 = sadd.s32 %s209, 1
      %s211 = scalar_select %p208, %s209, %s210
      %p214 = pneg %p208
      %p215 = scmp.eq.s32.totalorder %s14, 3
      %p216 = por %p214, %p215
      %p217 = scmp.ne.s32.totalorder %s209, %s212
      %p218 = scmp.eq.s32.totalorder %s14, 0
      %p219 = por %p217, %p218
      %p220 = scmp.ne.s32.totalorder %s209, %s212
      %p221 = scmp.eq.s32.totalorder %s19, 3
      %p222 = por %p220, %p221
      %p223 = scmp.ne.s32.totalorder %s212, %s213
      %p224 = scmp.eq.s32.totalorder %s19, 0
      %p225 = por %p223, %p224
      %p226 = scmp.ne.s32.totalorder %s212, %s213
      %p227 = scmp.eq.s32.totalorder %s20, 3
      %p228 = por %p226, %p227
      %p230 = scmp.ne.s32.totalorder %s213, %s229
      %p231 = scmp.eq.s32.totalorder %s20, 0
      %p232 = por %p230, %p231
      %s233 = ssub.s32 %s21, %s33
      %p234 = scmp.eq.s32.totalorder %s233, 0
      %s236 = sadd.s32 %s235, 1
      %s237 = scalar_select %p234, %s235, %s236
      %p240 = pneg %p234
      %p241 = scmp.eq.s32.totalorder %s14, 3
      %p242 = por %p240, %p241
      %p243 = scmp.ne.s32.totalorder %s235, %s238
      %p244 = scmp.eq.s32.totalorder %s14, 0
      %p245 = por %p243, %p244
      %p246 = scmp.ne.s32.totalorder %s235, %s238
      %p247 = scmp.eq.s32.totalorder %s19, 3
      %p248 = por %p246, %p247
      %p249 = scmp.ne.s32.totalorder %s238, %s239
      %p250 = scmp.eq.s32.totalorder %s19, 0
      %p251 = por %p249, %p250
      %p252 = scmp.ne.s32.totalorder %s238, %s239
      %p253 = scmp.eq.s32.totalorder %s20, 3
      %p254 = por %p252, %p253
      %p256 = scmp.ne.s32.totalorder %s239, %s255
      %p257 = scmp.eq.s32.totalorder %s20, 0
      %p258 = por %p256, %p257
      %p259 = scmp.le.s32.totalorder 1, %s14
      %p260 = scmp.lt.s32.totalorder %s14, 5
      %p261 = pnand %p259, %p260
      %p262 = pneg %p261
      // Predicated region
      $region9: #{gru_encoder_forward.4} parent=5 // pred_check
        _
      $region10: #{gru_encoder_forward.4} parent=5 // pred_check_branch
        %264 = sbr.rel (%p261) target = $region12
      $region11: #{gru_encoder_forward.4} parent=5 // pred_region
        %s265 = ssub.s32 %s14, 1
        // Predicated region
        $region13: #{gru_encoder_forward.4} parent=11 // pred_check
          %p266 = pneg %p88
        $region14: #{gru_encoder_forward.4} parent=11 // pred_check_branch
          %268 = sbr.rel (%p266) target = $region16
        $region15: #{gru_encoder_forward.4} parent=11 // pred_region
          %p269 = scmp.lt.s32.totalorder %s23, 1
          %s270 = scalar_select %p269, %s23, 1
          %s271 = smul.addr %s270, 8
          %s272 = smul.addr %s271, 8
          %s273 = scalar_lea.vmem %s1, %s272
        $region16: #{gru_encoder_forward.4} parent=11 // pred_fallthru
          _
        // Predicated region
        $region17: #{gru_encoder_forward.4} parent=11 // pred_check
          %p274 = pneg %p114
        $region18: #{gru_encoder_forward.4} parent=11 // pred_check_branch
          %276 = sbr.rel (%p274) target = $region20
        $region19: #{gru_encoder_forward.4} parent=11 // pred_region
          %p277 = scmp.lt.s32.totalorder %s23, 1
          %s278 = scalar_select %p277, %s23, 1
          %s279 = scalar_lea.vmem %s2, %s278
        $region20: #{gru_encoder_forward.4} parent=11 // pred_fallthru
          _
        // Predicated region
        $region21: #{gru_encoder_forward.4} parent=11 // pred_check
          %p280 = pneg %p140
        $region22: #{gru_encoder_forward.4} parent=11 // pred_check_branch
          %282 = sbr.rel (%p280) target = $region24
        $region23: #{gru_encoder_forward.4} parent=11 // pred_region
          %p283 = scmp.lt.s32.totalorder %s23, 1
          %s284 = scalar_select %p283, %s23, 1
          %s285 = smul.addr %s284, 4
          %s286 = smul.addr %s285, 8
          %s287 = scalar_lea.vmem %s3, %s286
        $region24: #{gru_encoder_forward.4} parent=11 // pred_fallthru
          _
        // Predicated region
        $region25: #{gru_encoder_forward.4} parent=11 // pred_check
          %p288 = pneg %p166
        $region26: #{gru_encoder_forward.4} parent=11 // pred_check_branch
          %290 = sbr.rel (%p288) target = $region28
        $region27: #{gru_encoder_forward.4} parent=11 // pred_region
          %p291 = scmp.lt.s32.totalorder %s23, 1
          %s292 = scalar_select %p291, %s23, 1
          %s293 = scalar_lea.vmem %s4, %s292
        $region28: #{gru_encoder_forward.4} parent=11 // pred_fallthru
          _
        // Predicated region
        $region29: #{gru_encoder_forward.4} parent=11 // pred_check
          %p294 = pneg %p187
        $region30: #{gru_encoder_forward.4} parent=11 // pred_check_branch
          %296 = sbr.rel (%p294) target = $region32
        $region31: #{gru_encoder_forward.4} parent=11 // pred_region
          _
        $region32: #{gru_encoder_forward.4} parent=11 // pred_fallthru
          _
      $region12: #{gru_encoder_forward.4} parent=5 // pred_fallthru
        _
      %p297 = scmp.lt.s32.totalorder %s14, 4
      // Predicated region
      $region33: #{gru_encoder_forward.4} parent=5 // pred_check
        %p298 = pneg %p297
      $region34: #{gru_encoder_forward.4} parent=5 // pred_check_branch
        %300 = sbr.rel (%p298) target = $region36
      $region35: #{gru_encoder_forward.4} parent=5 // pred_region
        // Predicated region
        $region37: #{gru_encoder_forward.4} parent=35 // pred_check
          %p301 = pneg %p56
        $region38: #{gru_encoder_forward.4} parent=35 // pred_check_branch
          %303 = sbr.rel (%p301) target = $region40
        $region39: #{gru_encoder_forward.4} parent=35 // pred_region
          %s304 = sand.u32 %s46, 1
          %s305 = sand.u32 %s46, 1
          %s306 = smul.addr %s305, 256
          %s307 = scalar_lea.vmem [#allocation4], %s306
          %s308 = ssub.s32 1, %s21
          %s309 = smul.u32 %s22, %s308
          %s310 = ssub.s32 1, %s22
          %s311 = smul.u32 %s310, %s21
          %s312 = sadd.s32 %s309, %s311
          %s313 = smul.u32 8, %s312
          %s314 = smul.addr %s313, 2
          %s315 = smul.addr %s314, 8
          %s316 = scalar_lea.vmem %s0, %s315
          // Predicated region
          $region41: #{gru_encoder_forward.4} parent=39 // pred_check
            _
          $region42: #{gru_encoder_forward.4} parent=39 // pred_check_branch
            %318 = sbr.rel (0) target = $region44
          $region43: #{gru_encoder_forward.4} parent=39 // pred_region
            // Predicated region
            $region45: #{gru_encoder_forward.4} parent=43 // pred_check
              _
            $region46: #{gru_encoder_forward.4} parent=43 // pred_check_branch
              %320 = sbr.rel (0) target = $region48
            $region47: #{gru_encoder_forward.4} parent=43 // pred_region
              // Predicated region
              $region60: #{gru_encoder_forward.4} parent=47 // pred_check
                _
              $region61: #{gru_encoder_forward.4} parent=47 // pred_check_branch
                %397 = sbr.rel (0) target = $region63
              $region62: #{gru_encoder_forward.4} parent=47 // pred_region
                loop: start=0, step=1, limit=1
                $region64: #{gru_encoder_forward.4} parent=62 // loop_pre_header
                  _
                $region65: #{gru_encoder_forward.4} parent=62 // loop_header
                  %s399 = sphi 0, %s403
                  %p400 = scmp.ge.s32.totalorder %s399, 1
                  %s404 = sphi %s316, %s316
                  %s405 = sphi %s307, %s307
                $region66: #{gru_encoder_forward.4} parent=62 // loop_header_branch
                  %402 = sbr.rel (%p400) target = $region70
                $region67: #{gru_encoder_forward.4} parent=62 // loop_body
                  %v406 = vld [vmem:[%s404] sm:$0xff]
                  %407 = vst [vmem:[%s405] sm:$0xff] %v406
                  %v408 = vld [vmem:[%s404 + $0x8] sm:$0xff]
                  %409 = vst [vmem:[%s405 + $0x8] sm:$0xff] %v408
                  %v410 = vld [vmem:[%s404 + $0x10] sm:$0xff]
                  %411 = vst [vmem:[%s405 + $0x10] sm:$0xff] %v410
                  %v412 = vld [vmem:[%s404 + $0x18] sm:$0xff]
                  %413 = vst [vmem:[%s405 + $0x18] sm:$0xff] %v412
                  %v414 = vld [vmem:[%s404 + $0x20] sm:$0xff]
                  %415 = vst [vmem:[%s405 + $0x20] sm:$0xff] %v414
                  %v416 = vld [vmem:[%s404 + $0x28] sm:$0xff]
                  %417 = vst [vmem:[%s405 + $0x28] sm:$0xff] %v416
                  %v418 = vld [vmem:[%s404 + $0x30] sm:$0xff]
                  %419 = vst [vmem:[%s405 + $0x30] sm:$0xff] %v418
                  %v420 = vld [vmem:[%s404 + $0x38] sm:$0xff]
                  %421 = vst [vmem:[%s405 + $0x38] sm:$0xff] %v420
                  %v422 = vld [vmem:[%s404 + $0x40] sm:$0xff]
                  %423 = vst [vmem:[%s405 + $0x40] sm:$0xff] %v422
                  %v424 = vld [vmem:[%s404 + $0x48] sm:$0xff]
                  %425 = vst [vmem:[%s405 + $0x48] sm:$0xff] %v424
                  %v426 = vld [vmem:[%s404 + $0x50] sm:$0xff]
                  %427 = vst [vmem:[%s405 + $0x50] sm:$0xff] %v426
                  %v428 = vld [vmem:[%s404 + $0x58] sm:$0xff]
                  %429 = vst [vmem:[%s405 + $0x58] sm:$0xff] %v428
                  %v430 = vld [vmem:[%s404 + $0x60] sm:$0xff]
                  %431 = vst [vmem:[%s405 + $0x60] sm:$0xff] %v430
                  %v432 = vld [vmem:[%s404 + $0x68] sm:$0xff]
                  %433 = vst [vmem:[%s405 + $0x68] sm:$0xff] %v432
                  %v434 = vld [vmem:[%s404 + $0x70] sm:$0xff]
                  %435 = vst [vmem:[%s405 + $0x70] sm:$0xff] %v434
                  %v436 = vld [vmem:[%s404 + $0x78] sm:$0xff]
                  %437 = vst [vmem:[%s405 + $0x78] sm:$0xff] %v436
                  %v438 = vld [vmem:[%s404 + $0x100] sm:$0xff]
                  %439 = vst [vmem:[%s405 + $0x80] sm:$0xff] %v438
                  %v440 = vld [vmem:[%s404 + $0x108] sm:$0xff]
                  %441 = vst [vmem:[%s405 + $0x88] sm:$0xff] %v440
                  %v442 = vld [vmem:[%s404 + $0x110] sm:$0xff]
                  %443 = vst [vmem:[%s405 + $0x90] sm:$0xff] %v442
                  %v444 = vld [vmem:[%s404 + $0x118] sm:$0xff]
                  %445 = vst [vmem:[%s405 + $0x98] sm:$0xff] %v444
                  %v446 = vld [vmem:[%s404 + $0x120] sm:$0xff]
                  %447 = vst [vmem:[%s405 + $0xa0] sm:$0xff] %v446
                  %v448 = vld [vmem:[%s404 + $0x128] sm:$0xff]
                  %449 = vst [vmem:[%s405 + $0xa8] sm:$0xff] %v448
                  %v450 = vld [vmem:[%s404 + $0x130] sm:$0xff]
                  %451 = vst [vmem:[%s405 + $0xb0] sm:$0xff] %v450
                  %v452 = vld [vmem:[%s404 + $0x138] sm:$0xff]
                  %453 = vst [vmem:[%s405 + $0xb8] sm:$0xff] %v452
                  %v454 = vld [vmem:[%s404 + $0x140] sm:$0xff]
                  %455 = vst [vmem:[%s405 + $0xc0] sm:$0xff] %v454
                  %v456 = vld [vmem:[%s404 + $0x148] sm:$0xff]
                  %457 = vst [vmem:[%s405 + $0xc8] sm:$0xff] %v456
                  %v458 = vld [vmem:[%s404 + $0x150] sm:$0xff]
                  %459 = vst [vmem:[%s405 + $0xd0] sm:$0xff] %v458
                  %v460 = vld [vmem:[%s404 + $0x158] sm:$0xff]
                  %461 = vst [vmem:[%s405 + $0xd8] sm:$0xff] %v460
                  %v462 = vld [vmem:[%s404 + $0x160] sm:$0xff]
                  %463 = vst [vmem:[%s405 + $0xe0] sm:$0xff] %v462
                  %v464 = vld [vmem:[%s404 + $0x168] sm:$0xff]
                  %465 = vst [vmem:[%s405 + $0xe8] sm:$0xff] %v464
                  %v466 = vld [vmem:[%s404 + $0x170] sm:$0xff]
                  %467 = vst [vmem:[%s405 + $0xf0] sm:$0xff] %v466
                  %v468 = vld [vmem:[%s404 + $0x178] sm:$0xff]
                  %469 = vst [vmem:[%s405 + $0xf8] sm:$0xff] %v468
                $region68: #{gru_encoder_forward.4} parent=62 // loop_footer
                  %s403 = sadd.s32 1, %s399
                $region69: #{gru_encoder_forward.4} parent=62 // loop_footer_branch
                  %398 = sbr.rel target = $region65
                $region70: #{gru_encoder_forward.4} parent=62 // loop_exit
                  _
              $region63: #{gru_encoder_forward.4} parent=47 // pred_fallthru
                _
              // Predicated region
              $region71: #{gru_encoder_forward.4} parent=47 // pred_check
                _
              $region72: #{gru_encoder_forward.4} parent=47 // pred_check_branch
                %471 = sbr.rel target = $region74
              $region73: #{gru_encoder_forward.4} parent=47 // pred_region
                _
              $region74: #{gru_encoder_forward.4} parent=47 // pred_fallthru
                _
            $region48: #{gru_encoder_forward.4} parent=43 // pred_fallthru
              _
            // Predicated region
            $region49: #{gru_encoder_forward.4} parent=43 // pred_check
              _
            $region50: #{gru_encoder_forward.4} parent=43 // pred_check_branch
              %322 = sbr.rel target = $region52
            $region51: #{gru_encoder_forward.4} parent=43 // pred_region
              loop: start=0, step=1, limit=1
              $region53: #{gru_encoder_forward.4} parent=51 // loop_pre_header
                _
              $region54: #{gru_encoder_forward.4} parent=51 // loop_header
                %s325 = sphi 0, %s329
                %p326 = scmp.ge.s32.totalorder %s325, 1
                %s330 = sphi %s316, %s316
                %s331 = sphi %s307, %s307
              $region55: #{gru_encoder_forward.4} parent=51 // loop_header_branch
                %328 = sbr.rel (%p326) target = $region59
              $region56: #{gru_encoder_forward.4} parent=51 // loop_body
                %v332 = vld [vmem:[%s330] sm:$0xff]
                %333 = vst [vmem:[%s331] sm:$0xff] %v332
                %v334 = vld [vmem:[%s330 + $0x8] sm:$0xff]
                %335 = vst [vmem:[%s331 + $0x8] sm:$0xff] %v334
                %v336 = vld [vmem:[%s330 + $0x10] sm:$0xff]
                %337 = vst [vmem:[%s331 + $0x10] sm:$0xff] %v336
                %v338 = vld [vmem:[%s330 + $0x18] sm:$0xff]
                %339 = vst [vmem:[%s331 + $0x18] sm:$0xff] %v338
                %v340 = vld [vmem:[%s330 + $0x20] sm:$0xff]
                %341 = vst [vmem:[%s331 + $0x20] sm:$0xff] %v340
                %v342 = vld [vmem:[%s330 + $0x28] sm:$0xff]
                %343 = vst [vmem:[%s331 + $0x28] sm:$0xff] %v342
                %v344 = vld [vmem:[%s330 + $0x30] sm:$0xff]
                %345 = vst [vmem:[%s331 + $0x30] sm:$0xff] %v344
                %v346 = vld [vmem:[%s330 + $0x38] sm:$0xff]
                %347 = vst [vmem:[%s331 + $0x38] sm:$0xff] %v346
                %v348 = vld [vmem:[%s330 + $0x40] sm:$0xff]
                %349 = vst [vmem:[%s331 + $0x40] sm:$0xff] %v348
                %v350 = vld [vmem:[%s330 + $0x48] sm:$0xff]
                %351 = vst [vmem:[%s331 + $0x48] sm:$0xff] %v350
                %v352 = vld [vmem:[%s330 + $0x50] sm:$0xff]
                %353 = vst [vmem:[%s331 + $0x50] sm:$0xff] %v352
                %v354 = vld [vmem:[%s330 + $0x58] sm:$0xff]
                %355 = vst [vmem:[%s331 + $0x58] sm:$0xff] %v354
                %v356 = vld [vmem:[%s330 + $0x60] sm:$0xff]
                %357 = vst [vmem:[%s331 + $0x60] sm:$0xff] %v356
                %v358 = vld [vmem:[%s330 + $0x68] sm:$0xff]
                %359 = vst [vmem:[%s331 + $0x68] sm:$0xff] %v358
                %v360 = vld [vmem:[%s330 + $0x70] sm:$0xff]
                %361 = vst [vmem:[%s331 + $0x70] sm:$0xff] %v360
                %v362 = vld [vmem:[%s330 + $0x78] sm:$0xff]
                %363 = vst [vmem:[%s331 + $0x78] sm:$0xff] %v362
                %v364 = vld [vmem:[%s330 + $0x100] sm:$0xff]
                %365 = vst [vmem:[%s331 + $0x80] sm:$0xff] %v364
                %v366 = vld [vmem:[%s330 + $0x108] sm:$0xff]
                %367 = vst [vmem:[%s331 + $0x88] sm:$0xff] %v366
                %v368 = vld [vmem:[%s330 + $0x110] sm:$0xff]
                %369 = vst [vmem:[%s331 + $0x90] sm:$0xff] %v368
                %v370 = vld [vmem:[%s330 + $0x118] sm:$0xff]
                %371 = vst [vmem:[%s331 + $0x98] sm:$0xff] %v370
                %v372 = vld [vmem:[%s330 + $0x120] sm:$0xff]
                %373 = vst [vmem:[%s331 + $0xa0] sm:$0xff] %v372
                %v374 = vld [vmem:[%s330 + $0x128] sm:$0xff]
                %375 = vst [vmem:[%s331 + $0xa8] sm:$0xff] %v374
                %v376 = vld [vmem:[%s330 + $0x130] sm:$0xff]
                %377 = vst [vmem:[%s331 + $0xb0] sm:$0xff] %v376
                %v378 = vld [vmem:[%s330 + $0x138] sm:$0xff]
                %379 = vst [vmem:[%s331 + $0xb8] sm:$0xff] %v378
                %v380 = vld [vmem:[%s330 + $0x140] sm:$0xff]
                %381 = vst [vmem:[%s331 + $0xc0] sm:$0xff] %v380
                %v382 = vld [vmem:[%s330 + $0x148] sm:$0xff]
                %383 = vst [vmem:[%s331 + $0xc8] sm:$0xff] %v382
                %v384 = vld [vmem:[%s330 + $0x150] sm:$0xff]
                %385 = vst [vmem:[%s331 + $0xd0] sm:$0xff] %v384
                %v386 = vld [vmem:[%s330 + $0x158] sm:$0xff]
                %387 = vst [vmem:[%s331 + $0xd8] sm:$0xff] %v386
                %v388 = vld [vmem:[%s330 + $0x160] sm:$0xff]
                %389 = vst [vmem:[%s331 + $0xe0] sm:$0xff] %v388
                %v390 = vld [vmem:[%s330 + $0x168] sm:$0xff]
                %391 = vst [vmem:[%s331 + $0xe8] sm:$0xff] %v390
                %v392 = vld [vmem:[%s330 + $0x170] sm:$0xff]
                %393 = vst [vmem:[%s331 + $0xf0] sm:$0xff] %v392
                %v394 = vld [vmem:[%s330 + $0x178] sm:$0xff]
                %395 = vst [vmem:[%s331 + $0xf8] sm:$0xff] %v394
              $region57: #{gru_encoder_forward.4} parent=51 // loop_footer
                %s329 = sadd.s32 1, %s325
              $region58: #{gru_encoder_forward.4} parent=51 // loop_footer_branch
                %324 = sbr.rel target = $region54
              $region59: #{gru_encoder_forward.4} parent=51 // loop_exit
                _
            $region52: #{gru_encoder_forward.4} parent=43 // pred_fallthru
              _
          $region44: #{gru_encoder_forward.4} parent=39 // pred_fallthru
            _
          %472 = vnop
        $region40: #{gru_encoder_forward.4} parent=35 // pred_fallthru
          _
      $region36: #{gru_encoder_forward.4} parent=5 // pred_fallthru
        _
      %p473 = scmp.le.s32.totalorder 1, %s14
      %p474 = scmp.lt.s32.totalorder %s14, 5
      %p475 = pnand %p473, %p474
      %p476 = pneg %p475
      // Predicated region
      $region75: #{gru_encoder_forward.4} parent=5 // pred_check
        _
      $region76: #{gru_encoder_forward.4} parent=5 // pred_check_branch
        %478 = sbr.rel (%p475) target = $region78
      $region77: #{gru_encoder_forward.4} parent=5 // pred_region
        %s479 = ssub.s32 %s14, 1
        %s480 = sand.u32 %s49, 1
        %s481 = sand.u32 %s49, 1
        %s482 = smul.addr %s481, 256
        %s483 = scalar_lea.vmem [#allocation4], %s482
        // Predicated region
        $region79: #{gru_encoder_forward.4} parent=77 // pred_check
          %p484 = pneg %p62
        $region80: #{gru_encoder_forward.4} parent=77 // pred_check_branch
          %486 = sbr.rel (%p484) target = $region82
        $region81: #{gru_encoder_forward.4} parent=77 // pred_region
          _
        $region82: #{gru_encoder_forward.4} parent=77 // pred_fallthru
          _
        %s487 = sand.u32 %s49, 1
        %s488 = sand.u32 %s49, 1
        %s489 = smul.addr %s488, 256
        %s490 = scalar_lea.vmem [#allocation4], %s489
        %p491 = pneg %p62
        %p492 = pneg %p59
        %p493 = scmp.lt.s32.totalorder %s23, 1
        %s494 = scalar_select %p493, %s23, 1
        %s495 = smul.addr %s494, 8
        %s496 = smul.addr %s495, 8
        %s497 = scalar_lea.vmem %s1, %s496
        %p498 = pneg %p88
        %p499 = pneg %p85
        %p500 = scmp.lt.s32.totalorder %s23, 1
        %s501 = scalar_select %p500, %s23, 1
        %s502 = scalar_lea.vmem %s2, %s501
        %p503 = pneg %p114
        %p504 = pneg %p111
        %p505 = scmp.lt.s32.totalorder %s23, 1
        %s506 = scalar_select %p505, %s23, 1
        %s507 = smul.addr %s506, 4
        %s508 = smul.addr %s507, 8
        %s509 = scalar_lea.vmem %s3, %s508
        %p510 = pneg %p140
        %p511 = pneg %p137
        %p512 = scmp.lt.s32.totalorder %s23, 1
        %s513 = scalar_select %p512, %s23, 1
        %s514 = scalar_lea.vmem %s4, %s513
        %p515 = pneg %p166
        %p516 = pneg %p163
        %p517 = pneg %p187
        %p518 = pneg %p184
        %p519 = pneg %p225
        %p520 = pneg %p222
        %s521 = ssub.s32 1, %s23
        %s522 = smul.u32 %s24, %s521
        %s523 = ssub.s32 1, %s24
        %s524 = smul.u32 %s523, %s23
        %s525 = sadd.s32 %s522, %s524
        %s526 = smul.u32 8, %s525
        %p527 = scmp.lt.s32.totalorder %s23, 1
        %s528 = scalar_select %p527, %s23, 1
        %p529 = scmp.lt.s32.totalorder %s526, 15
        %s530 = scalar_select %p529, %s526, 15
        %s531 = smul.addr %s530, 2
        %s532 = smul.addr %s528, 32
        %s533 = sadd.s32 %s531, %s532
        %s534 = smul.addr %s533, 8
        %s535 = scalar_lea.vmem %s6, %s534
        %p536 = pneg %p251
        %p537 = pneg %p248
        %p538 = scmp.lt.s32.totalorder %s23, 1
        %s539 = scalar_select %p538, %s23, 1
        %s540 = smul.addr %s539, 2
        %s541 = smul.addr %s540, 8
        %s542 = scalar_lea.vmem %s7, %s541
        %s543 = ssub.s32 1, %s23
        %s544 = smul.u32 %s24, %s543
        %s545 = ssub.s32 1, %s24
        %s546 = smul.u32 %s545, %s23
        %s547 = sadd.s32 %s544, %s546
        %s548 = smul.u32 8, %s547
        %p549 = scmp.lt.s32.totalorder %s23, 1
        %s550 = scalar_select %p549, %s23, 1
        %s551 = smul.addr %s550, 8
        %s552 = smul.addr %s551, 8
        %s553 = scalar_lea.vmem %s1, %s552
        %p554 = scmp.lt.s32.totalorder %s23, 1
        %s555 = scalar_select %p554, %s23, 1
        %s556 = scalar_lea.vmem %s2, %s555
        %p557 = scmp.lt.s32.totalorder %s23, 1
        %s558 = scalar_select %p557, %s23, 1
        %s559 = smul.addr %s558, 4
        %s560 = smul.addr %s559, 8
        %s561 = scalar_lea.vmem %s3, %s560
        %p562 = scmp.lt.s32.totalorder %s23, 1
        %s563 = scalar_select %p562, %s23, 1
        %s564 = scalar_lea.vmem %s4, %s563
        %s565 = ssub.s32 1, %s23
        %s566 = smul.u32 %s24, %s565
        %s567 = ssub.s32 1, %s24
        %s568 = smul.u32 %s567, %s23
        %s569 = sadd.s32 %s566, %s568
        %s570 = smul.u32 8, %s569
        %p571 = scmp.lt.s32.totalorder %s23, 1
        %s572 = scalar_select %p571, %s23, 1
        %p573 = scmp.lt.s32.totalorder %s570, 15
        %s574 = scalar_select %p573, %s570, 15
        %s575 = smul.addr %s574, 2
        %s576 = smul.addr %s572, 32
        %s577 = sadd.s32 %s575, %s576
        %s578 = smul.addr %s577, 8
        %s579 = scalar_lea.vmem %s6, %s578
        %s580 = ssub.s32 1, %s23
        %s581 = smul.u32 %s24, %s580
        %s582 = ssub.s32 1, %s24
        %s583 = smul.u32 %s582, %s23
        %s584 = sadd.s32 %s581, %s583
        %s585 = smul.u32 8, %s584
        %p586 = scmp.lt.s32.totalorder %s23, 1
        %s587 = scalar_select %p586, %s23, 1
        %s588 = smul.addr %s587, 2
        %s589 = smul.addr %s588, 8
        %s590 = scalar_lea.vmem %s7, %s589
        %p591 = scmp.eq.s32.totalorder %s24, 0
        // Predicated region
        $region83: #{gru_encoder_forward.4} parent=77 // pred_check
          %p592 = pneg %p591
        $region84: #{gru_encoder_forward.4} parent=77 // pred_check_branch
          %594 = sbr.rel (%p592) target = $region86
        $region85: #{gru_encoder_forward.4} parent=77 // pred_region
          %vm595 = vcmask 261120
          %596 = vst.msk [vmem:[#allocation2] sm:$0xff] %vm595, 0.0
          %597 = vst.msk [vmem:[#allocation2 + $0x8] sm:$0xff] %vm595, 0.0
        $region86: #{gru_encoder_forward.4} parent=77 // pred_fallthru
          _
        %v598 = vld [vmem:[%s483] sm:$0xff]
        %v599 = vld [vmem:[%s483 + $0x8] sm:$0xff]
        %v600 = vld [vmem:[%s483 + $0x10] sm:$0xff]
        %v601 = vld [vmem:[%s483 + $0x18] sm:$0xff]
        %v602 = vld [vmem:[%s483 + $0x20] sm:$0xff]
        %v603 = vld [vmem:[%s483 + $0x28] sm:$0xff]
        %v604 = vld [vmem:[%s483 + $0x30] sm:$0xff]
        %v605 = vld [vmem:[%s483 + $0x38] sm:$0xff]
        %v606 = vld [vmem:[%s483 + $0x40] sm:$0xff]
        %v607 = vld [vmem:[%s483 + $0x48] sm:$0xff]
        %v608 = vld [vmem:[%s483 + $0x50] sm:$0xff]
        %v609 = vld [vmem:[%s483 + $0x58] sm:$0xff]
        %v610 = vld [vmem:[%s483 + $0x60] sm:$0xff]
        %v611 = vld [vmem:[%s483 + $0x68] sm:$0xff]
        %v612 = vld [vmem:[%s483 + $0x70] sm:$0xff]
        %v613 = vld [vmem:[%s483 + $0x78] sm:$0xff]
        %v614 = vld [vmem:[%s553] sm:$0xff]
        %v615 = vld [vmem:[%s553 + $0x8] sm:$0xff]
        %v616 = vld [vmem:[%s553 + $0x10] sm:$0xff]
        %v617 = vld [vmem:[%s553 + $0x18] sm:$0xff]
        %s618 = scalar_lea.vmem %s483, 128 [#allocation4]
        %v619 = vld [vmem:[%s618] sm:$0xff]
        %v620 = vld [vmem:[%s618 + $0x8] sm:$0xff]
        %v621 = vld [vmem:[%s618 + $0x10] sm:$0xff]
        %v622 = vld [vmem:[%s618 + $0x18] sm:$0xff]
        %v623 = vld [vmem:[%s618 + $0x20] sm:$0xff]
        %v624 = vld [vmem:[%s618 + $0x28] sm:$0xff]
        %v625 = vld [vmem:[%s618 + $0x30] sm:$0xff]
        %v626 = vld [vmem:[%s618 + $0x38] sm:$0xff]
        %v627 = vld [vmem:[%s618 + $0x40] sm:$0xff]
        %v628 = vld [vmem:[%s618 + $0x48] sm:$0xff]
        %v629 = vld [vmem:[%s618 + $0x50] sm:$0xff]
        %v630 = vld [vmem:[%s618 + $0x58] sm:$0xff]
        %v631 = vld [vmem:[%s618 + $0x60] sm:$0xff]
        %v632 = vld [vmem:[%s618 + $0x68] sm:$0xff]
        %v633 = vld [vmem:[%s618 + $0x70] sm:$0xff]
        %v634 = vld [vmem:[%s618 + $0x78] sm:$0xff]
        %s635 = scalar_lea.vmem %s553, 32
        %v636 = vld [vmem:[%s635] sm:$0xff]
        %v637 = vld [vmem:[%s635 + $0x8] sm:$0xff]
        %v638 = vld [vmem:[%s635 + $0x10] sm:$0xff]
        %v639 = vld [vmem:[%s635 + $0x18] sm:$0xff]
        %vm640 = vcmask 261120
        %v642 = vsel %vm640, %v619, 0
        %v645 = vsel %vm640, %v620, 0
        %v648 = vsel %vm640, %v621, 0
        %v651 = vsel %vm640, %v622, 0
        %v654 = vsel %vm640, %v623, 0
        %v657 = vsel %vm640, %v624, 0
        %v660 = vsel %vm640, %v625, 0
        %v663 = vsel %vm640, %v626, 0
        %v666 = vsel %vm640, %v627, 0
        %v669 = vsel %vm640, %v628, 0
        %v672 = vsel %vm640, %v629, 0
        %v675 = vsel %vm640, %v630, 0
        %v678 = vsel %vm640, %v631, 0
        %v681 = vsel %vm640, %v632, 0
        %v684 = vsel %vm640, %v633, 0
        %v687 = vsel %vm640, %v634, 0
        %689 = vmatprep.subr.mxu0 0.0
        %690 = vmatpush1.msra.mxu0 %v636
        %691 = vmatprep.subr.mxu0 0.0
        %692 = vmatpush1.msra.mxu0 %v637
        %693 = vmatprep.subr.mxu0 0.0
        %694 = vmatpush1.msra.mxu0 %v638
        %695 = vmatprep.subr.mxu0 0.0
        %696 = vmatpush1.msra.mxu0 %v639
        %697 = vmatprep.subr.mxu0 0.0
        %698 = vmatpush1.msra.mxu0 0.0
        %699 = vmatprep.subr.mxu0 0.0
        %700 = vmatpush1.msra.mxu0 0.0
        %701 = vmatprep.subr.mxu0 0.0
        %702 = vmatpush1.msra.mxu0 0.0
        %703 = vmatprep.subr.mxu0 0.0
        %704 = vmatpush1.msra.mxu0 0.0
        %705 = vmatprep.subr.mxu0 0.0
        %706 = vmatpush1.msra.mxu0 0.0
        %707 = vmatprep.subr.mxu0 0.0
        %708 = vmatpush1.msra.mxu0 0.0
        %709 = vmatprep.subr.mxu0 0.0
        %710 = vmatpush1.msra.mxu0 0.0
        %711 = vmatprep.subr.mxu0 0.0
        %712 = vmatpush1.msra.mxu0 0.0
        %713 = vmatprep.subr.mxu0 0.0
        %714 = vmatpush1.msra.mxu0 0.0
        %715 = vmatprep.subr.mxu0 0.0
        %716 = vmatpush1.msra.mxu0 0.0
        %717 = vmatprep.subr.mxu0 0.0
        %718 = vmatpush1.msra.mxu0 0.0
        %719 = vmatprep.subr.mxu0 0.0
        %720 = vmatpush1.msra.mxu0 0.0
        %721 = vmatprep.subr.mxu0 0.0
        %722 = vmatpush1.msra.mxu0 0.0
        %723 = vmatprep.subr.mxu0 0.0
        %724 = vmatpush1.msra.mxu0 0.0
        %725 = vmatprep.subr.mxu0 0.0
        %726 = vmatpush1.msra.mxu0 0.0
        %727 = vmatprep.subr.mxu0 0.0
        %728 = vmatpush1.msra.mxu0 0.0
        %729 = vmatprep.subr.mxu0 0.0
        %730 = vmatpush1.msra.mxu0 0.0
        %731 = vmatprep.subr.mxu0 0.0
        %732 = vmatpush1.msra.mxu0 0.0
        %733 = vmatprep.subr.mxu0 0.0
        %734 = vmatpush1.msra.mxu0 0.0
        %735 = vmatprep.subr.mxu0 0.0
        %736 = vmatpush1.msra.mxu0 0.0
        %737 = vmatprep.subr.mxu0 0.0
        %738 = vmatpush1.msra.mxu0 0.0
        %739 = vmatprep.subr.mxu0 0.0
        %740 = vmatpush1.msra.mxu0 0.0
        %741 = vmatprep.subr.mxu0 0.0
        %742 = vmatpush1.msra.mxu0 0.0
        %743 = vmatprep.subr.mxu0 0.0
        %744 = vmatpush1.msra.mxu0 0.0
        %745 = vmatprep.subr.mxu0 0.0
        %746 = vmatpush1.msra.mxu0 0.0
        %747 = vmatprep.subr.mxu0 0.0
        %748 = vmatpush1.msra.mxu0 0.0
        %749 = vmatprep.subr.mxu0 0.0
        %750 = vmatpush1.msra.mxu0 0.0
        %751 = vmatprep.subr.mxu0 0.0
        %752 = vmatpush1.msra.mxu0 0.0
        %753 = vmatprep.mubr.f32.mxu0 0.0
        %754 = vmatmul.mubr.f32.gmra.mrb[0].mxu0 %v642
        %v755 = vpop.f32.mrb[0].mxu0
        %v756 = vadd.f32 0.0, %v755
        %v757 = vpop.f32.mrb[0].mxu0
        %758 = vmatprep.mubr.f32.mxu0 0.0
        %759 = vmatmul.mubr.f32.gmra.mrb[0].mxu0 %v645
        %v760 = vpop.f32.mrb[0].mxu0
        %v761 = vadd.f32 0.0, %v760
        %v762 = vpop.f32.mrb[0].mxu0
        %763 = vmatprep.mubr.f32.mxu0 0.0
        %764 = vmatmul.mubr.f32.gmra.mrb[0].mxu0 %v648
        %v765 = vpop.f32.mrb[0].mxu0
        %v766 = vadd.f32 0.0, %v765
        %v767 = vpop.f32.mrb[0].mxu0
        %768 = vmatprep.mubr.f32.mxu0 0.0
        %769 = vmatmul.mubr.f32.gmra.mrb[0].mxu0 %v651
        %v770 = vpop.f32.mrb[0].mxu0
        %v771 = vadd.f32 0.0, %v770
        %v772 = vpop.f32.mrb[0].mxu0
        %773 = vmatprep.mubr.f32.mxu0 0.0
        %774 = vmatmul.mubr.f32.gmra.mrb[0].mxu0 %v654
        %v775 = vpop.f32.mrb[0].mxu0
        %v776 = vadd.f32 0.0, %v775
        %v777 = vpop.f32.mrb[0].mxu0
        %778 = vmatprep.mubr.f32.mxu0 0.0
        %779 = vmatmul.mubr.f32.gmra.mrb[0].mxu0 %v657
        %v780 = vpop.f32.mrb[0].mxu0
        %v781 = vadd.f32 0.0, %v780
        %v782 = vpop.f32.mrb[0].mxu0
        %783 = vmatprep.mubr.f32.mxu0 0.0
        %784 = vmatmul.mubr.f32.gmra.mrb[0].mxu0 %v660
        %v785 = vpop.f32.mrb[0].mxu0
        %v786 = vadd.f32 0.0, %v785
        %v787 = vpop.f32.mrb[0].mxu0
        %788 = vmatprep.mubr.f32.mxu0 0.0
        %789 = vmatmul.mubr.f32.gmra.mrb[0].mxu0 %v663
        %v790 = vpop.f32.mrb[0].mxu0
        %v791 = vadd.f32 0.0, %v790
        %v792 = vpop.f32.mrb[0].mxu0
        %793 = vmatprep.mubr.f32.mxu0 0.0
        %794 = vmatmul.mubr.f32.gmra.mrb[0].mxu0 %v666
        %v795 = vpop.f32.mrb[0].mxu0
        %v796 = vadd.f32 0.0, %v795
        %v797 = vpop.f32.mrb[0].mxu0
        %798 = vmatprep.mubr.f32.mxu0 0.0
        %799 = vmatmul.mubr.f32.gmra.mrb[0].mxu0 %v669
        %v800 = vpop.f32.mrb[0].mxu0
        %v801 = vadd.f32 0.0, %v800
        %v802 = vpop.f32.mrb[0].mxu0
        %803 = vmatprep.mubr.f32.mxu0 0.0
        %804 = vmatmul.mubr.f32.gmra.mrb[0].mxu0 %v672
        %v805 = vpop.f32.mrb[0].mxu0
        %v806 = vadd.f32 0.0, %v805
        %v807 = vpop.f32.mrb[0].mxu0
        %808 = vmatprep.mubr.f32.mxu0 0.0
        %809 = vmatmul.mubr.f32.gmra.mrb[0].mxu0 %v675
        %v810 = vpop.f32.mrb[0].mxu0
        %v811 = vadd.f32 0.0, %v810
        %v812 = vpop.f32.mrb[0].mxu0
        %813 = vmatprep.mubr.f32.mxu0 0.0
        %814 = vmatmul.mubr.f32.gmra.mrb[0].mxu0 %v678
        %v815 = vpop.f32.mrb[0].mxu0
        %v816 = vadd.f32 0.0, %v815
        %v817 = vpop.f32.mrb[0].mxu0
        %818 = vmatprep.mubr.f32.mxu0 0.0
        %819 = vmatmul.mubr.f32.gmra.mrb[0].mxu0 %v681
        %v820 = vpop.f32.mrb[0].mxu0
        %v821 = vadd.f32 0.0, %v820
        %v822 = vpop.f32.mrb[0].mxu0
        %823 = vmatprep.mubr.f32.mxu0 0.0
        %824 = vmatmul.mubr.f32.gmra.mrb[0].mxu0 %v684
        %v825 = vpop.f32.mrb[0].mxu0
        %v826 = vadd.f32 0.0, %v825
        %v827 = vpop.f32.mrb[0].mxu0
        %828 = vmatprep.mubr.f32.mxu0 0.0
        %829 = vmatmul.mubr.f32.gmra.mrb[0].mxu0 %v687
        %v830 = vpop.f32.mrb[0].mxu0
        %v831 = vadd.f32 0.0, %v830
        %v832 = vpop.f32.mrb[0].mxu0
        %833 = vdwg.mxu0
        %v835 = vsel %vm640, %v598, 0
        %v838 = vsel %vm640, %v599, 0
        %v841 = vsel %vm640, %v600, 0
        %v844 = vsel %vm640, %v601, 0
        %v847 = vsel %vm640, %v602, 0
        %v850 = vsel %vm640, %v603, 0
        %v853 = vsel %vm640, %v604, 0
        %v856 = vsel %vm640, %v605, 0
        %v859 = vsel %vm640, %v606, 0
        %v862 = vsel %vm640, %v607, 0
        %v865 = vsel %vm640, %v608, 0
        %v868 = vsel %vm640, %v609, 0
        %v871 = vsel %vm640, %v610, 0
        %v874 = vsel %vm640, %v611, 0
        %v877 = vsel %vm640, %v612, 0
        %v880 = vsel %vm640, %v613, 0
        %882 = vmatprep.subr.mxu0 0.0
        %883 = vmatpush1.msra.mxu0 %v614
        %884 = vmatprep.subr.mxu0 0.0
        %885 = vmatpush1.msra.mxu0 %v615
        %886 = vmatprep.subr.mxu0 0.0
        %887 = vmatpush1.msra.mxu0 %v616
        %888 = vmatprep.subr.mxu0 0.0
        %889 = vmatpush1.msra.mxu0 %v617
        %890 = vmatprep.subr.mxu0 0.0
        %891 = vmatpush1.msra.mxu0 0.0
        %892 = vmatprep.subr.mxu0 0.0
        %893 = vmatpush1.msra.mxu0 0.0
        %894 = vmatprep.subr.mxu0 0.0
        %895 = vmatpush1.msra.mxu0 0.0
        %896 = vmatprep.subr.mxu0 0.0
        %897 = vmatpush1.msra.mxu0 0.0
        %898 = vmatprep.subr.mxu0 0.0
        %899 = vmatpush1.msra.mxu0 0.0
        %900 = vmatprep.subr.mxu0 0.0
        %901 = vmatpush1.msra.mxu0 0.0
        %902 = vmatprep.subr.mxu0 0.0
        %903 = vmatpush1.msra.mxu0 0.0
        %904 = vmatprep.subr.mxu0 0.0
        %905 = vmatpush1.msra.mxu0 0.0
        %906 = vmatprep.subr.mxu0 0.0
        %907 = vmatpush1.msra.mxu0 0.0
        %908 = vmatprep.subr.mxu0 0.0
        %909 = vmatpush1.msra.mxu0 0.0
        %910 = vmatprep.subr.mxu0 0.0
        %911 = vmatpush1.msra.mxu0 0.0
        %912 = vmatprep.subr.mxu0 0.0
        %913 = vmatpush1.msra.mxu0 0.0
        %914 = vmatprep.subr.mxu0 0.0
        %915 = vmatpush1.msra.mxu0 0.0
        %916 = vmatprep.subr.mxu0 0.0
        %917 = vmatpush1.msra.mxu0 0.0
        %918 = vmatprep.subr.mxu0 0.0
        %919 = vmatpush1.msra.mxu0 0.0
        %920 = vmatprep.subr.mxu0 0.0
        %921 = vmatpush1.msra.mxu0 0.0
        %922 = vmatprep.subr.mxu0 0.0
        %923 = vmatpush1.msra.mxu0 0.0
        %924 = vmatprep.subr.mxu0 0.0
        %925 = vmatpush1.msra.mxu0 0.0
        %926 = vmatprep.subr.mxu0 0.0
        %927 = vmatpush1.msra.mxu0 0.0
        %928 = vmatprep.subr.mxu0 0.0
        %929 = vmatpush1.msra.mxu0 0.0
        %930 = vmatprep.subr.mxu0 0.0
        %931 = vmatpush1.msra.mxu0 0.0
        %932 = vmatprep.subr.mxu0 0.0
        %933 = vmatpush1.msra.mxu0 0.0
        %934 = vmatprep.subr.mxu0 0.0
        %935 = vmatpush1.msra.mxu0 0.0
        %936 = vmatprep.subr.mxu0 0.0
        %937 = vmatpush1.msra.mxu0 0.0
        %938 = vmatprep.subr.mxu0 0.0
        %939 = vmatpush1.msra.mxu0 0.0
        %940 = vmatprep.subr.mxu0 0.0
        %941 = vmatpush1.msra.mxu0 0.0
        %942 = vmatprep.subr.mxu0 0.0
        %943 = vmatpush1.msra.mxu0 0.0
        %944 = vmatprep.subr.mxu0 0.0
        %945 = vmatpush1.msra.mxu0 0.0
        %946 = vmatprep.mubr.f32.mxu0 0.0
        %947 = vmatmul.mubr.f32.gmra.mrb[0].mxu0 %v835
        %v948 = vpop.f32.mrb[0].mxu0
        %v949 = vadd.f32 %v756, %v948
        %v950 = vpop.f32.mrb[0].mxu0
        %951 = vmatprep.mubr.f32.mxu0 0.0
        %952 = vmatmul.mubr.f32.gmra.mrb[0].mxu0 %v838
        %v953 = vpop.f32.mrb[0].mxu0
        %v954 = vadd.f32 %v761, %v953
        %v955 = vpop.f32.mrb[0].mxu0
        %956 = vmatprep.mubr.f32.mxu0 0.0
        %957 = vmatmul.mubr.f32.gmra.mrb[0].mxu0 %v841
        %v958 = vpop.f32.mrb[0].mxu0
        %v959 = vadd.f32 %v766, %v958
        %v960 = vpop.f32.mrb[0].mxu0
        %961 = vmatprep.mubr.f32.mxu0 0.0
        %962 = vmatmul.mubr.f32.gmra.mrb[0].mxu0 %v844
        %v963 = vpop.f32.mrb[0].mxu0
        %v964 = vadd.f32 %v771, %v963
        %v965 = vpop.f32.mrb[0].mxu0
        %966 = vmatprep.mubr.f32.mxu0 0.0
        %967 = vmatmul.mubr.f32.gmra.mrb[0].mxu0 %v847
        %v968 = vpop.f32.mrb[0].mxu0
        %v969 = vadd.f32 %v776, %v968
        %v970 = vpop.f32.mrb[0].mxu0
        %971 = vmatprep.mubr.f32.mxu0 0.0
        %972 = vmatmul.mubr.f32.gmra.mrb[0].mxu0 %v850
        %v973 = vpop.f32.mrb[0].mxu0
        %v974 = vadd.f32 %v781, %v973
        %v975 = vpop.f32.mrb[0].mxu0
        %976 = vmatprep.mubr.f32.mxu0 0.0
        %977 = vmatmul.mubr.f32.gmra.mrb[0].mxu0 %v853
        %v978 = vpop.f32.mrb[0].mxu0
        %v979 = vadd.f32 %v786, %v978
        %v980 = vpop.f32.mrb[0].mxu0
        %981 = vmatprep.mubr.f32.mxu0 0.0
        %982 = vmatmul.mubr.f32.gmra.mrb[0].mxu0 %v856
        %v983 = vpop.f32.mrb[0].mxu0
        %v984 = vadd.f32 %v791, %v983
        %v985 = vpop.f32.mrb[0].mxu0
        %986 = vmatprep.mubr.f32.mxu0 0.0
        %987 = vmatmul.mubr.f32.gmra.mrb[0].mxu0 %v859
        %v988 = vpop.f32.mrb[0].mxu0
        %v989 = vadd.f32 %v796, %v988
        %v990 = vpop.f32.mrb[0].mxu0
        %991 = vmatprep.mubr.f32.mxu0 0.0
        %992 = vmatmul.mubr.f32.gmra.mrb[0].mxu0 %v862
        %v993 = vpop.f32.mrb[0].mxu0
        %v994 = vadd.f32 %v801, %v993
        %v995 = vpop.f32.mrb[0].mxu0
        %996 = vmatprep.mubr.f32.mxu0 0.0
        %997 = vmatmul.mubr.f32.gmra.mrb[0].mxu0 %v865
        %v998 = vpop.f32.mrb[0].mxu0
        %v999 = vadd.f32 %v806, %v998
        %v1000 = vpop.f32.mrb[0].mxu0
        %1001 = vmatprep.mubr.f32.mxu0 0.0
        %1002 = vmatmul.mubr.f32.gmra.mrb[0].mxu0 %v868
        %v1003 = vpop.f32.mrb[0].mxu0
        %v1004 = vadd.f32 %v811, %v1003
        %v1005 = vpop.f32.mrb[0].mxu0
        %1006 = vmatprep.mubr.f32.mxu0 0.0
        %1007 = vmatmul.mubr.f32.gmra.mrb[0].mxu0 %v871
        %v1008 = vpop.f32.mrb[0].mxu0
        %v1009 = vadd.f32 %v816, %v1008
        %v1010 = vpop.f32.mrb[0].mxu0
        %1011 = vmatprep.mubr.f32.mxu0 0.0
        %1012 = vmatmul.mubr.f32.gmra.mrb[0].mxu0 %v874
        %v1013 = vpop.f32.mrb[0].mxu0
        %v1014 = vadd.f32 %v821, %v1013
        %v1015 = vpop.f32.mrb[0].mxu0
        %1016 = vmatprep.mubr.f32.mxu0 0.0
        %1017 = vmatmul.mubr.f32.gmra.mrb[0].mxu0 %v877
        %v1018 = vpop.f32.mrb[0].mxu0
        %v1019 = vadd.f32 %v826, %v1018
        %v1020 = vpop.f32.mrb[0].mxu0
        %1021 = vmatprep.mubr.f32.mxu0 0.0
        %1022 = vmatmul.mubr.f32.gmra.mrb[0].mxu0 %v880
        %v1023 = vpop.f32.mrb[0].mxu0
        %v1024 = vadd.f32 %v831, %v1023
        %v1025 = vpop.f32.mrb[0].mxu0
        %1026 = vdwg.mxu0
        %v1027 = vld [vmem:[%s556] sm:$0x1]
        %v1029 = vlaneseq
        %v1030 = vshrl.u32 %v1029, 7
        %v1031 = vsub.s32 0, %v1030
        %v1032 = vrot.slane %v1027, %v1031
        %v1034 = vadd.f32 %v949, %v1032
        %v1035 = vadd.f32 %v954, %v1032
        %v1036 = vadd.f32 %v959, %v1032
        %v1037 = vadd.f32 %v964, %v1032
        %v1038 = vadd.f32 %v969, %v1032
        %v1039 = vadd.f32 %v974, %v1032
        %v1040 = vadd.f32 %v979, %v1032
        %v1041 = vadd.f32 %v984, %v1032
        %v1042 = vadd.f32 %v989, %v1032
        %v1043 = vadd.f32 %v994, %v1032
        %v1044 = vadd.f32 %v999, %v1032
        %v1045 = vadd.f32 %v1004, %v1032
        %v1046 = vadd.f32 %v1009, %v1032
        %v1047 = vadd.f32 %v1014, %v1032
        %v1048 = vadd.f32 %v1019, %v1032
        %v1049 = vadd.f32 %v1024, %v1032
        %vm1050 = vcmask 785408
        %1051 = vst.msk [vmem:[#allocation3] sm:$0xff] %vm1050, %v1034
        %1052 = vst.msk [vmem:[#allocation3 + $0x8] sm:$0xff] %vm1050, %v1035
        %1053 = vst.msk [vmem:[#allocation3 + $0x10] sm:$0xff] %vm1050, %v1036
        %1054 = vst.msk [vmem:[#allocation3 + $0x18] sm:$0xff] %vm1050, %v1037
        %1055 = vst.msk [vmem:[#allocation3 + $0x20] sm:$0xff] %vm1050, %v1038
        %1056 = vst.msk [vmem:[#allocation3 + $0x28] sm:$0xff] %vm1050, %v1039
        %1057 = vst.msk [vmem:[#allocation3 + $0x30] sm:$0xff] %vm1050, %v1040
        %1058 = vst.msk [vmem:[#allocation3 + $0x38] sm:$0xff] %vm1050, %v1041
        %1059 = vst.msk [vmem:[#allocation3 + $0x40] sm:$0xff] %vm1050, %v1042
        %1060 = vst.msk [vmem:[#allocation3 + $0x48] sm:$0xff] %vm1050, %v1043
        %1061 = vst.msk [vmem:[#allocation3 + $0x50] sm:$0xff] %vm1050, %v1044
        %1062 = vst.msk [vmem:[#allocation3 + $0x58] sm:$0xff] %vm1050, %v1045
        %1063 = vst.msk [vmem:[#allocation3 + $0x60] sm:$0xff] %vm1050, %v1046
        %1064 = vst.msk [vmem:[#allocation3 + $0x68] sm:$0xff] %vm1050, %v1047
        %1065 = vst.msk [vmem:[#allocation3 + $0x70] sm:$0xff] %vm1050, %v1048
        %1066 = vst.msk [vmem:[#allocation3 + $0x78] sm:$0xff] %vm1050, %v1049
        %s1067 = ssub.s32 1, %s23
        %s1068 = smul.u32 %s24, %s1067
        %s1069 = ssub.s32 1, %s24
        %s1070 = smul.u32 %s1069, %s23
        %s1071 = sadd.s32 %s1068, %s1070
        %v1072 = vld [vmem:[%s5] sm:$0xff]
        %v1073 = vld [vmem:[%s5 + $0x8] sm:$0xff]
        %s1074 = smul.u32 %s1071, 8
        %v1075 = vstv %s1074
        %v1076 = vsub.s32 %v1072, %v1075
        %v1077 = vsub.s32 %v1073, %v1075
        %v1078 = vld [vmem:[%s564] sm:$0x1]
        %v1080 = vlaneseq
        %v1081 = vshrl.u32 %v1080, 7
        %v1082 = vsub.s32 0, %v1081
        %v1083 = vrot.slane %v1078, %v1082
        %s1084 = smul.u32 %s23, 7
        %v1085 = vld [vmem:[#allocation2] sm:$0xff]
        %v1086 = vld [vmem:[#allocation2 + $0x8] sm:$0xff]
        %s1087 = smul.u32 %s1084, 16
        %s1088 = scalar_lea.vmem [#allocation3], %s1087
        %v1089 = vld [vmem:[%s1088] sm:$0xff]
        %v1090 = vld [vmem:[%s1088 + $0x8] sm:$0xff]
        %v1091 = vld [vmem:[%s561] sm:$0xff]
        %v1092 = vld [vmem:[%s561 + $0x8] sm:$0xff]
        %v1093 = vld [vmem:[%s561 + $0x10] sm:$0xff]
        %v1094 = vld [vmem:[%s561 + $0x18] sm:$0xff]
        %v1096 = vsel %vm640, %v1085, 0
        %v1099 = vsel %vm640, %v1086, 0
        %1101 = vmatprep.subr.mxu0 0.0
        %1102 = vmatpush1.msra.mxu0 %v1091
        %1103 = vmatprep.subr.mxu0 0.0
        %1104 = vmatpush1.msra.mxu0 %v1092
        %1105 = vmatprep.subr.mxu0 0.0
        %1106 = vmatpush1.msra.mxu0 %v1093
        %1107 = vmatprep.subr.mxu0 0.0
        %1108 = vmatpush1.msra.mxu0 %v1094
        %1109 = vmatprep.subr.mxu0 0.0
        %1110 = vmatpush1.msra.mxu0 0.0
        %1111 = vmatprep.subr.mxu0 0.0
        %1112 = vmatpush1.msra.mxu0 0.0
        %1113 = vmatprep.subr.mxu0 0.0
        %1114 = vmatpush1.msra.mxu0 0.0
        %1115 = vmatprep.subr.mxu0 0.0
        %1116 = vmatpush1.msra.mxu0 0.0
        %1117 = vmatprep.subr.mxu0 0.0
        %1118 = vmatpush1.msra.mxu0 0.0
        %1119 = vmatprep.subr.mxu0 0.0
        %1120 = vmatpush1.msra.mxu0 0.0
        %1121 = vmatprep.subr.mxu0 0.0
        %1122 = vmatpush1.msra.mxu0 0.0
        %1123 = vmatprep.subr.mxu0 0.0
        %1124 = vmatpush1.msra.mxu0 0.0
        %1125 = vmatprep.subr.mxu0 0.0
        %1126 = vmatpush1.msra.mxu0 0.0
        %1127 = vmatprep.subr.mxu0 0.0
        %1128 = vmatpush1.msra.mxu0 0.0
        %1129 = vmatprep.subr.mxu0 0.0
        %1130 = vmatpush1.msra.mxu0 0.0
        %1131 = vmatprep.subr.mxu0 0.0
        %1132 = vmatpush1.msra.mxu0 0.0
        %1133 = vmatprep.subr.mxu0 0.0
        %1134 = vmatpush1.msra.mxu0 0.0
        %1135 = vmatprep.subr.mxu0 0.0
        %1136 = vmatpush1.msra.mxu0 0.0
        %1137 = vmatprep.subr.mxu0 0.0
        %1138 = vmatpush1.msra.mxu0 0.0
        %1139 = vmatprep.subr.mxu0 0.0
        %1140 = vmatpush1.msra.mxu0 0.0
        %1141 = vmatprep.subr.mxu0 0.0
        %1142 = vmatpush1.msra.mxu0 0.0
        %1143 = vmatprep.subr.mxu0 0.0
        %1144 = vmatpush1.msra.mxu0 0.0
        %1145 = vmatprep.subr.mxu0 0.0
        %1146 = vmatpush1.msra.mxu0 0.0
        %1147 = vmatprep.subr.mxu0 0.0
        %1148 = vmatpush1.msra.mxu0 0.0
        %1149 = vmatprep.subr.mxu0 0.0
        %1150 = vmatpush1.msra.mxu0 0.0
        %1151 = vmatprep.subr.mxu0 0.0
        %1152 = vmatpush1.msra.mxu0 0.0
        %1153 = vmatprep.subr.mxu0 0.0
        %1154 = vmatpush1.msra.mxu0 0.0
        %1155 = vmatprep.subr.mxu0 0.0
        %1156 = vmatpush1.msra.mxu0 0.0
        %1157 = vmatprep.subr.mxu0 0.0
        %1158 = vmatpush1.msra.mxu0 0.0
        %1159 = vmatprep.subr.mxu0 0.0
        %1160 = vmatpush1.msra.mxu0 0.0
        %1161 = vmatprep.subr.mxu0 0.0
        %1162 = vmatpush1.msra.mxu0 0.0
        %1163 = vmatprep.subr.mxu0 0.0
        %1164 = vmatpush1.msra.mxu0 0.0
        %1165 = vmatprep.mubr.f32.mxu0 0.0
        %1166 = vmatmul.mubr.f32.gmra.mrb[0].mxu0 %v1096
        %v1167 = vpop.f32.mrb[0].mxu0
        %v1168 = vadd.f32 0.0, %v1167
        %v1169 = vpop.f32.mrb[0].mxu0
        %1170 = vmatprep.mubr.f32.mxu0 0.0
        %1171 = vmatmul.mubr.f32.gmra.mrb[0].mxu0 %v1099
        %v1172 = vpop.f32.mrb[0].mxu0
        %v1173 = vadd.f32 0.0, %v1172
        %v1174 = vpop.f32.mrb[0].mxu0
        %1175 = vdwg.mxu0
        %v1176 = vadd.f32 %v1089, %v1168
        %v1177 = vadd.f32 %v1090, %v1173
        %v1178 = vxor.u32 %v1176, 2147483648
        %v1179 = vxor.u32 %v1177, 2147483648
        %v1180 = vmul.f32 %v1178, 1.442695
        %v1181 = vpow.pop %v1180
        %v1182 = vmul.f32 %v1179, 1.442695
        %v1183 = vpow.pop %v1182
        %v1184 = vadd.f32 %v1181, 1.0
        %v1185 = vadd.f32 %v1183, 1.0
        %v1186 = vrcp.pop %v1184
        %v1187 = vmul.f32 1.0, %v1186
        %v1188 = vrcp.pop %v1185
        %v1189 = vmul.f32 1.0, %v1188
        %1190 = vrot.lane.b32.xlu0 %v1083, 64
        %v1191 = vpop.permute.xlu0 %1190
        %v1193 = vadd.f32 %v1168, %v1191
        %v1194 = vadd.f32 %v1173, %v1191
        %1197 = vrot.lane.b32.xlu0 %v1193, 64
        %v1198 = vpop.permute.xlu0 %1197
        %1199 = vrot.lane.b32.xlu0 %v1194, 64
        %v1200 = vpop.permute.xlu0 %1199
        %v1203 = vmul.f32 %v1187, %v1198
        %v1204 = vmul.f32 %v1189, %v1200
        %1207 = vrot.lane.b32.xlu0 %v1203, 64
        %v1208 = vpop.permute.xlu0 %1207
        %1209 = vrot.lane.b32.xlu0 %v1204, 64
        %v1210 = vpop.permute.xlu0 %1209
        %v1213 = vadd.f32 %v1089, %v1208
        %v1214 = vadd.f32 %v1090, %v1210
        %v1215 = vtanh.pop %v1213
        %v1216 = vtanh.pop %v1214
        %1219 = vrot.lane.b32.xlu0 %v1215, 64
        %v1220 = vpop.permute.xlu0 %1219
        %1221 = vrot.lane.b32.xlu0 %v1216, 64
        %v1222 = vpop.permute.xlu0 %1221
        %v1225 = vsub.f32 %v1085, %v1220
        %v1226 = vsub.f32 %v1086, %v1222
        %1229 = vrot.lane.b32.xlu0 %v1225, 32
        %v1230 = vpop.permute.xlu0 %1229
        %1231 = vrot.lane.b32.xlu0 %v1226, 32
        %v1232 = vpop.permute.xlu0 %1231
        %v1235 = vmul.f32 %v1187, %v1230
        %v1236 = vmul.f32 %v1189, %v1232
        %1237 = vrot.lane.b32.xlu0 %v1215, 96
        %v1238 = vpop.permute.xlu0 %1237
        %1239 = vrot.lane.b32.xlu0 %v1216, 96
        %v1240 = vpop.permute.xlu0 %1239
        %v1243 = vadd.f32 %v1235, %v1238
        %v1244 = vadd.f32 %v1236, %v1240
        %v1245 = vstv %s1084
        %vm1246 = vcmp.lt.s32.totalorder %v1245, %v1076
        %vm1247 = vcmp.lt.s32.totalorder %v1245, %v1077
        %v1248 = vsel %vm1246, 1, 0
        %v1249 = vsel %vm1247, 1, 0
        %1250 = vset.pattern.permute.xlu0 0
        %1251 = vperm.xlu0 %1250, %v1248
        %v1252 = vpop.permute.xlu0 %1251
        %1253 = vset.pattern.permute.xlu0 0
        %1254 = vperm.xlu0 %1253, %v1249
        %v1255 = vpop.permute.xlu0 %1254
        %vm1256 = vcmp.eq.s32.totalorder %v1252, 1
        %vm1257 = vcmp.eq.s32.totalorder %v1255, 1
        %1258 = vrot.lane.b32.xlu0 %v1085, 32
        %v1259 = vpop.permute.xlu0 %1258
        %1260 = vrot.lane.b32.xlu0 %v1086, 32
        %v1261 = vpop.permute.xlu0 %1260
        %v1264 = vsel %vm1256, %v1243, %v1259
        %v1265 = vsel %vm1257, %v1244, %v1261
        %1268 = vrot.lane.b32.xlu0 %v1264, 96
        %v1269 = vpop.permute.xlu0 %1268
        %1270 = vrot.lane.b32.xlu0 %v1265, 96
        %v1271 = vpop.permute.xlu0 %1270
        %1274 = vst.msk [vmem:[#allocation2] sm:$0xff] %vm640, %v1269
        %1275 = vst.msk [vmem:[#allocation2 + $0x8] sm:$0xff] %vm640, %v1271
        %v1276 = vsel %vm1256, %v1243, 0.0
        %v1277 = vsel %vm1257, %v1244, 0.0
        %1280 = vrot.lane.b32.xlu0 %v1276, 96
        %v1281 = vpop.permute.xlu0 %1280
        %1282 = vrot.lane.b32.xlu0 %v1277, 96
        %v1283 = vpop.permute.xlu0 %1282
        %s1286 = scalar_lea.vmem %s579, %s1087
        %1287 = vst.msk [vmem:[%s1286] sm:$0xff] %vm640, %v1281
        %1288 = vst.msk [vmem:[%s1286 + $0x8] sm:$0xff] %vm640, %v1283
        %s1289 = smul.u32 %s23, 6
        %s1290 = sadd.s32 %s1067, %s1289
        %v1291 = vld [vmem:[#allocation2] sm:$0xff]
        %v1292 = vld [vmem:[#allocation2 + $0x8] sm:$0xff]
        %s1293 = smul.u32 %s1290, 16
        %s1294 = scalar_lea.vmem [#allocation3], %s1293
        %v1295 = vld [vmem:[%s1294] sm:$0xff]
        %v1296 = vld [vmem:[%s1294 + $0x8] sm:$0xff]
        %v1297 = vld [vmem:[%s561] sm:$0xff]
        %v1298 = vld [vmem:[%s561 + $0x8] sm:$0xff]
        %v1299 = vld [vmem:[%s561 + $0x10] sm:$0xff]
        %v1300 = vld [vmem:[%s561 + $0x18] sm:$0xff]
        %v1302 = vsel %vm640, %v1291, 0
        %v1305 = vsel %vm640, %v1292, 0
        %1307 = vmatprep.subr.mxu0 0.0
        %1308 = vmatpush1.msra.mxu0 %v1297
        %1309 = vmatprep.subr.mxu0 0.0
        %1310 = vmatpush1.msra.mxu0 %v1298
        %1311 = vmatprep.subr.mxu0 0.0
        %1312 = vmatpush1.msra.mxu0 %v1299
        %1313 = vmatprep.subr.mxu0 0.0
        %1314 = vmatpush1.msra.mxu0 %v1300
        %1315 = vmatprep.subr.mxu0 0.0
        %1316 = vmatpush1.msra.mxu0 0.0
        %1317 = vmatprep.subr.mxu0 0.0
        %1318 = vmatpush1.msra.mxu0 0.0
        %1319 = vmatprep.subr.mxu0 0.0
        %1320 = vmatpush1.msra.mxu0 0.0
        %1321 = vmatprep.subr.mxu0 0.0
        %1322 = vmatpush1.msra.mxu0 0.0
        %1323 = vmatprep.subr.mxu0 0.0
        %1324 = vmatpush1.msra.mxu0 0.0
        %1325 = vmatprep.subr.mxu0 0.0
        %1326 = vmatpush1.msra.mxu0 0.0
        %1327 = vmatprep.subr.mxu0 0.0
        %1328 = vmatpush1.msra.mxu0 0.0
        %1329 = vmatprep.subr.mxu0 0.0
        %1330 = vmatpush1.msra.mxu0 0.0
        %1331 = vmatprep.subr.mxu0 0.0
        %1332 = vmatpush1.msra.mxu0 0.0
        %1333 = vmatprep.subr.mxu0 0.0
        %1334 = vmatpush1.msra.mxu0 0.0
        %1335 = vmatprep.subr.mxu0 0.0
        %1336 = vmatpush1.msra.mxu0 0.0
        %1337 = vmatprep.subr.mxu0 0.0
        %1338 = vmatpush1.msra.mxu0 0.0
        %1339 = vmatprep.subr.mxu0 0.0
        %1340 = vmatpush1.msra.mxu0 0.0
        %1341 = vmatprep.subr.mxu0 0.0
        %1342 = vmatpush1.msra.mxu0 0.0
        %1343 = vmatprep.subr.mxu0 0.0
        %1344 = vmatpush1.msra.mxu0 0.0
        %1345 = vmatprep.subr.mxu0 0.0
        %1346 = vmatpush1.msra.mxu0 0.0
        %1347 = vmatprep.subr.mxu0 0.0
        %1348 = vmatpush1.msra.mxu0 0.0
        %1349 = vmatprep.subr.mxu0 0.0
        %1350 = vmatpush1.msra.mxu0 0.0
        %1351 = vmatprep.subr.mxu0 0.0
        %1352 = vmatpush1.msra.mxu0 0.0
        %1353 = vmatprep.subr.mxu0 0.0
        %1354 = vmatpush1.msra.mxu0 0.0
        %1355 = vmatprep.subr.mxu0 0.0
        %1356 = vmatpush1.msra.mxu0 0.0
        %1357 = vmatprep.subr.mxu0 0.0
        %1358 = vmatpush1.msra.mxu0 0.0
        %1359 = vmatprep.subr.mxu0 0.0
        %1360 = vmatpush1.msra.mxu0 0.0
        %1361 = vmatprep.subr.mxu0 0.0
        %1362 = vmatpush1.msra.mxu0 0.0
        %1363 = vmatprep.subr.mxu0 0.0
        %1364 = vmatpush1.msra.mxu0 0.0
        %1365 = vmatprep.subr.mxu0 0.0
        %1366 = vmatpush1.msra.mxu0 0.0
        %1367 = vmatprep.subr.mxu0 0.0
        %1368 = vmatpush1.msra.mxu0 0.0
        %1369 = vmatprep.subr.mxu0 0.0
        %1370 = vmatpush1.msra.mxu0 0.0
        %1371 = vmatprep.mubr.f32.mxu0 0.0
        %1372 = vmatmul.mubr.f32.gmra.mrb[0].mxu0 %v1302
        %v1373 = vpop.f32.mrb[0].mxu0
        %v1374 = vadd.f32 0.0, %v1373
        %v1375 = vpop.f32.mrb[0].mxu0
        %1376 = vmatprep.mubr.f32.mxu0 0.0
        %1377 = vmatmul.mubr.f32.gmra.mrb[0].mxu0 %v1305
        %v1378 = vpop.f32.mrb[0].mxu0
        %v1379 = vadd.f32 0.0, %v1378
        %v1380 = vpop.f32.mrb[0].mxu0
        %1381 = vdwg.mxu0
        %v1382 = vadd.f32 %v1295, %v1374
        %v1383 = vadd.f32 %v1296, %v1379
        %v1384 = vxor.u32 %v1382, 2147483648
        %v1385 = vxor.u32 %v1383, 2147483648
        %v1386 = vmul.f32 %v1384, 1.442695
        %v1387 = vpow.pop %v1386
        %v1388 = vmul.f32 %v1385, 1.442695
        %v1389 = vpow.pop %v1388
        %v1390 = vadd.f32 %v1387, 1.0
        %v1391 = vadd.f32 %v1389, 1.0
        %v1392 = vrcp.pop %v1390
        %v1393 = vmul.f32 1.0, %v1392
        %v1394 = vrcp.pop %v1391
        %v1395 = vmul.f32 1.0, %v1394
        %v1396 = vadd.f32 %v1374, %v1191
        %v1397 = vadd.f32 %v1379, %v1191
        %1400 = vrot.lane.b32.xlu0 %v1396, 64
        %v1401 = vpop.permute.xlu0 %1400
        %1402 = vrot.lane.b32.xlu0 %v1397, 64
        %v1403 = vpop.permute.xlu0 %1402
        %v1406 = vmul.f32 %v1393, %v1401
        %v1407 = vmul.f32 %v1395, %v1403
        %1410 = vrot.lane.b32.xlu0 %v1406, 64
        %v1411 = vpop.permute.xlu0 %1410
        %1412 = vrot.lane.b32.xlu0 %v1407, 64
        %v1413 = vpop.permute.xlu0 %1412
        %v1416 = vadd.f32 %v1295, %v1411
        %v1417 = vadd.f32 %v1296, %v1413
        %v1418 = vtanh.pop %v1416
        %v1419 = vtanh.pop %v1417
        %1422 = vrot.lane.b32.xlu0 %v1418, 64
        %v1423 = vpop.permute.xlu0 %1422
        %1424 = vrot.lane.b32.xlu0 %v1419, 64
        %v1425 = vpop.permute.xlu0 %1424
        %v1428 = vsub.f32 %v1291, %v1423
        %v1429 = vsub.f32 %v1292, %v1425
        %1432 = vrot.lane.b32.xlu0 %v1428, 32
        %v1433 = vpop.permute.xlu0 %1432
        %1434 = vrot.lane.b32.xlu0 %v1429, 32
        %v1435 = vpop.permute.xlu0 %1434
        %v1438 = vmul.f32 %v1393, %v1433
        %v1439 = vmul.f32 %v1395, %v1435
        %1440 = vrot.lane.b32.xlu0 %v1418, 96
        %v1441 = vpop.permute.xlu0 %1440
        %1442 = vrot.lane.b32.xlu0 %v1419, 96
        %v1443 = vpop.permute.xlu0 %1442
        %v1446 = vadd.f32 %v1438, %v1441
        %v1447 = vadd.f32 %v1439, %v1443
        %v1448 = vstv %s1290
        %vm1449 = vcmp.lt.s32.totalorder %v1448, %v1076
        %vm1450 = vcmp.lt.s32.totalorder %v1448, %v1077
        %v1451 = vsel %vm1449, 1, 0
        %v1452 = vsel %vm1450, 1, 0
        %1453 = vset.pattern.permute.xlu0 0
        %1454 = vperm.xlu0 %1453, %v1451
        %v1455 = vpop.permute.xlu0 %1454
        %1456 = vset.pattern.permute.xlu0 0
        %1457 = vperm.xlu0 %1456, %v1452
        %v1458 = vpop.permute.xlu0 %1457
        %vm1459 = vcmp.eq.s32.totalorder %v1455, 1
        %vm1460 = vcmp.eq.s32.totalorder %v1458, 1
        %1461 = vrot.lane.b32.xlu0 %v1291, 32
        %v1462 = vpop.permute.xlu0 %1461
        %1463 = vrot.lane.b32.xlu0 %v1292, 32
        %v1464 = vpop.permute.xlu0 %1463
        %v1467 = vsel %vm1459, %v1446, %v1462
        %v1468 = vsel %vm1460, %v1447, %v1464
        %1471 = vrot.lane.b32.xlu0 %v1467, 96
        %v1472 = vpop.permute.xlu0 %1471
        %1473 = vrot.lane.b32.xlu0 %v1468, 96
        %v1474 = vpop.permute.xlu0 %1473
        %1477 = vst.msk [vmem:[#allocation2] sm:$0xff] %vm640, %v1472
        %1478 = vst.msk [vmem:[#allocation2 + $0x8] sm:$0xff] %vm640, %v1474
        %v1479 = vsel %vm1459, %v1446, 0.0
        %v1480 = vsel %vm1460, %v1447, 0.0
        %1483 = vrot.lane.b32.xlu0 %v1479, 96
        %v1484 = vpop.permute.xlu0 %1483
        %1485 = vrot.lane.b32.xlu0 %v1480, 96
        %v1486 = vpop.permute.xlu0 %1485
        %s1489 = scalar_lea.vmem %s579, %s1293
        %1490 = vst.msk [vmem:[%s1489] sm:$0xff] %vm640, %v1484
        %1491 = vst.msk [vmem:[%s1489 + $0x8] sm:$0xff] %vm640, %v1486
        %s1492 = smul.u32 %s1067, 2
        %s1493 = smul.u32 %s23, 5
        %s1494 = sadd.s32 %s1492, %s1493
        %v1495 = vld [vmem:[#allocation2] sm:$0xff]
        %v1496 = vld [vmem:[#allocation2 + $0x8] sm:$0xff]
        %s1497 = smul.u32 %s1494, 16
        %s1498 = scalar_lea.vmem [#allocation3], %s1497
        %v1499 = vld [vmem:[%s1498] sm:$0xff]
        %v1500 = vld [vmem:[%s1498 + $0x8] sm:$0xff]
        %v1501 = vld [vmem:[%s561] sm:$0xff]
        %v1502 = vld [vmem:[%s561 + $0x8] sm:$0xff]
        %v1503 = vld [vmem:[%s561 + $0x10] sm:$0xff]
        %v1504 = vld [vmem:[%s561 + $0x18] sm:$0xff]
        %v1506 = vsel %vm640, %v1495, 0
        %v1509 = vsel %vm640, %v1496, 0
        %1511 = vmatprep.subr.mxu0 0.0
        %1512 = vmatpush1.msra.mxu0 %v1501
        %1513 = vmatprep.subr.mxu0 0.0
        %1514 = vmatpush1.msra.mxu0 %v1502
        %1515 = vmatprep.subr.mxu0 0.0
        %1516 = vmatpush1.msra.mxu0 %v1503
        %1517 = vmatprep.subr.mxu0 0.0
        %1518 = vmatpush1.msra.mxu0 %v1504
        %1519 = vmatprep.subr.mxu0 0.0
        %1520 = vmatpush1.msra.mxu0 0.0
        %1521 = vmatprep.subr.mxu0 0.0
        %1522 = vmatpush1.msra.mxu0 0.0
        %1523 = vmatprep.subr.mxu0 0.0
        %1524 = vmatpush1.msra.mxu0 0.0
        %1525 = vmatprep.subr.mxu0 0.0
        %1526 = vmatpush1.msra.mxu0 0.0
        %1527 = vmatprep.subr.mxu0 0.0
        %1528 = vmatpush1.msra.mxu0 0.0
        %1529 = vmatprep.subr.mxu0 0.0
        %1530 = vmatpush1.msra.mxu0 0.0
        %1531 = vmatprep.subr.mxu0 0.0
        %1532 = vmatpush1.msra.mxu0 0.0
        %1533 = vmatprep.subr.mxu0 0.0
        %1534 = vmatpush1.msra.mxu0 0.0
        %1535 = vmatprep.subr.mxu0 0.0
        %1536 = vmatpush1.msra.mxu0 0.0
        %1537 = vmatprep.subr.mxu0 0.0
        %1538 = vmatpush1.msra.mxu0 0.0
        %1539 = vmatprep.subr.mxu0 0.0
        %1540 = vmatpush1.msra.mxu0 0.0
        %1541 = vmatprep.subr.mxu0 0.0
        %1542 = vmatpush1.msra.mxu0 0.0
        %1543 = vmatprep.subr.mxu0 0.0
        %1544 = vmatpush1.msra.mxu0 0.0
        %1545 = vmatprep.subr.mxu0 0.0
        %1546 = vmatpush1.msra.mxu0 0.0
        %1547 = vmatprep.subr.mxu0 0.0
        %1548 = vmatpush1.msra.mxu0 0.0
        %1549 = vmatprep.subr.mxu0 0.0
        %1550 = vmatpush1.msra.mxu0 0.0
        %1551 = vmatprep.subr.mxu0 0.0
        %1552 = vmatpush1.msra.mxu0 0.0
        %1553 = vmatprep.subr.mxu0 0.0
        %1554 = vmatpush1.msra.mxu0 0.0
        %1555 = vmatprep.subr.mxu0 0.0
        %1556 = vmatpush1.msra.mxu0 0.0
        %1557 = vmatprep.subr.mxu0 0.0
        %1558 = vmatpush1.msra.mxu0 0.0
        %1559 = vmatprep.subr.mxu0 0.0
        %1560 = vmatpush1.msra.mxu0 0.0
        %1561 = vmatprep.subr.mxu0 0.0
        %1562 = vmatpush1.msra.mxu0 0.0
        %1563 = vmatprep.subr.mxu0 0.0
        %1564 = vmatpush1.msra.mxu0 0.0
        %1565 = vmatprep.subr.mxu0 0.0
        %1566 = vmatpush1.msra.mxu0 0.0
        %1567 = vmatprep.subr.mxu0 0.0
        %1568 = vmatpush1.msra.mxu0 0.0
        %1569 = vmatprep.subr.mxu0 0.0
        %1570 = vmatpush1.msra.mxu0 0.0
        %1571 = vmatprep.subr.mxu0 0.0
        %1572 = vmatpush1.msra.mxu0 0.0
        %1573 = vmatprep.subr.mxu0 0.0
        %1574 = vmatpush1.msra.mxu0 0.0
        %1575 = vmatprep.mubr.f32.mxu0 0.0
        %1576 = vmatmul.mubr.f32.gmra.mrb[0].mxu0 %v1506
        %v1577 = vpop.f32.mrb[0].mxu0
        %v1578 = vadd.f32 0.0, %v1577
        %v1579 = vpop.f32.mrb[0].mxu0
        %1580 = vmatprep.mubr.f32.mxu0 0.0
        %1581 = vmatmul.mubr.f32.gmra.mrb[0].mxu0 %v1509
        %v1582 = vpop.f32.mrb[0].mxu0
        %v1583 = vadd.f32 0.0, %v1582
        %v1584 = vpop.f32.mrb[0].mxu0
        %1585 = vdwg.mxu0
        %v1586 = vadd.f32 %v1499, %v1578
        %v1587 = vadd.f32 %v1500, %v1583
        %v1588 = vxor.u32 %v1586, 2147483648
        %v1589 = vxor.u32 %v1587, 2147483648
        %v1590 = vmul.f32 %v1588, 1.442695
        %v1591 = vpow.pop %v1590
        %v1592 = vmul.f32 %v1589, 1.442695
        %v1593 = vpow.pop %v1592
        %v1594 = vadd.f32 %v1591, 1.0
        %v1595 = vadd.f32 %v1593, 1.0
        %v1596 = vrcp.pop %v1594
        %v1597 = vmul.f32 1.0, %v1596
        %v1598 = vrcp.pop %v1595
        %v1599 = vmul.f32 1.0, %v1598
        %v1600 = vadd.f32 %v1578, %v1191
        %v1601 = vadd.f32 %v1583, %v1191
        %1604 = vrot.lane.b32.xlu0 %v1600, 64
        %v1605 = vpop.permute.xlu0 %1604
        %1606 = vrot.lane.b32.xlu0 %v1601, 64
        %v1607 = vpop.permute.xlu0 %1606
        %v1610 = vmul.f32 %v1597, %v1605
        %v1611 = vmul.f32 %v1599, %v1607
        %1614 = vrot.lane.b32.xlu0 %v1610, 64
        %v1615 = vpop.permute.xlu0 %1614
        %1616 = vrot.lane.b32.xlu0 %v1611, 64
        %v1617 = vpop.permute.xlu0 %1616
        %v1620 = vadd.f32 %v1499, %v1615
        %v1621 = vadd.f32 %v1500, %v1617
        %v1622 = vtanh.pop %v1620
        %v1623 = vtanh.pop %v1621
        %1626 = vrot.lane.b32.xlu0 %v1622, 64
        %v1627 = vpop.permute.xlu0 %1626
        %1628 = vrot.lane.b32.xlu0 %v1623, 64
        %v1629 = vpop.permute.xlu0 %1628
        %v1632 = vsub.f32 %v1495, %v1627
        %v1633 = vsub.f32 %v1496, %v1629
        %1636 = vrot.lane.b32.xlu0 %v1632, 32
        %v1637 = vpop.permute.xlu0 %1636
        %1638 = vrot.lane.b32.xlu0 %v1633, 32
        %v1639 = vpop.permute.xlu0 %1638
        %v1642 = vmul.f32 %v1597, %v1637
        %v1643 = vmul.f32 %v1599, %v1639
        %1644 = vrot.lane.b32.xlu0 %v1622, 96
        %v1645 = vpop.permute.xlu0 %1644
        %1646 = vrot.lane.b32.xlu0 %v1623, 96
        %v1647 = vpop.permute.xlu0 %1646
        %v1650 = vadd.f32 %v1642, %v1645
        %v1651 = vadd.f32 %v1643, %v1647
        %v1652 = vstv %s1494
        %vm1653 = vcmp.lt.s32.totalorder %v1652, %v1076
        %vm1654 = vcmp.lt.s32.totalorder %v1652, %v1077
        %v1655 = vsel %vm1653, 1, 0
        %v1656 = vsel %vm1654, 1, 0
        %1657 = vset.pattern.permute.xlu0 0
        %1658 = vperm.xlu0 %1657, %v1655
        %v1659 = vpop.permute.xlu0 %1658
        %1660 = vset.pattern.permute.xlu0 0
        %1661 = vperm.xlu0 %1660, %v1656
        %v1662 = vpop.permute.xlu0 %1661
        %vm1663 = vcmp.eq.s32.totalorder %v1659, 1
        %vm1664 = vcmp.eq.s32.totalorder %v1662, 1
        %1665 = vrot.lane.b32.xlu0 %v1495, 32
        %v1666 = vpop.permute.xlu0 %1665
        %1667 = vrot.lane.b32.xlu0 %v1496, 32
        %v1668 = vpop.permute.xlu0 %1667
        %v1671 = vsel %vm1663, %v1650, %v1666
        %v1672 = vsel %vm1664, %v1651, %v1668
        %1675 = vrot.lane.b32.xlu0 %v1671, 96
        %v1676 = vpop.permute.xlu0 %1675
        %1677 = vrot.lane.b32.xlu0 %v1672, 96
        %v1678 = vpop.permute.xlu0 %1677
        %1681 = vst.msk [vmem:[#allocation2] sm:$0xff] %vm640, %v1676
        %1682 = vst.msk [vmem:[#allocation2 + $0x8] sm:$0xff] %vm640, %v1678
        %v1683 = vsel %vm1663, %v1650, 0.0
        %v1684 = vsel %vm1664, %v1651, 0.0
        %1687 = vrot.lane.b32.xlu0 %v1683, 96
        %v1688 = vpop.permute.xlu0 %1687
        %1689 = vrot.lane.b32.xlu0 %v1684, 96
        %v1690 = vpop.permute.xlu0 %1689
        %s1693 = scalar_lea.vmem %s579, %s1497
        %1694 = vst.msk [vmem:[%s1693] sm:$0xff] %vm640, %v1688
        %1695 = vst.msk [vmem:[%s1693 + $0x8] sm:$0xff] %vm640, %v1690
        %s1696 = smul.u32 %s1067, 3
        %s1697 = smul.u32 %s23, 4
        %s1698 = sadd.s32 %s1696, %s1697
        %v1699 = vld [vmem:[#allocation2] sm:$0xff]
        %v1700 = vld [vmem:[#allocation2 + $0x8] sm:$0xff]
        %s1701 = smul.u32 %s1698, 16
        %s1702 = scalar_lea.vmem [#allocation3], %s1701
        %v1703 = vld [vmem:[%s1702] sm:$0xff]
        %v1704 = vld [vmem:[%s1702 + $0x8] sm:$0xff]
        %v1705 = vld [vmem:[%s561] sm:$0xff]
        %v1706 = vld [vmem:[%s561 + $0x8] sm:$0xff]
        %v1707 = vld [vmem:[%s561 + $0x10] sm:$0xff]
        %v1708 = vld [vmem:[%s561 + $0x18] sm:$0xff]
        %v1710 = vsel %vm640, %v1699, 0
        %v1713 = vsel %vm640, %v1700, 0
        %1715 = vmatprep.subr.mxu0 0.0
        %1716 = vmatpush1.msra.mxu0 %v1705
        %1717 = vmatprep.subr.mxu0 0.0
        %1718 = vmatpush1.msra.mxu0 %v1706
        %1719 = vmatprep.subr.mxu0 0.0
        %1720 = vmatpush1.msra.mxu0 %v1707
        %1721 = vmatprep.subr.mxu0 0.0
        %1722 = vmatpush1.msra.mxu0 %v1708
        %1723 = vmatprep.subr.mxu0 0.0
        %1724 = vmatpush1.msra.mxu0 0.0
        %1725 = vmatprep.subr.mxu0 0.0
        %1726 = vmatpush1.msra.mxu0 0.0
        %1727 = vmatprep.subr.mxu0 0.0
        %1728 = vmatpush1.msra.mxu0 0.0
        %1729 = vmatprep.subr.mxu0 0.0
        %1730 = vmatpush1.msra.mxu0 0.0
        %1731 = vmatprep.subr.mxu0 0.0
        %1732 = vmatpush1.msra.mxu0 0.0
        %1733 = vmatprep.subr.mxu0 0.0
        %1734 = vmatpush1.msra.mxu0 0.0
        %1735 = vmatprep.subr.mxu0 0.0
        %1736 = vmatpush1.msra.mxu0 0.0
        %1737 = vmatprep.subr.mxu0 0.0
        %1738 = vmatpush1.msra.mxu0 0.0
        %1739 = vmatprep.subr.mxu0 0.0
        %1740 = vmatpush1.msra.mxu0 0.0
        %1741 = vmatprep.subr.mxu0 0.0
        %1742 = vmatpush1.msra.mxu0 0.0
        %1743 = vmatprep.subr.mxu0 0.0
        %1744 = vmatpush1.msra.mxu0 0.0
        %1745 = vmatprep.subr.mxu0 0.0
        %1746 = vmatpush1.msra.mxu0 0.0
        %1747 = vmatprep.subr.mxu0 0.0
        %1748 = vmatpush1.msra.mxu0 0.0
        %1749 = vmatprep.subr.mxu0 0.0
        %1750 = vmatpush1.msra.mxu0 0.0
        %1751 = vmatprep.subr.mxu0 0.0
        %1752 = vmatpush1.msra.mxu0 0.0
        %1753 = vmatprep.subr.mxu0 0.0
        %1754 = vmatpush1.msra.mxu0 0.0
        %1755 = vmatprep.subr.mxu0 0.0
        %1756 = vmatpush1.msra.mxu0 0.0
        %1757 = vmatprep.subr.mxu0 0.0
        %1758 = vmatpush1.msra.mxu0 0.0
        %1759 = vmatprep.subr.mxu0 0.0
        %1760 = vmatpush1.msra.mxu0 0.0
        %1761 = vmatprep.subr.mxu0 0.0
        %1762 = vmatpush1.msra.mxu0 0.0
        %1763 = vmatprep.subr.mxu0 0.0
        %1764 = vmatpush1.msra.mxu0 0.0
        %1765 = vmatprep.subr.mxu0 0.0
        %1766 = vmatpush1.msra.mxu0 0.0
        %1767 = vmatprep.subr.mxu0 0.0
        %1768 = vmatpush1.msra.mxu0 0.0
        %1769 = vmatprep.subr.mxu0 0.0
        %1770 = vmatpush1.msra.mxu0 0.0
        %1771 = vmatprep.subr.mxu0 0.0
        %1772 = vmatpush1.msra.mxu0 0.0
        %1773 = vmatprep.subr.mxu0 0.0
        %1774 = vmatpush1.msra.mxu0 0.0
        %1775 = vmatprep.subr.mxu0 0.0
        %1776 = vmatpush1.msra.mxu0 0.0
        %1777 = vmatprep.subr.mxu0 0.0
        %1778 = vmatpush1.msra.mxu0 0.0
        %1779 = vmatprep.mubr.f32.mxu0 0.0
        %1780 = vmatmul.mubr.f32.gmra.mrb[0].mxu0 %v1710
        %v1781 = vpop.f32.mrb[0].mxu0
        %v1782 = vadd.f32 0.0, %v1781
        %v1783 = vpop.f32.mrb[0].mxu0
        %1784 = vmatprep.mubr.f32.mxu0 0.0
        %1785 = vmatmul.mubr.f32.gmra.mrb[0].mxu0 %v1713
        %v1786 = vpop.f32.mrb[0].mxu0
        %v1787 = vadd.f32 0.0, %v1786
        %v1788 = vpop.f32.mrb[0].mxu0
        %1789 = vdwg.mxu0
        %v1790 = vadd.f32 %v1703, %v1782
        %v1791 = vadd.f32 %v1704, %v1787
        %v1792 = vxor.u32 %v1790, 2147483648
        %v1793 = vxor.u32 %v1791, 2147483648
        %v1794 = vmul.f32 %v1792, 1.442695
        %v1795 = vpow.pop %v1794
        %v1796 = vmul.f32 %v1793, 1.442695
        %v1797 = vpow.pop %v1796
        %v1798 = vadd.f32 %v1795, 1.0
        %v1799 = vadd.f32 %v1797, 1.0
        %v1800 = vrcp.pop %v1798
        %v1801 = vmul.f32 1.0, %v1800
        %v1802 = vrcp.pop %v1799
        %v1803 = vmul.f32 1.0, %v1802
        %v1804 = vadd.f32 %v1782, %v1191
        %v1805 = vadd.f32 %v1787, %v1191
        %1808 = vrot.lane.b32.xlu0 %v1804, 64
        %v1809 = vpop.permute.xlu0 %1808
        %1810 = vrot.lane.b32.xlu0 %v1805, 64
        %v1811 = vpop.permute.xlu0 %1810
        %v1814 = vmul.f32 %v1801, %v1809
        %v1815 = vmul.f32 %v1803, %v1811
        %1818 = vrot.lane.b32.xlu0 %v1814, 64
        %v1819 = vpop.permute.xlu0 %1818
        %1820 = vrot.lane.b32.xlu0 %v1815, 64
        %v1821 = vpop.permute.xlu0 %1820
        %v1824 = vadd.f32 %v1703, %v1819
        %v1825 = vadd.f32 %v1704, %v1821
        %v1826 = vtanh.pop %v1824
        %v1827 = vtanh.pop %v1825
        %1830 = vrot.lane.b32.xlu0 %v1826, 64
        %v1831 = vpop.permute.xlu0 %1830
        %1832 = vrot.lane.b32.xlu0 %v1827, 64
        %v1833 = vpop.permute.xlu0 %1832
        %v1836 = vsub.f32 %v1699, %v1831
        %v1837 = vsub.f32 %v1700, %v1833
        %1840 = vrot.lane.b32.xlu0 %v1836, 32
        %v1841 = vpop.permute.xlu0 %1840
        %1842 = vrot.lane.b32.xlu0 %v1837, 32
        %v1843 = vpop.permute.xlu0 %1842
        %v1846 = vmul.f32 %v1801, %v1841
        %v1847 = vmul.f32 %v1803, %v1843
        %1848 = vrot.lane.b32.xlu0 %v1826, 96
        %v1849 = vpop.permute.xlu0 %1848
        %1850 = vrot.lane.b32.xlu0 %v1827, 96
        %v1851 = vpop.permute.xlu0 %1850
        %v1854 = vadd.f32 %v1846, %v1849
        %v1855 = vadd.f32 %v1847, %v1851
        %v1856 = vstv %s1698
        %vm1857 = vcmp.lt.s32.totalorder %v1856, %v1076
        %vm1858 = vcmp.lt.s32.totalorder %v1856, %v1077
        %v1859 = vsel %vm1857, 1, 0
        %v1860 = vsel %vm1858, 1, 0
        %1861 = vset.pattern.permute.xlu0 0
        %1862 = vperm.xlu0 %1861, %v1859
        %v1863 = vpop.permute.xlu0 %1862
        %1864 = vset.pattern.permute.xlu0 0
        %1865 = vperm.xlu0 %1864, %v1860
        %v1866 = vpop.permute.xlu0 %1865
        %vm1867 = vcmp.eq.s32.totalorder %v1863, 1
        %vm1868 = vcmp.eq.s32.totalorder %v1866, 1
        %1869 = vrot.lane.b32.xlu0 %v1699, 32
        %v1870 = vpop.permute.xlu0 %1869
        %1871 = vrot.lane.b32.xlu0 %v1700, 32
        %v1872 = vpop.permute.xlu0 %1871
        %v1875 = vsel %vm1867, %v1854, %v1870
        %v1876 = vsel %vm1868, %v1855, %v1872
        %1879 = vrot.lane.b32.xlu0 %v1875, 96
        %v1880 = vpop.permute.xlu0 %1879
        %1881 = vrot.lane.b32.xlu0 %v1876, 96
        %v1882 = vpop.permute.xlu0 %1881
        %1885 = vst.msk [vmem:[#allocation2] sm:$0xff] %vm640, %v1880
        %1886 = vst.msk [vmem:[#allocation2 + $0x8] sm:$0xff] %vm640, %v1882
        %v1887 = vsel %vm1867, %v1854, 0.0
        %v1888 = vsel %vm1868, %v1855, 0.0
        %1891 = vrot.lane.b32.xlu0 %v1887, 96
        %v1892 = vpop.permute.xlu0 %1891
        %1893 = vrot.lane.b32.xlu0 %v1888, 96
        %v1894 = vpop.permute.xlu0 %1893
        %s1897 = scalar_lea.vmem %s579, %s1701
        %1898 = vst.msk [vmem:[%s1897] sm:$0xff] %vm640, %v1892
        %1899 = vst.msk [vmem:[%s1897 + $0x8] sm:$0xff] %vm640, %v1894
        %s1900 = smul.u32 %s1067, 4
        %s1901 = smul.u32 %s23, 3
        %s1902 = sadd.s32 %s1900, %s1901
        %v1903 = vld [vmem:[#allocation2] sm:$0xff]
        %v1904 = vld [vmem:[#allocation2 + $0x8] sm:$0xff]
        %s1905 = smul.u32 %s1902, 16
        %s1906 = scalar_lea.vmem [#allocation3], %s1905
        %v1907 = vld [vmem:[%s1906] sm:$0xff]
        %v1908 = vld [vmem:[%s1906 + $0x8] sm:$0xff]
        %v1909 = vld [vmem:[%s561] sm:$0xff]
        %v1910 = vld [vmem:[%s561 + $0x8] sm:$0xff]
        %v1911 = vld [vmem:[%s561 + $0x10] sm:$0xff]
        %v1912 = vld [vmem:[%s561 + $0x18] sm:$0xff]
        %v1914 = vsel %vm640, %v1903, 0
        %v1917 = vsel %vm640, %v1904, 0
        %1919 = vmatprep.subr.mxu0 0.0
        %1920 = vmatpush1.msra.mxu0 %v1909
        %1921 = vmatprep.subr.mxu0 0.0
        %1922 = vmatpush1.msra.mxu0 %v1910
        %1923 = vmatprep.subr.mxu0 0.0
        %1924 = vmatpush1.msra.mxu0 %v1911
        %1925 = vmatprep.subr.mxu0 0.0
        %1926 = vmatpush1.msra.mxu0 %v1912
        %1927 = vmatprep.subr.mxu0 0.0
        %1928 = vmatpush1.msra.mxu0 0.0
        %1929 = vmatprep.subr.mxu0 0.0
        %1930 = vmatpush1.msra.mxu0 0.0
        %1931 = vmatprep.subr.mxu0 0.0
        %1932 = vmatpush1.msra.mxu0 0.0
        %1933 = vmatprep.subr.mxu0 0.0
        %1934 = vmatpush1.msra.mxu0 0.0
        %1935 = vmatprep.subr.mxu0 0.0
        %1936 = vmatpush1.msra.mxu0 0.0
        %1937 = vmatprep.subr.mxu0 0.0
        %1938 = vmatpush1.msra.mxu0 0.0
        %1939 = vmatprep.subr.mxu0 0.0
        %1940 = vmatpush1.msra.mxu0 0.0
        %1941 = vmatprep.subr.mxu0 0.0
        %1942 = vmatpush1.msra.mxu0 0.0
        %1943 = vmatprep.subr.mxu0 0.0
        %1944 = vmatpush1.msra.mxu0 0.0
        %1945 = vmatprep.subr.mxu0 0.0
        %1946 = vmatpush1.msra.mxu0 0.0
        %1947 = vmatprep.subr.mxu0 0.0
        %1948 = vmatpush1.msra.mxu0 0.0
        %1949 = vmatprep.subr.mxu0 0.0
        %1950 = vmatpush1.msra.mxu0 0.0
        %1951 = vmatprep.subr.mxu0 0.0
        %1952 = vmatpush1.msra.mxu0 0.0
        %1953 = vmatprep.subr.mxu0 0.0
        %1954 = vmatpush1.msra.mxu0 0.0
        %1955 = vmatprep.subr.mxu0 0.0
        %1956 = vmatpush1.msra.mxu0 0.0
        %1957 = vmatprep.subr.mxu0 0.0
        %1958 = vmatpush1.msra.mxu0 0.0
        %1959 = vmatprep.subr.mxu0 0.0
        %1960 = vmatpush1.msra.mxu0 0.0
        %1961 = vmatprep.subr.mxu0 0.0
        %1962 = vmatpush1.msra.mxu0 0.0
        %1963 = vmatprep.subr.mxu0 0.0
        %1964 = vmatpush1.msra.mxu0 0.0
        %1965 = vmatprep.subr.mxu0 0.0
        %1966 = vmatpush1.msra.mxu0 0.0
        %1967 = vmatprep.subr.mxu0 0.0
        %1968 = vmatpush1.msra.mxu0 0.0
        %1969 = vmatprep.subr.mxu0 0.0
        %1970 = vmatpush1.msra.mxu0 0.0
        %1971 = vmatprep.subr.mxu0 0.0
        %1972 = vmatpush1.msra.mxu0 0.0
        %1973 = vmatprep.subr.mxu0 0.0
        %1974 = vmatpush1.msra.mxu0 0.0
        %1975 = vmatprep.subr.mxu0 0.0
        %1976 = vmatpush1.msra.mxu0 0.0
        %1977 = vmatprep.subr.mxu0 0.0
        %1978 = vmatpush1.msra.mxu0 0.0
        %1979 = vmatprep.subr.mxu0 0.0
        %1980 = vmatpush1.msra.mxu0 0.0
        %1981 = vmatprep.subr.mxu0 0.0
        %1982 = vmatpush1.msra.mxu0 0.0
        %1983 = vmatprep.mubr.f32.mxu0 0.0
        %1984 = vmatmul.mubr.f32.gmra.mrb[0].mxu0 %v1914
        %v1985 = vpop.f32.mrb[0].mxu0
        %v1986 = vadd.f32 0.0, %v1985
        %v1987 = vpop.f32.mrb[0].mxu0
        %1988 = vmatprep.mubr.f32.mxu0 0.0
        %1989 = vmatmul.mubr.f32.gmra.mrb[0].mxu0 %v1917
        %v1990 = vpop.f32.mrb[0].mxu0
        %v1991 = vadd.f32 0.0, %v1990
        %v1992 = vpop.f32.mrb[0].mxu0
        %1993 = vdwg.mxu0
        %v1994 = vadd.f32 %v1907, %v1986
        %v1995 = vadd.f32 %v1908, %v1991
        %v1996 = vxor.u32 %v1994, 2147483648
        %v1997 = vxor.u32 %v1995, 2147483648
        %v1998 = vmul.f32 %v1996, 1.442695
        %v1999 = vpow.pop %v1998
        %v2000 = vmul.f32 %v1997, 1.442695
        %v2001 = vpow.pop %v2000
        %v2002 = vadd.f32 %v1999, 1.0
        %v2003 = vadd.f32 %v2001, 1.0
        %v2004 = vrcp.pop %v2002
        %v2005 = vmul.f32 1.0, %v2004
        %v2006 = vrcp.pop %v2003
        %v2007 = vmul.f32 1.0, %v2006
        %v2008 = vadd.f32 %v1986, %v1191
        %v2009 = vadd.f32 %v1991, %v1191
        %2012 = vrot.lane.b32.xlu0 %v2008, 64
        %v2013 = vpop.permute.xlu0 %2012
        %2014 = vrot.lane.b32.xlu0 %v2009, 64
        %v2015 = vpop.permute.xlu0 %2014
        %v2018 = vmul.f32 %v2005, %v2013
        %v2019 = vmul.f32 %v2007, %v2015
        %2022 = vrot.lane.b32.xlu0 %v2018, 64
        %v2023 = vpop.permute.xlu0 %2022
        %2024 = vrot.lane.b32.xlu0 %v2019, 64
        %v2025 = vpop.permute.xlu0 %2024
        %v2028 = vadd.f32 %v1907, %v2023
        %v2029 = vadd.f32 %v1908, %v2025
        %v2030 = vtanh.pop %v2028
        %v2031 = vtanh.pop %v2029
        %2034 = vrot.lane.b32.xlu0 %v2030, 64
        %v2035 = vpop.permute.xlu0 %2034
        %2036 = vrot.lane.b32.xlu0 %v2031, 64
        %v2037 = vpop.permute.xlu0 %2036
        %v2040 = vsub.f32 %v1903, %v2035
        %v2041 = vsub.f32 %v1904, %v2037
        %2044 = vrot.lane.b32.xlu0 %v2040, 32
        %v2045 = vpop.permute.xlu0 %2044
        %2046 = vrot.lane.b32.xlu0 %v2041, 32
        %v2047 = vpop.permute.xlu0 %2046
        %v2050 = vmul.f32 %v2005, %v2045
        %v2051 = vmul.f32 %v2007, %v2047
        %2052 = vrot.lane.b32.xlu0 %v2030, 96
        %v2053 = vpop.permute.xlu0 %2052
        %2054 = vrot.lane.b32.xlu0 %v2031, 96
        %v2055 = vpop.permute.xlu0 %2054
        %v2058 = vadd.f32 %v2050, %v2053
        %v2059 = vadd.f32 %v2051, %v2055
        %v2060 = vstv %s1902
        %vm2061 = vcmp.lt.s32.totalorder %v2060, %v1076
        %vm2062 = vcmp.lt.s32.totalorder %v2060, %v1077
        %v2063 = vsel %vm2061, 1, 0
        %v2064 = vsel %vm2062, 1, 0
        %2065 = vset.pattern.permute.xlu0 0
        %2066 = vperm.xlu0 %2065, %v2063
        %v2067 = vpop.permute.xlu0 %2066
        %2068 = vset.pattern.permute.xlu0 0
        %2069 = vperm.xlu0 %2068, %v2064
        %v2070 = vpop.permute.xlu0 %2069
        %vm2071 = vcmp.eq.s32.totalorder %v2067, 1
        %vm2072 = vcmp.eq.s32.totalorder %v2070, 1
        %2073 = vrot.lane.b32.xlu0 %v1903, 32
        %v2074 = vpop.permute.xlu0 %2073
        %2075 = vrot.lane.b32.xlu0 %v1904, 32
        %v2076 = vpop.permute.xlu0 %2075
        %v2079 = vsel %vm2071, %v2058, %v2074
        %v2080 = vsel %vm2072, %v2059, %v2076
        %2083 = vrot.lane.b32.xlu0 %v2079, 96
        %v2084 = vpop.permute.xlu0 %2083
        %2085 = vrot.lane.b32.xlu0 %v2080, 96
        %v2086 = vpop.permute.xlu0 %2085
        %2089 = vst.msk [vmem:[#allocation2] sm:$0xff] %vm640, %v2084
        %2090 = vst.msk [vmem:[#allocation2 + $0x8] sm:$0xff] %vm640, %v2086
        %v2091 = vsel %vm2071, %v2058, 0.0
        %v2092 = vsel %vm2072, %v2059, 0.0
        %2095 = vrot.lane.b32.xlu0 %v2091, 96
        %v2096 = vpop.permute.xlu0 %2095
        %2097 = vrot.lane.b32.xlu0 %v2092, 96
        %v2098 = vpop.permute.xlu0 %2097
        %s2101 = scalar_lea.vmem %s579, %s1905
        %2102 = vst.msk [vmem:[%s2101] sm:$0xff] %vm640, %v2096
        %2103 = vst.msk [vmem:[%s2101 + $0x8] sm:$0xff] %vm640, %v2098
        %s2104 = smul.u32 %s1067, 5
        %s2105 = smul.u32 %s23, 2
        %s2106 = sadd.s32 %s2104, %s2105
        %v2107 = vld [vmem:[#allocation2] sm:$0xff]
        %v2108 = vld [vmem:[#allocation2 + $0x8] sm:$0xff]
        %s2109 = smul.u32 %s2106, 16
        %s2110 = scalar_lea.vmem [#allocation3], %s2109
        %v2111 = vld [vmem:[%s2110] sm:$0xff]
        %v2112 = vld [vmem:[%s2110 + $0x8] sm:$0xff]
        %v2113 = vld [vmem:[%s561] sm:$0xff]
        %v2114 = vld [vmem:[%s561 + $0x8] sm:$0xff]
        %v2115 = vld [vmem:[%s561 + $0x10] sm:$0xff]
        %v2116 = vld [vmem:[%s561 + $0x18] sm:$0xff]
        %v2118 = vsel %vm640, %v2107, 0
        %v2121 = vsel %vm640, %v2108, 0
        %2123 = vmatprep.subr.mxu0 0.0
        %2124 = vmatpush1.msra.mxu0 %v2113
        %2125 = vmatprep.subr.mxu0 0.0
        %2126 = vmatpush1.msra.mxu0 %v2114
        %2127 = vmatprep.subr.mxu0 0.0
        %2128 = vmatpush1.msra.mxu0 %v2115
        %2129 = vmatprep.subr.mxu0 0.0
        %2130 = vmatpush1.msra.mxu0 %v2116
        %2131 = vmatprep.subr.mxu0 0.0
        %2132 = vmatpush1.msra.mxu0 0.0
        %2133 = vmatprep.subr.mxu0 0.0
        %2134 = vmatpush1.msra.mxu0 0.0
        %2135 = vmatprep.subr.mxu0 0.0
        %2136 = vmatpush1.msra.mxu0 0.0
        %2137 = vmatprep.subr.mxu0 0.0
        %2138 = vmatpush1.msra.mxu0 0.0
        %2139 = vmatprep.subr.mxu0 0.0
        %2140 = vmatpush1.msra.mxu0 0.0
        %2141 = vmatprep.subr.mxu0 0.0
        %2142 = vmatpush1.msra.mxu0 0.0
        %2143 = vmatprep.subr.mxu0 0.0
        %2144 = vmatpush1.msra.mxu0 0.0
        %2145 = vmatprep.subr.mxu0 0.0
        %2146 = vmatpush1.msra.mxu0 0.0
        %2147 = vmatprep.subr.mxu0 0.0
        %2148 = vmatpush1.msra.mxu0 0.0
        %2149 = vmatprep.subr.mxu0 0.0
        %2150 = vmatpush1.msra.mxu0 0.0
        %2151 = vmatprep.subr.mxu0 0.0
        %2152 = vmatpush1.msra.mxu0 0.0
        %2153 = vmatprep.subr.mxu0 0.0
        %2154 = vmatpush1.msra.mxu0 0.0
        %2155 = vmatprep.subr.mxu0 0.0
        %2156 = vmatpush1.msra.mxu0 0.0
        %2157 = vmatprep.subr.mxu0 0.0
        %2158 = vmatpush1.msra.mxu0 0.0
        %2159 = vmatprep.subr.mxu0 0.0
        %2160 = vmatpush1.msra.mxu0 0.0
        %2161 = vmatprep.subr.mxu0 0.0
        %2162 = vmatpush1.msra.mxu0 0.0
        %2163 = vmatprep.subr.mxu0 0.0
        %2164 = vmatpush1.msra.mxu0 0.0
        %2165 = vmatprep.subr.mxu0 0.0
        %2166 = vmatpush1.msra.mxu0 0.0
        %2167 = vmatprep.subr.mxu0 0.0
        %2168 = vmatpush1.msra.mxu0 0.0
        %2169 = vmatprep.subr.mxu0 0.0
        %2170 = vmatpush1.msra.mxu0 0.0
        %2171 = vmatprep.subr.mxu0 0.0
        %2172 = vmatpush1.msra.mxu0 0.0
        %2173 = vmatprep.subr.mxu0 0.0
        %2174 = vmatpush1.msra.mxu0 0.0
        %2175 = vmatprep.subr.mxu0 0.0
        %2176 = vmatpush1.msra.mxu0 0.0
        %2177 = vmatprep.subr.mxu0 0.0
        %2178 = vmatpush1.msra.mxu0 0.0
        %2179 = vmatprep.subr.mxu0 0.0
        %2180 = vmatpush1.msra.mxu0 0.0
        %2181 = vmatprep.subr.mxu0 0.0
        %2182 = vmatpush1.msra.mxu0 0.0
        %2183 = vmatprep.subr.mxu0 0.0
        %2184 = vmatpush1.msra.mxu0 0.0
        %2185 = vmatprep.subr.mxu0 0.0
        %2186 = vmatpush1.msra.mxu0 0.0
        %2187 = vmatprep.mubr.f32.mxu0 0.0
        %2188 = vmatmul.mubr.f32.gmra.mrb[0].mxu0 %v2118
        %v2189 = vpop.f32.mrb[0].mxu0
        %v2190 = vadd.f32 0.0, %v2189
        %v2191 = vpop.f32.mrb[0].mxu0
        %2192 = vmatprep.mubr.f32.mxu0 0.0
        %2193 = vmatmul.mubr.f32.gmra.mrb[0].mxu0 %v2121
        %v2194 = vpop.f32.mrb[0].mxu0
        %v2195 = vadd.f32 0.0, %v2194
        %v2196 = vpop.f32.mrb[0].mxu0
        %2197 = vdwg.mxu0
        %v2198 = vadd.f32 %v2111, %v2190
        %v2199 = vadd.f32 %v2112, %v2195
        %v2200 = vxor.u32 %v2198, 2147483648
        %v2201 = vxor.u32 %v2199, 2147483648
        %v2202 = vmul.f32 %v2200, 1.442695
        %v2203 = vpow.pop %v2202
        %v2204 = vmul.f32 %v2201, 1.442695
        %v2205 = vpow.pop %v2204
        %v2206 = vadd.f32 %v2203, 1.0
        %v2207 = vadd.f32 %v2205, 1.0
        %v2208 = vrcp.pop %v2206
        %v2209 = vmul.f32 1.0, %v2208
        %v2210 = vrcp.pop %v2207
        %v2211 = vmul.f32 1.0, %v2210
        %v2212 = vadd.f32 %v2190, %v1191
        %v2213 = vadd.f32 %v2195, %v1191
        %2216 = vrot.lane.b32.xlu0 %v2212, 64
        %v2217 = vpop.permute.xlu0 %2216
        %2218 = vrot.lane.b32.xlu0 %v2213, 64
        %v2219 = vpop.permute.xlu0 %2218
        %v2222 = vmul.f32 %v2209, %v2217
        %v2223 = vmul.f32 %v2211, %v2219
        %2226 = vrot.lane.b32.xlu0 %v2222, 64
        %v2227 = vpop.permute.xlu0 %2226
        %2228 = vrot.lane.b32.xlu0 %v2223, 64
        %v2229 = vpop.permute.xlu0 %2228
        %v2232 = vadd.f32 %v2111, %v2227
        %v2233 = vadd.f32 %v2112, %v2229
        %v2234 = vtanh.pop %v2232
        %v2235 = vtanh.pop %v2233
        %2238 = vrot.lane.b32.xlu0 %v2234, 64
        %v2239 = vpop.permute.xlu0 %2238
        %2240 = vrot.lane.b32.xlu0 %v2235, 64
        %v2241 = vpop.permute.xlu0 %2240
        %v2244 = vsub.f32 %v2107, %v2239
        %v2245 = vsub.f32 %v2108, %v2241
        %2248 = vrot.lane.b32.xlu0 %v2244, 32
        %v2249 = vpop.permute.xlu0 %2248
        %2250 = vrot.lane.b32.xlu0 %v2245, 32
        %v2251 = vpop.permute.xlu0 %2250
        %v2254 = vmul.f32 %v2209, %v2249
        %v2255 = vmul.f32 %v2211, %v2251
        %2256 = vrot.lane.b32.xlu0 %v2234, 96
        %v2257 = vpop.permute.xlu0 %2256
        %2258 = vrot.lane.b32.xlu0 %v2235, 96
        %v2259 = vpop.permute.xlu0 %2258
        %v2262 = vadd.f32 %v2254, %v2257
        %v2263 = vadd.f32 %v2255, %v2259
        %v2264 = vstv %s2106
        %vm2265 = vcmp.lt.s32.totalorder %v2264, %v1076
        %vm2266 = vcmp.lt.s32.totalorder %v2264, %v1077
        %v2267 = vsel %vm2265, 1, 0
        %v2268 = vsel %vm2266, 1, 0
        %2269 = vset.pattern.permute.xlu0 0
        %2270 = vperm.xlu0 %2269, %v2267
        %v2271 = vpop.permute.xlu0 %2270
        %2272 = vset.pattern.permute.xlu0 0
        %2273 = vperm.xlu0 %2272, %v2268
        %v2274 = vpop.permute.xlu0 %2273
        %vm2275 = vcmp.eq.s32.totalorder %v2271, 1
        %vm2276 = vcmp.eq.s32.totalorder %v2274, 1
        %2277 = vrot.lane.b32.xlu0 %v2107, 32
        %v2278 = vpop.permute.xlu0 %2277
        %2279 = vrot.lane.b32.xlu0 %v2108, 32
        %v2280 = vpop.permute.xlu0 %2279
        %v2283 = vsel %vm2275, %v2262, %v2278
        %v2284 = vsel %vm2276, %v2263, %v2280
        %2287 = vrot.lane.b32.xlu0 %v2283, 96
        %v2288 = vpop.permute.xlu0 %2287
        %2289 = vrot.lane.b32.xlu0 %v2284, 96
        %v2290 = vpop.permute.xlu0 %2289
        %2293 = vst.msk [vmem:[#allocation2] sm:$0xff] %vm640, %v2288
        %2294 = vst.msk [vmem:[#allocation2 + $0x8] sm:$0xff] %vm640, %v2290
        %v2295 = vsel %vm2275, %v2262, 0.0
        %v2296 = vsel %vm2276, %v2263, 0.0
        %2299 = vrot.lane.b32.xlu0 %v2295, 96
        %v2300 = vpop.permute.xlu0 %2299
        %2301 = vrot.lane.b32.xlu0 %v2296, 96
        %v2302 = vpop.permute.xlu0 %2301
        %s2305 = scalar_lea.vmem %s579, %s2109
        %2306 = vst.msk [vmem:[%s2305] sm:$0xff] %vm640, %v2300
        %2307 = vst.msk [vmem:[%s2305 + $0x8] sm:$0xff] %vm640, %v2302
        %s2308 = smul.u32 %s1067, 6
        %s2309 = sadd.s32 %s2308, %s23
        %v2310 = vld [vmem:[#allocation2] sm:$0xff]
        %v2311 = vld [vmem:[#allocation2 + $0x8] sm:$0xff]
        %s2312 = smul.u32 %s2309, 16
        %s2313 = scalar_lea.vmem [#allocation3], %s2312
        %v2314 = vld [vmem:[%s2313] sm:$0xff]
        %v2315 = vld [vmem:[%s2313 + $0x8] sm:$0xff]
        %v2316 = vld [vmem:[%s561] sm:$0xff]
        %v2317 = vld [vmem:[%s561 + $0x8] sm:$0xff]
        %v2318 = vld [vmem:[%s561 + $0x10] sm:$0xff]
        %v2319 = vld [vmem:[%s561 + $0x18] sm:$0xff]
        %v2321 = vsel %vm640, %v2310, 0
        %v2324 = vsel %vm640, %v2311, 0
        %2326 = vmatprep.subr.mxu0 0.0
        %2327 = vmatpush1.msra.mxu0 %v2316
        %2328 = vmatprep.subr.mxu0 0.0
        %2329 = vmatpush1.msra.mxu0 %v2317
        %2330 = vmatprep.subr.mxu0 0.0
        %2331 = vmatpush1.msra.mxu0 %v2318
        %2332 = vmatprep.subr.mxu0 0.0
        %2333 = vmatpush1.msra.mxu0 %v2319
        %2334 = vmatprep.subr.mxu0 0.0
        %2335 = vmatpush1.msra.mxu0 0.0
        %2336 = vmatprep.subr.mxu0 0.0
        %2337 = vmatpush1.msra.mxu0 0.0
        %2338 = vmatprep.subr.mxu0 0.0
        %2339 = vmatpush1.msra.mxu0 0.0
        %2340 = vmatprep.subr.mxu0 0.0
        %2341 = vmatpush1.msra.mxu0 0.0
        %2342 = vmatprep.subr.mxu0 0.0
        %2343 = vmatpush1.msra.mxu0 0.0
        %2344 = vmatprep.subr.mxu0 0.0
        %2345 = vmatpush1.msra.mxu0 0.0
        %2346 = vmatprep.subr.mxu0 0.0
        %2347 = vmatpush1.msra.mxu0 0.0
        %2348 = vmatprep.subr.mxu0 0.0
        %2349 = vmatpush1.msra.mxu0 0.0
        %2350 = vmatprep.subr.mxu0 0.0
        %2351 = vmatpush1.msra.mxu0 0.0
        %2352 = vmatprep.subr.mxu0 0.0
        %2353 = vmatpush1.msra.mxu0 0.0
        %2354 = vmatprep.subr.mxu0 0.0
        %2355 = vmatpush1.msra.mxu0 0.0
        %2356 = vmatprep.subr.mxu0 0.0
        %2357 = vmatpush1.msra.mxu0 0.0
        %2358 = vmatprep.subr.mxu0 0.0
        %2359 = vmatpush1.msra.mxu0 0.0
        %2360 = vmatprep.subr.mxu0 0.0
        %2361 = vmatpush1.msra.mxu0 0.0
        %2362 = vmatprep.subr.mxu0 0.0
        %2363 = vmatpush1.msra.mxu0 0.0
        %2364 = vmatprep.subr.mxu0 0.0
        %2365 = vmatpush1.msra.mxu0 0.0
        %2366 = vmatprep.subr.mxu0 0.0
        %2367 = vmatpush1.msra.mxu0 0.0
        %2368 = vmatprep.subr.mxu0 0.0
        %2369 = vmatpush1.msra.mxu0 0.0
        %2370 = vmatprep.subr.mxu0 0.0
        %2371 = vmatpush1.msra.mxu0 0.0
        %2372 = vmatprep.subr.mxu0 0.0
        %2373 = vmatpush1.msra.mxu0 0.0
        %2374 = vmatprep.subr.mxu0 0.0
        %2375 = vmatpush1.msra.mxu0 0.0
        %2376 = vmatprep.subr.mxu0 0.0
        %2377 = vmatpush1.msra.mxu0 0.0
        %2378 = vmatprep.subr.mxu0 0.0
        %2379 = vmatpush1.msra.mxu0 0.0
        %2380 = vmatprep.subr.mxu0 0.0
        %2381 = vmatpush1.msra.mxu0 0.0
        %2382 = vmatprep.subr.mxu0 0.0
        %2383 = vmatpush1.msra.mxu0 0.0
        %2384 = vmatprep.subr.mxu0 0.0
        %2385 = vmatpush1.msra.mxu0 0.0
        %2386 = vmatprep.subr.mxu0 0.0
        %2387 = vmatpush1.msra.mxu0 0.0
        %2388 = vmatprep.subr.mxu0 0.0
        %2389 = vmatpush1.msra.mxu0 0.0
        %2390 = vmatprep.mubr.f32.mxu0 0.0
        %2391 = vmatmul.mubr.f32.gmra.mrb[0].mxu0 %v2321
        %v2392 = vpop.f32.mrb[0].mxu0
        %v2393 = vadd.f32 0.0, %v2392
        %v2394 = vpop.f32.mrb[0].mxu0
        %2395 = vmatprep.mubr.f32.mxu0 0.0
        %2396 = vmatmul.mubr.f32.gmra.mrb[0].mxu0 %v2324
        %v2397 = vpop.f32.mrb[0].mxu0
        %v2398 = vadd.f32 0.0, %v2397
        %v2399 = vpop.f32.mrb[0].mxu0
        %2400 = vdwg.mxu0
        %v2401 = vadd.f32 %v2314, %v2393
        %v2402 = vadd.f32 %v2315, %v2398
        %v2403 = vxor.u32 %v2401, 2147483648
        %v2404 = vxor.u32 %v2402, 2147483648
        %v2405 = vmul.f32 %v2403, 1.442695
        %v2406 = vpow.pop %v2405
        %v2407 = vmul.f32 %v2404, 1.442695
        %v2408 = vpow.pop %v2407
        %v2409 = vadd.f32 %v2406, 1.0
        %v2410 = vadd.f32 %v2408, 1.0
        %v2411 = vrcp.pop %v2409
        %v2412 = vmul.f32 1.0, %v2411
        %v2413 = vrcp.pop %v2410
        %v2414 = vmul.f32 1.0, %v2413
        %v2415 = vadd.f32 %v2393, %v1191
        %v2416 = vadd.f32 %v2398, %v1191
        %2419 = vrot.lane.b32.xlu0 %v2415, 64
        %v2420 = vpop.permute.xlu0 %2419
        %2421 = vrot.lane.b32.xlu0 %v2416, 64
        %v2422 = vpop.permute.xlu0 %2421
        %v2425 = vmul.f32 %v2412, %v2420
        %v2426 = vmul.f32 %v2414, %v2422
        %2429 = vrot.lane.b32.xlu0 %v2425, 64
        %v2430 = vpop.permute.xlu0 %2429
        %2431 = vrot.lane.b32.xlu0 %v2426, 64
        %v2432 = vpop.permute.xlu0 %2431
        %v2435 = vadd.f32 %v2314, %v2430
        %v2436 = vadd.f32 %v2315, %v2432
        %v2437 = vtanh.pop %v2435
        %v2438 = vtanh.pop %v2436
        %2441 = vrot.lane.b32.xlu0 %v2437, 64
        %v2442 = vpop.permute.xlu0 %2441
        %2443 = vrot.lane.b32.xlu0 %v2438, 64
        %v2444 = vpop.permute.xlu0 %2443
        %v2447 = vsub.f32 %v2310, %v2442
        %v2448 = vsub.f32 %v2311, %v2444
        %2451 = vrot.lane.b32.xlu0 %v2447, 32
        %v2452 = vpop.permute.xlu0 %2451
        %2453 = vrot.lane.b32.xlu0 %v2448, 32
        %v2454 = vpop.permute.xlu0 %2453
        %v2457 = vmul.f32 %v2412, %v2452
        %v2458 = vmul.f32 %v2414, %v2454
        %2459 = vrot.lane.b32.xlu0 %v2437, 96
        %v2460 = vpop.permute.xlu0 %2459
        %2461 = vrot.lane.b32.xlu0 %v2438, 96
        %v2462 = vpop.permute.xlu0 %2461
        %v2465 = vadd.f32 %v2457, %v2460
        %v2466 = vadd.f32 %v2458, %v2462
        %v2467 = vstv %s2309
        %vm2468 = vcmp.lt.s32.totalorder %v2467, %v1076
        %vm2469 = vcmp.lt.s32.totalorder %v2467, %v1077
        %v2470 = vsel %vm2468, 1, 0
        %v2471 = vsel %vm2469, 1, 0
        %2472 = vset.pattern.permute.xlu0 0
        %2473 = vperm.xlu0 %2472, %v2470
        %v2474 = vpop.permute.xlu0 %2473
        %2475 = vset.pattern.permute.xlu0 0
        %2476 = vperm.xlu0 %2475, %v2471
        %v2477 = vpop.permute.xlu0 %2476
        %vm2478 = vcmp.eq.s32.totalorder %v2474, 1
        %vm2479 = vcmp.eq.s32.totalorder %v2477, 1
        %2480 = vrot.lane.b32.xlu0 %v2310, 32
        %v2481 = vpop.permute.xlu0 %2480
        %2482 = vrot.lane.b32.xlu0 %v2311, 32
        %v2483 = vpop.permute.xlu0 %2482
        %v2486 = vsel %vm2478, %v2465, %v2481
        %v2487 = vsel %vm2479, %v2466, %v2483
        %2490 = vrot.lane.b32.xlu0 %v2486, 96
        %v2491 = vpop.permute.xlu0 %2490
        %2492 = vrot.lane.b32.xlu0 %v2487, 96
        %v2493 = vpop.permute.xlu0 %2492
        %2496 = vst.msk [vmem:[#allocation2] sm:$0xff] %vm640, %v2491
        %2497 = vst.msk [vmem:[#allocation2 + $0x8] sm:$0xff] %vm640, %v2493
        %v2498 = vsel %vm2478, %v2465, 0.0
        %v2499 = vsel %vm2479, %v2466, 0.0
        %2502 = vrot.lane.b32.xlu0 %v2498, 96
        %v2503 = vpop.permute.xlu0 %2502
        %2504 = vrot.lane.b32.xlu0 %v2499, 96
        %v2505 = vpop.permute.xlu0 %2504
        %s2508 = scalar_lea.vmem %s579, %s2312
        %2509 = vst.msk [vmem:[%s2508] sm:$0xff] %vm640, %v2503
        %2510 = vst.msk [vmem:[%s2508 + $0x8] sm:$0xff] %vm640, %v2505
        %s2511 = smul.u32 %s1067, 7
        %v2512 = vld [vmem:[#allocation2] sm:$0xff]
        %v2513 = vld [vmem:[#allocation2 + $0x8] sm:$0xff]
        %s2514 = smul.u32 %s2511, 16
        %s2515 = scalar_lea.vmem [#allocation3], %s2514
        %v2516 = vld [vmem:[%s2515] sm:$0xff]
        %v2517 = vld [vmem:[%s2515 + $0x8] sm:$0xff]
        %v2518 = vld [vmem:[%s561] sm:$0xff]
        %v2519 = vld [vmem:[%s561 + $0x8] sm:$0xff]
        %v2520 = vld [vmem:[%s561 + $0x10] sm:$0xff]
        %v2521 = vld [vmem:[%s561 + $0x18] sm:$0xff]
        %v2523 = vsel %vm640, %v2512, 0
        %v2526 = vsel %vm640, %v2513, 0
        %2528 = vmatprep.subr.mxu0 0.0
        %2529 = vmatpush1.msra.mxu0 %v2518
        %2530 = vmatprep.subr.mxu0 0.0
        %2531 = vmatpush1.msra.mxu0 %v2519
        %2532 = vmatprep.subr.mxu0 0.0
        %2533 = vmatpush1.msra.mxu0 %v2520
        %2534 = vmatprep.subr.mxu0 0.0
        %2535 = vmatpush1.msra.mxu0 %v2521
        %2536 = vmatprep.subr.mxu0 0.0
        %2537 = vmatpush1.msra.mxu0 0.0
        %2538 = vmatprep.subr.mxu0 0.0
        %2539 = vmatpush1.msra.mxu0 0.0
        %2540 = vmatprep.subr.mxu0 0.0
        %2541 = vmatpush1.msra.mxu0 0.0
        %2542 = vmatprep.subr.mxu0 0.0
        %2543 = vmatpush1.msra.mxu0 0.0
        %2544 = vmatprep.subr.mxu0 0.0
        %2545 = vmatpush1.msra.mxu0 0.0
        %2546 = vmatprep.subr.mxu0 0.0
        %2547 = vmatpush1.msra.mxu0 0.0
        %2548 = vmatprep.subr.mxu0 0.0
        %2549 = vmatpush1.msra.mxu0 0.0
        %2550 = vmatprep.subr.mxu0 0.0
        %2551 = vmatpush1.msra.mxu0 0.0
        %2552 = vmatprep.subr.mxu0 0.0
        %2553 = vmatpush1.msra.mxu0 0.0
        %2554 = vmatprep.subr.mxu0 0.0
        %2555 = vmatpush1.msra.mxu0 0.0
        %2556 = vmatprep.subr.mxu0 0.0
        %2557 = vmatpush1.msra.mxu0 0.0
        %2558 = vmatprep.subr.mxu0 0.0
        %2559 = vmatpush1.msra.mxu0 0.0
        %2560 = vmatprep.subr.mxu0 0.0
        %2561 = vmatpush1.msra.mxu0 0.0
        %2562 = vmatprep.subr.mxu0 0.0
        %2563 = vmatpush1.msra.mxu0 0.0
        %2564 = vmatprep.subr.mxu0 0.0
        %2565 = vmatpush1.msra.mxu0 0.0
        %2566 = vmatprep.subr.mxu0 0.0
        %2567 = vmatpush1.msra.mxu0 0.0
        %2568 = vmatprep.subr.mxu0 0.0
        %2569 = vmatpush1.msra.mxu0 0.0
        %2570 = vmatprep.subr.mxu0 0.0
        %2571 = vmatpush1.msra.mxu0 0.0
        %2572 = vmatprep.subr.mxu0 0.0
        %2573 = vmatpush1.msra.mxu0 0.0
        %2574 = vmatprep.subr.mxu0 0.0
        %2575 = vmatpush1.msra.mxu0 0.0
        %2576 = vmatprep.subr.mxu0 0.0
        %2577 = vmatpush1.msra.mxu0 0.0
        %2578 = vmatprep.subr.mxu0 0.0
        %2579 = vmatpush1.msra.mxu0 0.0
        %2580 = vmatprep.subr.mxu0 0.0
        %2581 = vmatpush1.msra.mxu0 0.0
        %2582 = vmatprep.subr.mxu0 0.0
        %2583 = vmatpush1.msra.mxu0 0.0
        %2584 = vmatprep.subr.mxu0 0.0
        %2585 = vmatpush1.msra.mxu0 0.0
        %2586 = vmatprep.subr.mxu0 0.0
        %2587 = vmatpush1.msra.mxu0 0.0
        %2588 = vmatprep.subr.mxu0 0.0
        %2589 = vmatpush1.msra.mxu0 0.0
        %2590 = vmatprep.subr.mxu0 0.0
        %2591 = vmatpush1.msra.mxu0 0.0
        %2592 = vmatprep.mubr.f32.mxu0 0.0
        %2593 = vmatmul.mubr.f32.gmra.mrb[0].mxu0 %v2523
        %v2594 = vpop.f32.mrb[0].mxu0
        %v2595 = vadd.f32 0.0, %v2594
        %v2596 = vpop.f32.mrb[0].mxu0
        %2597 = vmatprep.mubr.f32.mxu0 0.0
        %2598 = vmatmul.mubr.f32.gmra.mrb[0].mxu0 %v2526
        %v2599 = vpop.f32.mrb[0].mxu0
        %v2600 = vadd.f32 0.0, %v2599
        %v2601 = vpop.f32.mrb[0].mxu0
        %2602 = vdwg.mxu0
        %v2603 = vadd.f32 %v2516, %v2595
        %v2604 = vadd.f32 %v2517, %v2600
        %v2605 = vxor.u32 %v2603, 2147483648
        %v2606 = vxor.u32 %v2604, 2147483648
        %v2607 = vmul.f32 %v2605, 1.442695
        %v2608 = vpow.pop %v2607
        %v2609 = vmul.f32 %v2606, 1.442695
        %v2610 = vpow.pop %v2609
        %v2611 = vadd.f32 %v2608, 1.0
        %v2612 = vadd.f32 %v2610, 1.0
        %v2613 = vrcp.pop %v2611
        %v2614 = vmul.f32 1.0, %v2613
        %v2615 = vrcp.pop %v2612
        %v2616 = vmul.f32 1.0, %v2615
        %v2617 = vadd.f32 %v2595, %v1191
        %v2618 = vadd.f32 %v2600, %v1191
        %2621 = vrot.lane.b32.xlu0 %v2617, 64
        %v2622 = vpop.permute.xlu0 %2621
        %2623 = vrot.lane.b32.xlu0 %v2618, 64
        %v2624 = vpop.permute.xlu0 %2623
        %v2627 = vmul.f32 %v2614, %v2622
        %v2628 = vmul.f32 %v2616, %v2624
        %2631 = vrot.lane.b32.xlu0 %v2627, 64
        %v2632 = vpop.permute.xlu0 %2631
        %2633 = vrot.lane.b32.xlu0 %v2628, 64
        %v2634 = vpop.permute.xlu0 %2633
        %v2637 = vadd.f32 %v2516, %v2632
        %v2638 = vadd.f32 %v2517, %v2634
        %v2639 = vtanh.pop %v2637
        %v2640 = vtanh.pop %v2638
        %2643 = vrot.lane.b32.xlu0 %v2639, 64
        %v2644 = vpop.permute.xlu0 %2643
        %2645 = vrot.lane.b32.xlu0 %v2640, 64
        %v2646 = vpop.permute.xlu0 %2645
        %v2649 = vsub.f32 %v2512, %v2644
        %v2650 = vsub.f32 %v2513, %v2646
        %2653 = vrot.lane.b32.xlu0 %v2649, 32
        %v2654 = vpop.permute.xlu0 %2653
        %2655 = vrot.lane.b32.xlu0 %v2650, 32
        %v2656 = vpop.permute.xlu0 %2655
        %v2659 = vmul.f32 %v2614, %v2654
        %v2660 = vmul.f32 %v2616, %v2656
        %2661 = vrot.lane.b32.xlu0 %v2639, 96
        %v2662 = vpop.permute.xlu0 %2661
        %2663 = vrot.lane.b32.xlu0 %v2640, 96
        %v2664 = vpop.permute.xlu0 %2663
        %v2667 = vadd.f32 %v2659, %v2662
        %v2668 = vadd.f32 %v2660, %v2664
        %v2669 = vstv %s2511
        %vm2670 = vcmp.lt.s32.totalorder %v2669, %v1076
        %vm2671 = vcmp.lt.s32.totalorder %v2669, %v1077
        %v2672 = vsel %vm2670, 1, 0
        %v2673 = vsel %vm2671, 1, 0
        %2674 = vset.pattern.permute.xlu0 0
        %2675 = vperm.xlu0 %2674, %v2672
        %v2676 = vpop.permute.xlu0 %2675
        %2677 = vset.pattern.permute.xlu0 0
        %2678 = vperm.xlu0 %2677, %v2673
        %v2679 = vpop.permute.xlu0 %2678
        %vm2680 = vcmp.eq.s32.totalorder %v2676, 1
        %vm2681 = vcmp.eq.s32.totalorder %v2679, 1
        %2682 = vrot.lane.b32.xlu0 %v2512, 32
        %v2683 = vpop.permute.xlu0 %2682
        %2684 = vrot.lane.b32.xlu0 %v2513, 32
        %v2685 = vpop.permute.xlu0 %2684
        %v2688 = vsel %vm2680, %v2667, %v2683
        %v2689 = vsel %vm2681, %v2668, %v2685
        %2692 = vrot.lane.b32.xlu0 %v2688, 96
        %v2693 = vpop.permute.xlu0 %2692
        %2694 = vrot.lane.b32.xlu0 %v2689, 96
        %v2695 = vpop.permute.xlu0 %2694
        %2698 = vst.msk [vmem:[#allocation2] sm:$0xff] %vm640, %v2693
        %2699 = vst.msk [vmem:[#allocation2 + $0x8] sm:$0xff] %vm640, %v2695
        %v2700 = vsel %vm2680, %v2667, 0.0
        %v2701 = vsel %vm2681, %v2668, 0.0
        %2704 = vrot.lane.b32.xlu0 %v2700, 96
        %v2705 = vpop.permute.xlu0 %2704
        %2706 = vrot.lane.b32.xlu0 %v2701, 96
        %v2707 = vpop.permute.xlu0 %2706
        %s2710 = scalar_lea.vmem %s579, %s2514
        %2711 = vst.msk [vmem:[%s2710] sm:$0xff] %vm640, %v2705
        %2712 = vst.msk [vmem:[%s2710 + $0x8] sm:$0xff] %vm640, %v2707
        %p2713 = scmp.eq.s32.totalorder %s24, 1
        // Predicated region
        $region87: #{gru_encoder_forward.4} parent=77 // pred_check
          %p2714 = pneg %p2713
        $region88: #{gru_encoder_forward.4} parent=77 // pred_check_branch
          %2716 = sbr.rel (%p2714) target = $region90
        $region89: #{gru_encoder_forward.4} parent=77 // pred_region
          %v2717 = vld [vmem:[#allocation2] sm:$0xff]
          %v2718 = vld [vmem:[#allocation2 + $0x8] sm:$0xff]
          %2719 = vst.msk [vmem:[%s590] sm:$0xff] %vm640, %v2717
          %2720 = vst.msk [vmem:[%s590 + $0x8] sm:$0xff] %vm640, %v2718
        $region90: #{gru_encoder_forward.4} parent=77 // pred_fallthru
          _
        %s2721 = ssub.s32 1, %s23
        %s2722 = smul.u32 %s24, %s2721
        %s2723 = ssub.s32 1, %s24
        %s2724 = smul.u32 %s2723, %s23
        %s2725 = sadd.s32 %s2722, %s2724
        %s2726 = smul.u32 8, %s2725
        %p2727 = scmp.lt.s32.totalorder %s23, 1
        %s2728 = scalar_select %p2727, %s23, 1
        %p2729 = scmp.lt.s32.totalorder %s2726, 15
        %s2730 = scalar_select %p2729, %s2726, 15
        %s2731 = smul.addr %s2730, 2
        %s2732 = smul.addr %s2728, 32
        %s2733 = sadd.s32 %s2731, %s2732
        %s2734 = smul.addr %s2733, 8
        %s2735 = scalar_lea.vmem %s6, %s2734
        %p2736 = scmp.lt.s32.totalorder %s23, 1
        %s2737 = scalar_select %p2736, %s23, 1
        %s2738 = smul.addr %s2737, 2
        %s2739 = smul.addr %s2738, 8
        %s2740 = scalar_lea.vmem %s7, %s2739
        // Predicated region
        $region91: #{gru_encoder_forward.4} parent=77 // pred_check
          %p2741 = pneg %p222
        $region92: #{gru_encoder_forward.4} parent=77 // pred_check_branch
          %2743 = sbr.rel (%p2741) target = $region94
        $region93: #{gru_encoder_forward.4} parent=77 // pred_region
          %s2744 = ssub.s32 1, %s23
          %s2745 = smul.u32 %s24, %s2744
          %s2746 = ssub.s32 1, %s24
          %s2747 = smul.u32 %s2746, %s23
          %s2748 = sadd.s32 %s2745, %s2747
          %s2749 = smul.u32 8, %s2748
        $region94: #{gru_encoder_forward.4} parent=77 // pred_fallthru
          _
        // Predicated region
        $region95: #{gru_encoder_forward.4} parent=77 // pred_check
          %p2750 = pneg %p248
        $region96: #{gru_encoder_forward.4} parent=77 // pred_check_branch
          %2752 = sbr.rel (%p2750) target = $region98
        $region97: #{gru_encoder_forward.4} parent=77 // pred_region
          _
        $region98: #{gru_encoder_forward.4} parent=77 // pred_fallthru
          _
      $region78: #{gru_encoder_forward.4} parent=5 // pred_fallthru
        _
      %p2753 = scmp.le.s32.totalorder 2, %s14
      // Predicated region
      $region99: #{gru_encoder_forward.4} parent=5 // pred_check
        %p2754 = pneg %p2753
      $region100: #{gru_encoder_forward.4} parent=5 // pred_check_branch
        %2756 = sbr.rel (%p2754) target = $region102
      $region101: #{gru_encoder_forward.4} parent=5 // pred_region
        %s2757 = ssub.s32 %s14, 2
        // Predicated region
        $region103: #{gru_encoder_forward.4} parent=101 // pred_check
          %p2758 = pneg %p228
        $region104: #{gru_encoder_forward.4} parent=101 // pred_check_branch
          %2760 = sbr.rel (%p2758) target = $region106
        $region105: #{gru_encoder_forward.4} parent=101 // pred_region
          %s2761 = ssub.s32 1, %s25
          %s2762 = smul.u32 %s26, %s2761
          %s2763 = ssub.s32 1, %s26
          %s2764 = smul.u32 %s2763, %s25
          %s2765 = sadd.s32 %s2762, %s2764
          %s2766 = smul.u32 8, %s2765
          %p2767 = scmp.lt.s32.totalorder %s25, 1
          %s2768 = scalar_select %p2767, %s25, 1
          %p2769 = scmp.lt.s32.totalorder %s2766, 15
          %s2770 = scalar_select %p2769, %s2766, 15
          %s2771 = smul.addr %s2770, 2
          %s2772 = smul.addr %s2768, 32
          %s2773 = sadd.s32 %s2771, %s2772
          %s2774 = smul.addr %s2773, 8
          %s2775 = scalar_lea.vmem %s6, %s2774
        $region106: #{gru_encoder_forward.4} parent=101 // pred_fallthru
          _
        // Predicated region
        $region107: #{gru_encoder_forward.4} parent=101 // pred_check
          %p2776 = pneg %p254
        $region108: #{gru_encoder_forward.4} parent=101 // pred_check_branch
          %2778 = sbr.rel (%p2776) target = $region110
        $region109: #{gru_encoder_forward.4} parent=101 // pred_region
          %p2779 = scmp.lt.s32.totalorder %s25, 1
          %s2780 = scalar_select %p2779, %s25, 1
          %s2781 = smul.addr %s2780, 2
          %s2782 = smul.addr %s2781, 8
          %s2783 = scalar_lea.vmem %s7, %s2782
        $region110: #{gru_encoder_forward.4} parent=101 // pred_fallthru
          _
      $region102: #{gru_encoder_forward.4} parent=5 // pred_fallthru
        _
    $region6: #{gru_encoder_forward.4} parent=1 // loop_footer
      %s18 = sadd.s32 1, %s14
    $region7: #{gru_encoder_forward.4} parent=1 // loop_footer_branch
      %13 = sbr.rel target = $region3
    $region8: #{gru_encoder_forward.4} parent=1 // loop_exit
      _

</llo_original>
